<compile_context>
chip_gen: v6e
topology: v6e:2x2x1
jax: 0.10.0
libtpu: 0.0.40
codegen_flags: <defaults>
</compile_context>

<pallas_src>
import jax
import jax.numpy as jnp
from jax import lax
from jax.experimental import pallas as pl
from jax.experimental.pallas import tpu as pltpu

IN_DIM = 784   # encoder rows / output rows & cols
HID = 32       # hidden dim (contraction dim of both matmuls)
BATCH = 32     # forced by torch.mm(h, encoder.T)


def _sigmoid(z):
    # sigmoid(z) == 0.5 * tanh(0.5 * z) + 0.5  -> single EUP op instead of exp + recip.
    return 0.5 * jnp.tanh(0.5 * z) + 0.5


def balanced_ae_kernel(enc_rows_ref, enc_full_ref, x_ref, out_ref):
    """One grid step computes `row_tile` rows of the (784, 784) output.

    enc_rows_ref : (row_tile, HID)   this step's rows of the encoder
    enc_full_ref : (IN_DIM, HID)     full encoder, resident across all steps
    x_ref        : (HID, BATCH)      full input, resident
    out_ref      : (row_tile, IN_DIM) this step's slab of the output
    """
    # h = sigmoid(encoder_rows @ x)                      -> (row_tile, BATCH == HID)
    h = _sigmoid(
        jnp.dot(enc_rows_ref[...], x_ref[...], preferred_element_type=jnp.float32)
    )

    # out = sigmoid(h @ encoder.T), written as a contraction over the hidden
    # dim of BOTH operands so no transpose/relayout of encoder is materialized.
    z = lax.dot_general(
        h,
        enc_full_ref[...],
        dimension_numbers=(((1,), (1,)), ((), ())),
        preferred_element_type=jnp.float32,
    )
    out_ref[...] = _sigmoid(z).astype(out_ref.dtype)


def _default_num_row_tiles():
    """1 step everywhere except v7x, where 2 row-tiles use both TensorCores."""
    try:
        kind = jax.devices()[0].device_kind.lower()
    except Exception:
        return 1
    if "v7" in kind or "7x" in kind:
        return 2
    return 1


def balanced_ae_forward(encoder, x, num_row_tiles=None):
    assert encoder.shape == (IN_DIM, HID)
    assert x.shape == (HID, BATCH)

    if num_row_tiles is None:
        num_row_tiles = _default_num_row_tiles()
    row_tile = IN_DIM // num_row_tiles
    assert row_tile * num_row_tiles == IN_DIM and row_tile % 8 == 0

    return pl.pallas_call(
        balanced_ae_kernel,
        out_shape=jax.ShapeDtypeStruct((IN_DIM, IN_DIM), jnp.float32),
        grid_spec=pl.GridSpec(
            grid=(num_row_tiles,),
            in_specs=[
                # row-tile of the encoder for this grid step
                pl.BlockSpec((row_tile, HID), lambda i: (i, 0)),
                # full encoder, resident across all grid steps
                pl.BlockSpec((IN_DIM, HID), lambda i: (0, 0)),
                # full input x, resident
                pl.BlockSpec((HID, BATCH), lambda i: (0, 0)),
            ],
            out_specs=pl.BlockSpec((row_tile, IN_DIM), lambda i: (i, 0)),
        ),
        compiler_params=pltpu.CompilerParams(
            dimension_semantics=("parallel",),
        ),
    )(encoder, encoder, x)


def balanced_ae_reference(encoder, x):
    h = jax.nn.sigmoid(encoder @ x)
    return jax.nn.sigmoid(h @ encoder.T)


if __name__ == "__main__":
    key = jax.random.PRNGKey(0)
    k_enc, k_x = jax.random.split(key)
    # torch.rand -> uniform [0, 1)
    encoder = jax.random.uniform(k_enc, (IN_DIM, HID), dtype=jnp.float32)
    x = jax.random.uniform(k_x, (HID, BATCH), dtype=jnp.float32)

    out = balanced_ae_forward(encoder, x)
    out = jax.block_until_ready(out)

    ref = balanced_ae_reference(encoder, x)
    assert out.shape == (IN_DIM, IN_DIM)
    assert jnp.allclose(out, ref, atol=1e-5, rtol=1e-5), "mismatch vs reference"

    print("KERNEL_OK")
</pallas_src>

<mosaic_0001>
module attributes {stable_mosaic.version = 11 : i64} {
  func.func @balanced_ae_kernel(%arg0: i32, %arg1: memref<784x32xf32, #tpu.memory_space<vmem>>, %arg2: memref<784x32xf32, #tpu.memory_space<vmem>>, %arg3: memref<32x32xf32, #tpu.memory_space<vmem>>, %arg4: memref<784x784xf32, #tpu.memory_space<vmem>>) attributes {dimension_semantics = [#tpu.dimension_semantics<parallel>], iteration_bounds = array<i64: 1>, scalar_prefetch = 0 : i64, scratch_operands = 0 : i64, tpu.core_type = #tpu.core_type<tc>, window_params = [{transform_indices = @transform_0, window_bounds = array<i64: 784, 32>}, {pipeline_mode = #tpu.pipeline_mode<synchronous>, transform_indices = @transform_1, window_bounds = array<i64: 784, 32>}, {pipeline_mode = #tpu.pipeline_mode<synchronous>, transform_indices = @transform_2, window_bounds = array<i64: 32, 32>}, {transform_indices = @transform_3, window_bounds = array<i64: 784, 784>}]} {
    %c0 = arith.constant 0 : index
    %c0_0 = arith.constant 0 : index
    %0 = vector.load %arg1[%c0, %c0_0] : memref<784x32xf32, #tpu.memory_space<vmem>>, vector<784x32xf32>
    %c0_1 = arith.constant 0 : index
    %c0_2 = arith.constant 0 : index
    %1 = vector.load %arg3[%c0_1, %c0_2] : memref<32x32xf32, #tpu.memory_space<vmem>>, vector<32x32xf32>
    %cst = arith.constant dense<0.000000e+00> : vector<784x32xf32>
    %2 = tpu.matmul %0, %1, %cst {dimension_numbers = #tpu.dot_dimension_numbers<[1], [0], [0], [1], [0, 0, 1, 1], [], []>} : vector<784x32xf32>, vector<32x32xf32>, vector<784x32xf32> -> vector<784x32xf32>
    %cst_3 = arith.constant 5.000000e-01 : f32
    %3 = vector.broadcast %cst_3 : f32 to vector<784x32xf32>
    %4 = arith.mulf %3, %2 : vector<784x32xf32>
    %5 = math.tanh %4 : vector<784x32xf32>
    %cst_4 = arith.constant 5.000000e-01 : f32
    %6 = vector.broadcast %cst_4 : f32 to vector<784x32xf32>
    %7 = arith.mulf %6, %5 : vector<784x32xf32>
    %cst_5 = arith.constant 5.000000e-01 : f32
    %8 = vector.broadcast %cst_5 : f32 to vector<784x32xf32>
    %9 = arith.addf %7, %8 : vector<784x32xf32>
    %c0_6 = arith.constant 0 : index
    %c0_7 = arith.constant 0 : index
    %10 = vector.load %arg2[%c0_6, %c0_7] : memref<784x32xf32, #tpu.memory_space<vmem>>, vector<784x32xf32>
    %cst_8 = arith.constant dense<0.000000e+00> : vector<784x784xf32>
    %11 = tpu.matmul %9, %10, %cst_8 {dimension_numbers = #tpu.dot_dimension_numbers<[1], [1], [0], [0], [0, 0, 1, 0], [], []>} : vector<784x32xf32>, vector<784x32xf32>, vector<784x784xf32> -> vector<784x784xf32>
    %cst_9 = arith.constant 5.000000e-01 : f32
    %12 = vector.broadcast %cst_9 : f32 to vector<784x784xf32>
    %13 = arith.mulf %12, %11 : vector<784x784xf32>
    %14 = math.tanh %13 : vector<784x784xf32>
    %cst_10 = arith.constant 5.000000e-01 : f32
    %15 = vector.broadcast %cst_10 : f32 to vector<784x784xf32>
    %16 = arith.mulf %15, %14 : vector<784x784xf32>
    %cst_11 = arith.constant 5.000000e-01 : f32
    %17 = vector.broadcast %cst_11 : f32 to vector<784x784xf32>
    %18 = arith.addf %16, %17 : vector<784x784xf32>
    %c0_12 = arith.constant 0 : index
    %c0_13 = arith.constant 0 : index
    %19 = vector.load %arg4[%c0_12, %c0_13] : memref<784x784xf32, #tpu.memory_space<vmem>>, vector<784x784xf32>
    tpu.vector_store %arg4[%c0_12, %c0_13], %18 {strides = array<i32>} : memref<784x784xf32, #tpu.memory_space<vmem>>, vector<784x784xf32>,
    return
  }
  func.func @transform_0(%arg0: i32) -> (i32, i32) {
    %c0_i32 = arith.constant 0 : i32
    %c0_i32_0 = arith.constant 0 : i32
    return %arg0, %c0_i32 : i32, i32
  }
  func.func @transform_1(%arg0: i32) -> (i32, i32) {
    %c0_i32 = arith.constant 0 : i32
    %c0_i32_0 = arith.constant 0 : i32
    %c0_i32_1 = arith.constant 0 : i32
    return %c0_i32, %c0_i32_0 : i32, i32
  }
  func.func @transform_2(%arg0: i32) -> (i32, i32) {
    %c0_i32 = arith.constant 0 : i32
    %c0_i32_0 = arith.constant 0 : i32
    %c0_i32_1 = arith.constant 0 : i32
    return %c0_i32, %c0_i32_0 : i32, i32
  }
  func.func @transform_3(%arg0: i32) -> (i32, i32) {
    %c0_i32 = arith.constant 0 : i32
    %c0_i32_0 = arith.constant 0 : i32
    return %arg0, %c0_i32 : i32, i32
  }
}

</mosaic_0001>

<llo_original>
// kernel: tpu_custom_call.1
$region0: #{tpu_custom_call.1}
  #allocation0 [shape = 'u32[]', space=smem, size = 0x4, offset = 0x4, fixed_abs, tag = 'smem constant byte address 0x4 - core index']
  #allocation1 [shape = 'u32[144,128]{1,0:T(1,128)}', space=vmem, size = 0x12000, scoped, tag = 'internal scratch']
  %s0 = inlined_call_operand.vmem [shape: f32[784,32], index: 0, kind: input, shape index: {}]
  %s1 = inlined_call_operand.vmem [shape: f32[784,32], index: 1, kind: input, shape index: {}]
  %s2 = inlined_call_operand.hbm [shape: f32[32,32], index: 2, kind: input, shape index: {}]
  %s3 = inlined_call_operand.hbm [shape: f32[784,784], index: 3, kind: output, shape index: {}]
  %s4 = sld [smem:[#allocation0]]
  $region26: #{tpu_custom_call.1} parent=0
    _
  %s6 = ssub.s32 1, %s4
  %s7 = scalar_select 0, %s6, %s4
  $region1: #{tpu_custom_call.1} parent=0
    #allocation2 [shape = 'u8[16384]{0}', space=vmem, size = 0x4000, scoped, tag = 'input window, operand 2, single buffered']
    #allocation3 [shape = 's32[1]{0}', space=sflag, size = 0x4, scoped, tag = 'scoped memory for tpu_custom_call.1']
    #allocation4 [shape = 's32[1]{0}', space=sflag, size = 0x4, scoped, tag = 'scoped memory for tpu_custom_call.1']
    #allocation5 [shape = 'u8[2809856]{0}', space=vmem, size = 0x2ae000, scoped, tag = 'output window, operand 0, single buffered']
    %8 = vsyncpa [#allocation3], 0
    %9 = vsyncpa [#allocation4], 0
    // Predicated region
    $region2: #{tpu_custom_call.1} parent=1 // pred_check
      _
    $region3: #{tpu_custom_call.1} parent=1 // pred_check_branch
      %11 = sbr.rel (0) target = $region5
    $region4: #{tpu_custom_call.1} parent=1 // pred_region
      _
    $region5: #{tpu_custom_call.1} parent=1 // pred_fallthru
      _
    // Predicated region
    $region6: #{tpu_custom_call.1} parent=1 // pred_check
      _
    $region7: #{tpu_custom_call.1} parent=1 // pred_check_branch
      %13 = sbr.rel (0) target = $region9
    $region8: #{tpu_custom_call.1} parent=1 // pred_region
      _
    $region9: #{tpu_custom_call.1} parent=1 // pred_fallthru
      _
    // Predicated region
    $region10: #{tpu_custom_call.1} parent=1 // pred_check
      _
    $region11: #{tpu_custom_call.1} parent=1 // pred_check_branch
      %15 = sbr.rel (0) target = $region13
    $region12: #{tpu_custom_call.1} parent=1 // pred_region
      %s17 = ssub.s32 512, 512
      %18 = vsyncadd [#allocation3], %s17
      %s19 = sshll.u32 [#allocation2], 4
      %s20 = int_to_ptr.vmem [resolvable:$true] %s19
      %25 = dma.hbm_to_vmem [thread:$0]  %s2, 512, %s20, [#allocation3], 128, 128, 8
    $region13: #{tpu_custom_call.1} parent=1 // pred_fallthru
      _
    // Predicated region
    $region14: #{tpu_custom_call.1} parent=1 // pred_check
      _
    $region15: #{tpu_custom_call.1} parent=1 // pred_check_branch
      %27 = sbr.rel (0) target = $region17
    $region16: #{tpu_custom_call.1} parent=1 // pred_region
      %28 = dma.done [#allocation3], 512
    $region17: #{tpu_custom_call.1} parent=1 // pred_fallthru
      _
    %v29 = vld [vmem:[%s0] sm:$0xff]
    %v30 = vld [vmem:[%s0 + $0x8] sm:$0xff]
    %v31 = vld [vmem:[%s0 + $0x10] sm:$0xff]
    %v32 = vld [vmem:[%s0 + $0x18] sm:$0xff]
    %v33 = vld [vmem:[%s0 + $0x20] sm:$0xff]
    %v34 = vld [vmem:[%s0 + $0x28] sm:$0xff]
    %v35 = vld [vmem:[%s0 + $0x30] sm:$0xff]
    %v36 = vld [vmem:[%s0 + $0x38] sm:$0xff]
    %v37 = vld [vmem:[%s0 + $0x40] sm:$0xff]
    %v38 = vld [vmem:[%s0 + $0x48] sm:$0xff]
    %v39 = vld [vmem:[%s0 + $0x50] sm:$0xff]
    %v40 = vld [vmem:[%s0 + $0x58] sm:$0xff]
    %v41 = vld [vmem:[%s0 + $0x60] sm:$0xff]
    %v42 = vld [vmem:[%s0 + $0x68] sm:$0xff]
    %v43 = vld [vmem:[%s0 + $0x70] sm:$0xff]
    %v44 = vld [vmem:[%s0 + $0x78] sm:$0xff]
    %v45 = vld [vmem:[%s0 + $0x80] sm:$0xff]
    %v46 = vld [vmem:[%s0 + $0x88] sm:$0xff]
    %v47 = vld [vmem:[%s0 + $0x90] sm:$0xff]
    %v48 = vld [vmem:[%s0 + $0x98] sm:$0xff]
    %v49 = vld [vmem:[%s0 + $0xa0] sm:$0xff]
    %v50 = vld [vmem:[%s0 + $0xa8] sm:$0xff]
    %v51 = vld [vmem:[%s0 + $0xb0] sm:$0xff]
    %v52 = vld [vmem:[%s0 + $0xb8] sm:$0xff]
    %v53 = vld [vmem:[%s0 + $0xc0] sm:$0xff]
    %v54 = vld [vmem:[%s0 + $0xc8] sm:$0xff]
    %v55 = vld [vmem:[%s0 + $0xd0] sm:$0xff]
    %v56 = vld [vmem:[%s0 + $0xd8] sm:$0xff]
    %v57 = vld [vmem:[%s0 + $0xe0] sm:$0xff]
    %v58 = vld [vmem:[%s0 + $0xe8] sm:$0xff]
    %v59 = vld [vmem:[%s0 + $0xf0] sm:$0xff]
    %v60 = vld [vmem:[%s0 + $0xf8] sm:$0xff]
    %v61 = vld [vmem:[%s0 + $0x100] sm:$0xff]
    %v62 = vld [vmem:[%s0 + $0x108] sm:$0xff]
    %v63 = vld [vmem:[%s0 + $0x110] sm:$0xff]
    %v64 = vld [vmem:[%s0 + $0x118] sm:$0xff]
    %v65 = vld [vmem:[%s0 + $0x120] sm:$0xff]
    %v66 = vld [vmem:[%s0 + $0x128] sm:$0xff]
    %v67 = vld [vmem:[%s0 + $0x130] sm:$0xff]
    %v68 = vld [vmem:[%s0 + $0x138] sm:$0xff]
    %v69 = vld [vmem:[%s0 + $0x140] sm:$0xff]
    %v70 = vld [vmem:[%s0 + $0x148] sm:$0xff]
    %v71 = vld [vmem:[%s0 + $0x150] sm:$0xff]
    %v72 = vld [vmem:[%s0 + $0x158] sm:$0xff]
    %v73 = vld [vmem:[%s0 + $0x160] sm:$0xff]
    %v74 = vld [vmem:[%s0 + $0x168] sm:$0xff]
    %v75 = vld [vmem:[%s0 + $0x170] sm:$0xff]
    %v76 = vld [vmem:[%s0 + $0x178] sm:$0xff]
    %v77 = vld [vmem:[%s0 + $0x180] sm:$0xff]
    %v78 = vld [vmem:[%s0 + $0x188] sm:$0xff]
    %v79 = vld [vmem:[%s0 + $0x190] sm:$0xff]
    %v80 = vld [vmem:[%s0 + $0x198] sm:$0xff]
    %v81 = vld [vmem:[%s0 + $0x1a0] sm:$0xff]
    %v82 = vld [vmem:[%s0 + $0x1a8] sm:$0xff]
    %v83 = vld [vmem:[%s0 + $0x1b0] sm:$0xff]
    %v84 = vld [vmem:[%s0 + $0x1b8] sm:$0xff]
    %v85 = vld [vmem:[%s0 + $0x1c0] sm:$0xff]
    %v86 = vld [vmem:[%s0 + $0x1c8] sm:$0xff]
    %v87 = vld [vmem:[%s0 + $0x1d0] sm:$0xff]
    %v88 = vld [vmem:[%s0 + $0x1d8] sm:$0xff]
    %v89 = vld [vmem:[%s0 + $0x1e0] sm:$0xff]
    %v90 = vld [vmem:[%s0 + $0x1e8] sm:$0xff]
    %v91 = vld [vmem:[%s0 + $0x1f0] sm:$0xff]
    %v92 = vld [vmem:[%s0 + $0x1f8] sm:$0xff]
    %v93 = vld [vmem:[%s0 + $0x200] sm:$0xff]
    %v94 = vld [vmem:[%s0 + $0x208] sm:$0xff]
    %v95 = vld [vmem:[%s0 + $0x210] sm:$0xff]
    %v96 = vld [vmem:[%s0 + $0x218] sm:$0xff]
    %v97 = vld [vmem:[%s0 + $0x220] sm:$0xff]
    %v98 = vld [vmem:[%s0 + $0x228] sm:$0xff]
    %v99 = vld [vmem:[%s0 + $0x230] sm:$0xff]
    %v100 = vld [vmem:[%s0 + $0x238] sm:$0xff]
    %v101 = vld [vmem:[%s0 + $0x240] sm:$0xff]
    %v102 = vld [vmem:[%s0 + $0x248] sm:$0xff]
    %v103 = vld [vmem:[%s0 + $0x250] sm:$0xff]
    %v104 = vld [vmem:[%s0 + $0x258] sm:$0xff]
    %v105 = vld [vmem:[%s0 + $0x260] sm:$0xff]
    %v106 = vld [vmem:[%s0 + $0x268] sm:$0xff]
    %v107 = vld [vmem:[%s0 + $0x270] sm:$0xff]
    %v108 = vld [vmem:[%s0 + $0x278] sm:$0xff]
    %v109 = vld [vmem:[%s0 + $0x280] sm:$0xff]
    %v110 = vld [vmem:[%s0 + $0x288] sm:$0xff]
    %v111 = vld [vmem:[%s0 + $0x290] sm:$0xff]
    %v112 = vld [vmem:[%s0 + $0x298] sm:$0xff]
    %v113 = vld [vmem:[%s0 + $0x2a0] sm:$0xff]
    %v114 = vld [vmem:[%s0 + $0x2a8] sm:$0xff]
    %v115 = vld [vmem:[%s0 + $0x2b0] sm:$0xff]
    %v116 = vld [vmem:[%s0 + $0x2b8] sm:$0xff]
    %v117 = vld [vmem:[%s0 + $0x2c0] sm:$0xff]
    %v118 = vld [vmem:[%s0 + $0x2c8] sm:$0xff]
    %v119 = vld [vmem:[%s0 + $0x2d0] sm:$0xff]
    %v120 = vld [vmem:[%s0 + $0x2d8] sm:$0xff]
    %v121 = vld [vmem:[%s0 + $0x2e0] sm:$0xff]
    %v122 = vld [vmem:[%s0 + $0x2e8] sm:$0xff]
    %v123 = vld [vmem:[%s0 + $0x2f0] sm:$0xff]
    %v124 = vld [vmem:[%s0 + $0x2f8] sm:$0xff]
    %v125 = vld [vmem:[%s0 + $0x300] sm:$0xff]
    %v126 = vld [vmem:[%s0 + $0x308] sm:$0xff]
    %v127 = vld [vmem:[#allocation2] sm:$0xff]
    %v128 = vld [vmem:[#allocation2 + $0x8] sm:$0xff]
    %v129 = vld [vmem:[#allocation2 + $0x10] sm:$0xff]
    %v130 = vld [vmem:[#allocation2 + $0x18] sm:$0xff]
    %vm131 = vcmask 261120
    %v133 = vsel %vm131, %v29, 0
    %v136 = vsel %vm131, %v30, 0
    %v139 = vsel %vm131, %v31, 0
    %v142 = vsel %vm131, %v32, 0
    %v145 = vsel %vm131, %v33, 0
    %v148 = vsel %vm131, %v34, 0
    %v151 = vsel %vm131, %v35, 0
    %v154 = vsel %vm131, %v36, 0
    %v157 = vsel %vm131, %v37, 0
    %v160 = vsel %vm131, %v38, 0
    %v163 = vsel %vm131, %v39, 0
    %v166 = vsel %vm131, %v40, 0
    %v169 = vsel %vm131, %v41, 0
    %v172 = vsel %vm131, %v42, 0
    %v175 = vsel %vm131, %v43, 0
    %v178 = vsel %vm131, %v44, 0
    %v181 = vsel %vm131, %v45, 0
    %v184 = vsel %vm131, %v46, 0
    %v187 = vsel %vm131, %v47, 0
    %v190 = vsel %vm131, %v48, 0
    %v193 = vsel %vm131, %v49, 0
    %v196 = vsel %vm131, %v50, 0
    %v199 = vsel %vm131, %v51, 0
    %v202 = vsel %vm131, %v52, 0
    %v205 = vsel %vm131, %v53, 0
    %v208 = vsel %vm131, %v54, 0
    %v211 = vsel %vm131, %v55, 0
    %v214 = vsel %vm131, %v56, 0
    %v217 = vsel %vm131, %v57, 0
    %v220 = vsel %vm131, %v58, 0
    %v223 = vsel %vm131, %v59, 0
    %v226 = vsel %vm131, %v60, 0
    %v229 = vsel %vm131, %v61, 0
    %v232 = vsel %vm131, %v62, 0
    %v235 = vsel %vm131, %v63, 0
    %v238 = vsel %vm131, %v64, 0
    %v241 = vsel %vm131, %v65, 0
    %v244 = vsel %vm131, %v66, 0
    %v247 = vsel %vm131, %v67, 0
    %v250 = vsel %vm131, %v68, 0
    %v253 = vsel %vm131, %v69, 0
    %v256 = vsel %vm131, %v70, 0
    %v259 = vsel %vm131, %v71, 0
    %v262 = vsel %vm131, %v72, 0
    %v265 = vsel %vm131, %v73, 0
    %v268 = vsel %vm131, %v74, 0
    %v271 = vsel %vm131, %v75, 0
    %v274 = vsel %vm131, %v76, 0
    %v277 = vsel %vm131, %v77, 0
    %v280 = vsel %vm131, %v78, 0
    %v283 = vsel %vm131, %v79, 0
    %v286 = vsel %vm131, %v80, 0
    %v289 = vsel %vm131, %v81, 0
    %v292 = vsel %vm131, %v82, 0
    %v295 = vsel %vm131, %v83, 0
    %v298 = vsel %vm131, %v84, 0
    %v301 = vsel %vm131, %v85, 0
    %v304 = vsel %vm131, %v86, 0
    %v307 = vsel %vm131, %v87, 0
    %v310 = vsel %vm131, %v88, 0
    %v313 = vsel %vm131, %v89, 0
    %v316 = vsel %vm131, %v90, 0
    %v319 = vsel %vm131, %v91, 0
    %v322 = vsel %vm131, %v92, 0
    %v325 = vsel %vm131, %v93, 0
    %v328 = vsel %vm131, %v94, 0
    %v331 = vsel %vm131, %v95, 0
    %v334 = vsel %vm131, %v96, 0
    %v337 = vsel %vm131, %v97, 0
    %v340 = vsel %vm131, %v98, 0
    %v343 = vsel %vm131, %v99, 0
    %v346 = vsel %vm131, %v100, 0
    %v349 = vsel %vm131, %v101, 0
    %v352 = vsel %vm131, %v102, 0
    %v355 = vsel %vm131, %v103, 0
    %v358 = vsel %vm131, %v104, 0
    %v361 = vsel %vm131, %v105, 0
    %v364 = vsel %vm131, %v106, 0
    %v367 = vsel %vm131, %v107, 0
    %v370 = vsel %vm131, %v108, 0
    %v373 = vsel %vm131, %v109, 0
    %v376 = vsel %vm131, %v110, 0
    %v379 = vsel %vm131, %v111, 0
    %v382 = vsel %vm131, %v112, 0
    %v385 = vsel %vm131, %v113, 0
    %v388 = vsel %vm131, %v114, 0
    %v391 = vsel %vm131, %v115, 0
    %v394 = vsel %vm131, %v116, 0
    %v397 = vsel %vm131, %v117, 0
    %v400 = vsel %vm131, %v118, 0
    %v403 = vsel %vm131, %v119, 0
    %v406 = vsel %vm131, %v120, 0
    %v409 = vsel %vm131, %v121, 0
    %v412 = vsel %vm131, %v122, 0
    %v415 = vsel %vm131, %v123, 0
    %v418 = vsel %vm131, %v124, 0
    %v421 = vsel %vm131, %v125, 0
    %v424 = vsel %vm131, %v126, 0
    %426 = vmatprep.subr.mxu0 0.0
    %427 = vmatpush1.msra.mxu0 0.0
    %428 = vmatprep.subr.mxu0 0.0
    %429 = vmatpush1.msra.mxu0 0.0
    %430 = vmatprep.subr.mxu0 0.0
    %431 = vmatpush1.msra.mxu0 0.0
    %432 = vmatprep.subr.mxu0 0.0
    %433 = vmatpush1.msra.mxu0 0.0
    %434 = vmatprep.subr.mxu0 0.0
    %435 = vmatpush1.msra.mxu0 0.0
    %436 = vmatprep.subr.mxu0 0.0
    %437 = vmatpush1.msra.mxu0 0.0
    %438 = vmatprep.subr.mxu0 0.0
    %439 = vmatpush1.msra.mxu0 0.0
    %440 = vmatprep.subr.mxu0 0.0
    %441 = vmatpush1.msra.mxu0 0.0
    %442 = vmatprep.subr.mxu0 0.0
    %443 = vmatpush1.msra.mxu0 0.0
    %444 = vmatprep.subr.mxu0 0.0
    %445 = vmatpush1.msra.mxu0 0.0
    %446 = vmatprep.subr.mxu0 0.0
    %447 = vmatpush1.msra.mxu0 0.0
    %448 = vmatprep.subr.mxu0 0.0
    %449 = vmatpush1.msra.mxu0 0.0
    %450 = vmatprep.subr.mxu0 0.0
    %451 = vmatpush1.msra.mxu0 %v130
    %452 = vmatprep.subr.mxu0 0.0
    %453 = vmatpush1.msra.mxu0 %v129
    %454 = vmatprep.subr.mxu0 0.0
    %455 = vmatpush1.msra.mxu0 %v128
    %456 = vmatprep.subr.mxu0 0.0
    %457 = vmatpush1.msra.mxu0 %v127
    %458 = vmatprep.subr.mxu0 0.0
    %459 = vmatpush2.msra.mxu0 0.0
    %460 = vmatprep.subr.mxu0 0.0
    %461 = vmatpush2.msra.mxu0 0.0
    %462 = vmatprep.subr.mxu0 0.0
    %463 = vmatpush2.msra.mxu0 0.0
    %464 = vmatprep.subr.mxu0 0.0
    %465 = vmatpush2.msra.mxu0 0.0
    %466 = vmatprep.subr.mxu0 0.0
    %467 = vmatpush2.msra.mxu0 0.0
    %468 = vmatprep.subr.mxu0 0.0
    %469 = vmatpush2.msra.mxu0 0.0
    %470 = vmatprep.subr.mxu0 0.0
    %471 = vmatpush2.msra.mxu0 0.0
    %472 = vmatprep.subr.mxu0 0.0
    %473 = vmatpush2.msra.mxu0 0.0
    %474 = vmatprep.subr.mxu0 0.0
    %475 = vmatpush2.msra.mxu0 0.0
    %476 = vmatprep.subr.mxu0 0.0
    %477 = vmatpush2.msra.mxu0 0.0
    %478 = vmatprep.subr.mxu0 0.0
    %479 = vmatpush2.msra.mxu0 0.0
    %480 = vmatprep.subr.mxu0 0.0
    %481 = vmatpush2.msra.mxu0 0.0
    %482 = vmatprep.subr.mxu0 0.0
    %483 = vmatpush2.msra.mxu0 0.0
    %484 = vmatprep.subr.mxu0 0.0
    %485 = vmatpush2.msra.mxu0 0.0
    %486 = vmatprep.subr.mxu0 0.0
    %487 = vmatpush2.msra.mxu0 0.0
    %488 = vmatprep.subr.mxu0 0.0
    %489 = vmatpush2.msra.mxu0 0.0
    %490 = vmatprep.mubr.f32.mxu0 0.0
    %491 = vmatmul.mubr.f32.gmra.mxu0 %v133
    %v492 = vpop.f32.mrf.mxu0
    %v493 = vadd.f32 0.0, %v492
    %v494 = vpop.f32.mrf.mxu0
    %495 = vmatprep.mubr.f32.mxu0 0.0
    %496 = vmatmul.mubr.f32.gmra.mxu0 %v136
    %v497 = vpop.f32.mrf.mxu0
    %v498 = vadd.f32 0.0, %v497
    %v499 = vpop.f32.mrf.mxu0
    %500 = vmatprep.mubr.f32.mxu0 0.0
    %501 = vmatmul.mubr.f32.gmra.mxu0 %v139
    %v502 = vpop.f32.mrf.mxu0
    %v503 = vadd.f32 0.0, %v502
    %v504 = vpop.f32.mrf.mxu0
    %505 = vmatprep.mubr.f32.mxu0 0.0
    %506 = vmatmul.mubr.f32.gmra.mxu0 %v142
    %v507 = vpop.f32.mrf.mxu0
    %v508 = vadd.f32 0.0, %v507
    %v509 = vpop.f32.mrf.mxu0
    %510 = vmatprep.mubr.f32.mxu0 0.0
    %511 = vmatmul.mubr.f32.gmra.mxu0 %v145
    %v512 = vpop.f32.mrf.mxu0
    %v513 = vadd.f32 0.0, %v512
    %v514 = vpop.f32.mrf.mxu0
    %515 = vmatprep.mubr.f32.mxu0 0.0
    %516 = vmatmul.mubr.f32.gmra.mxu0 %v148
    %v517 = vpop.f32.mrf.mxu0
    %v518 = vadd.f32 0.0, %v517
    %v519 = vpop.f32.mrf.mxu0
    %520 = vmatprep.mubr.f32.mxu0 0.0
    %521 = vmatmul.mubr.f32.gmra.mxu0 %v151
    %v522 = vpop.f32.mrf.mxu0
    %v523 = vadd.f32 0.0, %v522
    %v524 = vpop.f32.mrf.mxu0
    %525 = vmatprep.mubr.f32.mxu0 0.0
    %526 = vmatmul.mubr.f32.gmra.mxu0 %v154
    %v527 = vpop.f32.mrf.mxu0
    %v528 = vadd.f32 0.0, %v527
    %v529 = vpop.f32.mrf.mxu0
    %530 = vmatprep.mubr.f32.mxu0 0.0
    %531 = vmatmul.mubr.f32.gmra.mxu0 %v157
    %v532 = vpop.f32.mrf.mxu0
    %v533 = vadd.f32 0.0, %v532
    %v534 = vpop.f32.mrf.mxu0
    %535 = vmatprep.mubr.f32.mxu0 0.0
    %536 = vmatmul.mubr.f32.gmra.mxu0 %v160
    %v537 = vpop.f32.mrf.mxu0
    %v538 = vadd.f32 0.0, %v537
    %v539 = vpop.f32.mrf.mxu0
    %540 = vmatprep.mubr.f32.mxu0 0.0
    %541 = vmatmul.mubr.f32.gmra.mxu0 %v163
    %v542 = vpop.f32.mrf.mxu0
    %v543 = vadd.f32 0.0, %v542
    %v544 = vpop.f32.mrf.mxu0
    %545 = vmatprep.mubr.f32.mxu0 0.0
    %546 = vmatmul.mubr.f32.gmra.mxu0 %v166
    %v547 = vpop.f32.mrf.mxu0
    %v548 = vadd.f32 0.0, %v547
    %v549 = vpop.f32.mrf.mxu0
    %550 = vmatprep.mubr.f32.mxu0 0.0
    %551 = vmatmul.mubr.f32.gmra.mxu0 %v169
    %v552 = vpop.f32.mrf.mxu0
    %v553 = vadd.f32 0.0, %v552
    %v554 = vpop.f32.mrf.mxu0
    %555 = vmatprep.mubr.f32.mxu0 0.0
    %556 = vmatmul.mubr.f32.gmra.mxu0 %v172
    %v557 = vpop.f32.mrf.mxu0
    %v558 = vadd.f32 0.0, %v557
    %v559 = vpop.f32.mrf.mxu0
    %560 = vmatprep.mubr.f32.mxu0 0.0
    %561 = vmatmul.mubr.f32.gmra.mxu0 %v175
    %v562 = vpop.f32.mrf.mxu0
    %v563 = vadd.f32 0.0, %v562
    %v564 = vpop.f32.mrf.mxu0
    %565 = vmatprep.mubr.f32.mxu0 0.0
    %566 = vmatmul.mubr.f32.gmra.mxu0 %v178
    %v567 = vpop.f32.mrf.mxu0
    %v568 = vadd.f32 0.0, %v567
    %v569 = vpop.f32.mrf.mxu0
    %570 = vmatprep.mubr.f32.mxu0 0.0
    %571 = vmatmul.mubr.f32.gmra.mxu0 %v181
    %v572 = vpop.f32.mrf.mxu0
    %v573 = vadd.f32 0.0, %v572
    %v574 = vpop.f32.mrf.mxu0
    %575 = vmatprep.mubr.f32.mxu0 0.0
    %576 = vmatmul.mubr.f32.gmra.mxu0 %v184
    %v577 = vpop.f32.mrf.mxu0
    %v578 = vadd.f32 0.0, %v577
    %v579 = vpop.f32.mrf.mxu0
    %580 = vmatprep.mubr.f32.mxu0 0.0
    %581 = vmatmul.mubr.f32.gmra.mxu0 %v187
    %v582 = vpop.f32.mrf.mxu0
    %v583 = vadd.f32 0.0, %v582
    %v584 = vpop.f32.mrf.mxu0
    %585 = vmatprep.mubr.f32.mxu0 0.0
    %586 = vmatmul.mubr.f32.gmra.mxu0 %v190
    %v587 = vpop.f32.mrf.mxu0
    %v588 = vadd.f32 0.0, %v587
    %v589 = vpop.f32.mrf.mxu0
    %590 = vmatprep.mubr.f32.mxu0 0.0
    %591 = vmatmul.mubr.f32.gmra.mxu0 %v193
    %v592 = vpop.f32.mrf.mxu0
    %v593 = vadd.f32 0.0, %v592
    %v594 = vpop.f32.mrf.mxu0
    %595 = vmatprep.mubr.f32.mxu0 0.0
    %596 = vmatmul.mubr.f32.gmra.mxu0 %v196
    %v597 = vpop.f32.mrf.mxu0
    %v598 = vadd.f32 0.0, %v597
    %v599 = vpop.f32.mrf.mxu0
    %600 = vmatprep.mubr.f32.mxu0 0.0
    %601 = vmatmul.mubr.f32.gmra.mxu0 %v199
    %v602 = vpop.f32.mrf.mxu0
    %v603 = vadd.f32 0.0, %v602
    %v604 = vpop.f32.mrf.mxu0
    %605 = vmatprep.mubr.f32.mxu0 0.0
    %606 = vmatmul.mubr.f32.gmra.mxu0 %v202
    %v607 = vpop.f32.mrf.mxu0
    %v608 = vadd.f32 0.0, %v607
    %v609 = vpop.f32.mrf.mxu0
    %610 = vmatprep.mubr.f32.mxu0 0.0
    %611 = vmatmul.mubr.f32.gmra.mxu0 %v205
    %v612 = vpop.f32.mrf.mxu0
    %v613 = vadd.f32 0.0, %v612
    %v614 = vpop.f32.mrf.mxu0
    %615 = vmatprep.mubr.f32.mxu0 0.0
    %616 = vmatmul.mubr.f32.gmra.mxu0 %v208
    %v617 = vpop.f32.mrf.mxu0
    %v618 = vadd.f32 0.0, %v617
    %v619 = vpop.f32.mrf.mxu0
    %620 = vmatprep.mubr.f32.mxu0 0.0
    %621 = vmatmul.mubr.f32.gmra.mxu0 %v211
    %v622 = vpop.f32.mrf.mxu0
    %v623 = vadd.f32 0.0, %v622
    %v624 = vpop.f32.mrf.mxu0
    %625 = vmatprep.mubr.f32.mxu0 0.0
    %626 = vmatmul.mubr.f32.gmra.mxu0 %v214
    %v627 = vpop.f32.mrf.mxu0
    %v628 = vadd.f32 0.0, %v627
    %v629 = vpop.f32.mrf.mxu0
    %630 = vmatprep.mubr.f32.mxu0 0.0
    %631 = vmatmul.mubr.f32.gmra.mxu0 %v217
    %v632 = vpop.f32.mrf.mxu0
    %v633 = vadd.f32 0.0, %v632
    %v634 = vpop.f32.mrf.mxu0
    %635 = vmatprep.mubr.f32.mxu0 0.0
    %636 = vmatmul.mubr.f32.gmra.mxu0 %v220
    %v637 = vpop.f32.mrf.mxu0
    %v638 = vadd.f32 0.0, %v637
    %v639 = vpop.f32.mrf.mxu0
    %640 = vmatprep.mubr.f32.mxu0 0.0
    %641 = vmatmul.mubr.f32.gmra.mxu0 %v223
    %v642 = vpop.f32.mrf.mxu0
    %v643 = vadd.f32 0.0, %v642
    %v644 = vpop.f32.mrf.mxu0
    %645 = vmatprep.mubr.f32.mxu0 0.0
    %646 = vmatmul.mubr.f32.gmra.mxu0 %v226
    %v647 = vpop.f32.mrf.mxu0
    %v648 = vadd.f32 0.0, %v647
    %v649 = vpop.f32.mrf.mxu0
    %650 = vmatprep.mubr.f32.mxu0 0.0
    %651 = vmatmul.mubr.f32.gmra.mxu0 %v229
    %v652 = vpop.f32.mrf.mxu0
    %v653 = vadd.f32 0.0, %v652
    %v654 = vpop.f32.mrf.mxu0
    %655 = vmatprep.mubr.f32.mxu0 0.0
    %656 = vmatmul.mubr.f32.gmra.mxu0 %v232
    %v657 = vpop.f32.mrf.mxu0
    %v658 = vadd.f32 0.0, %v657
    %v659 = vpop.f32.mrf.mxu0
    %660 = vmatprep.mubr.f32.mxu0 0.0
    %661 = vmatmul.mubr.f32.gmra.mxu0 %v235
    %v662 = vpop.f32.mrf.mxu0
    %v663 = vadd.f32 0.0, %v662
    %v664 = vpop.f32.mrf.mxu0
    %665 = vmatprep.mubr.f32.mxu0 0.0
    %666 = vmatmul.mubr.f32.gmra.mxu0 %v238
    %v667 = vpop.f32.mrf.mxu0
    %v668 = vadd.f32 0.0, %v667
    %v669 = vpop.f32.mrf.mxu0
    %670 = vmatprep.mubr.f32.mxu0 0.0
    %671 = vmatmul.mubr.f32.gmra.mxu0 %v241
    %v672 = vpop.f32.mrf.mxu0
    %v673 = vadd.f32 0.0, %v672
    %v674 = vpop.f32.mrf.mxu0
    %675 = vmatprep.mubr.f32.mxu0 0.0
    %676 = vmatmul.mubr.f32.gmra.mxu0 %v244
    %v677 = vpop.f32.mrf.mxu0
    %v678 = vadd.f32 0.0, %v677
    %v679 = vpop.f32.mrf.mxu0
    %680 = vmatprep.mubr.f32.mxu0 0.0
    %681 = vmatmul.mubr.f32.gmra.mxu0 %v247
    %v682 = vpop.f32.mrf.mxu0
    %v683 = vadd.f32 0.0, %v682
    %v684 = vpop.f32.mrf.mxu0
    %685 = vmatprep.mubr.f32.mxu0 0.0
    %686 = vmatmul.mubr.f32.gmra.mxu0 %v250
    %v687 = vpop.f32.mrf.mxu0
    %v688 = vadd.f32 0.0, %v687
    %v689 = vpop.f32.mrf.mxu0
    %690 = vmatprep.mubr.f32.mxu0 0.0
    %691 = vmatmul.mubr.f32.gmra.mxu0 %v253
    %v692 = vpop.f32.mrf.mxu0
    %v693 = vadd.f32 0.0, %v692
    %v694 = vpop.f32.mrf.mxu0
    %695 = vmatprep.mubr.f32.mxu0 0.0
    %696 = vmatmul.mubr.f32.gmra.mxu0 %v256
    %v697 = vpop.f32.mrf.mxu0
    %v698 = vadd.f32 0.0, %v697
    %v699 = vpop.f32.mrf.mxu0
    %700 = vmatprep.mubr.f32.mxu0 0.0
    %701 = vmatmul.mubr.f32.gmra.mxu0 %v259
    %v702 = vpop.f32.mrf.mxu0
    %v703 = vadd.f32 0.0, %v702
    %v704 = vpop.f32.mrf.mxu0
    %705 = vmatprep.mubr.f32.mxu0 0.0
    %706 = vmatmul.mubr.f32.gmra.mxu0 %v262
    %v707 = vpop.f32.mrf.mxu0
    %v708 = vadd.f32 0.0, %v707
    %v709 = vpop.f32.mrf.mxu0
    %710 = vmatprep.mubr.f32.mxu0 0.0
    %711 = vmatmul.mubr.f32.gmra.mxu0 %v265
    %v712 = vpop.f32.mrf.mxu0
    %v713 = vadd.f32 0.0, %v712
    %v714 = vpop.f32.mrf.mxu0
    %715 = vmatprep.mubr.f32.mxu0 0.0
    %716 = vmatmul.mubr.f32.gmra.mxu0 %v268
    %v717 = vpop.f32.mrf.mxu0
    %v718 = vadd.f32 0.0, %v717
    %v719 = vpop.f32.mrf.mxu0
    %720 = vmatprep.mubr.f32.mxu0 0.0
    %721 = vmatmul.mubr.f32.gmra.mxu0 %v271
    %v722 = vpop.f32.mrf.mxu0
    %v723 = vadd.f32 0.0, %v722
    %v724 = vpop.f32.mrf.mxu0
    %725 = vmatprep.mubr.f32.mxu0 0.0
    %726 = vmatmul.mubr.f32.gmra.mxu0 %v274
    %v727 = vpop.f32.mrf.mxu0
    %v728 = vadd.f32 0.0, %v727
    %v729 = vpop.f32.mrf.mxu0
    %730 = vmatprep.mubr.f32.mxu0 0.0
    %731 = vmatmul.mubr.f32.gmra.mxu0 %v277
    %v732 = vpop.f32.mrf.mxu0
    %v733 = vadd.f32 0.0, %v732
    %v734 = vpop.f32.mrf.mxu0
    %735 = vmatprep.mubr.f32.mxu0 0.0
    %736 = vmatmul.mubr.f32.gmra.mxu0 %v280
    %v737 = vpop.f32.mrf.mxu0
    %v738 = vadd.f32 0.0, %v737
    %v739 = vpop.f32.mrf.mxu0
    %740 = vmatprep.mubr.f32.mxu0 0.0
    %741 = vmatmul.mubr.f32.gmra.mxu0 %v283
    %v742 = vpop.f32.mrf.mxu0
    %v743 = vadd.f32 0.0, %v742
    %v744 = vpop.f32.mrf.mxu0
    %745 = vmatprep.mubr.f32.mxu0 0.0
    %746 = vmatmul.mubr.f32.gmra.mxu0 %v286
    %v747 = vpop.f32.mrf.mxu0
    %v748 = vadd.f32 0.0, %v747
    %v749 = vpop.f32.mrf.mxu0
    %750 = vmatprep.mubr.f32.mxu0 0.0
    %751 = vmatmul.mubr.f32.gmra.mxu0 %v289
    %v752 = vpop.f32.mrf.mxu0
    %v753 = vadd.f32 0.0, %v752
    %v754 = vpop.f32.mrf.mxu0
    %755 = vmatprep.mubr.f32.mxu0 0.0
    %756 = vmatmul.mubr.f32.gmra.mxu0 %v292
    %v757 = vpop.f32.mrf.mxu0
    %v758 = vadd.f32 0.0, %v757
    %v759 = vpop.f32.mrf.mxu0
    %760 = vmatprep.mubr.f32.mxu0 0.0
    %761 = vmatmul.mubr.f32.gmra.mxu0 %v295
    %v762 = vpop.f32.mrf.mxu0
    %v763 = vadd.f32 0.0, %v762
    %v764 = vpop.f32.mrf.mxu0
    %765 = vmatprep.mubr.f32.mxu0 0.0
    %766 = vmatmul.mubr.f32.gmra.mxu0 %v298
    %v767 = vpop.f32.mrf.mxu0
    %v768 = vadd.f32 0.0, %v767
    %v769 = vpop.f32.mrf.mxu0
    %770 = vmatprep.mubr.f32.mxu0 0.0
    %771 = vmatmul.mubr.f32.gmra.mxu0 %v301
    %v772 = vpop.f32.mrf.mxu0
    %v773 = vadd.f32 0.0, %v772
    %v774 = vpop.f32.mrf.mxu0
    %775 = vmatprep.mubr.f32.mxu0 0.0
    %776 = vmatmul.mubr.f32.gmra.mxu0 %v304
    %v777 = vpop.f32.mrf.mxu0
    %v778 = vadd.f32 0.0, %v777
    %v779 = vpop.f32.mrf.mxu0
    %780 = vmatprep.mubr.f32.mxu0 0.0
    %781 = vmatmul.mubr.f32.gmra.mxu0 %v307
    %v782 = vpop.f32.mrf.mxu0
    %v783 = vadd.f32 0.0, %v782
    %v784 = vpop.f32.mrf.mxu0
    %785 = vmatprep.mubr.f32.mxu0 0.0
    %786 = vmatmul.mubr.f32.gmra.mxu0 %v310
    %v787 = vpop.f32.mrf.mxu0
    %v788 = vadd.f32 0.0, %v787
    %v789 = vpop.f32.mrf.mxu0
    %790 = vmatprep.mubr.f32.mxu0 0.0
    %791 = vmatmul.mubr.f32.gmra.mxu0 %v313
    %v792 = vpop.f32.mrf.mxu0
    %v793 = vadd.f32 0.0, %v792
    %v794 = vpop.f32.mrf.mxu0
    %795 = vmatprep.mubr.f32.mxu0 0.0
    %796 = vmatmul.mubr.f32.gmra.mxu0 %v316
    %v797 = vpop.f32.mrf.mxu0
    %v798 = vadd.f32 0.0, %v797
    %v799 = vpop.f32.mrf.mxu0
    %800 = vmatprep.mubr.f32.mxu0 0.0
    %801 = vmatmul.mubr.f32.gmra.mxu0 %v319
    %v802 = vpop.f32.mrf.mxu0
    %v803 = vadd.f32 0.0, %v802
    %v804 = vpop.f32.mrf.mxu0
    %805 = vmatprep.mubr.f32.mxu0 0.0
    %806 = vmatmul.mubr.f32.gmra.mxu0 %v322
    %v807 = vpop.f32.mrf.mxu0
    %v808 = vadd.f32 0.0, %v807
    %v809 = vpop.f32.mrf.mxu0
    %810 = vmatprep.mubr.f32.mxu0 0.0
    %811 = vmatmul.mubr.f32.gmra.mxu0 %v325
    %v812 = vpop.f32.mrf.mxu0
    %v813 = vadd.f32 0.0, %v812
    %v814 = vpop.f32.mrf.mxu0
    %815 = vmatprep.mubr.f32.mxu0 0.0
    %816 = vmatmul.mubr.f32.gmra.mxu0 %v328
    %v817 = vpop.f32.mrf.mxu0
    %v818 = vadd.f32 0.0, %v817
    %v819 = vpop.f32.mrf.mxu0
    %820 = vmatprep.mubr.f32.mxu0 0.0
    %821 = vmatmul.mubr.f32.gmra.mxu0 %v331
    %v822 = vpop.f32.mrf.mxu0
    %v823 = vadd.f32 0.0, %v822
    %v824 = vpop.f32.mrf.mxu0
    %825 = vmatprep.mubr.f32.mxu0 0.0
    %826 = vmatmul.mubr.f32.gmra.mxu0 %v334
    %v827 = vpop.f32.mrf.mxu0
    %v828 = vadd.f32 0.0, %v827
    %v829 = vpop.f32.mrf.mxu0
    %830 = vmatprep.mubr.f32.mxu0 0.0
    %831 = vmatmul.mubr.f32.gmra.mxu0 %v337
    %v832 = vpop.f32.mrf.mxu0
    %v833 = vadd.f32 0.0, %v832
    %v834 = vpop.f32.mrf.mxu0
    %835 = vmatprep.mubr.f32.mxu0 0.0
    %836 = vmatmul.mubr.f32.gmra.mxu0 %v340
    %v837 = vpop.f32.mrf.mxu0
    %v838 = vadd.f32 0.0, %v837
    %v839 = vpop.f32.mrf.mxu0
    %840 = vmatprep.mubr.f32.mxu0 0.0
    %841 = vmatmul.mubr.f32.gmra.mxu0 %v343
    %v842 = vpop.f32.mrf.mxu0
    %v843 = vadd.f32 0.0, %v842
    %v844 = vpop.f32.mrf.mxu0
    %845 = vmatprep.mubr.f32.mxu0 0.0
    %846 = vmatmul.mubr.f32.gmra.mxu0 %v346
    %v847 = vpop.f32.mrf.mxu0
    %v848 = vadd.f32 0.0, %v847
    %v849 = vpop.f32.mrf.mxu0
    %850 = vmatprep.mubr.f32.mxu0 0.0
    %851 = vmatmul.mubr.f32.gmra.mxu0 %v349
    %v852 = vpop.f32.mrf.mxu0
    %v853 = vadd.f32 0.0, %v852
    %v854 = vpop.f32.mrf.mxu0
    %855 = vmatprep.mubr.f32.mxu0 0.0
    %856 = vmatmul.mubr.f32.gmra.mxu0 %v352
    %v857 = vpop.f32.mrf.mxu0
    %v858 = vadd.f32 0.0, %v857
    %v859 = vpop.f32.mrf.mxu0
    %860 = vmatprep.mubr.f32.mxu0 0.0
    %861 = vmatmul.mubr.f32.gmra.mxu0 %v355
    %v862 = vpop.f32.mrf.mxu0
    %v863 = vadd.f32 0.0, %v862
    %v864 = vpop.f32.mrf.mxu0
    %865 = vmatprep.mubr.f32.mxu0 0.0
    %866 = vmatmul.mubr.f32.gmra.mxu0 %v358
    %v867 = vpop.f32.mrf.mxu0
    %v868 = vadd.f32 0.0, %v867
    %v869 = vpop.f32.mrf.mxu0
    %870 = vmatprep.mubr.f32.mxu0 0.0
    %871 = vmatmul.mubr.f32.gmra.mxu0 %v361
    %v872 = vpop.f32.mrf.mxu0
    %v873 = vadd.f32 0.0, %v872
    %v874 = vpop.f32.mrf.mxu0
    %875 = vmatprep.mubr.f32.mxu0 0.0
    %876 = vmatmul.mubr.f32.gmra.mxu0 %v364
    %v877 = vpop.f32.mrf.mxu0
    %v878 = vadd.f32 0.0, %v877
    %v879 = vpop.f32.mrf.mxu0
    %880 = vmatprep.mubr.f32.mxu0 0.0
    %881 = vmatmul.mubr.f32.gmra.mxu0 %v367
    %v882 = vpop.f32.mrf.mxu0
    %v883 = vadd.f32 0.0, %v882
    %v884 = vpop.f32.mrf.mxu0
    %885 = vmatprep.mubr.f32.mxu0 0.0
    %886 = vmatmul.mubr.f32.gmra.mxu0 %v370
    %v887 = vpop.f32.mrf.mxu0
    %v888 = vadd.f32 0.0, %v887
    %v889 = vpop.f32.mrf.mxu0
    %890 = vmatprep.mubr.f32.mxu0 0.0
    %891 = vmatmul.mubr.f32.gmra.mxu0 %v373
    %v892 = vpop.f32.mrf.mxu0
    %v893 = vadd.f32 0.0, %v892
    %v894 = vpop.f32.mrf.mxu0
    %895 = vmatprep.mubr.f32.mxu0 0.0
    %896 = vmatmul.mubr.f32.gmra.mxu0 %v376
    %v897 = vpop.f32.mrf.mxu0
    %v898 = vadd.f32 0.0, %v897
    %v899 = vpop.f32.mrf.mxu0
    %900 = vmatprep.mubr.f32.mxu0 0.0
    %901 = vmatmul.mubr.f32.gmra.mxu0 %v379
    %v902 = vpop.f32.mrf.mxu0
    %v903 = vadd.f32 0.0, %v902
    %v904 = vpop.f32.mrf.mxu0
    %905 = vmatprep.mubr.f32.mxu0 0.0
    %906 = vmatmul.mubr.f32.gmra.mxu0 %v382
    %v907 = vpop.f32.mrf.mxu0
    %v908 = vadd.f32 0.0, %v907
    %v909 = vpop.f32.mrf.mxu0
    %910 = vmatprep.mubr.f32.mxu0 0.0
    %911 = vmatmul.mubr.f32.gmra.mxu0 %v385
    %v912 = vpop.f32.mrf.mxu0
    %v913 = vadd.f32 0.0, %v912
    %v914 = vpop.f32.mrf.mxu0
    %915 = vmatprep.mubr.f32.mxu0 0.0
    %916 = vmatmul.mubr.f32.gmra.mxu0 %v388
    %v917 = vpop.f32.mrf.mxu0
    %v918 = vadd.f32 0.0, %v917
    %v919 = vpop.f32.mrf.mxu0
    %920 = vmatprep.mubr.f32.mxu0 0.0
    %921 = vmatmul.mubr.f32.gmra.mxu0 %v391
    %v922 = vpop.f32.mrf.mxu0
    %v923 = vadd.f32 0.0, %v922
    %v924 = vpop.f32.mrf.mxu0
    %925 = vmatprep.mubr.f32.mxu0 0.0
    %926 = vmatmul.mubr.f32.gmra.mxu0 %v394
    %v927 = vpop.f32.mrf.mxu0
    %v928 = vadd.f32 0.0, %v927
    %v929 = vpop.f32.mrf.mxu0
    %930 = vmatprep.mubr.f32.mxu0 0.0
    %931 = vmatmul.mubr.f32.gmra.mxu0 %v397
    %v932 = vpop.f32.mrf.mxu0
    %v933 = vadd.f32 0.0, %v932
    %v934 = vpop.f32.mrf.mxu0
    %935 = vmatprep.mubr.f32.mxu0 0.0
    %936 = vmatmul.mubr.f32.gmra.mxu0 %v400
    %v937 = vpop.f32.mrf.mxu0
    %v938 = vadd.f32 0.0, %v937
    %v939 = vpop.f32.mrf.mxu0
    %940 = vmatprep.mubr.f32.mxu0 0.0
    %941 = vmatmul.mubr.f32.gmra.mxu0 %v403
    %v942 = vpop.f32.mrf.mxu0
    %v943 = vadd.f32 0.0, %v942
    %v944 = vpop.f32.mrf.mxu0
    %945 = vmatprep.mubr.f32.mxu0 0.0
    %946 = vmatmul.mubr.f32.gmra.mxu0 %v406
    %v947 = vpop.f32.mrf.mxu0
    %v948 = vadd.f32 0.0, %v947
    %v949 = vpop.f32.mrf.mxu0
    %950 = vmatprep.mubr.f32.mxu0 0.0
    %951 = vmatmul.mubr.f32.gmra.mxu0 %v409
    %v952 = vpop.f32.mrf.mxu0
    %v953 = vadd.f32 0.0, %v952
    %v954 = vpop.f32.mrf.mxu0
    %955 = vmatprep.mubr.f32.mxu0 0.0
    %956 = vmatmul.mubr.f32.gmra.mxu0 %v412
    %v957 = vpop.f32.mrf.mxu0
    %v958 = vadd.f32 0.0, %v957
    %v959 = vpop.f32.mrf.mxu0
    %960 = vmatprep.mubr.f32.mxu0 0.0
    %961 = vmatmul.mubr.f32.gmra.mxu0 %v415
    %v962 = vpop.f32.mrf.mxu0
    %v963 = vadd.f32 0.0, %v962
    %v964 = vpop.f32.mrf.mxu0
    %965 = vmatprep.mubr.f32.mxu0 0.0
    %966 = vmatmul.mubr.f32.gmra.mxu0 %v418
    %v967 = vpop.f32.mrf.mxu0
    %v968 = vadd.f32 0.0, %v967
    %v969 = vpop.f32.mrf.mxu0
    %970 = vmatprep.mubr.f32.mxu0 0.0
    %971 = vmatmul.mubr.f32.gmra.mxu0 %v421
    %v972 = vpop.f32.mrf.mxu0
    %v973 = vadd.f32 0.0, %v972
    %v974 = vpop.f32.mrf.mxu0
    %975 = vmatprep.mubr.f32.mxu0 0.0
    %976 = vmatmul.mubr.f32.gmra.mxu0 %v424
    %v977 = vpop.f32.mrf.mxu0
    %v978 = vadd.f32 0.0, %v977
    %v979 = vpop.f32.mrf.mxu0
    %980 = vdwg.mxu0
    %v981 = vmul.f32 %v493, 0.5
    %v982 = vmul.f32 %v498, 0.5
    %v983 = vmul.f32 %v503, 0.5
    %v984 = vmul.f32 %v508, 0.5
    %v985 = vmul.f32 %v513, 0.5
    %v986 = vmul.f32 %v518, 0.5
    %v987 = vmul.f32 %v523, 0.5
    %v988 = vmul.f32 %v528, 0.5
    %v989 = vmul.f32 %v533, 0.5
    %v990 = vmul.f32 %v538, 0.5
    %v991 = vmul.f32 %v543, 0.5
    %v992 = vmul.f32 %v548, 0.5
    %v993 = vmul.f32 %v553, 0.5
    %v994 = vmul.f32 %v558, 0.5
    %v995 = vmul.f32 %v563, 0.5
    %v996 = vmul.f32 %v568, 0.5
    %v997 = vmul.f32 %v573, 0.5
    %v998 = vmul.f32 %v578, 0.5
    %v999 = vmul.f32 %v583, 0.5
    %v1000 = vmul.f32 %v588, 0.5
    %v1001 = vmul.f32 %v593, 0.5
    %v1002 = vmul.f32 %v598, 0.5
    %v1003 = vmul.f32 %v603, 0.5
    %v1004 = vmul.f32 %v608, 0.5
    %v1005 = vmul.f32 %v613, 0.5
    %v1006 = vmul.f32 %v618, 0.5
    %v1007 = vmul.f32 %v623, 0.5
    %v1008 = vmul.f32 %v628, 0.5
    %v1009 = vmul.f32 %v633, 0.5
    %v1010 = vmul.f32 %v638, 0.5
    %v1011 = vmul.f32 %v643, 0.5
    %v1012 = vmul.f32 %v648, 0.5
    %v1013 = vmul.f32 %v653, 0.5
    %v1014 = vmul.f32 %v658, 0.5
    %v1015 = vmul.f32 %v663, 0.5
    %v1016 = vmul.f32 %v668, 0.5
    %v1017 = vmul.f32 %v673, 0.5
    %v1018 = vmul.f32 %v678, 0.5
    %v1019 = vmul.f32 %v683, 0.5
    %v1020 = vmul.f32 %v688, 0.5
    %v1021 = vmul.f32 %v693, 0.5
    %v1022 = vmul.f32 %v698, 0.5
    %v1023 = vmul.f32 %v703, 0.5
    %v1024 = vmul.f32 %v708, 0.5
    %v1025 = vmul.f32 %v713, 0.5
    %v1026 = vmul.f32 %v718, 0.5
    %v1027 = vmul.f32 %v723, 0.5
    %v1028 = vmul.f32 %v728, 0.5
    %v1029 = vmul.f32 %v733, 0.5
    %v1030 = vmul.f32 %v738, 0.5
    %v1031 = vmul.f32 %v743, 0.5
    %v1032 = vmul.f32 %v748, 0.5
    %v1033 = vmul.f32 %v753, 0.5
    %v1034 = vmul.f32 %v758, 0.5
    %v1035 = vmul.f32 %v763, 0.5
    %v1036 = vmul.f32 %v768, 0.5
    %v1037 = vmul.f32 %v773, 0.5
    %v1038 = vmul.f32 %v778, 0.5
    %v1039 = vmul.f32 %v783, 0.5
    %v1040 = vmul.f32 %v788, 0.5
    %v1041 = vmul.f32 %v793, 0.5
    %v1042 = vmul.f32 %v798, 0.5
    %v1043 = vmul.f32 %v803, 0.5
    %v1044 = vmul.f32 %v808, 0.5
    %v1045 = vmul.f32 %v813, 0.5
    %v1046 = vmul.f32 %v818, 0.5
    %v1047 = vmul.f32 %v823, 0.5
    %v1048 = vmul.f32 %v828, 0.5
    %v1049 = vmul.f32 %v833, 0.5
    %v1050 = vmul.f32 %v838, 0.5
    %v1051 = vmul.f32 %v843, 0.5
    %v1052 = vmul.f32 %v848, 0.5
    %v1053 = vmul.f32 %v853, 0.5
    %v1054 = vmul.f32 %v858, 0.5
    %v1055 = vmul.f32 %v863, 0.5
    %v1056 = vmul.f32 %v868, 0.5
    %v1057 = vmul.f32 %v873, 0.5
    %v1058 = vmul.f32 %v878, 0.5
    %v1059 = vmul.f32 %v883, 0.5
    %v1060 = vmul.f32 %v888, 0.5
    %v1061 = vmul.f32 %v893, 0.5
    %v1062 = vmul.f32 %v898, 0.5
    %v1063 = vmul.f32 %v903, 0.5
    %v1064 = vmul.f32 %v908, 0.5
    %v1065 = vmul.f32 %v913, 0.5
    %v1066 = vmul.f32 %v918, 0.5
    %v1067 = vmul.f32 %v923, 0.5
    %v1068 = vmul.f32 %v928, 0.5
    %v1069 = vmul.f32 %v933, 0.5
    %v1070 = vmul.f32 %v938, 0.5
    %v1071 = vmul.f32 %v943, 0.5
    %v1072 = vmul.f32 %v948, 0.5
    %v1073 = vmul.f32 %v953, 0.5
    %v1074 = vmul.f32 %v958, 0.5
    %v1075 = vmul.f32 %v963, 0.5
    %v1076 = vmul.f32 %v968, 0.5
    %v1077 = vmul.f32 %v973, 0.5
    %v1078 = vmul.f32 %v978, 0.5
    %v1079 = vtanh.pop %v981
    %v1080 = vtanh.pop %v982
    %v1081 = vtanh.pop %v983
    %v1082 = vtanh.pop %v984
    %v1083 = vtanh.pop %v985
    %v1084 = vtanh.pop %v986
    %v1085 = vtanh.pop %v987
    %v1086 = vtanh.pop %v988
    %v1087 = vtanh.pop %v989
    %v1088 = vtanh.pop %v990
    %v1089 = vtanh.pop %v991
    %v1090 = vtanh.pop %v992
    %v1091 = vtanh.pop %v993
    %v1092 = vtanh.pop %v994
    %v1093 = vtanh.pop %v995
    %v1094 = vtanh.pop %v996
    %v1095 = vtanh.pop %v997
    %v1096 = vtanh.pop %v998
    %v1097 = vtanh.pop %v999
    %v1098 = vtanh.pop %v1000
    %v1099 = vtanh.pop %v1001
    %v1100 = vtanh.pop %v1002
    %v1101 = vtanh.pop %v1003
    %v1102 = vtanh.pop %v1004
    %v1103 = vtanh.pop %v1005
    %v1104 = vtanh.pop %v1006
    %v1105 = vtanh.pop %v1007
    %v1106 = vtanh.pop %v1008
    %v1107 = vtanh.pop %v1009
    %v1108 = vtanh.pop %v1010
    %v1109 = vtanh.pop %v1011
    %v1110 = vtanh.pop %v1012
    %v1111 = vtanh.pop %v1013
    %v1112 = vtanh.pop %v1014
    %v1113 = vtanh.pop %v1015
    %v1114 = vtanh.pop %v1016
    %v1115 = vtanh.pop %v1017
    %v1116 = vtanh.pop %v1018
    %v1117 = vtanh.pop %v1019
    %v1118 = vtanh.pop %v1020
    %v1119 = vtanh.pop %v1021
    %v1120 = vtanh.pop %v1022
    %v1121 = vtanh.pop %v1023
    %v1122 = vtanh.pop %v1024
    %v1123 = vtanh.pop %v1025
    %v1124 = vtanh.pop %v1026
    %v1125 = vtanh.pop %v1027
    %v1126 = vtanh.pop %v1028
    %v1127 = vtanh.pop %v1029
    %v1128 = vtanh.pop %v1030
    %v1129 = vtanh.pop %v1031
    %v1130 = vtanh.pop %v1032
    %v1131 = vtanh.pop %v1033
    %v1132 = vtanh.pop %v1034
    %v1133 = vtanh.pop %v1035
    %v1134 = vtanh.pop %v1036
    %v1135 = vtanh.pop %v1037
    %v1136 = vtanh.pop %v1038
    %v1137 = vtanh.pop %v1039
    %v1138 = vtanh.pop %v1040
    %v1139 = vtanh.pop %v1041
    %v1140 = vtanh.pop %v1042
    %v1141 = vtanh.pop %v1043
    %v1142 = vtanh.pop %v1044
    %v1143 = vtanh.pop %v1045
    %v1144 = vtanh.pop %v1046
    %v1145 = vtanh.pop %v1047
    %v1146 = vtanh.pop %v1048
    %v1147 = vtanh.pop %v1049
    %v1148 = vtanh.pop %v1050
    %v1149 = vtanh.pop %v1051
    %v1150 = vtanh.pop %v1052
    %v1151 = vtanh.pop %v1053
    %v1152 = vtanh.pop %v1054
    %v1153 = vtanh.pop %v1055
    %v1154 = vtanh.pop %v1056
    %v1155 = vtanh.pop %v1057
    %v1156 = vtanh.pop %v1058
    %v1157 = vtanh.pop %v1059
    %v1158 = vtanh.pop %v1060
    %v1159 = vtanh.pop %v1061
    %v1160 = vtanh.pop %v1062
    %v1161 = vtanh.pop %v1063
    %v1162 = vtanh.pop %v1064
    %v1163 = vtanh.pop %v1065
    %v1164 = vtanh.pop %v1066
    %v1165 = vtanh.pop %v1067
    %v1166 = vtanh.pop %v1068
    %v1167 = vtanh.pop %v1069
    %v1168 = vtanh.pop %v1070
    %v1169 = vtanh.pop %v1071
    %v1170 = vtanh.pop %v1072
    %v1171 = vtanh.pop %v1073
    %v1172 = vtanh.pop %v1074
    %v1173 = vtanh.pop %v1075
    %v1174 = vtanh.pop %v1076
    %v1175 = vtanh.pop %v1077
    %v1176 = vtanh.pop %v1078
    %v1177 = vmul.f32 %v1079, 0.5
    %v1178 = vmul.f32 %v1080, 0.5
    %v1179 = vmul.f32 %v1081, 0.5
    %v1180 = vmul.f32 %v1082, 0.5
    %v1181 = vmul.f32 %v1083, 0.5
    %v1182 = vmul.f32 %v1084, 0.5
    %v1183 = vmul.f32 %v1085, 0.5
    %v1184 = vmul.f32 %v1086, 0.5
    %v1185 = vmul.f32 %v1087, 0.5
    %v1186 = vmul.f32 %v1088, 0.5
    %v1187 = vmul.f32 %v1089, 0.5
    %v1188 = vmul.f32 %v1090, 0.5
    %v1189 = vmul.f32 %v1091, 0.5
    %v1190 = vmul.f32 %v1092, 0.5
    %v1191 = vmul.f32 %v1093, 0.5
    %v1192 = vmul.f32 %v1094, 0.5
    %v1193 = vmul.f32 %v1095, 0.5
    %v1194 = vmul.f32 %v1096, 0.5
    %v1195 = vmul.f32 %v1097, 0.5
    %v1196 = vmul.f32 %v1098, 0.5
    %v1197 = vmul.f32 %v1099, 0.5
    %v1198 = vmul.f32 %v1100, 0.5
    %v1199 = vmul.f32 %v1101, 0.5
    %v1200 = vmul.f32 %v1102, 0.5
    %v1201 = vmul.f32 %v1103, 0.5
    %v1202 = vmul.f32 %v1104, 0.5
    %v1203 = vmul.f32 %v1105, 0.5
    %v1204 = vmul.f32 %v1106, 0.5
    %v1205 = vmul.f32 %v1107, 0.5
    %v1206 = vmul.f32 %v1108, 0.5
    %v1207 = vmul.f32 %v1109, 0.5
    %v1208 = vmul.f32 %v1110, 0.5
    %v1209 = vmul.f32 %v1111, 0.5
    %v1210 = vmul.f32 %v1112, 0.5
    %v1211 = vmul.f32 %v1113, 0.5
    %v1212 = vmul.f32 %v1114, 0.5
    %v1213 = vmul.f32 %v1115, 0.5
    %v1214 = vmul.f32 %v1116, 0.5
    %v1215 = vmul.f32 %v1117, 0.5
    %v1216 = vmul.f32 %v1118, 0.5
    %v1217 = vmul.f32 %v1119, 0.5
    %v1218 = vmul.f32 %v1120, 0.5
    %v1219 = vmul.f32 %v1121, 0.5
    %v1220 = vmul.f32 %v1122, 0.5
    %v1221 = vmul.f32 %v1123, 0.5
    %v1222 = vmul.f32 %v1124, 0.5
    %v1223 = vmul.f32 %v1125, 0.5
    %v1224 = vmul.f32 %v1126, 0.5
    %v1225 = vmul.f32 %v1127, 0.5
    %v1226 = vmul.f32 %v1128, 0.5
    %v1227 = vmul.f32 %v1129, 0.5
    %v1228 = vmul.f32 %v1130, 0.5
    %v1229 = vmul.f32 %v1131, 0.5
    %v1230 = vmul.f32 %v1132, 0.5
    %v1231 = vmul.f32 %v1133, 0.5
    %v1232 = vmul.f32 %v1134, 0.5
    %v1233 = vmul.f32 %v1135, 0.5
    %v1234 = vmul.f32 %v1136, 0.5
    %v1235 = vmul.f32 %v1137, 0.5
    %v1236 = vmul.f32 %v1138, 0.5
    %v1237 = vmul.f32 %v1139, 0.5
    %v1238 = vmul.f32 %v1140, 0.5
    %v1239 = vmul.f32 %v1141, 0.5
    %v1240 = vmul.f32 %v1142, 0.5
    %v1241 = vmul.f32 %v1143, 0.5
    %v1242 = vmul.f32 %v1144, 0.5
    %v1243 = vmul.f32 %v1145, 0.5
    %v1244 = vmul.f32 %v1146, 0.5
    %v1245 = vmul.f32 %v1147, 0.5
    %v1246 = vmul.f32 %v1148, 0.5
    %v1247 = vmul.f32 %v1149, 0.5
    %v1248 = vmul.f32 %v1150, 0.5
    %v1249 = vmul.f32 %v1151, 0.5
    %v1250 = vmul.f32 %v1152, 0.5
    %v1251 = vmul.f32 %v1153, 0.5
    %v1252 = vmul.f32 %v1154, 0.5
    %v1253 = vmul.f32 %v1155, 0.5
    %v1254 = vmul.f32 %v1156, 0.5
    %v1255 = vmul.f32 %v1157, 0.5
    %v1256 = vmul.f32 %v1158, 0.5
    %v1257 = vmul.f32 %v1159, 0.5
    %v1258 = vmul.f32 %v1160, 0.5
    %v1259 = vmul.f32 %v1161, 0.5
    %v1260 = vmul.f32 %v1162, 0.5
    %v1261 = vmul.f32 %v1163, 0.5
    %v1262 = vmul.f32 %v1164, 0.5
    %v1263 = vmul.f32 %v1165, 0.5
    %v1264 = vmul.f32 %v1166, 0.5
    %v1265 = vmul.f32 %v1167, 0.5
    %v1266 = vmul.f32 %v1168, 0.5
    %v1267 = vmul.f32 %v1169, 0.5
    %v1268 = vmul.f32 %v1170, 0.5
    %v1269 = vmul.f32 %v1171, 0.5
    %v1270 = vmul.f32 %v1172, 0.5
    %v1271 = vmul.f32 %v1173, 0.5
    %v1272 = vmul.f32 %v1174, 0.5
    %v1273 = vmul.f32 %v1175, 0.5
    %v1274 = vmul.f32 %v1176, 0.5
    %v1275 = vadd.f32 %v1177, 0.5
    %v1276 = vadd.f32 %v1178, 0.5
    %v1277 = vadd.f32 %v1179, 0.5
    %v1278 = vadd.f32 %v1180, 0.5
    %v1279 = vadd.f32 %v1181, 0.5
    %v1280 = vadd.f32 %v1182, 0.5
    %v1281 = vadd.f32 %v1183, 0.5
    %v1282 = vadd.f32 %v1184, 0.5
    %v1283 = vadd.f32 %v1185, 0.5
    %v1284 = vadd.f32 %v1186, 0.5
    %v1285 = vadd.f32 %v1187, 0.5
    %v1286 = vadd.f32 %v1188, 0.5
    %v1287 = vadd.f32 %v1189, 0.5
    %v1288 = vadd.f32 %v1190, 0.5
    %v1289 = vadd.f32 %v1191, 0.5
    %v1290 = vadd.f32 %v1192, 0.5
    %v1291 = vadd.f32 %v1193, 0.5
    %v1292 = vadd.f32 %v1194, 0.5
    %v1293 = vadd.f32 %v1195, 0.5
    %v1294 = vadd.f32 %v1196, 0.5
    %v1295 = vadd.f32 %v1197, 0.5
    %v1296 = vadd.f32 %v1198, 0.5
    %v1297 = vadd.f32 %v1199, 0.5
    %v1298 = vadd.f32 %v1200, 0.5
    %v1299 = vadd.f32 %v1201, 0.5
    %v1300 = vadd.f32 %v1202, 0.5
    %v1301 = vadd.f32 %v1203, 0.5
    %v1302 = vadd.f32 %v1204, 0.5
    %v1303 = vadd.f32 %v1205, 0.5
    %v1304 = vadd.f32 %v1206, 0.5
    %v1305 = vadd.f32 %v1207, 0.5
    %v1306 = vadd.f32 %v1208, 0.5
    %v1307 = vadd.f32 %v1209, 0.5
    %v1308 = vadd.f32 %v1210, 0.5
    %v1309 = vadd.f32 %v1211, 0.5
    %v1310 = vadd.f32 %v1212, 0.5
    %v1311 = vadd.f32 %v1213, 0.5
    %v1312 = vadd.f32 %v1214, 0.5
    %v1313 = vadd.f32 %v1215, 0.5
    %v1314 = vadd.f32 %v1216, 0.5
    %v1315 = vadd.f32 %v1217, 0.5
    %v1316 = vadd.f32 %v1218, 0.5
    %v1317 = vadd.f32 %v1219, 0.5
    %v1318 = vadd.f32 %v1220, 0.5
    %v1319 = vadd.f32 %v1221, 0.5
    %v1320 = vadd.f32 %v1222, 0.5
    %v1321 = vadd.f32 %v1223, 0.5
    %v1322 = vadd.f32 %v1224, 0.5
    %v1323 = vadd.f32 %v1225, 0.5
    %v1324 = vadd.f32 %v1226, 0.5
    %v1325 = vadd.f32 %v1227, 0.5
    %v1326 = vadd.f32 %v1228, 0.5
    %v1327 = vadd.f32 %v1229, 0.5
    %v1328 = vadd.f32 %v1230, 0.5
    %v1329 = vadd.f32 %v1231, 0.5
    %v1330 = vadd.f32 %v1232, 0.5
    %v1331 = vadd.f32 %v1233, 0.5
    %v1332 = vadd.f32 %v1234, 0.5
    %v1333 = vadd.f32 %v1235, 0.5
    %v1334 = vadd.f32 %v1236, 0.5
    %v1335 = vadd.f32 %v1237, 0.5
    %v1336 = vadd.f32 %v1238, 0.5
    %v1337 = vadd.f32 %v1239, 0.5
    %v1338 = vadd.f32 %v1240, 0.5
    %v1339 = vadd.f32 %v1241, 0.5
    %v1340 = vadd.f32 %v1242, 0.5
    %v1341 = vadd.f32 %v1243, 0.5
    %v1342 = vadd.f32 %v1244, 0.5
    %v1343 = vadd.f32 %v1245, 0.5
    %v1344 = vadd.f32 %v1246, 0.5
    %v1345 = vadd.f32 %v1247, 0.5
    %v1346 = vadd.f32 %v1248, 0.5
    %v1347 = vadd.f32 %v1249, 0.5
    %v1348 = vadd.f32 %v1250, 0.5
    %v1349 = vadd.f32 %v1251, 0.5
    %v1350 = vadd.f32 %v1252, 0.5
    %v1351 = vadd.f32 %v1253, 0.5
    %v1352 = vadd.f32 %v1254, 0.5
    %v1353 = vadd.f32 %v1255, 0.5
    %v1354 = vadd.f32 %v1256, 0.5
    %v1355 = vadd.f32 %v1257, 0.5
    %v1356 = vadd.f32 %v1258, 0.5
    %v1357 = vadd.f32 %v1259, 0.5
    %v1358 = vadd.f32 %v1260, 0.5
    %v1359 = vadd.f32 %v1261, 0.5
    %v1360 = vadd.f32 %v1262, 0.5
    %v1361 = vadd.f32 %v1263, 0.5
    %v1362 = vadd.f32 %v1264, 0.5
    %v1363 = vadd.f32 %v1265, 0.5
    %v1364 = vadd.f32 %v1266, 0.5
    %v1365 = vadd.f32 %v1267, 0.5
    %v1366 = vadd.f32 %v1268, 0.5
    %v1367 = vadd.f32 %v1269, 0.5
    %v1368 = vadd.f32 %v1270, 0.5
    %v1369 = vadd.f32 %v1271, 0.5
    %v1370 = vadd.f32 %v1272, 0.5
    %v1371 = vadd.f32 %v1273, 0.5
    %v1372 = vadd.f32 %v1274, 0.5
    %v1373 = vld [vmem:[%s1] sm:$0xff]
    %v1374 = vld [vmem:[%s1 + $0x8] sm:$0xff]
    %v1375 = vld [vmem:[%s1 + $0x10] sm:$0xff]
    %v1376 = vld [vmem:[%s1 + $0x18] sm:$0xff]
    %v1377 = vld [vmem:[%s1 + $0x20] sm:$0xff]
    %v1378 = vld [vmem:[%s1 + $0x28] sm:$0xff]
    %v1379 = vld [vmem:[%s1 + $0x30] sm:$0xff]
    %v1380 = vld [vmem:[%s1 + $0x38] sm:$0xff]
    %v1381 = vld [vmem:[%s1 + $0x40] sm:$0xff]
    %v1382 = vld [vmem:[%s1 + $0x48] sm:$0xff]
    %v1383 = vld [vmem:[%s1 + $0x50] sm:$0xff]
    %v1384 = vld [vmem:[%s1 + $0x58] sm:$0xff]
    %v1385 = vld [vmem:[%s1 + $0x60] sm:$0xff]
    %v1386 = vld [vmem:[%s1 + $0x68] sm:$0xff]
    %v1387 = vld [vmem:[%s1 + $0x70] sm:$0xff]
    %v1388 = vld [vmem:[%s1 + $0x78] sm:$0xff]
    %v1389 = vld [vmem:[%s1 + $0x80] sm:$0xff]
    %v1390 = vld [vmem:[%s1 + $0x88] sm:$0xff]
    %v1391 = vld [vmem:[%s1 + $0x90] sm:$0xff]
    %v1392 = vld [vmem:[%s1 + $0x98] sm:$0xff]
    %v1393 = vld [vmem:[%s1 + $0xa0] sm:$0xff]
    %v1394 = vld [vmem:[%s1 + $0xa8] sm:$0xff]
    %v1395 = vld [vmem:[%s1 + $0xb0] sm:$0xff]
    %v1396 = vld [vmem:[%s1 + $0xb8] sm:$0xff]
    %v1397 = vld [vmem:[%s1 + $0xc0] sm:$0xff]
    %v1398 = vld [vmem:[%s1 + $0xc8] sm:$0xff]
    %v1399 = vld [vmem:[%s1 + $0xd0] sm:$0xff]
    %v1400 = vld [vmem:[%s1 + $0xd8] sm:$0xff]
    %v1401 = vld [vmem:[%s1 + $0xe0] sm:$0xff]
    %v1402 = vld [vmem:[%s1 + $0xe8] sm:$0xff]
    %v1403 = vld [vmem:[%s1 + $0xf0] sm:$0xff]
    %v1404 = vld [vmem:[%s1 + $0xf8] sm:$0xff]
    %v1405 = vld [vmem:[%s1 + $0x100] sm:$0xff]
    %v1406 = vld [vmem:[%s1 + $0x108] sm:$0xff]
    %v1407 = vld [vmem:[%s1 + $0x110] sm:$0xff]
    %v1408 = vld [vmem:[%s1 + $0x118] sm:$0xff]
    %v1409 = vld [vmem:[%s1 + $0x120] sm:$0xff]
    %v1410 = vld [vmem:[%s1 + $0x128] sm:$0xff]
    %v1411 = vld [vmem:[%s1 + $0x130] sm:$0xff]
    %v1412 = vld [vmem:[%s1 + $0x138] sm:$0xff]
    %v1413 = vld [vmem:[%s1 + $0x140] sm:$0xff]
    %v1414 = vld [vmem:[%s1 + $0x148] sm:$0xff]
    %v1415 = vld [vmem:[%s1 + $0x150] sm:$0xff]
    %v1416 = vld [vmem:[%s1 + $0x158] sm:$0xff]
    %v1417 = vld [vmem:[%s1 + $0x160] sm:$0xff]
    %v1418 = vld [vmem:[%s1 + $0x168] sm:$0xff]
    %v1419 = vld [vmem:[%s1 + $0x170] sm:$0xff]
    %v1420 = vld [vmem:[%s1 + $0x178] sm:$0xff]
    %v1421 = vld [vmem:[%s1 + $0x180] sm:$0xff]
    %v1422 = vld [vmem:[%s1 + $0x188] sm:$0xff]
    %v1423 = vld [vmem:[%s1 + $0x190] sm:$0xff]
    %v1424 = vld [vmem:[%s1 + $0x198] sm:$0xff]
    %v1425 = vld [vmem:[%s1 + $0x1a0] sm:$0xff]
    %v1426 = vld [vmem:[%s1 + $0x1a8] sm:$0xff]
    %v1427 = vld [vmem:[%s1 + $0x1b0] sm:$0xff]
    %v1428 = vld [vmem:[%s1 + $0x1b8] sm:$0xff]
    %v1429 = vld [vmem:[%s1 + $0x1c0] sm:$0xff]
    %v1430 = vld [vmem:[%s1 + $0x1c8] sm:$0xff]
    %v1431 = vld [vmem:[%s1 + $0x1d0] sm:$0xff]
    %v1432 = vld [vmem:[%s1 + $0x1d8] sm:$0xff]
    %v1433 = vld [vmem:[%s1 + $0x1e0] sm:$0xff]
    %v1434 = vld [vmem:[%s1 + $0x1e8] sm:$0xff]
    %v1435 = vld [vmem:[%s1 + $0x1f0] sm:$0xff]
    %v1436 = vld [vmem:[%s1 + $0x1f8] sm:$0xff]
    %v1437 = vld [vmem:[%s1 + $0x200] sm:$0xff]
    %v1438 = vld [vmem:[%s1 + $0x208] sm:$0xff]
    %v1439 = vld [vmem:[%s1 + $0x210] sm:$0xff]
    %v1440 = vld [vmem:[%s1 + $0x218] sm:$0xff]
    %v1441 = vld [vmem:[%s1 + $0x220] sm:$0xff]
    %v1442 = vld [vmem:[%s1 + $0x228] sm:$0xff]
    %v1443 = vld [vmem:[%s1 + $0x230] sm:$0xff]
    %v1444 = vld [vmem:[%s1 + $0x238] sm:$0xff]
    %v1445 = vld [vmem:[%s1 + $0x240] sm:$0xff]
    %v1446 = vld [vmem:[%s1 + $0x248] sm:$0xff]
    %v1447 = vld [vmem:[%s1 + $0x250] sm:$0xff]
    %v1448 = vld [vmem:[%s1 + $0x258] sm:$0xff]
    %v1449 = vld [vmem:[%s1 + $0x260] sm:$0xff]
    %v1450 = vld [vmem:[%s1 + $0x268] sm:$0xff]
    %v1451 = vld [vmem:[%s1 + $0x270] sm:$0xff]
    %v1452 = vld [vmem:[%s1 + $0x278] sm:$0xff]
    %v1453 = vld [vmem:[%s1 + $0x280] sm:$0xff]
    %v1454 = vld [vmem:[%s1 + $0x288] sm:$0xff]
    %v1455 = vld [vmem:[%s1 + $0x290] sm:$0xff]
    %v1456 = vld [vmem:[%s1 + $0x298] sm:$0xff]
    %v1457 = vld [vmem:[%s1 + $0x2a0] sm:$0xff]
    %v1458 = vld [vmem:[%s1 + $0x2a8] sm:$0xff]
    %v1459 = vld [vmem:[%s1 + $0x2b0] sm:$0xff]
    %v1460 = vld [vmem:[%s1 + $0x2b8] sm:$0xff]
    %v1461 = vld [vmem:[%s1 + $0x2c0] sm:$0xff]
    %v1462 = vld [vmem:[%s1 + $0x2c8] sm:$0xff]
    %v1463 = vld [vmem:[%s1 + $0x2d0] sm:$0xff]
    %v1464 = vld [vmem:[%s1 + $0x2d8] sm:$0xff]
    %v1465 = vld [vmem:[%s1 + $0x2e0] sm:$0xff]
    %v1466 = vld [vmem:[%s1 + $0x2e8] sm:$0xff]
    %v1467 = vld [vmem:[%s1 + $0x2f0] sm:$0xff]
    %v1468 = vld [vmem:[%s1 + $0x2f8] sm:$0xff]
    %v1469 = vld [vmem:[%s1 + $0x300] sm:$0xff]
    %v1470 = vld [vmem:[%s1 + $0x308] sm:$0xff]
    %v1472 = vsel %vm131, %v1275, 0
    %v1475 = vsel %vm131, %v1276, 0
    %v1478 = vsel %vm131, %v1277, 0
    %v1481 = vsel %vm131, %v1278, 0
    %v1484 = vsel %vm131, %v1279, 0
    %v1487 = vsel %vm131, %v1280, 0
    %v1490 = vsel %vm131, %v1281, 0
    %v1493 = vsel %vm131, %v1282, 0
    %v1496 = vsel %vm131, %v1283, 0
    %v1499 = vsel %vm131, %v1284, 0
    %v1502 = vsel %vm131, %v1285, 0
    %v1505 = vsel %vm131, %v1286, 0
    %v1508 = vsel %vm131, %v1287, 0
    %v1511 = vsel %vm131, %v1288, 0
    %v1514 = vsel %vm131, %v1289, 0
    %v1517 = vsel %vm131, %v1290, 0
    %v1520 = vsel %vm131, %v1291, 0
    %v1523 = vsel %vm131, %v1292, 0
    %v1526 = vsel %vm131, %v1293, 0
    %v1529 = vsel %vm131, %v1294, 0
    %v1532 = vsel %vm131, %v1295, 0
    %v1535 = vsel %vm131, %v1296, 0
    %v1538 = vsel %vm131, %v1297, 0
    %v1541 = vsel %vm131, %v1298, 0
    %v1544 = vsel %vm131, %v1299, 0
    %v1547 = vsel %vm131, %v1300, 0
    %v1550 = vsel %vm131, %v1301, 0
    %v1553 = vsel %vm131, %v1302, 0
    %v1556 = vsel %vm131, %v1303, 0
    %v1559 = vsel %vm131, %v1304, 0
    %v1562 = vsel %vm131, %v1305, 0
    %v1565 = vsel %vm131, %v1306, 0
    %v1568 = vsel %vm131, %v1307, 0
    %v1571 = vsel %vm131, %v1308, 0
    %v1574 = vsel %vm131, %v1309, 0
    %v1577 = vsel %vm131, %v1310, 0
    %v1580 = vsel %vm131, %v1311, 0
    %v1583 = vsel %vm131, %v1312, 0
    %v1586 = vsel %vm131, %v1313, 0
    %v1589 = vsel %vm131, %v1314, 0
    %v1592 = vsel %vm131, %v1315, 0
    %v1595 = vsel %vm131, %v1316, 0
    %v1598 = vsel %vm131, %v1317, 0
    %v1601 = vsel %vm131, %v1318, 0
    %v1604 = vsel %vm131, %v1319, 0
    %v1607 = vsel %vm131, %v1320, 0
    %v1610 = vsel %vm131, %v1321, 0
    %v1613 = vsel %vm131, %v1322, 0
    %v1616 = vsel %vm131, %v1323, 0
    %v1619 = vsel %vm131, %v1324, 0
    %v1622 = vsel %vm131, %v1325, 0
    %v1625 = vsel %vm131, %v1326, 0
    %v1628 = vsel %vm131, %v1327, 0
    %v1631 = vsel %vm131, %v1328, 0
    %v1634 = vsel %vm131, %v1329, 0
    %v1637 = vsel %vm131, %v1330, 0
    %v1640 = vsel %vm131, %v1331, 0
    %v1643 = vsel %vm131, %v1332, 0
    %v1646 = vsel %vm131, %v1333, 0
    %v1649 = vsel %vm131, %v1334, 0
    %v1652 = vsel %vm131, %v1335, 0
    %v1655 = vsel %vm131, %v1336, 0
    %v1658 = vsel %vm131, %v1337, 0
    %v1661 = vsel %vm131, %v1338, 0
    %v1664 = vsel %vm131, %v1339, 0
    %v1667 = vsel %vm131, %v1340, 0
    %v1670 = vsel %vm131, %v1341, 0
    %v1673 = vsel %vm131, %v1342, 0
    %v1676 = vsel %vm131, %v1343, 0
    %v1679 = vsel %vm131, %v1344, 0
    %v1682 = vsel %vm131, %v1345, 0
    %v1685 = vsel %vm131, %v1346, 0
    %v1688 = vsel %vm131, %v1347, 0
    %v1691 = vsel %vm131, %v1348, 0
    %v1694 = vsel %vm131, %v1349, 0
    %v1697 = vsel %vm131, %v1350, 0
    %v1700 = vsel %vm131, %v1351, 0
    %v1703 = vsel %vm131, %v1352, 0
    %v1706 = vsel %vm131, %v1353, 0
    %v1709 = vsel %vm131, %v1354, 0
    %v1712 = vsel %vm131, %v1355, 0
    %v1715 = vsel %vm131, %v1356, 0
    %v1718 = vsel %vm131, %v1357, 0
    %v1721 = vsel %vm131, %v1358, 0
    %v1724 = vsel %vm131, %v1359, 0
    %v1727 = vsel %vm131, %v1360, 0
    %v1730 = vsel %vm131, %v1361, 0
    %v1733 = vsel %vm131, %v1362, 0
    %v1736 = vsel %vm131, %v1363, 0
    %v1739 = vsel %vm131, %v1364, 0
    %v1742 = vsel %vm131, %v1365, 0
    %v1745 = vsel %vm131, %v1366, 0
    %v1748 = vsel %vm131, %v1367, 0
    %v1751 = vsel %vm131, %v1368, 0
    %v1754 = vsel %vm131, %v1369, 0
    %v1757 = vsel %vm131, %v1370, 0
    %v1760 = vsel %vm131, %v1371, 0
    %v1763 = vsel %vm131, %v1372, 0
    %v1766 = vsel %vm131, %v1373, 0
    %v1769 = vsel %vm131, %v1374, 0
    %v1772 = vsel %vm131, %v1375, 0
    %v1775 = vsel %vm131, %v1376, 0
    %v1778 = vsel %vm131, %v1377, 0
    %v1781 = vsel %vm131, %v1378, 0
    %v1784 = vsel %vm131, %v1379, 0
    %v1787 = vsel %vm131, %v1380, 0
    %v1790 = vsel %vm131, %v1381, 0
    %v1793 = vsel %vm131, %v1382, 0
    %v1796 = vsel %vm131, %v1383, 0
    %v1799 = vsel %vm131, %v1384, 0
    %v1802 = vsel %vm131, %v1385, 0
    %v1805 = vsel %vm131, %v1386, 0
    %v1808 = vsel %vm131, %v1387, 0
    %v1811 = vsel %vm131, %v1388, 0
    %v1814 = vsel %vm131, %v1389, 0
    %v1817 = vsel %vm131, %v1390, 0
    %v1820 = vsel %vm131, %v1391, 0
    %v1823 = vsel %vm131, %v1392, 0
    %v1826 = vsel %vm131, %v1393, 0
    %v1829 = vsel %vm131, %v1394, 0
    %v1832 = vsel %vm131, %v1395, 0
    %v1835 = vsel %vm131, %v1396, 0
    %v1838 = vsel %vm131, %v1397, 0
    %v1841 = vsel %vm131, %v1398, 0
    %v1844 = vsel %vm131, %v1399, 0
    %v1847 = vsel %vm131, %v1400, 0
    %v1850 = vsel %vm131, %v1401, 0
    %v1853 = vsel %vm131, %v1402, 0
    %v1856 = vsel %vm131, %v1403, 0
    %v1859 = vsel %vm131, %v1404, 0
    %v1862 = vsel %vm131, %v1405, 0
    %v1865 = vsel %vm131, %v1406, 0
    %v1868 = vsel %vm131, %v1407, 0
    %v1871 = vsel %vm131, %v1408, 0
    %v1874 = vsel %vm131, %v1409, 0
    %v1877 = vsel %vm131, %v1410, 0
    %v1880 = vsel %vm131, %v1411, 0
    %v1883 = vsel %vm131, %v1412, 0
    %v1886 = vsel %vm131, %v1413, 0
    %v1889 = vsel %vm131, %v1414, 0
    %v1892 = vsel %vm131, %v1415, 0
    %v1895 = vsel %vm131, %v1416, 0
    %v1898 = vsel %vm131, %v1417, 0
    %v1901 = vsel %vm131, %v1418, 0
    %v1904 = vsel %vm131, %v1419, 0
    %v1907 = vsel %vm131, %v1420, 0
    %v1910 = vsel %vm131, %v1421, 0
    %v1913 = vsel %vm131, %v1422, 0
    %v1916 = vsel %vm131, %v1423, 0
    %v1919 = vsel %vm131, %v1424, 0
    %v1922 = vsel %vm131, %v1425, 0
    %v1925 = vsel %vm131, %v1426, 0
    %v1928 = vsel %vm131, %v1427, 0
    %v1931 = vsel %vm131, %v1428, 0
    %v1934 = vsel %vm131, %v1429, 0
    %v1937 = vsel %vm131, %v1430, 0
    %v1940 = vsel %vm131, %v1431, 0
    %v1943 = vsel %vm131, %v1432, 0
    %v1946 = vsel %vm131, %v1433, 0
    %v1949 = vsel %vm131, %v1434, 0
    %v1952 = vsel %vm131, %v1435, 0
    %v1955 = vsel %vm131, %v1436, 0
    %v1958 = vsel %vm131, %v1437, 0
    %v1961 = vsel %vm131, %v1438, 0
    %v1964 = vsel %vm131, %v1439, 0
    %v1967 = vsel %vm131, %v1440, 0
    %v1970 = vsel %vm131, %v1441, 0
    %v1973 = vsel %vm131, %v1442, 0
    %v1976 = vsel %vm131, %v1443, 0
    %v1979 = vsel %vm131, %v1444, 0
    %v1982 = vsel %vm131, %v1445, 0
    %v1985 = vsel %vm131, %v1446, 0
    %v1988 = vsel %vm131, %v1447, 0
    %v1991 = vsel %vm131, %v1448, 0
    %v1994 = vsel %vm131, %v1449, 0
    %v1997 = vsel %vm131, %v1450, 0
    %v2000 = vsel %vm131, %v1451, 0
    %v2003 = vsel %vm131, %v1452, 0
    %v2006 = vsel %vm131, %v1453, 0
    %v2009 = vsel %vm131, %v1454, 0
    %v2012 = vsel %vm131, %v1455, 0
    %v2015 = vsel %vm131, %v1456, 0
    %v2018 = vsel %vm131, %v1457, 0
    %v2021 = vsel %vm131, %v1458, 0
    %v2024 = vsel %vm131, %v1459, 0
    %v2027 = vsel %vm131, %v1460, 0
    %v2030 = vsel %vm131, %v1461, 0
    %v2033 = vsel %vm131, %v1462, 0
    %v2036 = vsel %vm131, %v1463, 0
    %v2039 = vsel %vm131, %v1464, 0
    %v2042 = vsel %vm131, %v1465, 0
    %v2045 = vsel %vm131, %v1466, 0
    %v2048 = vsel %vm131, %v1467, 0
    %v2051 = vsel %vm131, %v1468, 0
    %v2054 = vsel %vm131, %v1469, 0
    %v2057 = vsel %vm131, %v1470, 0
    %2059 = vmatprep.subr.mxu0 0.0
    %2060 = vmatpush1.xpose.msra.mxu0 %v1811
    %2061 = vmatprep.subr.mxu0 0.0
    %2062 = vmatpush1.xpose.msra.mxu0 %v1808
    %2063 = vmatprep.subr.mxu0 0.0
    %2064 = vmatpush1.xpose.msra.mxu0 %v1805
    %2065 = vmatprep.subr.mxu0 0.0
    %2066 = vmatpush1.xpose.msra.mxu0 %v1802
    %2067 = vmatprep.subr.mxu0 0.0
    %2068 = vmatpush1.xpose.msra.mxu0 %v1799
    %2069 = vmatprep.subr.mxu0 0.0
    %2070 = vmatpush1.xpose.msra.mxu0 %v1796
    %2071 = vmatprep.subr.mxu0 0.0
    %2072 = vmatpush1.xpose.msra.mxu0 %v1793
    %2073 = vmatprep.subr.mxu0 0.0
    %2074 = vmatpush1.xpose.msra.mxu0 %v1790
    %2075 = vmatprep.subr.mxu0 0.0
    %2076 = vmatpush1.xpose.msra.mxu0 %v1787
    %2077 = vmatprep.subr.mxu0 0.0
    %2078 = vmatpush1.xpose.msra.mxu0 %v1784
    %2079 = vmatprep.subr.mxu0 0.0
    %2080 = vmatpush1.xpose.msra.mxu0 %v1781
    %2081 = vmatprep.subr.mxu0 0.0
    %2082 = vmatpush1.xpose.msra.mxu0 %v1778
    %2083 = vmatprep.subr.mxu0 0.0
    %2084 = vmatpush1.xpose.msra.mxu0 %v1775
    %2085 = vmatprep.subr.mxu0 0.0
    %2086 = vmatpush1.xpose.msra.mxu0 %v1772
    %2087 = vmatprep.subr.mxu0 0.0
    %2088 = vmatpush1.xpose.msra.mxu0 %v1769
    %2089 = vmatprep.subr.mxu0 0.0
    %2090 = vmatpush1.xpose.msra.mxu0 %v1766
    %2091 = vmatprep.subr.mxu0 0.0
    %2092 = vmatpush2.xpose.msra.mxu0 %v1859
    %2093 = vmatprep.subr.mxu0 0.0
    %2094 = vmatpush2.xpose.msra.mxu0 %v1856
    %2095 = vmatprep.subr.mxu0 0.0
    %2096 = vmatpush2.xpose.msra.mxu0 %v1853
    %2097 = vmatprep.subr.mxu0 0.0
    %2098 = vmatpush2.xpose.msra.mxu0 %v1850
    %2099 = vmatprep.subr.mxu0 0.0
    %2100 = vmatpush2.xpose.msra.mxu0 %v1847
    %2101 = vmatprep.subr.mxu0 0.0
    %2102 = vmatpush2.xpose.msra.mxu0 %v1844
    %2103 = vmatprep.subr.mxu0 0.0
    %2104 = vmatpush2.xpose.msra.mxu0 %v1841
    %2105 = vmatprep.subr.mxu0 0.0
    %2106 = vmatpush2.xpose.msra.mxu0 %v1838
    %2107 = vmatprep.subr.mxu0 0.0
    %2108 = vmatpush2.xpose.msra.mxu0 %v1835
    %2109 = vmatprep.subr.mxu0 0.0
    %2110 = vmatpush2.xpose.msra.mxu0 %v1832
    %2111 = vmatprep.subr.mxu0 0.0
    %2112 = vmatpush2.xpose.msra.mxu0 %v1829
    %2113 = vmatprep.subr.mxu0 0.0
    %2114 = vmatpush2.xpose.msra.mxu0 %v1826
    %2115 = vmatprep.subr.mxu0 0.0
    %2116 = vmatpush2.xpose.msra.mxu0 %v1823
    %2117 = vmatprep.subr.mxu0 0.0
    %2118 = vmatpush2.xpose.msra.mxu0 %v1820
    %2119 = vmatprep.subr.mxu0 0.0
    %2120 = vmatpush2.xpose.msra.mxu0 %v1817
    %2121 = vmatprep.subr.mxu0 0.0
    %2122 = vmatpush2.xpose.msra.mxu0 %v1814
    %2123 = vmatprep.mubr.f32.mxu0 0.0
    %2124 = vmatmul.mubr.f32.gmra.mxu0 %v1472
    %v2125 = vpop.f32.mrf.mxu0
    %v2126 = vadd.f32 0.0, %v2125
    %v2127 = vpop.f32.mrf.mxu0
    %v2128 = vadd.f32 0.0, %v2127
    %2129 = vmatprep.mubr.f32.mxu0 0.0
    %2130 = vmatmul.mubr.f32.gmra.mxu0 %v1475
    %v2131 = vpop.f32.mrf.mxu0
    %v2132 = vadd.f32 0.0, %v2131
    %v2133 = vpop.f32.mrf.mxu0
    %v2134 = vadd.f32 0.0, %v2133
    %2135 = vmatprep.mubr.f32.mxu0 0.0
    %2136 = vmatmul.mubr.f32.gmra.mxu0 %v1478
    %v2137 = vpop.f32.mrf.mxu0
    %v2138 = vadd.f32 0.0, %v2137
    %v2139 = vpop.f32.mrf.mxu0
    %v2140 = vadd.f32 0.0, %v2139
    %2141 = vmatprep.mubr.f32.mxu0 0.0
    %2142 = vmatmul.mubr.f32.gmra.mxu0 %v1481
    %v2143 = vpop.f32.mrf.mxu0
    %v2144 = vadd.f32 0.0, %v2143
    %v2145 = vpop.f32.mrf.mxu0
    %v2146 = vadd.f32 0.0, %v2145
    %2147 = vmatprep.mubr.f32.mxu0 0.0
    %2148 = vmatmul.mubr.f32.gmra.mxu0 %v1484
    %v2149 = vpop.f32.mrf.mxu0
    %v2150 = vadd.f32 0.0, %v2149
    %v2151 = vpop.f32.mrf.mxu0
    %v2152 = vadd.f32 0.0, %v2151
    %2153 = vmatprep.mubr.f32.mxu0 0.0
    %2154 = vmatmul.mubr.f32.gmra.mxu0 %v1487
    %v2155 = vpop.f32.mrf.mxu0
    %v2156 = vadd.f32 0.0, %v2155
    %v2157 = vpop.f32.mrf.mxu0
    %v2158 = vadd.f32 0.0, %v2157
    %2159 = vmatprep.mubr.f32.mxu0 0.0
    %2160 = vmatmul.mubr.f32.gmra.mxu0 %v1490
    %v2161 = vpop.f32.mrf.mxu0
    %v2162 = vadd.f32 0.0, %v2161
    %v2163 = vpop.f32.mrf.mxu0
    %v2164 = vadd.f32 0.0, %v2163
    %2165 = vmatprep.mubr.f32.mxu0 0.0
    %2166 = vmatmul.mubr.f32.gmra.mxu0 %v1493
    %v2167 = vpop.f32.mrf.mxu0
    %v2168 = vadd.f32 0.0, %v2167
    %v2169 = vpop.f32.mrf.mxu0
    %v2170 = vadd.f32 0.0, %v2169
    %2171 = vmatprep.mubr.f32.mxu0 0.0
    %2172 = vmatmul.mubr.f32.gmra.mxu0 %v1496
    %v2173 = vpop.f32.mrf.mxu0
    %v2174 = vadd.f32 0.0, %v2173
    %v2175 = vpop.f32.mrf.mxu0
    %v2176 = vadd.f32 0.0, %v2175
    %2177 = vmatprep.mubr.f32.mxu0 0.0
    %2178 = vmatmul.mubr.f32.gmra.mxu0 %v1499
    %v2179 = vpop.f32.mrf.mxu0
    %v2180 = vadd.f32 0.0, %v2179
    %v2181 = vpop.f32.mrf.mxu0
    %v2182 = vadd.f32 0.0, %v2181
    %2183 = vmatprep.mubr.f32.mxu0 0.0
    %2184 = vmatmul.mubr.f32.gmra.mxu0 %v1502
    %v2185 = vpop.f32.mrf.mxu0
    %v2186 = vadd.f32 0.0, %v2185
    %v2187 = vpop.f32.mrf.mxu0
    %v2188 = vadd.f32 0.0, %v2187
    %2189 = vmatprep.mubr.f32.mxu0 0.0
    %2190 = vmatmul.mubr.f32.gmra.mxu0 %v1505
    %v2191 = vpop.f32.mrf.mxu0
    %v2192 = vadd.f32 0.0, %v2191
    %v2193 = vpop.f32.mrf.mxu0
    %v2194 = vadd.f32 0.0, %v2193
    %2195 = vmatprep.mubr.f32.mxu0 0.0
    %2196 = vmatmul.mubr.f32.gmra.mxu0 %v1508
    %v2197 = vpop.f32.mrf.mxu0
    %v2198 = vadd.f32 0.0, %v2197
    %v2199 = vpop.f32.mrf.mxu0
    %v2200 = vadd.f32 0.0, %v2199
    %2201 = vmatprep.mubr.f32.mxu0 0.0
    %2202 = vmatmul.mubr.f32.gmra.mxu0 %v1511
    %v2203 = vpop.f32.mrf.mxu0
    %v2204 = vadd.f32 0.0, %v2203
    %v2205 = vpop.f32.mrf.mxu0
    %v2206 = vadd.f32 0.0, %v2205
    %2207 = vmatprep.mubr.f32.mxu0 0.0
    %2208 = vmatmul.mubr.f32.gmra.mxu0 %v1514
    %v2209 = vpop.f32.mrf.mxu0
    %v2210 = vadd.f32 0.0, %v2209
    %v2211 = vpop.f32.mrf.mxu0
    %v2212 = vadd.f32 0.0, %v2211
    %2213 = vmatprep.mubr.f32.mxu0 0.0
    %2214 = vmatmul.mubr.f32.gmra.mxu0 %v1517
    %v2215 = vpop.f32.mrf.mxu0
    %v2216 = vadd.f32 0.0, %v2215
    %v2217 = vpop.f32.mrf.mxu0
    %v2218 = vadd.f32 0.0, %v2217
    %2219 = vmatprep.mubr.f32.mxu0 0.0
    %2220 = vmatmul.mubr.f32.gmra.mxu0 %v1520
    %v2221 = vpop.f32.mrf.mxu0
    %v2222 = vadd.f32 0.0, %v2221
    %v2223 = vpop.f32.mrf.mxu0
    %v2224 = vadd.f32 0.0, %v2223
    %2225 = vmatprep.mubr.f32.mxu0 0.0
    %2226 = vmatmul.mubr.f32.gmra.mxu0 %v1523
    %v2227 = vpop.f32.mrf.mxu0
    %v2228 = vadd.f32 0.0, %v2227
    %v2229 = vpop.f32.mrf.mxu0
    %v2230 = vadd.f32 0.0, %v2229
    %2231 = vmatprep.mubr.f32.mxu0 0.0
    %2232 = vmatmul.mubr.f32.gmra.mxu0 %v1526
    %v2233 = vpop.f32.mrf.mxu0
    %v2234 = vadd.f32 0.0, %v2233
    %v2235 = vpop.f32.mrf.mxu0
    %v2236 = vadd.f32 0.0, %v2235
    %2237 = vmatprep.mubr.f32.mxu0 0.0
    %2238 = vmatmul.mubr.f32.gmra.mxu0 %v1529
    %v2239 = vpop.f32.mrf.mxu0
    %v2240 = vadd.f32 0.0, %v2239
    %v2241 = vpop.f32.mrf.mxu0
    %v2242 = vadd.f32 0.0, %v2241
    %2243 = vmatprep.mubr.f32.mxu0 0.0
    %2244 = vmatmul.mubr.f32.gmra.mxu0 %v1532
    %v2245 = vpop.f32.mrf.mxu0
    %v2246 = vadd.f32 0.0, %v2245
    %v2247 = vpop.f32.mrf.mxu0
    %v2248 = vadd.f32 0.0, %v2247
    %2249 = vmatprep.mubr.f32.mxu0 0.0
    %2250 = vmatmul.mubr.f32.gmra.mxu0 %v1535
    %v2251 = vpop.f32.mrf.mxu0
    %v2252 = vadd.f32 0.0, %v2251
    %v2253 = vpop.f32.mrf.mxu0
    %v2254 = vadd.f32 0.0, %v2253
    %2255 = vmatprep.mubr.f32.mxu0 0.0
    %2256 = vmatmul.mubr.f32.gmra.mxu0 %v1538
    %v2257 = vpop.f32.mrf.mxu0
    %v2258 = vadd.f32 0.0, %v2257
    %v2259 = vpop.f32.mrf.mxu0
    %v2260 = vadd.f32 0.0, %v2259
    %2261 = vmatprep.mubr.f32.mxu0 0.0
    %2262 = vmatmul.mubr.f32.gmra.mxu0 %v1541
    %v2263 = vpop.f32.mrf.mxu0
    %v2264 = vadd.f32 0.0, %v2263
    %v2265 = vpop.f32.mrf.mxu0
    %v2266 = vadd.f32 0.0, %v2265
    %2267 = vmatprep.mubr.f32.mxu0 0.0
    %2268 = vmatmul.mubr.f32.gmra.mxu0 %v1544
    %v2269 = vpop.f32.mrf.mxu0
    %v2270 = vadd.f32 0.0, %v2269
    %v2271 = vpop.f32.mrf.mxu0
    %v2272 = vadd.f32 0.0, %v2271
    %2273 = vmatprep.mubr.f32.mxu0 0.0
    %2274 = vmatmul.mubr.f32.gmra.mxu0 %v1547
    %v2275 = vpop.f32.mrf.mxu0
    %v2276 = vadd.f32 0.0, %v2275
    %v2277 = vpop.f32.mrf.mxu0
    %v2278 = vadd.f32 0.0, %v2277
    %2279 = vmatprep.mubr.f32.mxu0 0.0
    %2280 = vmatmul.mubr.f32.gmra.mxu0 %v1550
    %v2281 = vpop.f32.mrf.mxu0
    %v2282 = vadd.f32 0.0, %v2281
    %v2283 = vpop.f32.mrf.mxu0
    %v2284 = vadd.f32 0.0, %v2283
    %2285 = vmatprep.mubr.f32.mxu0 0.0
    %2286 = vmatmul.mubr.f32.gmra.mxu0 %v1553
    %v2287 = vpop.f32.mrf.mxu0
    %v2288 = vadd.f32 0.0, %v2287
    %v2289 = vpop.f32.mrf.mxu0
    %v2290 = vadd.f32 0.0, %v2289
    %2291 = vmatprep.mubr.f32.mxu0 0.0
    %2292 = vmatmul.mubr.f32.gmra.mxu0 %v1556
    %v2293 = vpop.f32.mrf.mxu0
    %v2294 = vadd.f32 0.0, %v2293
    %v2295 = vpop.f32.mrf.mxu0
    %v2296 = vadd.f32 0.0, %v2295
    %2297 = vmatprep.mubr.f32.mxu0 0.0
    %2298 = vmatmul.mubr.f32.gmra.mxu0 %v1559
    %v2299 = vpop.f32.mrf.mxu0
    %v2300 = vadd.f32 0.0, %v2299
    %v2301 = vpop.f32.mrf.mxu0
    %v2302 = vadd.f32 0.0, %v2301
    %2303 = vmatprep.mubr.f32.mxu0 0.0
    %2304 = vmatmul.mubr.f32.gmra.mxu0 %v1562
    %v2305 = vpop.f32.mrf.mxu0
    %v2306 = vadd.f32 0.0, %v2305
    %v2307 = vpop.f32.mrf.mxu0
    %v2308 = vadd.f32 0.0, %v2307
    %2309 = vmatprep.mubr.f32.mxu0 0.0
    %2310 = vmatmul.mubr.f32.gmra.mxu0 %v1565
    %v2311 = vpop.f32.mrf.mxu0
    %v2312 = vadd.f32 0.0, %v2311
    %v2313 = vpop.f32.mrf.mxu0
    %v2314 = vadd.f32 0.0, %v2313
    %2315 = vmatprep.mubr.f32.mxu0 0.0
    %2316 = vmatmul.mubr.f32.gmra.mxu0 %v1568
    %v2317 = vpop.f32.mrf.mxu0
    %v2318 = vadd.f32 0.0, %v2317
    %v2319 = vpop.f32.mrf.mxu0
    %v2320 = vadd.f32 0.0, %v2319
    %2321 = vmatprep.mubr.f32.mxu0 0.0
    %2322 = vmatmul.mubr.f32.gmra.mxu0 %v1571
    %v2323 = vpop.f32.mrf.mxu0
    %v2324 = vadd.f32 0.0, %v2323
    %v2325 = vpop.f32.mrf.mxu0
    %v2326 = vadd.f32 0.0, %v2325
    %2327 = vmatprep.mubr.f32.mxu0 0.0
    %2328 = vmatmul.mubr.f32.gmra.mxu0 %v1574
    %v2329 = vpop.f32.mrf.mxu0
    %v2330 = vadd.f32 0.0, %v2329
    %v2331 = vpop.f32.mrf.mxu0
    %v2332 = vadd.f32 0.0, %v2331
    %2333 = vmatprep.mubr.f32.mxu0 0.0
    %2334 = vmatmul.mubr.f32.gmra.mxu0 %v1577
    %v2335 = vpop.f32.mrf.mxu0
    %v2336 = vadd.f32 0.0, %v2335
    %v2337 = vpop.f32.mrf.mxu0
    %v2338 = vadd.f32 0.0, %v2337
    %2339 = vmatprep.mubr.f32.mxu0 0.0
    %2340 = vmatmul.mubr.f32.gmra.mxu0 %v1580
    %v2341 = vpop.f32.mrf.mxu0
    %v2342 = vadd.f32 0.0, %v2341
    %v2343 = vpop.f32.mrf.mxu0
    %v2344 = vadd.f32 0.0, %v2343
    %2345 = vmatprep.mubr.f32.mxu0 0.0
    %2346 = vmatmul.mubr.f32.gmra.mxu0 %v1583
    %v2347 = vpop.f32.mrf.mxu0
    %v2348 = vadd.f32 0.0, %v2347
    %v2349 = vpop.f32.mrf.mxu0
    %v2350 = vadd.f32 0.0, %v2349
    %2351 = vmatprep.mubr.f32.mxu0 0.0
    %2352 = vmatmul.mubr.f32.gmra.mxu0 %v1586
    %v2353 = vpop.f32.mrf.mxu0
    %v2354 = vadd.f32 0.0, %v2353
    %v2355 = vpop.f32.mrf.mxu0
    %v2356 = vadd.f32 0.0, %v2355
    %2357 = vmatprep.mubr.f32.mxu0 0.0
    %2358 = vmatmul.mubr.f32.gmra.mxu0 %v1589
    %v2359 = vpop.f32.mrf.mxu0
    %v2360 = vadd.f32 0.0, %v2359
    %v2361 = vpop.f32.mrf.mxu0
    %v2362 = vadd.f32 0.0, %v2361
    %2363 = vmatprep.mubr.f32.mxu0 0.0
    %2364 = vmatmul.mubr.f32.gmra.mxu0 %v1592
    %v2365 = vpop.f32.mrf.mxu0
    %v2366 = vadd.f32 0.0, %v2365
    %v2367 = vpop.f32.mrf.mxu0
    %v2368 = vadd.f32 0.0, %v2367
    %2369 = vmatprep.mubr.f32.mxu0 0.0
    %2370 = vmatmul.mubr.f32.gmra.mxu0 %v1595
    %v2371 = vpop.f32.mrf.mxu0
    %v2372 = vadd.f32 0.0, %v2371
    %v2373 = vpop.f32.mrf.mxu0
    %v2374 = vadd.f32 0.0, %v2373
    %2375 = vmatprep.mubr.f32.mxu0 0.0
    %2376 = vmatmul.mubr.f32.gmra.mxu0 %v1598
    %v2377 = vpop.f32.mrf.mxu0
    %v2378 = vadd.f32 0.0, %v2377
    %v2379 = vpop.f32.mrf.mxu0
    %v2380 = vadd.f32 0.0, %v2379
    %2381 = vmatprep.mubr.f32.mxu0 0.0
    %2382 = vmatmul.mubr.f32.gmra.mxu0 %v1601
    %v2383 = vpop.f32.mrf.mxu0
    %v2384 = vadd.f32 0.0, %v2383
    %v2385 = vpop.f32.mrf.mxu0
    %v2386 = vadd.f32 0.0, %v2385
    %2387 = vmatprep.mubr.f32.mxu0 0.0
    %2388 = vmatmul.mubr.f32.gmra.mxu0 %v1604
    %v2389 = vpop.f32.mrf.mxu0
    %v2390 = vadd.f32 0.0, %v2389
    %v2391 = vpop.f32.mrf.mxu0
    %v2392 = vadd.f32 0.0, %v2391
    %2393 = vmatprep.mubr.f32.mxu0 0.0
    %2394 = vmatmul.mubr.f32.gmra.mxu0 %v1607
    %v2395 = vpop.f32.mrf.mxu0
    %v2396 = vadd.f32 0.0, %v2395
    %v2397 = vpop.f32.mrf.mxu0
    %v2398 = vadd.f32 0.0, %v2397
    %2399 = vmatprep.mubr.f32.mxu0 0.0
    %2400 = vmatmul.mubr.f32.gmra.mxu0 %v1610
    %v2401 = vpop.f32.mrf.mxu0
    %v2402 = vadd.f32 0.0, %v2401
    %v2403 = vpop.f32.mrf.mxu0
    %v2404 = vadd.f32 0.0, %v2403
    %2405 = vmatprep.mubr.f32.mxu0 0.0
    %2406 = vmatmul.mubr.f32.gmra.mxu0 %v1613
    %v2407 = vpop.f32.mrf.mxu0
    %v2408 = vadd.f32 0.0, %v2407
    %v2409 = vpop.f32.mrf.mxu0
    %v2410 = vadd.f32 0.0, %v2409
    %2411 = vmatprep.mubr.f32.mxu0 0.0
    %2412 = vmatmul.mubr.f32.gmra.mxu0 %v1616
    %v2413 = vpop.f32.mrf.mxu0
    %v2414 = vadd.f32 0.0, %v2413
    %v2415 = vpop.f32.mrf.mxu0
    %v2416 = vadd.f32 0.0, %v2415
    %2417 = vmatprep.mubr.f32.mxu0 0.0
    %2418 = vmatmul.mubr.f32.gmra.mxu0 %v1619
    %v2419 = vpop.f32.mrf.mxu0
    %v2420 = vadd.f32 0.0, %v2419
    %v2421 = vpop.f32.mrf.mxu0
    %v2422 = vadd.f32 0.0, %v2421
    %2423 = vmatprep.mubr.f32.mxu0 0.0
    %2424 = vmatmul.mubr.f32.gmra.mxu0 %v1622
    %v2425 = vpop.f32.mrf.mxu0
    %v2426 = vadd.f32 0.0, %v2425
    %v2427 = vpop.f32.mrf.mxu0
    %v2428 = vadd.f32 0.0, %v2427
    %2429 = vmatprep.mubr.f32.mxu0 0.0
    %2430 = vmatmul.mubr.f32.gmra.mxu0 %v1625
    %v2431 = vpop.f32.mrf.mxu0
    %v2432 = vadd.f32 0.0, %v2431
    %v2433 = vpop.f32.mrf.mxu0
    %v2434 = vadd.f32 0.0, %v2433
    %2435 = vmatprep.mubr.f32.mxu0 0.0
    %2436 = vmatmul.mubr.f32.gmra.mxu0 %v1628
    %v2437 = vpop.f32.mrf.mxu0
    %v2438 = vadd.f32 0.0, %v2437
    %v2439 = vpop.f32.mrf.mxu0
    %v2440 = vadd.f32 0.0, %v2439
    %2441 = vmatprep.mubr.f32.mxu0 0.0
    %2442 = vmatmul.mubr.f32.gmra.mxu0 %v1631
    %v2443 = vpop.f32.mrf.mxu0
    %v2444 = vadd.f32 0.0, %v2443
    %v2445 = vpop.f32.mrf.mxu0
    %v2446 = vadd.f32 0.0, %v2445
    %2447 = vmatprep.mubr.f32.mxu0 0.0
    %2448 = vmatmul.mubr.f32.gmra.mxu0 %v1634
    %v2449 = vpop.f32.mrf.mxu0
    %v2450 = vadd.f32 0.0, %v2449
    %v2451 = vpop.f32.mrf.mxu0
    %v2452 = vadd.f32 0.0, %v2451
    %2453 = vmatprep.mubr.f32.mxu0 0.0
    %2454 = vmatmul.mubr.f32.gmra.mxu0 %v1637
    %v2455 = vpop.f32.mrf.mxu0
    %v2456 = vadd.f32 0.0, %v2455
    %v2457 = vpop.f32.mrf.mxu0
    %v2458 = vadd.f32 0.0, %v2457
    %2459 = vmatprep.mubr.f32.mxu0 0.0
    %2460 = vmatmul.mubr.f32.gmra.mxu0 %v1640
    %v2461 = vpop.f32.mrf.mxu0
    %v2462 = vadd.f32 0.0, %v2461
    %v2463 = vpop.f32.mrf.mxu0
    %v2464 = vadd.f32 0.0, %v2463
    %2465 = vmatprep.mubr.f32.mxu0 0.0
    %2466 = vmatmul.mubr.f32.gmra.mxu0 %v1643
    %v2467 = vpop.f32.mrf.mxu0
    %v2468 = vadd.f32 0.0, %v2467
    %v2469 = vpop.f32.mrf.mxu0
    %v2470 = vadd.f32 0.0, %v2469
    %2471 = vmatprep.mubr.f32.mxu0 0.0
    %2472 = vmatmul.mubr.f32.gmra.mxu0 %v1646
    %v2473 = vpop.f32.mrf.mxu0
    %v2474 = vadd.f32 0.0, %v2473
    %v2475 = vpop.f32.mrf.mxu0
    %v2476 = vadd.f32 0.0, %v2475
    %2477 = vmatprep.mubr.f32.mxu0 0.0
    %2478 = vmatmul.mubr.f32.gmra.mxu0 %v1649
    %v2479 = vpop.f32.mrf.mxu0
    %v2480 = vadd.f32 0.0, %v2479
    %v2481 = vpop.f32.mrf.mxu0
    %v2482 = vadd.f32 0.0, %v2481
    %2483 = vmatprep.mubr.f32.mxu0 0.0
    %2484 = vmatmul.mubr.f32.gmra.mxu0 %v1652
    %v2485 = vpop.f32.mrf.mxu0
    %v2486 = vadd.f32 0.0, %v2485
    %v2487 = vpop.f32.mrf.mxu0
    %v2488 = vadd.f32 0.0, %v2487
    %2489 = vmatprep.mubr.f32.mxu0 0.0
    %2490 = vmatmul.mubr.f32.gmra.mxu0 %v1655
    %v2491 = vpop.f32.mrf.mxu0
    %v2492 = vadd.f32 0.0, %v2491
    %v2493 = vpop.f32.mrf.mxu0
    %v2494 = vadd.f32 0.0, %v2493
    %2495 = vmatprep.mubr.f32.mxu0 0.0
    %2496 = vmatmul.mubr.f32.gmra.mxu0 %v1658
    %v2497 = vpop.f32.mrf.mxu0
    %v2498 = vadd.f32 0.0, %v2497
    %v2499 = vpop.f32.mrf.mxu0
    %v2500 = vadd.f32 0.0, %v2499
    %2501 = vmatprep.mubr.f32.mxu0 0.0
    %2502 = vmatmul.mubr.f32.gmra.mxu0 %v1661
    %v2503 = vpop.f32.mrf.mxu0
    %v2504 = vadd.f32 0.0, %v2503
    %v2505 = vpop.f32.mrf.mxu0
    %v2506 = vadd.f32 0.0, %v2505
    %2507 = vmatprep.mubr.f32.mxu0 0.0
    %2508 = vmatmul.mubr.f32.gmra.mxu0 %v1664
    %v2509 = vpop.f32.mrf.mxu0
    %v2510 = vadd.f32 0.0, %v2509
    %v2511 = vpop.f32.mrf.mxu0
    %v2512 = vadd.f32 0.0, %v2511
    %2513 = vmatprep.mubr.f32.mxu0 0.0
    %2514 = vmatmul.mubr.f32.gmra.mxu0 %v1667
    %v2515 = vpop.f32.mrf.mxu0
    %v2516 = vadd.f32 0.0, %v2515
    %v2517 = vpop.f32.mrf.mxu0
    %v2518 = vadd.f32 0.0, %v2517
    %2519 = vmatprep.mubr.f32.mxu0 0.0
    %2520 = vmatmul.mubr.f32.gmra.mxu0 %v1670
    %v2521 = vpop.f32.mrf.mxu0
    %v2522 = vadd.f32 0.0, %v2521
    %v2523 = vpop.f32.mrf.mxu0
    %v2524 = vadd.f32 0.0, %v2523
    %2525 = vmatprep.mubr.f32.mxu0 0.0
    %2526 = vmatmul.mubr.f32.gmra.mxu0 %v1673
    %v2527 = vpop.f32.mrf.mxu0
    %v2528 = vadd.f32 0.0, %v2527
    %v2529 = vpop.f32.mrf.mxu0
    %v2530 = vadd.f32 0.0, %v2529
    %2531 = vmatprep.mubr.f32.mxu0 0.0
    %2532 = vmatmul.mubr.f32.gmra.mxu0 %v1676
    %v2533 = vpop.f32.mrf.mxu0
    %v2534 = vadd.f32 0.0, %v2533
    %v2535 = vpop.f32.mrf.mxu0
    %v2536 = vadd.f32 0.0, %v2535
    %2537 = vmatprep.mubr.f32.mxu0 0.0
    %2538 = vmatmul.mubr.f32.gmra.mxu0 %v1679
    %v2539 = vpop.f32.mrf.mxu0
    %v2540 = vadd.f32 0.0, %v2539
    %v2541 = vpop.f32.mrf.mxu0
    %v2542 = vadd.f32 0.0, %v2541
    %2543 = vmatprep.mubr.f32.mxu0 0.0
    %2544 = vmatmul.mubr.f32.gmra.mxu0 %v1682
    %v2545 = vpop.f32.mrf.mxu0
    %v2546 = vadd.f32 0.0, %v2545
    %v2547 = vpop.f32.mrf.mxu0
    %v2548 = vadd.f32 0.0, %v2547
    %2549 = vmatprep.mubr.f32.mxu0 0.0
    %2550 = vmatmul.mubr.f32.gmra.mxu0 %v1685
    %v2551 = vpop.f32.mrf.mxu0
    %v2552 = vadd.f32 0.0, %v2551
    %v2553 = vpop.f32.mrf.mxu0
    %v2554 = vadd.f32 0.0, %v2553
    %2555 = vmatprep.mubr.f32.mxu0 0.0
    %2556 = vmatmul.mubr.f32.gmra.mxu0 %v1688
    %v2557 = vpop.f32.mrf.mxu0
    %v2558 = vadd.f32 0.0, %v2557
    %v2559 = vpop.f32.mrf.mxu0
    %v2560 = vadd.f32 0.0, %v2559
    %2561 = vmatprep.mubr.f32.mxu0 0.0
    %2562 = vmatmul.mubr.f32.gmra.mxu0 %v1691
    %v2563 = vpop.f32.mrf.mxu0
    %v2564 = vadd.f32 0.0, %v2563
    %v2565 = vpop.f32.mrf.mxu0
    %v2566 = vadd.f32 0.0, %v2565
    %2567 = vmatprep.mubr.f32.mxu0 0.0
    %2568 = vmatmul.mubr.f32.gmra.mxu0 %v1694
    %v2569 = vpop.f32.mrf.mxu0
    %v2570 = vadd.f32 0.0, %v2569
    %v2571 = vpop.f32.mrf.mxu0
    %v2572 = vadd.f32 0.0, %v2571
    %2573 = vmatprep.mubr.f32.mxu0 0.0
    %2574 = vmatmul.mubr.f32.gmra.mxu0 %v1697
    %v2575 = vpop.f32.mrf.mxu0
    %v2576 = vadd.f32 0.0, %v2575
    %v2577 = vpop.f32.mrf.mxu0
    %v2578 = vadd.f32 0.0, %v2577
    %2579 = vmatprep.mubr.f32.mxu0 0.0
    %2580 = vmatmul.mubr.f32.gmra.mxu0 %v1700
    %v2581 = vpop.f32.mrf.mxu0
    %v2582 = vadd.f32 0.0, %v2581
    %v2583 = vpop.f32.mrf.mxu0
    %v2584 = vadd.f32 0.0, %v2583
    %2585 = vmatprep.mubr.f32.mxu0 0.0
    %2586 = vmatmul.mubr.f32.gmra.mxu0 %v1703
    %v2587 = vpop.f32.mrf.mxu0
    %v2588 = vadd.f32 0.0, %v2587
    %v2589 = vpop.f32.mrf.mxu0
    %v2590 = vadd.f32 0.0, %v2589
    %2591 = vmatprep.mubr.f32.mxu0 0.0
    %2592 = vmatmul.mubr.f32.gmra.mxu0 %v1706
    %v2593 = vpop.f32.mrf.mxu0
    %v2594 = vadd.f32 0.0, %v2593
    %v2595 = vpop.f32.mrf.mxu0
    %v2596 = vadd.f32 0.0, %v2595
    %2597 = vmatprep.mubr.f32.mxu0 0.0
    %2598 = vmatmul.mubr.f32.gmra.mxu0 %v1709
    %v2599 = vpop.f32.mrf.mxu0
    %v2600 = vadd.f32 0.0, %v2599
    %v2601 = vpop.f32.mrf.mxu0
    %v2602 = vadd.f32 0.0, %v2601
    %2603 = vmatprep.mubr.f32.mxu0 0.0
    %2604 = vmatmul.mubr.f32.gmra.mxu0 %v1712
    %v2605 = vpop.f32.mrf.mxu0
    %v2606 = vadd.f32 0.0, %v2605
    %v2607 = vpop.f32.mrf.mxu0
    %v2608 = vadd.f32 0.0, %v2607
    %2609 = vmatprep.mubr.f32.mxu0 0.0
    %2610 = vmatmul.mubr.f32.gmra.mxu0 %v1715
    %v2611 = vpop.f32.mrf.mxu0
    %v2612 = vadd.f32 0.0, %v2611
    %v2613 = vpop.f32.mrf.mxu0
    %v2614 = vadd.f32 0.0, %v2613
    %2615 = vmatprep.mubr.f32.mxu0 0.0
    %2616 = vmatmul.mubr.f32.gmra.mxu0 %v1718
    %v2617 = vpop.f32.mrf.mxu0
    %v2618 = vadd.f32 0.0, %v2617
    %v2619 = vpop.f32.mrf.mxu0
    %v2620 = vadd.f32 0.0, %v2619
    %2621 = vmatprep.mubr.f32.mxu0 0.0
    %2622 = vmatmul.mubr.f32.gmra.mxu0 %v1721
    %v2623 = vpop.f32.mrf.mxu0
    %v2624 = vadd.f32 0.0, %v2623
    %v2625 = vpop.f32.mrf.mxu0
    %v2626 = vadd.f32 0.0, %v2625
    %2627 = vmatprep.mubr.f32.mxu0 0.0
    %2628 = vmatmul.mubr.f32.gmra.mxu0 %v1724
    %v2629 = vpop.f32.mrf.mxu0
    %v2630 = vadd.f32 0.0, %v2629
    %v2631 = vpop.f32.mrf.mxu0
    %v2632 = vadd.f32 0.0, %v2631
    %2633 = vmatprep.mubr.f32.mxu0 0.0
    %2634 = vmatmul.mubr.f32.gmra.mxu0 %v1727
    %v2635 = vpop.f32.mrf.mxu0
    %v2636 = vadd.f32 0.0, %v2635
    %v2637 = vpop.f32.mrf.mxu0
    %v2638 = vadd.f32 0.0, %v2637
    %2639 = vmatprep.mubr.f32.mxu0 0.0
    %2640 = vmatmul.mubr.f32.gmra.mxu0 %v1730
    %v2641 = vpop.f32.mrf.mxu0
    %v2642 = vadd.f32 0.0, %v2641
    %v2643 = vpop.f32.mrf.mxu0
    %v2644 = vadd.f32 0.0, %v2643
    %2645 = vmatprep.mubr.f32.mxu0 0.0
    %2646 = vmatmul.mubr.f32.gmra.mxu0 %v1733
    %v2647 = vpop.f32.mrf.mxu0
    %v2648 = vadd.f32 0.0, %v2647
    %v2649 = vpop.f32.mrf.mxu0
    %v2650 = vadd.f32 0.0, %v2649
    %2651 = vmatprep.mubr.f32.mxu0 0.0
    %2652 = vmatmul.mubr.f32.gmra.mxu0 %v1736
    %v2653 = vpop.f32.mrf.mxu0
    %v2654 = vadd.f32 0.0, %v2653
    %v2655 = vpop.f32.mrf.mxu0
    %v2656 = vadd.f32 0.0, %v2655
    %2657 = vmatprep.mubr.f32.mxu0 0.0
    %2658 = vmatmul.mubr.f32.gmra.mxu0 %v1739
    %v2659 = vpop.f32.mrf.mxu0
    %v2660 = vadd.f32 0.0, %v2659
    %v2661 = vpop.f32.mrf.mxu0
    %v2662 = vadd.f32 0.0, %v2661
    %2663 = vmatprep.mubr.f32.mxu0 0.0
    %2664 = vmatmul.mubr.f32.gmra.mxu0 %v1742
    %v2665 = vpop.f32.mrf.mxu0
    %v2666 = vadd.f32 0.0, %v2665
    %v2667 = vpop.f32.mrf.mxu0
    %v2668 = vadd.f32 0.0, %v2667
    %2669 = vmatprep.mubr.f32.mxu0 0.0
    %2670 = vmatmul.mubr.f32.gmra.mxu0 %v1745
    %v2671 = vpop.f32.mrf.mxu0
    %v2672 = vadd.f32 0.0, %v2671
    %v2673 = vpop.f32.mrf.mxu0
    %v2674 = vadd.f32 0.0, %v2673
    %2675 = vmatprep.mubr.f32.mxu0 0.0
    %2676 = vmatmul.mubr.f32.gmra.mxu0 %v1748
    %v2677 = vpop.f32.mrf.mxu0
    %v2678 = vadd.f32 0.0, %v2677
    %v2679 = vpop.f32.mrf.mxu0
    %v2680 = vadd.f32 0.0, %v2679
    %2681 = vmatprep.mubr.f32.mxu0 0.0
    %2682 = vmatmul.mubr.f32.gmra.mxu0 %v1751
    %v2683 = vpop.f32.mrf.mxu0
    %v2684 = vadd.f32 0.0, %v2683
    %v2685 = vpop.f32.mrf.mxu0
    %v2686 = vadd.f32 0.0, %v2685
    %2687 = vmatprep.mubr.f32.mxu0 0.0
    %2688 = vmatmul.mubr.f32.gmra.mxu0 %v1754
    %v2689 = vpop.f32.mrf.mxu0
    %v2690 = vadd.f32 0.0, %v2689
    %v2691 = vpop.f32.mrf.mxu0
    %v2692 = vadd.f32 0.0, %v2691
    %2693 = vmatprep.mubr.f32.mxu0 0.0
    %2694 = vmatmul.mubr.f32.gmra.mxu0 %v1757
    %v2695 = vpop.f32.mrf.mxu0
    %v2696 = vadd.f32 0.0, %v2695
    %v2697 = vpop.f32.mrf.mxu0
    %v2698 = vadd.f32 0.0, %v2697
    %2699 = vmatprep.mubr.f32.mxu0 0.0
    %2700 = vmatmul.mubr.f32.gmra.mxu0 %v1760
    %v2701 = vpop.f32.mrf.mxu0
    %v2702 = vadd.f32 0.0, %v2701
    %v2703 = vpop.f32.mrf.mxu0
    %v2704 = vadd.f32 0.0, %v2703
    %2705 = vmatprep.mubr.f32.mxu0 0.0
    %2706 = vmatmul.mubr.f32.gmra.mxu0 %v1763
    %v2707 = vpop.f32.mrf.mxu0
    %v2708 = vadd.f32 0.0, %v2707
    %v2709 = vpop.f32.mrf.mxu0
    %v2710 = vadd.f32 0.0, %v2709
    %2711 = vdwg.mxu0
    %2712 = vmatprep.subr.mxu0 0.0
    %2713 = vmatpush1.xpose.msra.mxu0 %v1907
    %2714 = vmatprep.subr.mxu0 0.0
    %2715 = vmatpush1.xpose.msra.mxu0 %v1904
    %2716 = vmatprep.subr.mxu0 0.0
    %2717 = vmatpush1.xpose.msra.mxu0 %v1901
    %2718 = vmatprep.subr.mxu0 0.0
    %2719 = vmatpush1.xpose.msra.mxu0 %v1898
    %2720 = vmatprep.subr.mxu0 0.0
    %2721 = vmatpush1.xpose.msra.mxu0 %v1895
    %2722 = vmatprep.subr.mxu0 0.0
    %2723 = vmatpush1.xpose.msra.mxu0 %v1892
    %2724 = vmatprep.subr.mxu0 0.0
    %2725 = vmatpush1.xpose.msra.mxu0 %v1889
    %2726 = vmatprep.subr.mxu0 0.0
    %2727 = vmatpush1.xpose.msra.mxu0 %v1886
    %2728 = vmatprep.subr.mxu0 0.0
    %2729 = vmatpush1.xpose.msra.mxu0 %v1883
    %2730 = vmatprep.subr.mxu0 0.0
    %2731 = vmatpush1.xpose.msra.mxu0 %v1880
    %2732 = vmatprep.subr.mxu0 0.0
    %2733 = vmatpush1.xpose.msra.mxu0 %v1877
    %2734 = vmatprep.subr.mxu0 0.0
    %2735 = vmatpush1.xpose.msra.mxu0 %v1874
    %2736 = vmatprep.subr.mxu0 0.0
    %2737 = vmatpush1.xpose.msra.mxu0 %v1871
    %2738 = vmatprep.subr.mxu0 0.0
    %2739 = vmatpush1.xpose.msra.mxu0 %v1868
    %2740 = vmatprep.subr.mxu0 0.0
    %2741 = vmatpush1.xpose.msra.mxu0 %v1865
    %2742 = vmatprep.subr.mxu0 0.0
    %2743 = vmatpush1.xpose.msra.mxu0 %v1862
    %2744 = vmatprep.subr.mxu0 0.0
    %2745 = vmatpush2.xpose.msra.mxu0 %v1955
    %2746 = vmatprep.subr.mxu0 0.0
    %2747 = vmatpush2.xpose.msra.mxu0 %v1952
    %2748 = vmatprep.subr.mxu0 0.0
    %2749 = vmatpush2.xpose.msra.mxu0 %v1949
    %2750 = vmatprep.subr.mxu0 0.0
    %2751 = vmatpush2.xpose.msra.mxu0 %v1946
    %2752 = vmatprep.subr.mxu0 0.0
    %2753 = vmatpush2.xpose.msra.mxu0 %v1943
    %2754 = vmatprep.subr.mxu0 0.0
    %2755 = vmatpush2.xpose.msra.mxu0 %v1940
    %2756 = vmatprep.subr.mxu0 0.0
    %2757 = vmatpush2.xpose.msra.mxu0 %v1937
    %2758 = vmatprep.subr.mxu0 0.0
    %2759 = vmatpush2.xpose.msra.mxu0 %v1934
    %2760 = vmatprep.subr.mxu0 0.0
    %2761 = vmatpush2.xpose.msra.mxu0 %v1931
    %2762 = vmatprep.subr.mxu0 0.0
    %2763 = vmatpush2.xpose.msra.mxu0 %v1928
    %2764 = vmatprep.subr.mxu0 0.0
    %2765 = vmatpush2.xpose.msra.mxu0 %v1925
    %2766 = vmatprep.subr.mxu0 0.0
    %2767 = vmatpush2.xpose.msra.mxu0 %v1922
    %2768 = vmatprep.subr.mxu0 0.0
    %2769 = vmatpush2.xpose.msra.mxu0 %v1919
    %2770 = vmatprep.subr.mxu0 0.0
    %2771 = vmatpush2.xpose.msra.mxu0 %v1916
    %2772 = vmatprep.subr.mxu0 0.0
    %2773 = vmatpush2.xpose.msra.mxu0 %v1913
    %2774 = vmatprep.subr.mxu0 0.0
    %2775 = vmatpush2.xpose.msra.mxu0 %v1910
    %2776 = vmatprep.mubr.f32.mxu0 0.0
    %2777 = vmatmul.mubr.f32.gmra.mxu0 %v1472
    %v2778 = vpop.f32.mrf.mxu0
    %v2779 = vadd.f32 0.0, %v2778
    %v2780 = vpop.f32.mrf.mxu0
    %v2781 = vadd.f32 0.0, %v2780
    %2782 = vmatprep.mubr.f32.mxu0 0.0
    %2783 = vmatmul.mubr.f32.gmra.mxu0 %v1475
    %v2784 = vpop.f32.mrf.mxu0
    %v2785 = vadd.f32 0.0, %v2784
    %v2786 = vpop.f32.mrf.mxu0
    %v2787 = vadd.f32 0.0, %v2786
    %2788 = vmatprep.mubr.f32.mxu0 0.0
    %2789 = vmatmul.mubr.f32.gmra.mxu0 %v1478
    %v2790 = vpop.f32.mrf.mxu0
    %v2791 = vadd.f32 0.0, %v2790
    %v2792 = vpop.f32.mrf.mxu0
    %v2793 = vadd.f32 0.0, %v2792
    %2794 = vmatprep.mubr.f32.mxu0 0.0
    %2795 = vmatmul.mubr.f32.gmra.mxu0 %v1481
    %v2796 = vpop.f32.mrf.mxu0
    %v2797 = vadd.f32 0.0, %v2796
    %v2798 = vpop.f32.mrf.mxu0
    %v2799 = vadd.f32 0.0, %v2798
    %2800 = vmatprep.mubr.f32.mxu0 0.0
    %2801 = vmatmul.mubr.f32.gmra.mxu0 %v1484
    %v2802 = vpop.f32.mrf.mxu0
    %v2803 = vadd.f32 0.0, %v2802
    %v2804 = vpop.f32.mrf.mxu0
    %v2805 = vadd.f32 0.0, %v2804
    %2806 = vmatprep.mubr.f32.mxu0 0.0
    %2807 = vmatmul.mubr.f32.gmra.mxu0 %v1487
    %v2808 = vpop.f32.mrf.mxu0
    %v2809 = vadd.f32 0.0, %v2808
    %v2810 = vpop.f32.mrf.mxu0
    %v2811 = vadd.f32 0.0, %v2810
    %2812 = vmatprep.mubr.f32.mxu0 0.0
    %2813 = vmatmul.mubr.f32.gmra.mxu0 %v1490
    %v2814 = vpop.f32.mrf.mxu0
    %v2815 = vadd.f32 0.0, %v2814
    %v2816 = vpop.f32.mrf.mxu0
    %v2817 = vadd.f32 0.0, %v2816
    %2818 = vmatprep.mubr.f32.mxu0 0.0
    %2819 = vmatmul.mubr.f32.gmra.mxu0 %v1493
    %v2820 = vpop.f32.mrf.mxu0
    %v2821 = vadd.f32 0.0, %v2820
    %v2822 = vpop.f32.mrf.mxu0
    %v2823 = vadd.f32 0.0, %v2822
    %2824 = vmatprep.mubr.f32.mxu0 0.0
    %2825 = vmatmul.mubr.f32.gmra.mxu0 %v1496
    %v2826 = vpop.f32.mrf.mxu0
    %v2827 = vadd.f32 0.0, %v2826
    %v2828 = vpop.f32.mrf.mxu0
    %v2829 = vadd.f32 0.0, %v2828
    %2830 = vmatprep.mubr.f32.mxu0 0.0
    %2831 = vmatmul.mubr.f32.gmra.mxu0 %v1499
    %v2832 = vpop.f32.mrf.mxu0
    %v2833 = vadd.f32 0.0, %v2832
    %v2834 = vpop.f32.mrf.mxu0
    %v2835 = vadd.f32 0.0, %v2834
    %2836 = vmatprep.mubr.f32.mxu0 0.0
    %2837 = vmatmul.mubr.f32.gmra.mxu0 %v1502
    %v2838 = vpop.f32.mrf.mxu0
    %v2839 = vadd.f32 0.0, %v2838
    %v2840 = vpop.f32.mrf.mxu0
    %v2841 = vadd.f32 0.0, %v2840
    %2842 = vmatprep.mubr.f32.mxu0 0.0
    %2843 = vmatmul.mubr.f32.gmra.mxu0 %v1505
    %v2844 = vpop.f32.mrf.mxu0
    %v2845 = vadd.f32 0.0, %v2844
    %v2846 = vpop.f32.mrf.mxu0
    %v2847 = vadd.f32 0.0, %v2846
    %2848 = vmatprep.mubr.f32.mxu0 0.0
    %2849 = vmatmul.mubr.f32.gmra.mxu0 %v1508
    %v2850 = vpop.f32.mrf.mxu0
    %v2851 = vadd.f32 0.0, %v2850
    %v2852 = vpop.f32.mrf.mxu0
    %v2853 = vadd.f32 0.0, %v2852
    %2854 = vmatprep.mubr.f32.mxu0 0.0
    %2855 = vmatmul.mubr.f32.gmra.mxu0 %v1511
    %v2856 = vpop.f32.mrf.mxu0
    %v2857 = vadd.f32 0.0, %v2856
    %v2858 = vpop.f32.mrf.mxu0
    %v2859 = vadd.f32 0.0, %v2858
    %2860 = vmatprep.mubr.f32.mxu0 0.0
    %2861 = vmatmul.mubr.f32.gmra.mxu0 %v1514
    %v2862 = vpop.f32.mrf.mxu0
    %v2863 = vadd.f32 0.0, %v2862
    %v2864 = vpop.f32.mrf.mxu0
    %v2865 = vadd.f32 0.0, %v2864
    %2866 = vmatprep.mubr.f32.mxu0 0.0
    %2867 = vmatmul.mubr.f32.gmra.mxu0 %v1517
    %v2868 = vpop.f32.mrf.mxu0
    %v2869 = vadd.f32 0.0, %v2868
    %v2870 = vpop.f32.mrf.mxu0
    %v2871 = vadd.f32 0.0, %v2870
    %2872 = vmatprep.mubr.f32.mxu0 0.0
    %2873 = vmatmul.mubr.f32.gmra.mxu0 %v1520
    %v2874 = vpop.f32.mrf.mxu0
    %v2875 = vadd.f32 0.0, %v2874
    %v2876 = vpop.f32.mrf.mxu0
    %v2877 = vadd.f32 0.0, %v2876
    %2878 = vmatprep.mubr.f32.mxu0 0.0
    %2879 = vmatmul.mubr.f32.gmra.mxu0 %v1523
    %v2880 = vpop.f32.mrf.mxu0
    %v2881 = vadd.f32 0.0, %v2880
    %v2882 = vpop.f32.mrf.mxu0
    %v2883 = vadd.f32 0.0, %v2882
    %2884 = vmatprep.mubr.f32.mxu0 0.0
    %2885 = vmatmul.mubr.f32.gmra.mxu0 %v1526
    %v2886 = vpop.f32.mrf.mxu0
    %v2887 = vadd.f32 0.0, %v2886
    %v2888 = vpop.f32.mrf.mxu0
    %v2889 = vadd.f32 0.0, %v2888
    %2890 = vmatprep.mubr.f32.mxu0 0.0
    %2891 = vmatmul.mubr.f32.gmra.mxu0 %v1529
    %v2892 = vpop.f32.mrf.mxu0
    %v2893 = vadd.f32 0.0, %v2892
    %v2894 = vpop.f32.mrf.mxu0
    %v2895 = vadd.f32 0.0, %v2894
    %2896 = vmatprep.mubr.f32.mxu0 0.0
    %2897 = vmatmul.mubr.f32.gmra.mxu0 %v1532
    %v2898 = vpop.f32.mrf.mxu0
    %v2899 = vadd.f32 0.0, %v2898
    %v2900 = vpop.f32.mrf.mxu0
    %v2901 = vadd.f32 0.0, %v2900
    %2902 = vmatprep.mubr.f32.mxu0 0.0
    %2903 = vmatmul.mubr.f32.gmra.mxu0 %v1535
    %v2904 = vpop.f32.mrf.mxu0
    %v2905 = vadd.f32 0.0, %v2904
    %v2906 = vpop.f32.mrf.mxu0
    %v2907 = vadd.f32 0.0, %v2906
    %2908 = vmatprep.mubr.f32.mxu0 0.0
    %2909 = vmatmul.mubr.f32.gmra.mxu0 %v1538
    %v2910 = vpop.f32.mrf.mxu0
    %v2911 = vadd.f32 0.0, %v2910
    %v2912 = vpop.f32.mrf.mxu0
    %v2913 = vadd.f32 0.0, %v2912
    %2914 = vmatprep.mubr.f32.mxu0 0.0
    %2915 = vmatmul.mubr.f32.gmra.mxu0 %v1541
    %v2916 = vpop.f32.mrf.mxu0
    %v2917 = vadd.f32 0.0, %v2916
    %v2918 = vpop.f32.mrf.mxu0
    %v2919 = vadd.f32 0.0, %v2918
    %2920 = vmatprep.mubr.f32.mxu0 0.0
    %2921 = vmatmul.mubr.f32.gmra.mxu0 %v1544
    %v2922 = vpop.f32.mrf.mxu0
    %v2923 = vadd.f32 0.0, %v2922
    %v2924 = vpop.f32.mrf.mxu0
    %v2925 = vadd.f32 0.0, %v2924
    %2926 = vmatprep.mubr.f32.mxu0 0.0
    %2927 = vmatmul.mubr.f32.gmra.mxu0 %v1547
    %v2928 = vpop.f32.mrf.mxu0
    %v2929 = vadd.f32 0.0, %v2928
    %v2930 = vpop.f32.mrf.mxu0
    %v2931 = vadd.f32 0.0, %v2930
    %2932 = vmatprep.mubr.f32.mxu0 0.0
    %2933 = vmatmul.mubr.f32.gmra.mxu0 %v1550
    %v2934 = vpop.f32.mrf.mxu0
    %v2935 = vadd.f32 0.0, %v2934
    %v2936 = vpop.f32.mrf.mxu0
    %v2937 = vadd.f32 0.0, %v2936
    %2938 = vmatprep.mubr.f32.mxu0 0.0
    %2939 = vmatmul.mubr.f32.gmra.mxu0 %v1553
    %v2940 = vpop.f32.mrf.mxu0
    %v2941 = vadd.f32 0.0, %v2940
    %v2942 = vpop.f32.mrf.mxu0
    %v2943 = vadd.f32 0.0, %v2942
    %2944 = vmatprep.mubr.f32.mxu0 0.0
    %2945 = vmatmul.mubr.f32.gmra.mxu0 %v1556
    %v2946 = vpop.f32.mrf.mxu0
    %v2947 = vadd.f32 0.0, %v2946
    %v2948 = vpop.f32.mrf.mxu0
    %v2949 = vadd.f32 0.0, %v2948
    %2950 = vmatprep.mubr.f32.mxu0 0.0
    %2951 = vmatmul.mubr.f32.gmra.mxu0 %v1559
    %v2952 = vpop.f32.mrf.mxu0
    %v2953 = vadd.f32 0.0, %v2952
    %v2954 = vpop.f32.mrf.mxu0
    %v2955 = vadd.f32 0.0, %v2954
    %2956 = vmatprep.mubr.f32.mxu0 0.0
    %2957 = vmatmul.mubr.f32.gmra.mxu0 %v1562
    %v2958 = vpop.f32.mrf.mxu0
    %v2959 = vadd.f32 0.0, %v2958
    %v2960 = vpop.f32.mrf.mxu0
    %v2961 = vadd.f32 0.0, %v2960
    %2962 = vmatprep.mubr.f32.mxu0 0.0
    %2963 = vmatmul.mubr.f32.gmra.mxu0 %v1565
    %v2964 = vpop.f32.mrf.mxu0
    %v2965 = vadd.f32 0.0, %v2964
    %v2966 = vpop.f32.mrf.mxu0
    %v2967 = vadd.f32 0.0, %v2966
    %2968 = vmatprep.mubr.f32.mxu0 0.0
    %2969 = vmatmul.mubr.f32.gmra.mxu0 %v1568
    %v2970 = vpop.f32.mrf.mxu0
    %v2971 = vadd.f32 0.0, %v2970
    %v2972 = vpop.f32.mrf.mxu0
    %v2973 = vadd.f32 0.0, %v2972
    %2974 = vmatprep.mubr.f32.mxu0 0.0
    %2975 = vmatmul.mubr.f32.gmra.mxu0 %v1571
    %v2976 = vpop.f32.mrf.mxu0
    %v2977 = vadd.f32 0.0, %v2976
    %v2978 = vpop.f32.mrf.mxu0
    %v2979 = vadd.f32 0.0, %v2978
    %2980 = vmatprep.mubr.f32.mxu0 0.0
    %2981 = vmatmul.mubr.f32.gmra.mxu0 %v1574
    %v2982 = vpop.f32.mrf.mxu0
    %v2983 = vadd.f32 0.0, %v2982
    %v2984 = vpop.f32.mrf.mxu0
    %v2985 = vadd.f32 0.0, %v2984
    %2986 = vmatprep.mubr.f32.mxu0 0.0
    %2987 = vmatmul.mubr.f32.gmra.mxu0 %v1577
    %v2988 = vpop.f32.mrf.mxu0
    %v2989 = vadd.f32 0.0, %v2988
    %v2990 = vpop.f32.mrf.mxu0
    %v2991 = vadd.f32 0.0, %v2990
    %2992 = vmatprep.mubr.f32.mxu0 0.0
    %2993 = vmatmul.mubr.f32.gmra.mxu0 %v1580
    %v2994 = vpop.f32.mrf.mxu0
    %v2995 = vadd.f32 0.0, %v2994
    %v2996 = vpop.f32.mrf.mxu0
    %v2997 = vadd.f32 0.0, %v2996
    %2998 = vmatprep.mubr.f32.mxu0 0.0
    %2999 = vmatmul.mubr.f32.gmra.mxu0 %v1583
    %v3000 = vpop.f32.mrf.mxu0
    %v3001 = vadd.f32 0.0, %v3000
    %v3002 = vpop.f32.mrf.mxu0
    %v3003 = vadd.f32 0.0, %v3002
    %3004 = vmatprep.mubr.f32.mxu0 0.0
    %3005 = vmatmul.mubr.f32.gmra.mxu0 %v1586
    %v3006 = vpop.f32.mrf.mxu0
    %v3007 = vadd.f32 0.0, %v3006
    %v3008 = vpop.f32.mrf.mxu0
    %v3009 = vadd.f32 0.0, %v3008
    %3010 = vmatprep.mubr.f32.mxu0 0.0
    %3011 = vmatmul.mubr.f32.gmra.mxu0 %v1589
    %v3012 = vpop.f32.mrf.mxu0
    %v3013 = vadd.f32 0.0, %v3012
    %v3014 = vpop.f32.mrf.mxu0
    %v3015 = vadd.f32 0.0, %v3014
    %3016 = vmatprep.mubr.f32.mxu0 0.0
    %3017 = vmatmul.mubr.f32.gmra.mxu0 %v1592
    %v3018 = vpop.f32.mrf.mxu0
    %v3019 = vadd.f32 0.0, %v3018
    %v3020 = vpop.f32.mrf.mxu0
    %v3021 = vadd.f32 0.0, %v3020
    %3022 = vmatprep.mubr.f32.mxu0 0.0
    %3023 = vmatmul.mubr.f32.gmra.mxu0 %v1595
    %v3024 = vpop.f32.mrf.mxu0
    %v3025 = vadd.f32 0.0, %v3024
    %v3026 = vpop.f32.mrf.mxu0
    %v3027 = vadd.f32 0.0, %v3026
    %3028 = vmatprep.mubr.f32.mxu0 0.0
    %3029 = vmatmul.mubr.f32.gmra.mxu0 %v1598
    %v3030 = vpop.f32.mrf.mxu0
    %v3031 = vadd.f32 0.0, %v3030
    %v3032 = vpop.f32.mrf.mxu0
    %v3033 = vadd.f32 0.0, %v3032
    %3034 = vmatprep.mubr.f32.mxu0 0.0
    %3035 = vmatmul.mubr.f32.gmra.mxu0 %v1601
    %v3036 = vpop.f32.mrf.mxu0
    %v3037 = vadd.f32 0.0, %v3036
    %v3038 = vpop.f32.mrf.mxu0
    %v3039 = vadd.f32 0.0, %v3038
    %3040 = vmatprep.mubr.f32.mxu0 0.0
    %3041 = vmatmul.mubr.f32.gmra.mxu0 %v1604
    %v3042 = vpop.f32.mrf.mxu0
    %v3043 = vadd.f32 0.0, %v3042
    %v3044 = vpop.f32.mrf.mxu0
    %v3045 = vadd.f32 0.0, %v3044
    %3046 = vmatprep.mubr.f32.mxu0 0.0
    %3047 = vmatmul.mubr.f32.gmra.mxu0 %v1607
    %v3048 = vpop.f32.mrf.mxu0
    %v3049 = vadd.f32 0.0, %v3048
    %v3050 = vpop.f32.mrf.mxu0
    %v3051 = vadd.f32 0.0, %v3050
    %3052 = vmatprep.mubr.f32.mxu0 0.0
    %3053 = vmatmul.mubr.f32.gmra.mxu0 %v1610
    %v3054 = vpop.f32.mrf.mxu0
    %v3055 = vadd.f32 0.0, %v3054
    %v3056 = vpop.f32.mrf.mxu0
    %v3057 = vadd.f32 0.0, %v3056
    %3058 = vmatprep.mubr.f32.mxu0 0.0
    %3059 = vmatmul.mubr.f32.gmra.mxu0 %v1613
    %v3060 = vpop.f32.mrf.mxu0
    %v3061 = vadd.f32 0.0, %v3060
    %v3062 = vpop.f32.mrf.mxu0
    %v3063 = vadd.f32 0.0, %v3062
    %3064 = vmatprep.mubr.f32.mxu0 0.0
    %3065 = vmatmul.mubr.f32.gmra.mxu0 %v1616
    %v3066 = vpop.f32.mrf.mxu0
    %v3067 = vadd.f32 0.0, %v3066
    %v3068 = vpop.f32.mrf.mxu0
    %v3069 = vadd.f32 0.0, %v3068
    %3070 = vmatprep.mubr.f32.mxu0 0.0
    %3071 = vmatmul.mubr.f32.gmra.mxu0 %v1619
    %v3072 = vpop.f32.mrf.mxu0
    %v3073 = vadd.f32 0.0, %v3072
    %v3074 = vpop.f32.mrf.mxu0
    %v3075 = vadd.f32 0.0, %v3074
    %3076 = vmatprep.mubr.f32.mxu0 0.0
    %3077 = vmatmul.mubr.f32.gmra.mxu0 %v1622
    %v3078 = vpop.f32.mrf.mxu0
    %v3079 = vadd.f32 0.0, %v3078
    %v3080 = vpop.f32.mrf.mxu0
    %v3081 = vadd.f32 0.0, %v3080
    %3082 = vmatprep.mubr.f32.mxu0 0.0
    %3083 = vmatmul.mubr.f32.gmra.mxu0 %v1625
    %v3084 = vpop.f32.mrf.mxu0
    %v3085 = vadd.f32 0.0, %v3084
    %v3086 = vpop.f32.mrf.mxu0
    %v3087 = vadd.f32 0.0, %v3086
    %3088 = vmatprep.mubr.f32.mxu0 0.0
    %3089 = vmatmul.mubr.f32.gmra.mxu0 %v1628
    %v3090 = vpop.f32.mrf.mxu0
    %v3091 = vadd.f32 0.0, %v3090
    %v3092 = vpop.f32.mrf.mxu0
    %v3093 = vadd.f32 0.0, %v3092
    %3094 = vmatprep.mubr.f32.mxu0 0.0
    %3095 = vmatmul.mubr.f32.gmra.mxu0 %v1631
    %v3096 = vpop.f32.mrf.mxu0
    %v3097 = vadd.f32 0.0, %v3096
    %v3098 = vpop.f32.mrf.mxu0
    %v3099 = vadd.f32 0.0, %v3098
    %3100 = vmatprep.mubr.f32.mxu0 0.0
    %3101 = vmatmul.mubr.f32.gmra.mxu0 %v1634
    %v3102 = vpop.f32.mrf.mxu0
    %v3103 = vadd.f32 0.0, %v3102
    %v3104 = vpop.f32.mrf.mxu0
    %v3105 = vadd.f32 0.0, %v3104
    %3106 = vmatprep.mubr.f32.mxu0 0.0
    %3107 = vmatmul.mubr.f32.gmra.mxu0 %v1637
    %v3108 = vpop.f32.mrf.mxu0
    %v3109 = vadd.f32 0.0, %v3108
    %v3110 = vpop.f32.mrf.mxu0
    %v3111 = vadd.f32 0.0, %v3110
    %3112 = vmatprep.mubr.f32.mxu0 0.0
    %3113 = vmatmul.mubr.f32.gmra.mxu0 %v1640
    %v3114 = vpop.f32.mrf.mxu0
    %v3115 = vadd.f32 0.0, %v3114
    %v3116 = vpop.f32.mrf.mxu0
    %v3117 = vadd.f32 0.0, %v3116
    %3118 = vmatprep.mubr.f32.mxu0 0.0
    %3119 = vmatmul.mubr.f32.gmra.mxu0 %v1643
    %v3120 = vpop.f32.mrf.mxu0
    %v3121 = vadd.f32 0.0, %v3120
    %v3122 = vpop.f32.mrf.mxu0
    %v3123 = vadd.f32 0.0, %v3122
    %3124 = vmatprep.mubr.f32.mxu0 0.0
    %3125 = vmatmul.mubr.f32.gmra.mxu0 %v1646
    %v3126 = vpop.f32.mrf.mxu0
    %v3127 = vadd.f32 0.0, %v3126
    %v3128 = vpop.f32.mrf.mxu0
    %v3129 = vadd.f32 0.0, %v3128
    %3130 = vmatprep.mubr.f32.mxu0 0.0
    %3131 = vmatmul.mubr.f32.gmra.mxu0 %v1649
    %v3132 = vpop.f32.mrf.mxu0
    %v3133 = vadd.f32 0.0, %v3132
    %v3134 = vpop.f32.mrf.mxu0
    %v3135 = vadd.f32 0.0, %v3134
    %3136 = vmatprep.mubr.f32.mxu0 0.0
    %3137 = vmatmul.mubr.f32.gmra.mxu0 %v1652
    %v3138 = vpop.f32.mrf.mxu0
    %v3139 = vadd.f32 0.0, %v3138
    %v3140 = vpop.f32.mrf.mxu0
    %v3141 = vadd.f32 0.0, %v3140
    %3142 = vmatprep.mubr.f32.mxu0 0.0
    %3143 = vmatmul.mubr.f32.gmra.mxu0 %v1655
    %v3144 = vpop.f32.mrf.mxu0
    %v3145 = vadd.f32 0.0, %v3144
    %v3146 = vpop.f32.mrf.mxu0
    %v3147 = vadd.f32 0.0, %v3146
    %3148 = vmatprep.mubr.f32.mxu0 0.0
    %3149 = vmatmul.mubr.f32.gmra.mxu0 %v1658
    %v3150 = vpop.f32.mrf.mxu0
    %v3151 = vadd.f32 0.0, %v3150
    %v3152 = vpop.f32.mrf.mxu0
    %v3153 = vadd.f32 0.0, %v3152
    %3154 = vmatprep.mubr.f32.mxu0 0.0
    %3155 = vmatmul.mubr.f32.gmra.mxu0 %v1661
    %v3156 = vpop.f32.mrf.mxu0
    %v3157 = vadd.f32 0.0, %v3156
    %v3158 = vpop.f32.mrf.mxu0
    %v3159 = vadd.f32 0.0, %v3158
    %3160 = vmatprep.mubr.f32.mxu0 0.0
    %3161 = vmatmul.mubr.f32.gmra.mxu0 %v1664
    %v3162 = vpop.f32.mrf.mxu0
    %v3163 = vadd.f32 0.0, %v3162
    %v3164 = vpop.f32.mrf.mxu0
    %v3165 = vadd.f32 0.0, %v3164
    %3166 = vmatprep.mubr.f32.mxu0 0.0
    %3167 = vmatmul.mubr.f32.gmra.mxu0 %v1667
    %v3168 = vpop.f32.mrf.mxu0
    %v3169 = vadd.f32 0.0, %v3168
    %v3170 = vpop.f32.mrf.mxu0
    %v3171 = vadd.f32 0.0, %v3170
    %3172 = vmatprep.mubr.f32.mxu0 0.0
    %3173 = vmatmul.mubr.f32.gmra.mxu0 %v1670
    %v3174 = vpop.f32.mrf.mxu0
    %v3175 = vadd.f32 0.0, %v3174
    %v3176 = vpop.f32.mrf.mxu0
    %v3177 = vadd.f32 0.0, %v3176
    %3178 = vmatprep.mubr.f32.mxu0 0.0
    %3179 = vmatmul.mubr.f32.gmra.mxu0 %v1673
    %v3180 = vpop.f32.mrf.mxu0
    %v3181 = vadd.f32 0.0, %v3180
    %v3182 = vpop.f32.mrf.mxu0
    %v3183 = vadd.f32 0.0, %v3182
    %3184 = vmatprep.mubr.f32.mxu0 0.0
    %3185 = vmatmul.mubr.f32.gmra.mxu0 %v1676
    %v3186 = vpop.f32.mrf.mxu0
    %v3187 = vadd.f32 0.0, %v3186
    %v3188 = vpop.f32.mrf.mxu0
    %v3189 = vadd.f32 0.0, %v3188
    %3190 = vmatprep.mubr.f32.mxu0 0.0
    %3191 = vmatmul.mubr.f32.gmra.mxu0 %v1679
    %v3192 = vpop.f32.mrf.mxu0
    %v3193 = vadd.f32 0.0, %v3192
    %v3194 = vpop.f32.mrf.mxu0
    %v3195 = vadd.f32 0.0, %v3194
    %3196 = vmatprep.mubr.f32.mxu0 0.0
    %3197 = vmatmul.mubr.f32.gmra.mxu0 %v1682
    %v3198 = vpop.f32.mrf.mxu0
    %v3199 = vadd.f32 0.0, %v3198
    %v3200 = vpop.f32.mrf.mxu0
    %v3201 = vadd.f32 0.0, %v3200
    %3202 = vmatprep.mubr.f32.mxu0 0.0
    %3203 = vmatmul.mubr.f32.gmra.mxu0 %v1685
    %v3204 = vpop.f32.mrf.mxu0
    %v3205 = vadd.f32 0.0, %v3204
    %v3206 = vpop.f32.mrf.mxu0
    %v3207 = vadd.f32 0.0, %v3206
    %3208 = vmatprep.mubr.f32.mxu0 0.0
    %3209 = vmatmul.mubr.f32.gmra.mxu0 %v1688
    %v3210 = vpop.f32.mrf.mxu0
    %v3211 = vadd.f32 0.0, %v3210
    %v3212 = vpop.f32.mrf.mxu0
    %v3213 = vadd.f32 0.0, %v3212
    %3214 = vmatprep.mubr.f32.mxu0 0.0
    %3215 = vmatmul.mubr.f32.gmra.mxu0 %v1691
    %v3216 = vpop.f32.mrf.mxu0
    %v3217 = vadd.f32 0.0, %v3216
    %v3218 = vpop.f32.mrf.mxu0
    %v3219 = vadd.f32 0.0, %v3218
    %3220 = vmatprep.mubr.f32.mxu0 0.0
    %3221 = vmatmul.mubr.f32.gmra.mxu0 %v1694
    %v3222 = vpop.f32.mrf.mxu0
    %v3223 = vadd.f32 0.0, %v3222
    %v3224 = vpop.f32.mrf.mxu0
    %v3225 = vadd.f32 0.0, %v3224
    %3226 = vmatprep.mubr.f32.mxu0 0.0
    %3227 = vmatmul.mubr.f32.gmra.mxu0 %v1697
    %v3228 = vpop.f32.mrf.mxu0
    %v3229 = vadd.f32 0.0, %v3228
    %v3230 = vpop.f32.mrf.mxu0
    %v3231 = vadd.f32 0.0, %v3230
    %3232 = vmatprep.mubr.f32.mxu0 0.0
    %3233 = vmatmul.mubr.f32.gmra.mxu0 %v1700
    %v3234 = vpop.f32.mrf.mxu0
    %v3235 = vadd.f32 0.0, %v3234
    %v3236 = vpop.f32.mrf.mxu0
    %v3237 = vadd.f32 0.0, %v3236
    %3238 = vmatprep.mubr.f32.mxu0 0.0
    %3239 = vmatmul.mubr.f32.gmra.mxu0 %v1703
    %v3240 = vpop.f32.mrf.mxu0
    %v3241 = vadd.f32 0.0, %v3240
    %v3242 = vpop.f32.mrf.mxu0
    %v3243 = vadd.f32 0.0, %v3242
    %3244 = vmatprep.mubr.f32.mxu0 0.0
    %3245 = vmatmul.mubr.f32.gmra.mxu0 %v1706
    %v3246 = vpop.f32.mrf.mxu0
    %v3247 = vadd.f32 0.0, %v3246
    %v3248 = vpop.f32.mrf.mxu0
    %v3249 = vadd.f32 0.0, %v3248
    %3250 = vmatprep.mubr.f32.mxu0 0.0
    %3251 = vmatmul.mubr.f32.gmra.mxu0 %v1709
    %v3252 = vpop.f32.mrf.mxu0
    %v3253 = vadd.f32 0.0, %v3252
    %v3254 = vpop.f32.mrf.mxu0
    %v3255 = vadd.f32 0.0, %v3254
    %3256 = vmatprep.mubr.f32.mxu0 0.0
    %3257 = vmatmul.mubr.f32.gmra.mxu0 %v1712
    %v3258 = vpop.f32.mrf.mxu0
    %v3259 = vadd.f32 0.0, %v3258
    %v3260 = vpop.f32.mrf.mxu0
    %v3261 = vadd.f32 0.0, %v3260
    %3262 = vmatprep.mubr.f32.mxu0 0.0
    %3263 = vmatmul.mubr.f32.gmra.mxu0 %v1715
    %v3264 = vpop.f32.mrf.mxu0
    %v3265 = vadd.f32 0.0, %v3264
    %v3266 = vpop.f32.mrf.mxu0
    %v3267 = vadd.f32 0.0, %v3266
    %3268 = vmatprep.mubr.f32.mxu0 0.0
    %3269 = vmatmul.mubr.f32.gmra.mxu0 %v1718
    %v3270 = vpop.f32.mrf.mxu0
    %v3271 = vadd.f32 0.0, %v3270
    %v3272 = vpop.f32.mrf.mxu0
    %v3273 = vadd.f32 0.0, %v3272
    %3274 = vmatprep.mubr.f32.mxu0 0.0
    %3275 = vmatmul.mubr.f32.gmra.mxu0 %v1721
    %v3276 = vpop.f32.mrf.mxu0
    %v3277 = vadd.f32 0.0, %v3276
    %v3278 = vpop.f32.mrf.mxu0
    %v3279 = vadd.f32 0.0, %v3278
    %3280 = vmatprep.mubr.f32.mxu0 0.0
    %3281 = vmatmul.mubr.f32.gmra.mxu0 %v1724
    %v3282 = vpop.f32.mrf.mxu0
    %v3283 = vadd.f32 0.0, %v3282
    %v3284 = vpop.f32.mrf.mxu0
    %v3285 = vadd.f32 0.0, %v3284
    %3286 = vmatprep.mubr.f32.mxu0 0.0
    %3287 = vmatmul.mubr.f32.gmra.mxu0 %v1727
    %v3288 = vpop.f32.mrf.mxu0
    %v3289 = vadd.f32 0.0, %v3288
    %v3290 = vpop.f32.mrf.mxu0
    %v3291 = vadd.f32 0.0, %v3290
    %3292 = vmatprep.mubr.f32.mxu0 0.0
    %3293 = vmatmul.mubr.f32.gmra.mxu0 %v1730
    %v3294 = vpop.f32.mrf.mxu0
    %v3295 = vadd.f32 0.0, %v3294
    %v3296 = vpop.f32.mrf.mxu0
    %v3297 = vadd.f32 0.0, %v3296
    %3298 = vmatprep.mubr.f32.mxu0 0.0
    %3299 = vmatmul.mubr.f32.gmra.mxu0 %v1733
    %v3300 = vpop.f32.mrf.mxu0
    %v3301 = vadd.f32 0.0, %v3300
    %v3302 = vpop.f32.mrf.mxu0
    %v3303 = vadd.f32 0.0, %v3302
    %3304 = vmatprep.mubr.f32.mxu0 0.0
    %3305 = vmatmul.mubr.f32.gmra.mxu0 %v1736
    %v3306 = vpop.f32.mrf.mxu0
    %v3307 = vadd.f32 0.0, %v3306
    %v3308 = vpop.f32.mrf.mxu0
    %v3309 = vadd.f32 0.0, %v3308
    %3310 = vmatprep.mubr.f32.mxu0 0.0
    %3311 = vmatmul.mubr.f32.gmra.mxu0 %v1739
    %v3312 = vpop.f32.mrf.mxu0
    %v3313 = vadd.f32 0.0, %v3312
    %v3314 = vpop.f32.mrf.mxu0
    %v3315 = vadd.f32 0.0, %v3314
    %3316 = vmatprep.mubr.f32.mxu0 0.0
    %3317 = vmatmul.mubr.f32.gmra.mxu0 %v1742
    %v3318 = vpop.f32.mrf.mxu0
    %v3319 = vadd.f32 0.0, %v3318
    %v3320 = vpop.f32.mrf.mxu0
    %v3321 = vadd.f32 0.0, %v3320
    %3322 = vmatprep.mubr.f32.mxu0 0.0
    %3323 = vmatmul.mubr.f32.gmra.mxu0 %v1745
    %v3324 = vpop.f32.mrf.mxu0
    %v3325 = vadd.f32 0.0, %v3324
    %v3326 = vpop.f32.mrf.mxu0
    %v3327 = vadd.f32 0.0, %v3326
    %3328 = vmatprep.mubr.f32.mxu0 0.0
    %3329 = vmatmul.mubr.f32.gmra.mxu0 %v1748
    %v3330 = vpop.f32.mrf.mxu0
    %v3331 = vadd.f32 0.0, %v3330
    %v3332 = vpop.f32.mrf.mxu0
    %v3333 = vadd.f32 0.0, %v3332
    %3334 = vmatprep.mubr.f32.mxu0 0.0
    %3335 = vmatmul.mubr.f32.gmra.mxu0 %v1751
    %v3336 = vpop.f32.mrf.mxu0
    %v3337 = vadd.f32 0.0, %v3336
    %v3338 = vpop.f32.mrf.mxu0
    %v3339 = vadd.f32 0.0, %v3338
    %3340 = vmatprep.mubr.f32.mxu0 0.0
    %3341 = vmatmul.mubr.f32.gmra.mxu0 %v1754
    %v3342 = vpop.f32.mrf.mxu0
    %v3343 = vadd.f32 0.0, %v3342
    %v3344 = vpop.f32.mrf.mxu0
    %v3345 = vadd.f32 0.0, %v3344
    %3346 = vmatprep.mubr.f32.mxu0 0.0
    %3347 = vmatmul.mubr.f32.gmra.mxu0 %v1757
    %v3348 = vpop.f32.mrf.mxu0
    %v3349 = vadd.f32 0.0, %v3348
    %v3350 = vpop.f32.mrf.mxu0
    %v3351 = vadd.f32 0.0, %v3350
    %3352 = vmatprep.mubr.f32.mxu0 0.0
    %3353 = vmatmul.mubr.f32.gmra.mxu0 %v1760
    %v3354 = vpop.f32.mrf.mxu0
    %v3355 = vadd.f32 0.0, %v3354
    %v3356 = vpop.f32.mrf.mxu0
    %v3357 = vadd.f32 0.0, %v3356
    %3358 = vmatprep.mubr.f32.mxu0 0.0
    %3359 = vmatmul.mubr.f32.gmra.mxu0 %v1763
    %v3360 = vpop.f32.mrf.mxu0
    %v3361 = vadd.f32 0.0, %v3360
    %v3362 = vpop.f32.mrf.mxu0
    %v3363 = vadd.f32 0.0, %v3362
    %3364 = vdwg.mxu0
    %3365 = vmatprep.subr.mxu0 0.0
    %3366 = vmatpush1.xpose.msra.mxu0 %v2003
    %3367 = vmatprep.subr.mxu0 0.0
    %3368 = vmatpush1.xpose.msra.mxu0 %v2000
    %3369 = vmatprep.subr.mxu0 0.0
    %3370 = vmatpush1.xpose.msra.mxu0 %v1997
    %3371 = vmatprep.subr.mxu0 0.0
    %3372 = vmatpush1.xpose.msra.mxu0 %v1994
    %3373 = vmatprep.subr.mxu0 0.0
    %3374 = vmatpush1.xpose.msra.mxu0 %v1991
    %3375 = vmatprep.subr.mxu0 0.0
    %3376 = vmatpush1.xpose.msra.mxu0 %v1988
    %3377 = vmatprep.subr.mxu0 0.0
    %3378 = vmatpush1.xpose.msra.mxu0 %v1985
    %3379 = vmatprep.subr.mxu0 0.0
    %3380 = vmatpush1.xpose.msra.mxu0 %v1982
    %3381 = vmatprep.subr.mxu0 0.0
    %3382 = vmatpush1.xpose.msra.mxu0 %v1979
    %3383 = vmatprep.subr.mxu0 0.0
    %3384 = vmatpush1.xpose.msra.mxu0 %v1976
    %3385 = vmatprep.subr.mxu0 0.0
    %3386 = vmatpush1.xpose.msra.mxu0 %v1973
    %3387 = vmatprep.subr.mxu0 0.0
    %3388 = vmatpush1.xpose.msra.mxu0 %v1970
    %3389 = vmatprep.subr.mxu0 0.0
    %3390 = vmatpush1.xpose.msra.mxu0 %v1967
    %3391 = vmatprep.subr.mxu0 0.0
    %3392 = vmatpush1.xpose.msra.mxu0 %v1964
    %3393 = vmatprep.subr.mxu0 0.0
    %3394 = vmatpush1.xpose.msra.mxu0 %v1961
    %3395 = vmatprep.subr.mxu0 0.0
    %3396 = vmatpush1.xpose.msra.mxu0 %v1958
    %3397 = vmatprep.subr.mxu0 0.0
    %3398 = vmatpush2.xpose.msra.mxu0 %v2051
    %3399 = vmatprep.subr.mxu0 0.0
    %3400 = vmatpush2.xpose.msra.mxu0 %v2048
    %3401 = vmatprep.subr.mxu0 0.0
    %3402 = vmatpush2.xpose.msra.mxu0 %v2045
    %3403 = vmatprep.subr.mxu0 0.0
    %3404 = vmatpush2.xpose.msra.mxu0 %v2042
    %3405 = vmatprep.subr.mxu0 0.0
    %3406 = vmatpush2.xpose.msra.mxu0 %v2039
    %3407 = vmatprep.subr.mxu0 0.0
    %3408 = vmatpush2.xpose.msra.mxu0 %v2036
    %3409 = vmatprep.subr.mxu0 0.0
    %3410 = vmatpush2.xpose.msra.mxu0 %v2033
    %3411 = vmatprep.subr.mxu0 0.0
    %3412 = vmatpush2.xpose.msra.mxu0 %v2030
    %3413 = vmatprep.subr.mxu0 0.0
    %3414 = vmatpush2.xpose.msra.mxu0 %v2027
    %3415 = vmatprep.subr.mxu0 0.0
    %3416 = vmatpush2.xpose.msra.mxu0 %v2024
    %3417 = vmatprep.subr.mxu0 0.0
    %3418 = vmatpush2.xpose.msra.mxu0 %v2021
    %3419 = vmatprep.subr.mxu0 0.0
    %3420 = vmatpush2.xpose.msra.mxu0 %v2018
    %3421 = vmatprep.subr.mxu0 0.0
    %3422 = vmatpush2.xpose.msra.mxu0 %v2015
    %3423 = vmatprep.subr.mxu0 0.0
    %3424 = vmatpush2.xpose.msra.mxu0 %v2012
    %3425 = vmatprep.subr.mxu0 0.0
    %3426 = vmatpush2.xpose.msra.mxu0 %v2009
    %3427 = vmatprep.subr.mxu0 0.0
    %3428 = vmatpush2.xpose.msra.mxu0 %v2006
    %3429 = vmatprep.mubr.f32.mxu0 0.0
    %3430 = vmatmul.mubr.f32.gmra.mxu0 %v1472
    %v3431 = vpop.f32.mrf.mxu0
    %v3432 = vadd.f32 0.0, %v3431
    %v3433 = vpop.f32.mrf.mxu0
    %v3434 = vadd.f32 0.0, %v3433
    %3435 = vmatprep.mubr.f32.mxu0 0.0
    %3436 = vmatmul.mubr.f32.gmra.mxu0 %v1475
    %v3437 = vpop.f32.mrf.mxu0
    %v3438 = vadd.f32 0.0, %v3437
    %v3439 = vpop.f32.mrf.mxu0
    %v3440 = vadd.f32 0.0, %v3439
    %3441 = vmatprep.mubr.f32.mxu0 0.0
    %3442 = vmatmul.mubr.f32.gmra.mxu0 %v1478
    %v3443 = vpop.f32.mrf.mxu0
    %v3444 = vadd.f32 0.0, %v3443
    %v3445 = vpop.f32.mrf.mxu0
    %v3446 = vadd.f32 0.0, %v3445
    %3447 = vmatprep.mubr.f32.mxu0 0.0
    %3448 = vmatmul.mubr.f32.gmra.mxu0 %v1481
    %v3449 = vpop.f32.mrf.mxu0
    %v3450 = vadd.f32 0.0, %v3449
    %v3451 = vpop.f32.mrf.mxu0
    %v3452 = vadd.f32 0.0, %v3451
    %3453 = vmatprep.mubr.f32.mxu0 0.0
    %3454 = vmatmul.mubr.f32.gmra.mxu0 %v1484
    %v3455 = vpop.f32.mrf.mxu0
    %v3456 = vadd.f32 0.0, %v3455
    %v3457 = vpop.f32.mrf.mxu0
    %v3458 = vadd.f32 0.0, %v3457
    %3459 = vmatprep.mubr.f32.mxu0 0.0
    %3460 = vmatmul.mubr.f32.gmra.mxu0 %v1487
    %v3461 = vpop.f32.mrf.mxu0
    %v3462 = vadd.f32 0.0, %v3461
    %v3463 = vpop.f32.mrf.mxu0
    %v3464 = vadd.f32 0.0, %v3463
    %3465 = vmatprep.mubr.f32.mxu0 0.0
    %3466 = vmatmul.mubr.f32.gmra.mxu0 %v1490
    %v3467 = vpop.f32.mrf.mxu0
    %v3468 = vadd.f32 0.0, %v3467
    %v3469 = vpop.f32.mrf.mxu0
    %v3470 = vadd.f32 0.0, %v3469
    %3471 = vmatprep.mubr.f32.mxu0 0.0
    %3472 = vmatmul.mubr.f32.gmra.mxu0 %v1493
    %v3473 = vpop.f32.mrf.mxu0
    %v3474 = vadd.f32 0.0, %v3473
    %v3475 = vpop.f32.mrf.mxu0
    %v3476 = vadd.f32 0.0, %v3475
    %3477 = vmatprep.mubr.f32.mxu0 0.0
    %3478 = vmatmul.mubr.f32.gmra.mxu0 %v1496
    %v3479 = vpop.f32.mrf.mxu0
    %v3480 = vadd.f32 0.0, %v3479
    %v3481 = vpop.f32.mrf.mxu0
    %v3482 = vadd.f32 0.0, %v3481
    %3483 = vmatprep.mubr.f32.mxu0 0.0
    %3484 = vmatmul.mubr.f32.gmra.mxu0 %v1499
    %v3485 = vpop.f32.mrf.mxu0
    %v3486 = vadd.f32 0.0, %v3485
    %v3487 = vpop.f32.mrf.mxu0
    %v3488 = vadd.f32 0.0, %v3487
    %3489 = vmatprep.mubr.f32.mxu0 0.0
    %3490 = vmatmul.mubr.f32.gmra.mxu0 %v1502
    %v3491 = vpop.f32.mrf.mxu0
    %v3492 = vadd.f32 0.0, %v3491
    %v3493 = vpop.f32.mrf.mxu0
    %v3494 = vadd.f32 0.0, %v3493
    %3495 = vmatprep.mubr.f32.mxu0 0.0
    %3496 = vmatmul.mubr.f32.gmra.mxu0 %v1505
    %v3497 = vpop.f32.mrf.mxu0
    %v3498 = vadd.f32 0.0, %v3497
    %v3499 = vpop.f32.mrf.mxu0
    %v3500 = vadd.f32 0.0, %v3499
    %3501 = vmatprep.mubr.f32.mxu0 0.0
    %3502 = vmatmul.mubr.f32.gmra.mxu0 %v1508
    %v3503 = vpop.f32.mrf.mxu0
    %v3504 = vadd.f32 0.0, %v3503
    %v3505 = vpop.f32.mrf.mxu0
    %v3506 = vadd.f32 0.0, %v3505
    %3507 = vmatprep.mubr.f32.mxu0 0.0
    %3508 = vmatmul.mubr.f32.gmra.mxu0 %v1511
    %v3509 = vpop.f32.mrf.mxu0
    %v3510 = vadd.f32 0.0, %v3509
    %v3511 = vpop.f32.mrf.mxu0
    %v3512 = vadd.f32 0.0, %v3511
    %3513 = vmatprep.mubr.f32.mxu0 0.0
    %3514 = vmatmul.mubr.f32.gmra.mxu0 %v1514
    %v3515 = vpop.f32.mrf.mxu0
    %v3516 = vadd.f32 0.0, %v3515
    %v3517 = vpop.f32.mrf.mxu0
    %v3518 = vadd.f32 0.0, %v3517
    %3519 = vmatprep.mubr.f32.mxu0 0.0
    %3520 = vmatmul.mubr.f32.gmra.mxu0 %v1517
    %v3521 = vpop.f32.mrf.mxu0
    %v3522 = vadd.f32 0.0, %v3521
    %v3523 = vpop.f32.mrf.mxu0
    %v3524 = vadd.f32 0.0, %v3523
    %3525 = vmatprep.mubr.f32.mxu0 0.0
    %3526 = vmatmul.mubr.f32.gmra.mxu0 %v1520
    %v3527 = vpop.f32.mrf.mxu0
    %v3528 = vadd.f32 0.0, %v3527
    %v3529 = vpop.f32.mrf.mxu0
    %v3530 = vadd.f32 0.0, %v3529
    %3531 = vmatprep.mubr.f32.mxu0 0.0
    %3532 = vmatmul.mubr.f32.gmra.mxu0 %v1523
    %v3533 = vpop.f32.mrf.mxu0
    %v3534 = vadd.f32 0.0, %v3533
    %v3535 = vpop.f32.mrf.mxu0
    %v3536 = vadd.f32 0.0, %v3535
    %3537 = vmatprep.mubr.f32.mxu0 0.0
    %3538 = vmatmul.mubr.f32.gmra.mxu0 %v1526
    %v3539 = vpop.f32.mrf.mxu0
    %v3540 = vadd.f32 0.0, %v3539
    %v3541 = vpop.f32.mrf.mxu0
    %v3542 = vadd.f32 0.0, %v3541
    %3543 = vmatprep.mubr.f32.mxu0 0.0
    %3544 = vmatmul.mubr.f32.gmra.mxu0 %v1529
    %v3545 = vpop.f32.mrf.mxu0
    %v3546 = vadd.f32 0.0, %v3545
    %v3547 = vpop.f32.mrf.mxu0
    %v3548 = vadd.f32 0.0, %v3547
    %3549 = vmatprep.mubr.f32.mxu0 0.0
    %3550 = vmatmul.mubr.f32.gmra.mxu0 %v1532
    %v3551 = vpop.f32.mrf.mxu0
    %v3552 = vadd.f32 0.0, %v3551
    %v3553 = vpop.f32.mrf.mxu0
    %v3554 = vadd.f32 0.0, %v3553
    %3555 = vmatprep.mubr.f32.mxu0 0.0
    %3556 = vmatmul.mubr.f32.gmra.mxu0 %v1535
    %v3557 = vpop.f32.mrf.mxu0
    %v3558 = vadd.f32 0.0, %v3557
    %v3559 = vpop.f32.mrf.mxu0
    %v3560 = vadd.f32 0.0, %v3559
    %3561 = vmatprep.mubr.f32.mxu0 0.0
    %3562 = vmatmul.mubr.f32.gmra.mxu0 %v1538
    %v3563 = vpop.f32.mrf.mxu0
    %v3564 = vadd.f32 0.0, %v3563
    %v3565 = vpop.f32.mrf.mxu0
    %v3566 = vadd.f32 0.0, %v3565
    %3567 = vmatprep.mubr.f32.mxu0 0.0
    %3568 = vmatmul.mubr.f32.gmra.mxu0 %v1541
    %v3569 = vpop.f32.mrf.mxu0
    %v3570 = vadd.f32 0.0, %v3569
    %v3571 = vpop.f32.mrf.mxu0
    %v3572 = vadd.f32 0.0, %v3571
    %3573 = vmatprep.mubr.f32.mxu0 0.0
    %3574 = vmatmul.mubr.f32.gmra.mxu0 %v1544
    %v3575 = vpop.f32.mrf.mxu0
    %v3576 = vadd.f32 0.0, %v3575
    %v3577 = vpop.f32.mrf.mxu0
    %v3578 = vadd.f32 0.0, %v3577
    %3579 = vmatprep.mubr.f32.mxu0 0.0
    %3580 = vmatmul.mubr.f32.gmra.mxu0 %v1547
    %v3581 = vpop.f32.mrf.mxu0
    %v3582 = vadd.f32 0.0, %v3581
    %v3583 = vpop.f32.mrf.mxu0
    %v3584 = vadd.f32 0.0, %v3583
    %3585 = vmatprep.mubr.f32.mxu0 0.0
    %3586 = vmatmul.mubr.f32.gmra.mxu0 %v1550
    %v3587 = vpop.f32.mrf.mxu0
    %v3588 = vadd.f32 0.0, %v3587
    %v3589 = vpop.f32.mrf.mxu0
    %v3590 = vadd.f32 0.0, %v3589
    %3591 = vmatprep.mubr.f32.mxu0 0.0
    %3592 = vmatmul.mubr.f32.gmra.mxu0 %v1553
    %v3593 = vpop.f32.mrf.mxu0
    %v3594 = vadd.f32 0.0, %v3593
    %v3595 = vpop.f32.mrf.mxu0
    %v3596 = vadd.f32 0.0, %v3595
    %3597 = vmatprep.mubr.f32.mxu0 0.0
    %3598 = vmatmul.mubr.f32.gmra.mxu0 %v1556
    %v3599 = vpop.f32.mrf.mxu0
    %v3600 = vadd.f32 0.0, %v3599
    %v3601 = vpop.f32.mrf.mxu0
    %v3602 = vadd.f32 0.0, %v3601
    %3603 = vmatprep.mubr.f32.mxu0 0.0
    %3604 = vmatmul.mubr.f32.gmra.mxu0 %v1559
    %v3605 = vpop.f32.mrf.mxu0
    %v3606 = vadd.f32 0.0, %v3605
    %v3607 = vpop.f32.mrf.mxu0
    %v3608 = vadd.f32 0.0, %v3607
    %3609 = vmatprep.mubr.f32.mxu0 0.0
    %3610 = vmatmul.mubr.f32.gmra.mxu0 %v1562
    %v3611 = vpop.f32.mrf.mxu0
    %v3612 = vadd.f32 0.0, %v3611
    %v3613 = vpop.f32.mrf.mxu0
    %v3614 = vadd.f32 0.0, %v3613
    %3615 = vmatprep.mubr.f32.mxu0 0.0
    %3616 = vmatmul.mubr.f32.gmra.mxu0 %v1565
    %v3617 = vpop.f32.mrf.mxu0
    %v3618 = vadd.f32 0.0, %v3617
    %v3619 = vpop.f32.mrf.mxu0
    %v3620 = vadd.f32 0.0, %v3619
    %3621 = vmatprep.mubr.f32.mxu0 0.0
    %3622 = vmatmul.mubr.f32.gmra.mxu0 %v1568
    %v3623 = vpop.f32.mrf.mxu0
    %v3624 = vadd.f32 0.0, %v3623
    %v3625 = vpop.f32.mrf.mxu0
    %v3626 = vadd.f32 0.0, %v3625
    %3627 = vmatprep.mubr.f32.mxu0 0.0
    %3628 = vmatmul.mubr.f32.gmra.mxu0 %v1571
    %v3629 = vpop.f32.mrf.mxu0
    %v3630 = vadd.f32 0.0, %v3629
    %v3631 = vpop.f32.mrf.mxu0
    %v3632 = vadd.f32 0.0, %v3631
    %3633 = vmatprep.mubr.f32.mxu0 0.0
    %3634 = vmatmul.mubr.f32.gmra.mxu0 %v1574
    %v3635 = vpop.f32.mrf.mxu0
    %v3636 = vadd.f32 0.0, %v3635
    %v3637 = vpop.f32.mrf.mxu0
    %v3638 = vadd.f32 0.0, %v3637
    %3639 = vmatprep.mubr.f32.mxu0 0.0
    %3640 = vmatmul.mubr.f32.gmra.mxu0 %v1577
    %v3641 = vpop.f32.mrf.mxu0
    %v3642 = vadd.f32 0.0, %v3641
    %v3643 = vpop.f32.mrf.mxu0
    %v3644 = vadd.f32 0.0, %v3643
    %3645 = vmatprep.mubr.f32.mxu0 0.0
    %3646 = vmatmul.mubr.f32.gmra.mxu0 %v1580
    %v3647 = vpop.f32.mrf.mxu0
    %v3648 = vadd.f32 0.0, %v3647
    %v3649 = vpop.f32.mrf.mxu0
    %v3650 = vadd.f32 0.0, %v3649
    %3651 = vmatprep.mubr.f32.mxu0 0.0
    %3652 = vmatmul.mubr.f32.gmra.mxu0 %v1583
    %v3653 = vpop.f32.mrf.mxu0
    %v3654 = vadd.f32 0.0, %v3653
    %v3655 = vpop.f32.mrf.mxu0
    %v3656 = vadd.f32 0.0, %v3655
    %3657 = vmatprep.mubr.f32.mxu0 0.0
    %3658 = vmatmul.mubr.f32.gmra.mxu0 %v1586
    %v3659 = vpop.f32.mrf.mxu0
    %v3660 = vadd.f32 0.0, %v3659
    %v3661 = vpop.f32.mrf.mxu0
    %v3662 = vadd.f32 0.0, %v3661
    %3663 = vmatprep.mubr.f32.mxu0 0.0
    %3664 = vmatmul.mubr.f32.gmra.mxu0 %v1589
    %v3665 = vpop.f32.mrf.mxu0
    %v3666 = vadd.f32 0.0, %v3665
    %v3667 = vpop.f32.mrf.mxu0
    %v3668 = vadd.f32 0.0, %v3667
    %3669 = vmatprep.mubr.f32.mxu0 0.0
    %3670 = vmatmul.mubr.f32.gmra.mxu0 %v1592
    %v3671 = vpop.f32.mrf.mxu0
    %v3672 = vadd.f32 0.0, %v3671
    %v3673 = vpop.f32.mrf.mxu0
    %v3674 = vadd.f32 0.0, %v3673
    %3675 = vmatprep.mubr.f32.mxu0 0.0
    %3676 = vmatmul.mubr.f32.gmra.mxu0 %v1595
    %v3677 = vpop.f32.mrf.mxu0
    %v3678 = vadd.f32 0.0, %v3677
    %v3679 = vpop.f32.mrf.mxu0
    %v3680 = vadd.f32 0.0, %v3679
    %3681 = vmatprep.mubr.f32.mxu0 0.0
    %3682 = vmatmul.mubr.f32.gmra.mxu0 %v1598
    %v3683 = vpop.f32.mrf.mxu0
    %v3684 = vadd.f32 0.0, %v3683
    %v3685 = vpop.f32.mrf.mxu0
    %v3686 = vadd.f32 0.0, %v3685
    %3687 = vmatprep.mubr.f32.mxu0 0.0
    %3688 = vmatmul.mubr.f32.gmra.mxu0 %v1601
    %v3689 = vpop.f32.mrf.mxu0
    %v3690 = vadd.f32 0.0, %v3689
    %v3691 = vpop.f32.mrf.mxu0
    %v3692 = vadd.f32 0.0, %v3691
    %3693 = vmatprep.mubr.f32.mxu0 0.0
    %3694 = vmatmul.mubr.f32.gmra.mxu0 %v1604
    %v3695 = vpop.f32.mrf.mxu0
    %v3696 = vadd.f32 0.0, %v3695
    %v3697 = vpop.f32.mrf.mxu0
    %v3698 = vadd.f32 0.0, %v3697
    %3699 = vmatprep.mubr.f32.mxu0 0.0
    %3700 = vmatmul.mubr.f32.gmra.mxu0 %v1607
    %v3701 = vpop.f32.mrf.mxu0
    %v3702 = vadd.f32 0.0, %v3701
    %v3703 = vpop.f32.mrf.mxu0
    %v3704 = vadd.f32 0.0, %v3703
    %3705 = vmatprep.mubr.f32.mxu0 0.0
    %3706 = vmatmul.mubr.f32.gmra.mxu0 %v1610
    %v3707 = vpop.f32.mrf.mxu0
    %v3708 = vadd.f32 0.0, %v3707
    %v3709 = vpop.f32.mrf.mxu0
    %v3710 = vadd.f32 0.0, %v3709
    %3711 = vmatprep.mubr.f32.mxu0 0.0
    %3712 = vmatmul.mubr.f32.gmra.mxu0 %v1613
    %v3713 = vpop.f32.mrf.mxu0
    %v3714 = vadd.f32 0.0, %v3713
    %v3715 = vpop.f32.mrf.mxu0
    %v3716 = vadd.f32 0.0, %v3715
    %3717 = vmatprep.mubr.f32.mxu0 0.0
    %3718 = vmatmul.mubr.f32.gmra.mxu0 %v1616
    %v3719 = vpop.f32.mrf.mxu0
    %v3720 = vadd.f32 0.0, %v3719
    %v3721 = vpop.f32.mrf.mxu0
    %v3722 = vadd.f32 0.0, %v3721
    %3723 = vmatprep.mubr.f32.mxu0 0.0
    %3724 = vmatmul.mubr.f32.gmra.mxu0 %v1619
    %v3725 = vpop.f32.mrf.mxu0
    %v3726 = vadd.f32 0.0, %v3725
    %v3727 = vpop.f32.mrf.mxu0
    %v3728 = vadd.f32 0.0, %v3727
    %3729 = vmatprep.mubr.f32.mxu0 0.0
    %3730 = vmatmul.mubr.f32.gmra.mxu0 %v1622
    %v3731 = vpop.f32.mrf.mxu0
    %v3732 = vadd.f32 0.0, %v3731
    %v3733 = vpop.f32.mrf.mxu0
    %v3734 = vadd.f32 0.0, %v3733
    %3735 = vmatprep.mubr.f32.mxu0 0.0
    %3736 = vmatmul.mubr.f32.gmra.mxu0 %v1625
    %v3737 = vpop.f32.mrf.mxu0
    %v3738 = vadd.f32 0.0, %v3737
    %v3739 = vpop.f32.mrf.mxu0
    %v3740 = vadd.f32 0.0, %v3739
    %3741 = vmatprep.mubr.f32.mxu0 0.0
    %3742 = vmatmul.mubr.f32.gmra.mxu0 %v1628
    %v3743 = vpop.f32.mrf.mxu0
    %v3744 = vadd.f32 0.0, %v3743
    %v3745 = vpop.f32.mrf.mxu0
    %v3746 = vadd.f32 0.0, %v3745
    %3747 = vmatprep.mubr.f32.mxu0 0.0
    %3748 = vmatmul.mubr.f32.gmra.mxu0 %v1631
    %v3749 = vpop.f32.mrf.mxu0
    %v3750 = vadd.f32 0.0, %v3749
    %v3751 = vpop.f32.mrf.mxu0
    %v3752 = vadd.f32 0.0, %v3751
    %3753 = vmatprep.mubr.f32.mxu0 0.0
    %3754 = vmatmul.mubr.f32.gmra.mxu0 %v1634
    %v3755 = vpop.f32.mrf.mxu0
    %v3756 = vadd.f32 0.0, %v3755
    %v3757 = vpop.f32.mrf.mxu0
    %v3758 = vadd.f32 0.0, %v3757
    %3759 = vmatprep.mubr.f32.mxu0 0.0
    %3760 = vmatmul.mubr.f32.gmra.mxu0 %v1637
    %v3761 = vpop.f32.mrf.mxu0
    %v3762 = vadd.f32 0.0, %v3761
    %v3763 = vpop.f32.mrf.mxu0
    %v3764 = vadd.f32 0.0, %v3763
    %3765 = vmatprep.mubr.f32.mxu0 0.0
    %3766 = vmatmul.mubr.f32.gmra.mxu0 %v1640
    %v3767 = vpop.f32.mrf.mxu0
    %v3768 = vadd.f32 0.0, %v3767
    %v3769 = vpop.f32.mrf.mxu0
    %v3770 = vadd.f32 0.0, %v3769
    %3771 = vmatprep.mubr.f32.mxu0 0.0
    %3772 = vmatmul.mubr.f32.gmra.mxu0 %v1643
    %v3773 = vpop.f32.mrf.mxu0
    %v3774 = vadd.f32 0.0, %v3773
    %v3775 = vpop.f32.mrf.mxu0
    %v3776 = vadd.f32 0.0, %v3775
    %3777 = vmatprep.mubr.f32.mxu0 0.0
    %3778 = vmatmul.mubr.f32.gmra.mxu0 %v1646
    %v3779 = vpop.f32.mrf.mxu0
    %v3780 = vadd.f32 0.0, %v3779
    %v3781 = vpop.f32.mrf.mxu0
    %v3782 = vadd.f32 0.0, %v3781
    %3783 = vmatprep.mubr.f32.mxu0 0.0
    %3784 = vmatmul.mubr.f32.gmra.mxu0 %v1649
    %v3785 = vpop.f32.mrf.mxu0
    %v3786 = vadd.f32 0.0, %v3785
    %v3787 = vpop.f32.mrf.mxu0
    %v3788 = vadd.f32 0.0, %v3787
    %3789 = vmatprep.mubr.f32.mxu0 0.0
    %3790 = vmatmul.mubr.f32.gmra.mxu0 %v1652
    %v3791 = vpop.f32.mrf.mxu0
    %v3792 = vadd.f32 0.0, %v3791
    %v3793 = vpop.f32.mrf.mxu0
    %v3794 = vadd.f32 0.0, %v3793
    %3795 = vmatprep.mubr.f32.mxu0 0.0
    %3796 = vmatmul.mubr.f32.gmra.mxu0 %v1655
    %v3797 = vpop.f32.mrf.mxu0
    %v3798 = vadd.f32 0.0, %v3797
    %v3799 = vpop.f32.mrf.mxu0
    %v3800 = vadd.f32 0.0, %v3799
    %3801 = vmatprep.mubr.f32.mxu0 0.0
    %3802 = vmatmul.mubr.f32.gmra.mxu0 %v1658
    %v3803 = vpop.f32.mrf.mxu0
    %v3804 = vadd.f32 0.0, %v3803
    %v3805 = vpop.f32.mrf.mxu0
    %v3806 = vadd.f32 0.0, %v3805
    %3807 = vmatprep.mubr.f32.mxu0 0.0
    %3808 = vmatmul.mubr.f32.gmra.mxu0 %v1661
    %v3809 = vpop.f32.mrf.mxu0
    %v3810 = vadd.f32 0.0, %v3809
    %v3811 = vpop.f32.mrf.mxu0
    %v3812 = vadd.f32 0.0, %v3811
    %3813 = vmatprep.mubr.f32.mxu0 0.0
    %3814 = vmatmul.mubr.f32.gmra.mxu0 %v1664
    %v3815 = vpop.f32.mrf.mxu0
    %v3816 = vadd.f32 0.0, %v3815
    %v3817 = vpop.f32.mrf.mxu0
    %v3818 = vadd.f32 0.0, %v3817
    %3819 = vmatprep.mubr.f32.mxu0 0.0
    %3820 = vmatmul.mubr.f32.gmra.mxu0 %v1667
    %v3821 = vpop.f32.mrf.mxu0
    %v3822 = vadd.f32 0.0, %v3821
    %v3823 = vpop.f32.mrf.mxu0
    %v3824 = vadd.f32 0.0, %v3823
    %3825 = vmatprep.mubr.f32.mxu0 0.0
    %3826 = vmatmul.mubr.f32.gmra.mxu0 %v1670
    %v3827 = vpop.f32.mrf.mxu0
    %v3828 = vadd.f32 0.0, %v3827
    %v3829 = vpop.f32.mrf.mxu0
    %v3830 = vadd.f32 0.0, %v3829
    %3831 = vmatprep.mubr.f32.mxu0 0.0
    %3832 = vmatmul.mubr.f32.gmra.mxu0 %v1673
    %v3833 = vpop.f32.mrf.mxu0
    %v3834 = vadd.f32 0.0, %v3833
    %v3835 = vpop.f32.mrf.mxu0
    %v3836 = vadd.f32 0.0, %v3835
    %3837 = vmatprep.mubr.f32.mxu0 0.0
    %3838 = vmatmul.mubr.f32.gmra.mxu0 %v1676
    %v3839 = vpop.f32.mrf.mxu0
    %v3840 = vadd.f32 0.0, %v3839
    %v3841 = vpop.f32.mrf.mxu0
    %v3842 = vadd.f32 0.0, %v3841
    %3843 = vmatprep.mubr.f32.mxu0 0.0
    %3844 = vmatmul.mubr.f32.gmra.mxu0 %v1679
    %v3845 = vpop.f32.mrf.mxu0
    %v3846 = vadd.f32 0.0, %v3845
    %v3847 = vpop.f32.mrf.mxu0
    %v3848 = vadd.f32 0.0, %v3847
    %3849 = vmatprep.mubr.f32.mxu0 0.0
    %3850 = vmatmul.mubr.f32.gmra.mxu0 %v1682
    %v3851 = vpop.f32.mrf.mxu0
    %v3852 = vadd.f32 0.0, %v3851
    %v3853 = vpop.f32.mrf.mxu0
    %v3854 = vadd.f32 0.0, %v3853
    %3855 = vmatprep.mubr.f32.mxu0 0.0
    %3856 = vmatmul.mubr.f32.gmra.mxu0 %v1685
    %v3857 = vpop.f32.mrf.mxu0
    %v3858 = vadd.f32 0.0, %v3857
    %v3859 = vpop.f32.mrf.mxu0
    %v3860 = vadd.f32 0.0, %v3859
    %3861 = vmatprep.mubr.f32.mxu0 0.0
    %3862 = vmatmul.mubr.f32.gmra.mxu0 %v1688
    %v3863 = vpop.f32.mrf.mxu0
    %v3864 = vadd.f32 0.0, %v3863
    %v3865 = vpop.f32.mrf.mxu0
    %v3866 = vadd.f32 0.0, %v3865
    %3867 = vmatprep.mubr.f32.mxu0 0.0
    %3868 = vmatmul.mubr.f32.gmra.mxu0 %v1691
    %v3869 = vpop.f32.mrf.mxu0
    %v3870 = vadd.f32 0.0, %v3869
    %v3871 = vpop.f32.mrf.mxu0
    %v3872 = vadd.f32 0.0, %v3871
    %3873 = vmatprep.mubr.f32.mxu0 0.0
    %3874 = vmatmul.mubr.f32.gmra.mxu0 %v1694
    %v3875 = vpop.f32.mrf.mxu0
    %v3876 = vadd.f32 0.0, %v3875
    %v3877 = vpop.f32.mrf.mxu0
    %v3878 = vadd.f32 0.0, %v3877
    %3879 = vmatprep.mubr.f32.mxu0 0.0
    %3880 = vmatmul.mubr.f32.gmra.mxu0 %v1697
    %v3881 = vpop.f32.mrf.mxu0
    %v3882 = vadd.f32 0.0, %v3881
    %v3883 = vpop.f32.mrf.mxu0
    %v3884 = vadd.f32 0.0, %v3883
    %3885 = vmatprep.mubr.f32.mxu0 0.0
    %3886 = vmatmul.mubr.f32.gmra.mxu0 %v1700
    %v3887 = vpop.f32.mrf.mxu0
    %v3888 = vadd.f32 0.0, %v3887
    %v3889 = vpop.f32.mrf.mxu0
    %v3890 = vadd.f32 0.0, %v3889
    %3891 = vmatprep.mubr.f32.mxu0 0.0
    %3892 = vmatmul.mubr.f32.gmra.mxu0 %v1703
    %v3893 = vpop.f32.mrf.mxu0
    %v3894 = vadd.f32 0.0, %v3893
    %v3895 = vpop.f32.mrf.mxu0
    %v3896 = vadd.f32 0.0, %v3895
    %3897 = vmatprep.mubr.f32.mxu0 0.0
    %3898 = vmatmul.mubr.f32.gmra.mxu0 %v1706
    %v3899 = vpop.f32.mrf.mxu0
    %v3900 = vadd.f32 0.0, %v3899
    %v3901 = vpop.f32.mrf.mxu0
    %v3902 = vadd.f32 0.0, %v3901
    %3903 = vmatprep.mubr.f32.mxu0 0.0
    %3904 = vmatmul.mubr.f32.gmra.mxu0 %v1709
    %v3905 = vpop.f32.mrf.mxu0
    %v3906 = vadd.f32 0.0, %v3905
    %v3907 = vpop.f32.mrf.mxu0
    %v3908 = vadd.f32 0.0, %v3907
    %3909 = vmatprep.mubr.f32.mxu0 0.0
    %3910 = vmatmul.mubr.f32.gmra.mxu0 %v1712
    %v3911 = vpop.f32.mrf.mxu0
    %v3912 = vadd.f32 0.0, %v3911
    %v3913 = vpop.f32.mrf.mxu0
    %v3914 = vadd.f32 0.0, %v3913
    %3915 = vmatprep.mubr.f32.mxu0 0.0
    %3916 = vmatmul.mubr.f32.gmra.mxu0 %v1715
    %v3917 = vpop.f32.mrf.mxu0
    %v3918 = vadd.f32 0.0, %v3917
    %v3919 = vpop.f32.mrf.mxu0
    %v3920 = vadd.f32 0.0, %v3919
    %3921 = vmatprep.mubr.f32.mxu0 0.0
    %3922 = vmatmul.mubr.f32.gmra.mxu0 %v1718
    %v3923 = vpop.f32.mrf.mxu0
    %v3924 = vadd.f32 0.0, %v3923
    %v3925 = vpop.f32.mrf.mxu0
    %v3926 = vadd.f32 0.0, %v3925
    %3927 = vmatprep.mubr.f32.mxu0 0.0
    %3928 = vmatmul.mubr.f32.gmra.mxu0 %v1721
    %v3929 = vpop.f32.mrf.mxu0
    %v3930 = vadd.f32 0.0, %v3929
    %v3931 = vpop.f32.mrf.mxu0
    %v3932 = vadd.f32 0.0, %v3931
    %3933 = vmatprep.mubr.f32.mxu0 0.0
    %3934 = vmatmul.mubr.f32.gmra.mxu0 %v1724
    %v3935 = vpop.f32.mrf.mxu0
    %v3936 = vadd.f32 0.0, %v3935
    %v3937 = vpop.f32.mrf.mxu0
    %v3938 = vadd.f32 0.0, %v3937
    %3939 = vmatprep.mubr.f32.mxu0 0.0
    %3940 = vmatmul.mubr.f32.gmra.mxu0 %v1727
    %v3941 = vpop.f32.mrf.mxu0
    %v3942 = vadd.f32 0.0, %v3941
    %v3943 = vpop.f32.mrf.mxu0
    %v3944 = vadd.f32 0.0, %v3943
    %3945 = vmatprep.mubr.f32.mxu0 0.0
    %3946 = vmatmul.mubr.f32.gmra.mxu0 %v1730
    %v3947 = vpop.f32.mrf.mxu0
    %v3948 = vadd.f32 0.0, %v3947
    %v3949 = vpop.f32.mrf.mxu0
    %v3950 = vadd.f32 0.0, %v3949
    %3951 = vmatprep.mubr.f32.mxu0 0.0
    %3952 = vmatmul.mubr.f32.gmra.mxu0 %v1733
    %v3953 = vpop.f32.mrf.mxu0
    %v3954 = vadd.f32 0.0, %v3953
    %v3955 = vpop.f32.mrf.mxu0
    %v3956 = vadd.f32 0.0, %v3955
    %3957 = vmatprep.mubr.f32.mxu0 0.0
    %3958 = vmatmul.mubr.f32.gmra.mxu0 %v1736
    %v3959 = vpop.f32.mrf.mxu0
    %v3960 = vadd.f32 0.0, %v3959
    %v3961 = vpop.f32.mrf.mxu0
    %v3962 = vadd.f32 0.0, %v3961
    %3963 = vmatprep.mubr.f32.mxu0 0.0
    %3964 = vmatmul.mubr.f32.gmra.mxu0 %v1739
    %v3965 = vpop.f32.mrf.mxu0
    %v3966 = vadd.f32 0.0, %v3965
    %v3967 = vpop.f32.mrf.mxu0
    %v3968 = vadd.f32 0.0, %v3967
    %3969 = vmatprep.mubr.f32.mxu0 0.0
    %3970 = vmatmul.mubr.f32.gmra.mxu0 %v1742
    %v3971 = vpop.f32.mrf.mxu0
    %v3972 = vadd.f32 0.0, %v3971
    %v3973 = vpop.f32.mrf.mxu0
    %v3974 = vadd.f32 0.0, %v3973
    %3975 = vmatprep.mubr.f32.mxu0 0.0
    %3976 = vmatmul.mubr.f32.gmra.mxu0 %v1745
    %v3977 = vpop.f32.mrf.mxu0
    %v3978 = vadd.f32 0.0, %v3977
    %v3979 = vpop.f32.mrf.mxu0
    %v3980 = vadd.f32 0.0, %v3979
    %3981 = vmatprep.mubr.f32.mxu0 0.0
    %3982 = vmatmul.mubr.f32.gmra.mxu0 %v1748
    %v3983 = vpop.f32.mrf.mxu0
    %v3984 = vadd.f32 0.0, %v3983
    %v3985 = vpop.f32.mrf.mxu0
    %v3986 = vadd.f32 0.0, %v3985
    %3987 = vmatprep.mubr.f32.mxu0 0.0
    %3988 = vmatmul.mubr.f32.gmra.mxu0 %v1751
    %v3989 = vpop.f32.mrf.mxu0
    %v3990 = vadd.f32 0.0, %v3989
    %v3991 = vpop.f32.mrf.mxu0
    %v3992 = vadd.f32 0.0, %v3991
    %3993 = vmatprep.mubr.f32.mxu0 0.0
    %3994 = vmatmul.mubr.f32.gmra.mxu0 %v1754
    %v3995 = vpop.f32.mrf.mxu0
    %v3996 = vadd.f32 0.0, %v3995
    %v3997 = vpop.f32.mrf.mxu0
    %v3998 = vadd.f32 0.0, %v3997
    %3999 = vmatprep.mubr.f32.mxu0 0.0
    %4000 = vmatmul.mubr.f32.gmra.mxu0 %v1757
    %v4001 = vpop.f32.mrf.mxu0
    %v4002 = vadd.f32 0.0, %v4001
    %v4003 = vpop.f32.mrf.mxu0
    %v4004 = vadd.f32 0.0, %v4003
    %4005 = vmatprep.mubr.f32.mxu0 0.0
    %4006 = vmatmul.mubr.f32.gmra.mxu0 %v1760
    %v4007 = vpop.f32.mrf.mxu0
    %v4008 = vadd.f32 0.0, %v4007
    %v4009 = vpop.f32.mrf.mxu0
    %v4010 = vadd.f32 0.0, %v4009
    %4011 = vmatprep.mubr.f32.mxu0 0.0
    %4012 = vmatmul.mubr.f32.gmra.mxu0 %v1763
    %v4013 = vpop.f32.mrf.mxu0
    %v4014 = vadd.f32 0.0, %v4013
    %v4015 = vpop.f32.mrf.mxu0
    %v4016 = vadd.f32 0.0, %v4015
    %4017 = vdwg.mxu0
    %4018 = vmatprep.subr.mxu0 0.0
    %4019 = vmatpush1.xpose.msra.mxu0 0.0
    %4020 = vmatprep.subr.mxu0 0.0
    %4021 = vmatpush1.xpose.msra.mxu0 0.0
    %4022 = vmatprep.subr.mxu0 0.0
    %4023 = vmatpush1.xpose.msra.mxu0 0.0
    %4024 = vmatprep.subr.mxu0 0.0
    %4025 = vmatpush1.xpose.msra.mxu0 0.0
    %4026 = vmatprep.subr.mxu0 0.0
    %4027 = vmatpush1.xpose.msra.mxu0 0.0
    %4028 = vmatprep.subr.mxu0 0.0
    %4029 = vmatpush1.xpose.msra.mxu0 0.0
    %4030 = vmatprep.subr.mxu0 0.0
    %4031 = vmatpush1.xpose.msra.mxu0 0.0
    %4032 = vmatprep.subr.mxu0 0.0
    %4033 = vmatpush1.xpose.msra.mxu0 0.0
    %4034 = vmatprep.subr.mxu0 0.0
    %4035 = vmatpush1.xpose.msra.mxu0 0.0
    %4036 = vmatprep.subr.mxu0 0.0
    %4037 = vmatpush1.xpose.msra.mxu0 0.0
    %4038 = vmatprep.subr.mxu0 0.0
    %4039 = vmatpush1.xpose.msra.mxu0 0.0
    %4040 = vmatprep.subr.mxu0 0.0
    %4041 = vmatpush1.xpose.msra.mxu0 0.0
    %4042 = vmatprep.subr.mxu0 0.0
    %4043 = vmatpush1.xpose.msra.mxu0 0.0
    %4044 = vmatprep.subr.mxu0 0.0
    %4045 = vmatpush1.xpose.msra.mxu0 0.0
    %4046 = vmatprep.subr.mxu0 0.0
    %4047 = vmatpush1.xpose.msra.mxu0 %v2057
    %4048 = vmatprep.subr.mxu0 0.0
    %4049 = vmatpush1.xpose.msra.mxu0 %v2054
    %4050 = vmatprep.subr.mxu0 0.0
    %4051 = vmatpush2.xpose.msra.mxu0 0.0
    %4052 = vmatprep.subr.mxu0 0.0
    %4053 = vmatpush2.xpose.msra.mxu0 0.0
    %4054 = vmatprep.subr.mxu0 0.0
    %4055 = vmatpush2.xpose.msra.mxu0 0.0
    %4056 = vmatprep.subr.mxu0 0.0
    %4057 = vmatpush2.xpose.msra.mxu0 0.0
    %4058 = vmatprep.subr.mxu0 0.0
    %4059 = vmatpush2.xpose.msra.mxu0 0.0
    %4060 = vmatprep.subr.mxu0 0.0
    %4061 = vmatpush2.xpose.msra.mxu0 0.0
    %4062 = vmatprep.subr.mxu0 0.0
    %4063 = vmatpush2.xpose.msra.mxu0 0.0
    %4064 = vmatprep.subr.mxu0 0.0
    %4065 = vmatpush2.xpose.msra.mxu0 0.0
    %4066 = vmatprep.subr.mxu0 0.0
    %4067 = vmatpush2.xpose.msra.mxu0 0.0
    %4068 = vmatprep.subr.mxu0 0.0
    %4069 = vmatpush2.xpose.msra.mxu0 0.0
    %4070 = vmatprep.subr.mxu0 0.0
    %4071 = vmatpush2.xpose.msra.mxu0 0.0
    %4072 = vmatprep.subr.mxu0 0.0
    %4073 = vmatpush2.xpose.msra.mxu0 0.0
    %4074 = vmatprep.subr.mxu0 0.0
    %4075 = vmatpush2.xpose.msra.mxu0 0.0
    %4076 = vmatprep.subr.mxu0 0.0
    %4077 = vmatpush2.xpose.msra.mxu0 0.0
    %4078 = vmatprep.subr.mxu0 0.0
    %4079 = vmatpush2.xpose.msra.mxu0 0.0
    %4080 = vmatprep.subr.mxu0 0.0
    %4081 = vmatpush2.xpose.msra.mxu0 0.0
    %4082 = vmatprep.mubr.f32.mxu0 0.0
    %4083 = vmatmul.mubr.f32.gmra.mxu0 %v1472
    %v4084 = vpop.f32.mrf.mxu0
    %v4085 = vadd.f32 0.0, %v4084
    %v4086 = vpop.f32.mrf.mxu0
    %4087 = vmatprep.mubr.f32.mxu0 0.0
    %4088 = vmatmul.mubr.f32.gmra.mxu0 %v1475
    %v4089 = vpop.f32.mrf.mxu0
    %v4090 = vadd.f32 0.0, %v4089
    %v4091 = vpop.f32.mrf.mxu0
    %4092 = vmatprep.mubr.f32.mxu0 0.0
    %4093 = vmatmul.mubr.f32.gmra.mxu0 %v1478
    %v4094 = vpop.f32.mrf.mxu0
    %v4095 = vadd.f32 0.0, %v4094
    %v4096 = vpop.f32.mrf.mxu0
    %4097 = vmatprep.mubr.f32.mxu0 0.0
    %4098 = vmatmul.mubr.f32.gmra.mxu0 %v1481
    %v4099 = vpop.f32.mrf.mxu0
    %v4100 = vadd.f32 0.0, %v4099
    %v4101 = vpop.f32.mrf.mxu0
    %4102 = vmatprep.mubr.f32.mxu0 0.0
    %4103 = vmatmul.mubr.f32.gmra.mxu0 %v1484
    %v4104 = vpop.f32.mrf.mxu0
    %v4105 = vadd.f32 0.0, %v4104
    %v4106 = vpop.f32.mrf.mxu0
    %4107 = vmatprep.mubr.f32.mxu0 0.0
    %4108 = vmatmul.mubr.f32.gmra.mxu0 %v1487
    %v4109 = vpop.f32.mrf.mxu0
    %v4110 = vadd.f32 0.0, %v4109
    %v4111 = vpop.f32.mrf.mxu0
    %4112 = vmatprep.mubr.f32.mxu0 0.0
    %4113 = vmatmul.mubr.f32.gmra.mxu0 %v1490
    %v4114 = vpop.f32.mrf.mxu0
    %v4115 = vadd.f32 0.0, %v4114
    %v4116 = vpop.f32.mrf.mxu0
    %4117 = vmatprep.mubr.f32.mxu0 0.0
    %4118 = vmatmul.mubr.f32.gmra.mxu0 %v1493
    %v4119 = vpop.f32.mrf.mxu0
    %v4120 = vadd.f32 0.0, %v4119
    %v4121 = vpop.f32.mrf.mxu0
    %4122 = vmatprep.mubr.f32.mxu0 0.0
    %4123 = vmatmul.mubr.f32.gmra.mxu0 %v1496
    %v4124 = vpop.f32.mrf.mxu0
    %v4125 = vadd.f32 0.0, %v4124
    %v4126 = vpop.f32.mrf.mxu0
    %4127 = vmatprep.mubr.f32.mxu0 0.0
    %4128 = vmatmul.mubr.f32.gmra.mxu0 %v1499
    %v4129 = vpop.f32.mrf.mxu0
    %v4130 = vadd.f32 0.0, %v4129
    %v4131 = vpop.f32.mrf.mxu0
    %4132 = vmatprep.mubr.f32.mxu0 0.0
    %4133 = vmatmul.mubr.f32.gmra.mxu0 %v1502
    %v4134 = vpop.f32.mrf.mxu0
    %v4135 = vadd.f32 0.0, %v4134
    %v4136 = vpop.f32.mrf.mxu0
    %4137 = vmatprep.mubr.f32.mxu0 0.0
    %4138 = vmatmul.mubr.f32.gmra.mxu0 %v1505
    %v4139 = vpop.f32.mrf.mxu0
    %v4140 = vadd.f32 0.0, %v4139
    %v4141 = vpop.f32.mrf.mxu0
    %4142 = vmatprep.mubr.f32.mxu0 0.0
    %4143 = vmatmul.mubr.f32.gmra.mxu0 %v1508
    %v4144 = vpop.f32.mrf.mxu0
    %v4145 = vadd.f32 0.0, %v4144
    %v4146 = vpop.f32.mrf.mxu0
    %4147 = vmatprep.mubr.f32.mxu0 0.0
    %4148 = vmatmul.mubr.f32.gmra.mxu0 %v1511
    %v4149 = vpop.f32.mrf.mxu0
    %v4150 = vadd.f32 0.0, %v4149
    %v4151 = vpop.f32.mrf.mxu0
    %4152 = vmatprep.mubr.f32.mxu0 0.0
    %4153 = vmatmul.mubr.f32.gmra.mxu0 %v1514
    %v4154 = vpop.f32.mrf.mxu0
    %v4155 = vadd.f32 0.0, %v4154
    %v4156 = vpop.f32.mrf.mxu0
    %4157 = vmatprep.mubr.f32.mxu0 0.0
    %4158 = vmatmul.mubr.f32.gmra.mxu0 %v1517
    %v4159 = vpop.f32.mrf.mxu0
    %v4160 = vadd.f32 0.0, %v4159
    %v4161 = vpop.f32.mrf.mxu0
    %4162 = vmatprep.mubr.f32.mxu0 0.0
    %4163 = vmatmul.mubr.f32.gmra.mxu0 %v1520
    %v4164 = vpop.f32.mrf.mxu0
    %v4165 = vadd.f32 0.0, %v4164
    %v4166 = vpop.f32.mrf.mxu0
    %4167 = vmatprep.mubr.f32.mxu0 0.0
    %4168 = vmatmul.mubr.f32.gmra.mxu0 %v1523
    %v4169 = vpop.f32.mrf.mxu0
    %v4170 = vadd.f32 0.0, %v4169
    %v4171 = vpop.f32.mrf.mxu0
    %4172 = vmatprep.mubr.f32.mxu0 0.0
    %4173 = vmatmul.mubr.f32.gmra.mxu0 %v1526
    %v4174 = vpop.f32.mrf.mxu0
    %v4175 = vadd.f32 0.0, %v4174
    %v4176 = vpop.f32.mrf.mxu0
    %4177 = vmatprep.mubr.f32.mxu0 0.0
    %4178 = vmatmul.mubr.f32.gmra.mxu0 %v1529
    %v4179 = vpop.f32.mrf.mxu0
    %v4180 = vadd.f32 0.0, %v4179
    %v4181 = vpop.f32.mrf.mxu0
    %4182 = vmatprep.mubr.f32.mxu0 0.0
    %4183 = vmatmul.mubr.f32.gmra.mxu0 %v1532
    %v4184 = vpop.f32.mrf.mxu0
    %v4185 = vadd.f32 0.0, %v4184
    %v4186 = vpop.f32.mrf.mxu0
    %4187 = vmatprep.mubr.f32.mxu0 0.0
    %4188 = vmatmul.mubr.f32.gmra.mxu0 %v1535
    %v4189 = vpop.f32.mrf.mxu0
    %v4190 = vadd.f32 0.0, %v4189
    %v4191 = vpop.f32.mrf.mxu0
    %4192 = vmatprep.mubr.f32.mxu0 0.0
    %4193 = vmatmul.mubr.f32.gmra.mxu0 %v1538
    %v4194 = vpop.f32.mrf.mxu0
    %v4195 = vadd.f32 0.0, %v4194
    %v4196 = vpop.f32.mrf.mxu0
    %4197 = vmatprep.mubr.f32.mxu0 0.0
    %4198 = vmatmul.mubr.f32.gmra.mxu0 %v1541
    %v4199 = vpop.f32.mrf.mxu0
    %v4200 = vadd.f32 0.0, %v4199
    %v4201 = vpop.f32.mrf.mxu0
    %4202 = vmatprep.mubr.f32.mxu0 0.0
    %4203 = vmatmul.mubr.f32.gmra.mxu0 %v1544
    %v4204 = vpop.f32.mrf.mxu0
    %v4205 = vadd.f32 0.0, %v4204
    %v4206 = vpop.f32.mrf.mxu0
    %4207 = vmatprep.mubr.f32.mxu0 0.0
    %4208 = vmatmul.mubr.f32.gmra.mxu0 %v1547
    %v4209 = vpop.f32.mrf.mxu0
    %v4210 = vadd.f32 0.0, %v4209
    %v4211 = vpop.f32.mrf.mxu0
    %4212 = vmatprep.mubr.f32.mxu0 0.0
    %4213 = vmatmul.mubr.f32.gmra.mxu0 %v1550
    %v4214 = vpop.f32.mrf.mxu0
    %v4215 = vadd.f32 0.0, %v4214
    %v4216 = vpop.f32.mrf.mxu0
    %4217 = vmatprep.mubr.f32.mxu0 0.0
    %4218 = vmatmul.mubr.f32.gmra.mxu0 %v1553
    %v4219 = vpop.f32.mrf.mxu0
    %v4220 = vadd.f32 0.0, %v4219
    %v4221 = vpop.f32.mrf.mxu0
    %4222 = vmatprep.mubr.f32.mxu0 0.0
    %4223 = vmatmul.mubr.f32.gmra.mxu0 %v1556
    %v4224 = vpop.f32.mrf.mxu0
    %v4225 = vadd.f32 0.0, %v4224
    %v4226 = vpop.f32.mrf.mxu0
    %4227 = vmatprep.mubr.f32.mxu0 0.0
    %4228 = vmatmul.mubr.f32.gmra.mxu0 %v1559
    %v4229 = vpop.f32.mrf.mxu0
    %v4230 = vadd.f32 0.0, %v4229
    %v4231 = vpop.f32.mrf.mxu0
    %4232 = vmatprep.mubr.f32.mxu0 0.0
    %4233 = vmatmul.mubr.f32.gmra.mxu0 %v1562
    %v4234 = vpop.f32.mrf.mxu0
    %v4235 = vadd.f32 0.0, %v4234
    %v4236 = vpop.f32.mrf.mxu0
    %4237 = vmatprep.mubr.f32.mxu0 0.0
    %4238 = vmatmul.mubr.f32.gmra.mxu0 %v1565
    %v4239 = vpop.f32.mrf.mxu0
    %v4240 = vadd.f32 0.0, %v4239
    %v4241 = vpop.f32.mrf.mxu0
    %4242 = vmatprep.mubr.f32.mxu0 0.0
    %4243 = vmatmul.mubr.f32.gmra.mxu0 %v1568
    %v4244 = vpop.f32.mrf.mxu0
    %v4245 = vadd.f32 0.0, %v4244
    %v4246 = vpop.f32.mrf.mxu0
    %4247 = vmatprep.mubr.f32.mxu0 0.0
    %4248 = vmatmul.mubr.f32.gmra.mxu0 %v1571
    %v4249 = vpop.f32.mrf.mxu0
    %v4250 = vadd.f32 0.0, %v4249
    %v4251 = vpop.f32.mrf.mxu0
    %4252 = vmatprep.mubr.f32.mxu0 0.0
    %4253 = vmatmul.mubr.f32.gmra.mxu0 %v1574
    %v4254 = vpop.f32.mrf.mxu0
    %v4255 = vadd.f32 0.0, %v4254
    %v4256 = vpop.f32.mrf.mxu0
    %4257 = vmatprep.mubr.f32.mxu0 0.0
    %4258 = vmatmul.mubr.f32.gmra.mxu0 %v1577
    %v4259 = vpop.f32.mrf.mxu0
    %v4260 = vadd.f32 0.0, %v4259
    %v4261 = vpop.f32.mrf.mxu0
    %4262 = vmatprep.mubr.f32.mxu0 0.0
    %4263 = vmatmul.mubr.f32.gmra.mxu0 %v1580
    %v4264 = vpop.f32.mrf.mxu0
    %v4265 = vadd.f32 0.0, %v4264
    %v4266 = vpop.f32.mrf.mxu0
    %4267 = vmatprep.mubr.f32.mxu0 0.0
    %4268 = vmatmul.mubr.f32.gmra.mxu0 %v1583
    %v4269 = vpop.f32.mrf.mxu0
    %v4270 = vadd.f32 0.0, %v4269
    %v4271 = vpop.f32.mrf.mxu0
    %4272 = vmatprep.mubr.f32.mxu0 0.0
    %4273 = vmatmul.mubr.f32.gmra.mxu0 %v1586
    %v4274 = vpop.f32.mrf.mxu0
    %v4275 = vadd.f32 0.0, %v4274
    %v4276 = vpop.f32.mrf.mxu0
    %4277 = vmatprep.mubr.f32.mxu0 0.0
    %4278 = vmatmul.mubr.f32.gmra.mxu0 %v1589
    %v4279 = vpop.f32.mrf.mxu0
    %v4280 = vadd.f32 0.0, %v4279
    %v4281 = vpop.f32.mrf.mxu0
    %4282 = vmatprep.mubr.f32.mxu0 0.0
    %4283 = vmatmul.mubr.f32.gmra.mxu0 %v1592
    %v4284 = vpop.f32.mrf.mxu0
    %v4285 = vadd.f32 0.0, %v4284
    %v4286 = vpop.f32.mrf.mxu0
    %4287 = vmatprep.mubr.f32.mxu0 0.0
    %4288 = vmatmul.mubr.f32.gmra.mxu0 %v1595
    %v4289 = vpop.f32.mrf.mxu0
    %v4290 = vadd.f32 0.0, %v4289
    %v4291 = vpop.f32.mrf.mxu0
    %4292 = vmatprep.mubr.f32.mxu0 0.0
    %4293 = vmatmul.mubr.f32.gmra.mxu0 %v1598
    %v4294 = vpop.f32.mrf.mxu0
    %v4295 = vadd.f32 0.0, %v4294
    %v4296 = vpop.f32.mrf.mxu0
    %4297 = vmatprep.mubr.f32.mxu0 0.0
    %4298 = vmatmul.mubr.f32.gmra.mxu0 %v1601
    %v4299 = vpop.f32.mrf.mxu0
    %v4300 = vadd.f32 0.0, %v4299
    %v4301 = vpop.f32.mrf.mxu0
    %4302 = vmatprep.mubr.f32.mxu0 0.0
    %4303 = vmatmul.mubr.f32.gmra.mxu0 %v1604
    %v4304 = vpop.f32.mrf.mxu0
    %v4305 = vadd.f32 0.0, %v4304
    %v4306 = vpop.f32.mrf.mxu0
    %4307 = vmatprep.mubr.f32.mxu0 0.0
    %4308 = vmatmul.mubr.f32.gmra.mxu0 %v1607
    %v4309 = vpop.f32.mrf.mxu0
    %v4310 = vadd.f32 0.0, %v4309
    %v4311 = vpop.f32.mrf.mxu0
    %4312 = vmatprep.mubr.f32.mxu0 0.0
    %4313 = vmatmul.mubr.f32.gmra.mxu0 %v1610
    %v4314 = vpop.f32.mrf.mxu0
    %v4315 = vadd.f32 0.0, %v4314
    %v4316 = vpop.f32.mrf.mxu0
    %4317 = vmatprep.mubr.f32.mxu0 0.0
    %4318 = vmatmul.mubr.f32.gmra.mxu0 %v1613
    %v4319 = vpop.f32.mrf.mxu0
    %v4320 = vadd.f32 0.0, %v4319
    %v4321 = vpop.f32.mrf.mxu0
    %4322 = vmatprep.mubr.f32.mxu0 0.0
    %4323 = vmatmul.mubr.f32.gmra.mxu0 %v1616
    %v4324 = vpop.f32.mrf.mxu0
    %v4325 = vadd.f32 0.0, %v4324
    %v4326 = vpop.f32.mrf.mxu0
    %4327 = vmatprep.mubr.f32.mxu0 0.0
    %4328 = vmatmul.mubr.f32.gmra.mxu0 %v1619
    %v4329 = vpop.f32.mrf.mxu0
    %v4330 = vadd.f32 0.0, %v4329
    %v4331 = vpop.f32.mrf.mxu0
    %4332 = vmatprep.mubr.f32.mxu0 0.0
    %4333 = vmatmul.mubr.f32.gmra.mxu0 %v1622
    %v4334 = vpop.f32.mrf.mxu0
    %v4335 = vadd.f32 0.0, %v4334
    %v4336 = vpop.f32.mrf.mxu0
    %4337 = vmatprep.mubr.f32.mxu0 0.0
    %4338 = vmatmul.mubr.f32.gmra.mxu0 %v1625
    %v4339 = vpop.f32.mrf.mxu0
    %v4340 = vadd.f32 0.0, %v4339
    %v4341 = vpop.f32.mrf.mxu0
    %4342 = vmatprep.mubr.f32.mxu0 0.0
    %4343 = vmatmul.mubr.f32.gmra.mxu0 %v1628
    %v4344 = vpop.f32.mrf.mxu0
    %v4345 = vadd.f32 0.0, %v4344
    %v4346 = vpop.f32.mrf.mxu0
    %4347 = vmatprep.mubr.f32.mxu0 0.0
    %4348 = vmatmul.mubr.f32.gmra.mxu0 %v1631
    %v4349 = vpop.f32.mrf.mxu0
    %v4350 = vadd.f32 0.0, %v4349
    %v4351 = vpop.f32.mrf.mxu0
    %4352 = vmatprep.mubr.f32.mxu0 0.0
    %4353 = vmatmul.mubr.f32.gmra.mxu0 %v1634
    %v4354 = vpop.f32.mrf.mxu0
    %v4355 = vadd.f32 0.0, %v4354
    %v4356 = vpop.f32.mrf.mxu0
    %4357 = vmatprep.mubr.f32.mxu0 0.0
    %4358 = vmatmul.mubr.f32.gmra.mxu0 %v1637
    %v4359 = vpop.f32.mrf.mxu0
    %v4360 = vadd.f32 0.0, %v4359
    %v4361 = vpop.f32.mrf.mxu0
    %4362 = vmatprep.mubr.f32.mxu0 0.0
    %4363 = vmatmul.mubr.f32.gmra.mxu0 %v1640
    %v4364 = vpop.f32.mrf.mxu0
    %v4365 = vadd.f32 0.0, %v4364
    %v4366 = vpop.f32.mrf.mxu0
    %4367 = vmatprep.mubr.f32.mxu0 0.0
    %4368 = vmatmul.mubr.f32.gmra.mxu0 %v1643
    %v4369 = vpop.f32.mrf.mxu0
    %v4370 = vadd.f32 0.0, %v4369
    %v4371 = vpop.f32.mrf.mxu0
    %4372 = vmatprep.mubr.f32.mxu0 0.0
    %4373 = vmatmul.mubr.f32.gmra.mxu0 %v1646
    %v4374 = vpop.f32.mrf.mxu0
    %v4375 = vadd.f32 0.0, %v4374
    %v4376 = vpop.f32.mrf.mxu0
    %4377 = vmatprep.mubr.f32.mxu0 0.0
    %4378 = vmatmul.mubr.f32.gmra.mxu0 %v1649
    %v4379 = vpop.f32.mrf.mxu0
    %v4380 = vadd.f32 0.0, %v4379
    %v4381 = vpop.f32.mrf.mxu0
    %4382 = vmatprep.mubr.f32.mxu0 0.0
    %4383 = vmatmul.mubr.f32.gmra.mxu0 %v1652
    %v4384 = vpop.f32.mrf.mxu0
    %v4385 = vadd.f32 0.0, %v4384
    %v4386 = vpop.f32.mrf.mxu0
    %4387 = vmatprep.mubr.f32.mxu0 0.0
    %4388 = vmatmul.mubr.f32.gmra.mxu0 %v1655
    %v4389 = vpop.f32.mrf.mxu0
    %v4390 = vadd.f32 0.0, %v4389
    %v4391 = vpop.f32.mrf.mxu0
    %4392 = vmatprep.mubr.f32.mxu0 0.0
    %4393 = vmatmul.mubr.f32.gmra.mxu0 %v1658
    %v4394 = vpop.f32.mrf.mxu0
    %v4395 = vadd.f32 0.0, %v4394
    %v4396 = vpop.f32.mrf.mxu0
    %4397 = vmatprep.mubr.f32.mxu0 0.0
    %4398 = vmatmul.mubr.f32.gmra.mxu0 %v1661
    %v4399 = vpop.f32.mrf.mxu0
    %v4400 = vadd.f32 0.0, %v4399
    %v4401 = vpop.f32.mrf.mxu0
    %4402 = vmatprep.mubr.f32.mxu0 0.0
    %4403 = vmatmul.mubr.f32.gmra.mxu0 %v1664
    %v4404 = vpop.f32.mrf.mxu0
    %v4405 = vadd.f32 0.0, %v4404
    %v4406 = vpop.f32.mrf.mxu0
    %4407 = vmatprep.mubr.f32.mxu0 0.0
    %4408 = vmatmul.mubr.f32.gmra.mxu0 %v1667
    %v4409 = vpop.f32.mrf.mxu0
    %v4410 = vadd.f32 0.0, %v4409
    %v4411 = vpop.f32.mrf.mxu0
    %4412 = vmatprep.mubr.f32.mxu0 0.0
    %4413 = vmatmul.mubr.f32.gmra.mxu0 %v1670
    %v4414 = vpop.f32.mrf.mxu0
    %v4415 = vadd.f32 0.0, %v4414
    %v4416 = vpop.f32.mrf.mxu0
    %4417 = vmatprep.mubr.f32.mxu0 0.0
    %4418 = vmatmul.mubr.f32.gmra.mxu0 %v1673
    %v4419 = vpop.f32.mrf.mxu0
    %v4420 = vadd.f32 0.0, %v4419
    %v4421 = vpop.f32.mrf.mxu0
    %4422 = vmatprep.mubr.f32.mxu0 0.0
    %4423 = vmatmul.mubr.f32.gmra.mxu0 %v1676
    %v4424 = vpop.f32.mrf.mxu0
    %v4425 = vadd.f32 0.0, %v4424
    %v4426 = vpop.f32.mrf.mxu0
    %4427 = vmatprep.mubr.f32.mxu0 0.0
    %4428 = vmatmul.mubr.f32.gmra.mxu0 %v1679
    %v4429 = vpop.f32.mrf.mxu0
    %v4430 = vadd.f32 0.0, %v4429
    %v4431 = vpop.f32.mrf.mxu0
    %4432 = vmatprep.mubr.f32.mxu0 0.0
    %4433 = vmatmul.mubr.f32.gmra.mxu0 %v1682
    %v4434 = vpop.f32.mrf.mxu0
    %v4435 = vadd.f32 0.0, %v4434
    %v4436 = vpop.f32.mrf.mxu0
    %4437 = vmatprep.mubr.f32.mxu0 0.0
    %4438 = vmatmul.mubr.f32.gmra.mxu0 %v1685
    %v4439 = vpop.f32.mrf.mxu0
    %v4440 = vadd.f32 0.0, %v4439
    %v4441 = vpop.f32.mrf.mxu0
    %4442 = vmatprep.mubr.f32.mxu0 0.0
    %4443 = vmatmul.mubr.f32.gmra.mxu0 %v1688
    %v4444 = vpop.f32.mrf.mxu0
    %v4445 = vadd.f32 0.0, %v4444
    %v4446 = vpop.f32.mrf.mxu0
    %4447 = vmatprep.mubr.f32.mxu0 0.0
    %4448 = vmatmul.mubr.f32.gmra.mxu0 %v1691
    %v4449 = vpop.f32.mrf.mxu0
    %v4450 = vadd.f32 0.0, %v4449
    %v4451 = vpop.f32.mrf.mxu0
    %4452 = vmatprep.mubr.f32.mxu0 0.0
    %4453 = vmatmul.mubr.f32.gmra.mxu0 %v1694
    %v4454 = vpop.f32.mrf.mxu0
    %v4455 = vadd.f32 0.0, %v4454
    %v4456 = vpop.f32.mrf.mxu0
    %4457 = vmatprep.mubr.f32.mxu0 0.0
    %4458 = vmatmul.mubr.f32.gmra.mxu0 %v1697
    %v4459 = vpop.f32.mrf.mxu0
    %v4460 = vadd.f32 0.0, %v4459
    %v4461 = vpop.f32.mrf.mxu0
    %4462 = vmatprep.mubr.f32.mxu0 0.0
    %4463 = vmatmul.mubr.f32.gmra.mxu0 %v1700
    %v4464 = vpop.f32.mrf.mxu0
    %v4465 = vadd.f32 0.0, %v4464
    %v4466 = vpop.f32.mrf.mxu0
    %4467 = vmatprep.mubr.f32.mxu0 0.0
    %4468 = vmatmul.mubr.f32.gmra.mxu0 %v1703
    %v4469 = vpop.f32.mrf.mxu0
    %v4470 = vadd.f32 0.0, %v4469
    %v4471 = vpop.f32.mrf.mxu0
    %4472 = vmatprep.mubr.f32.mxu0 0.0
    %4473 = vmatmul.mubr.f32.gmra.mxu0 %v1706
    %v4474 = vpop.f32.mrf.mxu0
    %v4475 = vadd.f32 0.0, %v4474
    %v4476 = vpop.f32.mrf.mxu0
    %4477 = vmatprep.mubr.f32.mxu0 0.0
    %4478 = vmatmul.mubr.f32.gmra.mxu0 %v1709
    %v4479 = vpop.f32.mrf.mxu0
    %v4480 = vadd.f32 0.0, %v4479
    %v4481 = vpop.f32.mrf.mxu0
    %4482 = vmatprep.mubr.f32.mxu0 0.0
    %4483 = vmatmul.mubr.f32.gmra.mxu0 %v1712
    %v4484 = vpop.f32.mrf.mxu0
    %v4485 = vadd.f32 0.0, %v4484
    %v4486 = vpop.f32.mrf.mxu0
    %4487 = vmatprep.mubr.f32.mxu0 0.0
    %4488 = vmatmul.mubr.f32.gmra.mxu0 %v1715
    %v4489 = vpop.f32.mrf.mxu0
    %v4490 = vadd.f32 0.0, %v4489
    %v4491 = vpop.f32.mrf.mxu0
    %4492 = vmatprep.mubr.f32.mxu0 0.0
    %4493 = vmatmul.mubr.f32.gmra.mxu0 %v1718
    %v4494 = vpop.f32.mrf.mxu0
    %v4495 = vadd.f32 0.0, %v4494
    %v4496 = vpop.f32.mrf.mxu0
    %4497 = vmatprep.mubr.f32.mxu0 0.0
    %4498 = vmatmul.mubr.f32.gmra.mxu0 %v1721
    %v4499 = vpop.f32.mrf.mxu0
    %v4500 = vadd.f32 0.0, %v4499
    %v4501 = vpop.f32.mrf.mxu0
    %4502 = vmatprep.mubr.f32.mxu0 0.0
    %4503 = vmatmul.mubr.f32.gmra.mxu0 %v1724
    %v4504 = vpop.f32.mrf.mxu0
    %v4505 = vadd.f32 0.0, %v4504
    %v4506 = vpop.f32.mrf.mxu0
    %4507 = vmatprep.mubr.f32.mxu0 0.0
    %4508 = vmatmul.mubr.f32.gmra.mxu0 %v1727
    %v4509 = vpop.f32.mrf.mxu0
    %v4510 = vadd.f32 0.0, %v4509
    %v4511 = vpop.f32.mrf.mxu0
    %4512 = vmatprep.mubr.f32.mxu0 0.0
    %4513 = vmatmul.mubr.f32.gmra.mxu0 %v1730
    %v4514 = vpop.f32.mrf.mxu0
    %v4515 = vadd.f32 0.0, %v4514
    %v4516 = vpop.f32.mrf.mxu0
    %4517 = vmatprep.mubr.f32.mxu0 0.0
    %4518 = vmatmul.mubr.f32.gmra.mxu0 %v1733
    %v4519 = vpop.f32.mrf.mxu0
    %v4520 = vadd.f32 0.0, %v4519
    %v4521 = vpop.f32.mrf.mxu0
    %4522 = vmatprep.mubr.f32.mxu0 0.0
    %4523 = vmatmul.mubr.f32.gmra.mxu0 %v1736
    %v4524 = vpop.f32.mrf.mxu0
    %v4525 = vadd.f32 0.0, %v4524
    %v4526 = vpop.f32.mrf.mxu0
    %4527 = vmatprep.mubr.f32.mxu0 0.0
    %4528 = vmatmul.mubr.f32.gmra.mxu0 %v1739
    %v4529 = vpop.f32.mrf.mxu0
    %v4530 = vadd.f32 0.0, %v4529
    %v4531 = vpop.f32.mrf.mxu0
    %4532 = vmatprep.mubr.f32.mxu0 0.0
    %4533 = vmatmul.mubr.f32.gmra.mxu0 %v1742
    %v4534 = vpop.f32.mrf.mxu0
    %v4535 = vadd.f32 0.0, %v4534
    %v4536 = vpop.f32.mrf.mxu0
    %4537 = vmatprep.mubr.f32.mxu0 0.0
    %4538 = vmatmul.mubr.f32.gmra.mxu0 %v1745
    %v4539 = vpop.f32.mrf.mxu0
    %v4540 = vadd.f32 0.0, %v4539
    %v4541 = vpop.f32.mrf.mxu0
    %4542 = vmatprep.mubr.f32.mxu0 0.0
    %4543 = vmatmul.mubr.f32.gmra.mxu0 %v1748
    %v4544 = vpop.f32.mrf.mxu0
    %v4545 = vadd.f32 0.0, %v4544
    %v4546 = vpop.f32.mrf.mxu0
    %4547 = vmatprep.mubr.f32.mxu0 0.0
    %4548 = vmatmul.mubr.f32.gmra.mxu0 %v1751
    %v4549 = vpop.f32.mrf.mxu0
    %v4550 = vadd.f32 0.0, %v4549
    %v4551 = vpop.f32.mrf.mxu0
    %4552 = vmatprep.mubr.f32.mxu0 0.0
    %4553 = vmatmul.mubr.f32.gmra.mxu0 %v1754
    %v4554 = vpop.f32.mrf.mxu0
    %v4555 = vadd.f32 0.0, %v4554
    %v4556 = vpop.f32.mrf.mxu0
    %4557 = vmatprep.mubr.f32.mxu0 0.0
    %4558 = vmatmul.mubr.f32.gmra.mxu0 %v1757
    %v4559 = vpop.f32.mrf.mxu0
    %v4560 = vadd.f32 0.0, %v4559
    %v4561 = vpop.f32.mrf.mxu0
    %4562 = vmatprep.mubr.f32.mxu0 0.0
    %4563 = vmatmul.mubr.f32.gmra.mxu0 %v1760
    %v4564 = vpop.f32.mrf.mxu0
    %v4565 = vadd.f32 0.0, %v4564
    %v4566 = vpop.f32.mrf.mxu0
    %4567 = vmatprep.mubr.f32.mxu0 0.0
    %4568 = vmatmul.mubr.f32.gmra.mxu0 %v1763
    %v4569 = vpop.f32.mrf.mxu0
    %v4570 = vadd.f32 0.0, %v4569
    %v4571 = vpop.f32.mrf.mxu0
    %4572 = vdwg.mxu0
    %v4573 = vmul.f32 %v2126, 0.5
    %v4574 = vmul.f32 %v2128, 0.5
    %v4575 = vmul.f32 %v2779, 0.5
    %v4576 = vmul.f32 %v2781, 0.5
    %v4577 = vmul.f32 %v3432, 0.5
    %v4578 = vmul.f32 %v3434, 0.5
    %v4579 = vmul.f32 %v4085, 0.5
    %v4580 = vmul.f32 %v2132, 0.5
    %v4581 = vmul.f32 %v2134, 0.5
    %v4582 = vmul.f32 %v2785, 0.5
    %v4583 = vmul.f32 %v2787, 0.5
    %v4584 = vmul.f32 %v3438, 0.5
    %v4585 = vmul.f32 %v3440, 0.5
    %v4586 = vmul.f32 %v4090, 0.5
    %v4587 = vmul.f32 %v2138, 0.5
    %v4588 = vmul.f32 %v2140, 0.5
    %v4589 = vmul.f32 %v2791, 0.5
    %v4590 = vmul.f32 %v2793, 0.5
    %v4591 = vmul.f32 %v3444, 0.5
    %v4592 = vmul.f32 %v3446, 0.5
    %v4593 = vmul.f32 %v4095, 0.5
    %v4594 = vmul.f32 %v2144, 0.5
    %v4595 = vmul.f32 %v2146, 0.5
    %v4596 = vmul.f32 %v2797, 0.5
    %v4597 = vmul.f32 %v2799, 0.5
    %v4598 = vmul.f32 %v3450, 0.5
    %v4599 = vmul.f32 %v3452, 0.5
    %v4600 = vmul.f32 %v4100, 0.5
    %v4601 = vmul.f32 %v2150, 0.5
    %v4602 = vmul.f32 %v2152, 0.5
    %v4603 = vmul.f32 %v2803, 0.5
    %v4604 = vmul.f32 %v2805, 0.5
    %v4605 = vmul.f32 %v3456, 0.5
    %v4606 = vmul.f32 %v3458, 0.5
    %v4607 = vmul.f32 %v4105, 0.5
    %v4608 = vmul.f32 %v2156, 0.5
    %v4609 = vmul.f32 %v2158, 0.5
    %v4610 = vmul.f32 %v2809, 0.5
    %v4611 = vmul.f32 %v2811, 0.5
    %v4612 = vmul.f32 %v3462, 0.5
    %v4613 = vmul.f32 %v3464, 0.5
    %v4614 = vmul.f32 %v4110, 0.5
    %v4615 = vmul.f32 %v2162, 0.5
    %v4616 = vmul.f32 %v2164, 0.5
    %v4617 = vmul.f32 %v2815, 0.5
    %v4618 = vmul.f32 %v2817, 0.5
    %v4619 = vmul.f32 %v3468, 0.5
    %v4620 = vmul.f32 %v3470, 0.5
    %v4621 = vmul.f32 %v4115, 0.5
    %v4622 = vmul.f32 %v2168, 0.5
    %v4623 = vmul.f32 %v2170, 0.5
    %v4624 = vmul.f32 %v2821, 0.5
    %v4625 = vmul.f32 %v2823, 0.5
    %v4626 = vmul.f32 %v3474, 0.5
    %v4627 = vmul.f32 %v3476, 0.5
    %v4628 = vmul.f32 %v4120, 0.5
    %v4629 = vmul.f32 %v2174, 0.5
    %v4630 = vmul.f32 %v2176, 0.5
    %v4631 = vmul.f32 %v2827, 0.5
    %v4632 = vmul.f32 %v2829, 0.5
    %v4633 = vmul.f32 %v3480, 0.5
    %v4634 = vmul.f32 %v3482, 0.5
    %v4635 = vmul.f32 %v4125, 0.5
    %v4636 = vmul.f32 %v2180, 0.5
    %v4637 = vmul.f32 %v2182, 0.5
    %v4638 = vmul.f32 %v2833, 0.5
    %v4639 = vmul.f32 %v2835, 0.5
    %v4640 = vmul.f32 %v3486, 0.5
    %v4641 = vmul.f32 %v3488, 0.5
    %v4642 = vmul.f32 %v4130, 0.5
    %v4643 = vmul.f32 %v2186, 0.5
    %v4644 = vmul.f32 %v2188, 0.5
    %v4645 = vmul.f32 %v2839, 0.5
    %v4646 = vmul.f32 %v2841, 0.5
    %v4647 = vmul.f32 %v3492, 0.5
    %v4648 = vmul.f32 %v3494, 0.5
    %v4649 = vmul.f32 %v4135, 0.5
    %v4650 = vmul.f32 %v2192, 0.5
    %v4651 = vmul.f32 %v2194, 0.5
    %v4652 = vmul.f32 %v2845, 0.5
    %v4653 = vmul.f32 %v2847, 0.5
    %v4654 = vmul.f32 %v3498, 0.5
    %v4655 = vmul.f32 %v3500, 0.5
    %v4656 = vmul.f32 %v4140, 0.5
    %v4657 = vmul.f32 %v2198, 0.5
    %v4658 = vmul.f32 %v2200, 0.5
    %v4659 = vmul.f32 %v2851, 0.5
    %v4660 = vmul.f32 %v2853, 0.5
    %v4661 = vmul.f32 %v3504, 0.5
    %v4662 = vmul.f32 %v3506, 0.5
    %v4663 = vmul.f32 %v4145, 0.5
    %v4664 = vmul.f32 %v2204, 0.5
    %v4665 = vmul.f32 %v2206, 0.5
    %v4666 = vmul.f32 %v2857, 0.5
    %v4667 = vmul.f32 %v2859, 0.5
    %v4668 = vmul.f32 %v3510, 0.5
    %v4669 = vmul.f32 %v3512, 0.5
    %v4670 = vmul.f32 %v4150, 0.5
    %v4671 = vmul.f32 %v2210, 0.5
    %v4672 = vmul.f32 %v2212, 0.5
    %v4673 = vmul.f32 %v2863, 0.5
    %v4674 = vmul.f32 %v2865, 0.5
    %v4675 = vmul.f32 %v3516, 0.5
    %v4676 = vmul.f32 %v3518, 0.5
    %v4677 = vmul.f32 %v4155, 0.5
    %v4678 = vmul.f32 %v2216, 0.5
    %v4679 = vmul.f32 %v2218, 0.5
    %v4680 = vmul.f32 %v2869, 0.5
    %v4681 = vmul.f32 %v2871, 0.5
    %v4682 = vmul.f32 %v3522, 0.5
    %v4683 = vmul.f32 %v3524, 0.5
    %v4684 = vmul.f32 %v4160, 0.5
    %v4685 = vmul.f32 %v2222, 0.5
    %v4686 = vmul.f32 %v2224, 0.5
    %v4687 = vmul.f32 %v2875, 0.5
    %v4688 = vmul.f32 %v2877, 0.5
    %v4689 = vmul.f32 %v3528, 0.5
    %v4690 = vmul.f32 %v3530, 0.5
    %v4691 = vmul.f32 %v4165, 0.5
    %v4692 = vmul.f32 %v2228, 0.5
    %v4693 = vmul.f32 %v2230, 0.5
    %v4694 = vmul.f32 %v2881, 0.5
    %v4695 = vmul.f32 %v2883, 0.5
    %v4696 = vmul.f32 %v3534, 0.5
    %v4697 = vmul.f32 %v3536, 0.5
    %v4698 = vmul.f32 %v4170, 0.5
    %v4699 = vmul.f32 %v2234, 0.5
    %v4700 = vmul.f32 %v2236, 0.5
    %v4701 = vmul.f32 %v2887, 0.5
    %v4702 = vmul.f32 %v2889, 0.5
    %v4703 = vmul.f32 %v3540, 0.5
    %v4704 = vmul.f32 %v3542, 0.5
    %v4705 = vmul.f32 %v4175, 0.5
    %v4706 = vmul.f32 %v2240, 0.5
    %v4707 = vmul.f32 %v2242, 0.5
    %v4708 = vmul.f32 %v2893, 0.5
    %v4709 = vmul.f32 %v2895, 0.5
    %v4710 = vmul.f32 %v3546, 0.5
    %v4711 = vmul.f32 %v3548, 0.5
    %v4712 = vmul.f32 %v4180, 0.5
    %v4713 = vmul.f32 %v2246, 0.5
    %v4714 = vmul.f32 %v2248, 0.5
    %v4715 = vmul.f32 %v2899, 0.5
    %v4716 = vmul.f32 %v2901, 0.5
    %v4717 = vmul.f32 %v3552, 0.5
    %v4718 = vmul.f32 %v3554, 0.5
    %v4719 = vmul.f32 %v4185, 0.5
    %v4720 = vmul.f32 %v2252, 0.5
    %v4721 = vmul.f32 %v2254, 0.5
    %v4722 = vmul.f32 %v2905, 0.5
    %v4723 = vmul.f32 %v2907, 0.5
    %v4724 = vmul.f32 %v3558, 0.5
    %v4725 = vmul.f32 %v3560, 0.5
    %v4726 = vmul.f32 %v4190, 0.5
    %v4727 = vmul.f32 %v2258, 0.5
    %v4728 = vmul.f32 %v2260, 0.5
    %v4729 = vmul.f32 %v2911, 0.5
    %v4730 = vmul.f32 %v2913, 0.5
    %v4731 = vmul.f32 %v3564, 0.5
    %v4732 = vmul.f32 %v3566, 0.5
    %v4733 = vmul.f32 %v4195, 0.5
    %v4734 = vmul.f32 %v2264, 0.5
    %v4735 = vmul.f32 %v2266, 0.5
    %v4736 = vmul.f32 %v2917, 0.5
    %v4737 = vmul.f32 %v2919, 0.5
    %v4738 = vmul.f32 %v3570, 0.5
    %v4739 = vmul.f32 %v3572, 0.5
    %v4740 = vmul.f32 %v4200, 0.5
    %v4741 = vmul.f32 %v2270, 0.5
    %v4742 = vmul.f32 %v2272, 0.5
    %v4743 = vmul.f32 %v2923, 0.5
    %v4744 = vmul.f32 %v2925, 0.5
    %v4745 = vmul.f32 %v3576, 0.5
    %v4746 = vmul.f32 %v3578, 0.5
    %v4747 = vmul.f32 %v4205, 0.5
    %v4748 = vmul.f32 %v2276, 0.5
    %v4749 = vmul.f32 %v2278, 0.5
    %v4750 = vmul.f32 %v2929, 0.5
    %v4751 = vmul.f32 %v2931, 0.5
    %v4752 = vmul.f32 %v3582, 0.5
    %v4753 = vmul.f32 %v3584, 0.5
    %v4754 = vmul.f32 %v4210, 0.5
    %v4755 = vmul.f32 %v2282, 0.5
    %v4756 = vmul.f32 %v2284, 0.5
    %v4757 = vmul.f32 %v2935, 0.5
    %v4758 = vmul.f32 %v2937, 0.5
    %v4759 = vmul.f32 %v3588, 0.5
    %v4760 = vmul.f32 %v3590, 0.5
    %v4761 = vmul.f32 %v4215, 0.5
    %v4762 = vmul.f32 %v2288, 0.5
    %v4763 = vmul.f32 %v2290, 0.5
    %v4764 = vmul.f32 %v2941, 0.5
    %v4765 = vmul.f32 %v2943, 0.5
    %v4766 = vmul.f32 %v3594, 0.5
    %v4767 = vmul.f32 %v3596, 0.5
    %v4768 = vmul.f32 %v4220, 0.5
    %v4769 = vmul.f32 %v2294, 0.5
    %v4770 = vmul.f32 %v2296, 0.5
    %v4771 = vmul.f32 %v2947, 0.5
    %v4772 = vmul.f32 %v2949, 0.5
    %v4773 = vmul.f32 %v3600, 0.5
    %v4774 = vmul.f32 %v3602, 0.5
    %v4775 = vmul.f32 %v4225, 0.5
    %v4776 = vmul.f32 %v2300, 0.5
    %v4777 = vmul.f32 %v2302, 0.5
    %v4778 = vmul.f32 %v2953, 0.5
    %v4779 = vmul.f32 %v2955, 0.5
    %v4780 = vmul.f32 %v3606, 0.5
    %v4781 = vmul.f32 %v3608, 0.5
    %v4782 = vmul.f32 %v4230, 0.5
    %v4783 = vmul.f32 %v2306, 0.5
    %v4784 = vmul.f32 %v2308, 0.5
    %v4785 = vmul.f32 %v2959, 0.5
    %v4786 = vmul.f32 %v2961, 0.5
    %v4787 = vmul.f32 %v3612, 0.5
    %v4788 = vmul.f32 %v3614, 0.5
    %v4789 = vmul.f32 %v4235, 0.5
    %v4790 = vmul.f32 %v2312, 0.5
    %v4791 = vmul.f32 %v2314, 0.5
    %v4792 = vmul.f32 %v2965, 0.5
    %v4793 = vmul.f32 %v2967, 0.5
    %v4794 = vmul.f32 %v3618, 0.5
    %v4795 = vmul.f32 %v3620, 0.5
    %v4796 = vmul.f32 %v4240, 0.5
    %v4797 = vmul.f32 %v2318, 0.5
    %v4798 = vmul.f32 %v2320, 0.5
    %v4799 = vmul.f32 %v2971, 0.5
    %v4800 = vmul.f32 %v2973, 0.5
    %v4801 = vmul.f32 %v3624, 0.5
    %v4802 = vmul.f32 %v3626, 0.5
    %v4803 = vmul.f32 %v4245, 0.5
    %v4804 = vmul.f32 %v2324, 0.5
    %v4805 = vmul.f32 %v2326, 0.5
    %v4806 = vmul.f32 %v2977, 0.5
    %v4807 = vmul.f32 %v2979, 0.5
    %v4808 = vmul.f32 %v3630, 0.5
    %v4809 = vmul.f32 %v3632, 0.5
    %v4810 = vmul.f32 %v4250, 0.5
    %v4811 = vmul.f32 %v2330, 0.5
    %v4812 = vmul.f32 %v2332, 0.5
    %v4813 = vmul.f32 %v2983, 0.5
    %v4814 = vmul.f32 %v2985, 0.5
    %v4815 = vmul.f32 %v3636, 0.5
    %v4816 = vmul.f32 %v3638, 0.5
    %v4817 = vmul.f32 %v4255, 0.5
    %v4818 = vmul.f32 %v2336, 0.5
    %v4819 = vmul.f32 %v2338, 0.5
    %v4820 = vmul.f32 %v2989, 0.5
    %v4821 = vmul.f32 %v2991, 0.5
    %v4822 = vmul.f32 %v3642, 0.5
    %v4823 = vmul.f32 %v3644, 0.5
    %v4824 = vmul.f32 %v4260, 0.5
    %v4825 = vmul.f32 %v2342, 0.5
    %v4826 = vmul.f32 %v2344, 0.5
    %v4827 = vmul.f32 %v2995, 0.5
    %v4828 = vmul.f32 %v2997, 0.5
    %v4829 = vmul.f32 %v3648, 0.5
    %v4830 = vmul.f32 %v3650, 0.5
    %v4831 = vmul.f32 %v4265, 0.5
    %v4832 = vmul.f32 %v2348, 0.5
    %v4833 = vmul.f32 %v2350, 0.5
    %v4834 = vmul.f32 %v3001, 0.5
    %v4835 = vmul.f32 %v3003, 0.5
    %v4836 = vmul.f32 %v3654, 0.5
    %v4837 = vmul.f32 %v3656, 0.5
    %v4838 = vmul.f32 %v4270, 0.5
    %v4839 = vmul.f32 %v2354, 0.5
    %v4840 = vmul.f32 %v2356, 0.5
    %v4841 = vmul.f32 %v3007, 0.5
    %v4842 = vmul.f32 %v3009, 0.5
    %v4843 = vmul.f32 %v3660, 0.5
    %v4844 = vmul.f32 %v3662, 0.5
    %v4845 = vmul.f32 %v4275, 0.5
    %v4846 = vmul.f32 %v2360, 0.5
    %v4847 = vmul.f32 %v2362, 0.5
    %v4848 = vmul.f32 %v3013, 0.5
    %v4849 = vmul.f32 %v3015, 0.5
    %v4850 = vmul.f32 %v3666, 0.5
    %v4851 = vmul.f32 %v3668, 0.5
    %v4852 = vmul.f32 %v4280, 0.5
    %v4853 = vmul.f32 %v2366, 0.5
    %v4854 = vmul.f32 %v2368, 0.5
    %v4855 = vmul.f32 %v3019, 0.5
    %v4856 = vmul.f32 %v3021, 0.5
    %v4857 = vmul.f32 %v3672, 0.5
    %v4858 = vmul.f32 %v3674, 0.5
    %v4859 = vmul.f32 %v4285, 0.5
    %v4860 = vmul.f32 %v2372, 0.5
    %v4861 = vmul.f32 %v2374, 0.5
    %v4862 = vmul.f32 %v3025, 0.5
    %v4863 = vmul.f32 %v3027, 0.5
    %v4864 = vmul.f32 %v3678, 0.5
    %v4865 = vmul.f32 %v3680, 0.5
    %v4866 = vmul.f32 %v4290, 0.5
    %v4867 = vmul.f32 %v2378, 0.5
    %v4868 = vmul.f32 %v2380, 0.5
    %v4869 = vmul.f32 %v3031, 0.5
    %v4870 = vmul.f32 %v3033, 0.5
    %v4871 = vmul.f32 %v3684, 0.5
    %v4872 = vmul.f32 %v3686, 0.5
    %v4873 = vmul.f32 %v4295, 0.5
    %v4874 = vmul.f32 %v2384, 0.5
    %v4875 = vmul.f32 %v2386, 0.5
    %v4876 = vmul.f32 %v3037, 0.5
    %v4877 = vmul.f32 %v3039, 0.5
    %v4878 = vmul.f32 %v3690, 0.5
    %v4879 = vmul.f32 %v3692, 0.5
    %v4880 = vmul.f32 %v4300, 0.5
    %v4881 = vmul.f32 %v2390, 0.5
    %v4882 = vmul.f32 %v2392, 0.5
    %v4883 = vmul.f32 %v3043, 0.5
    %v4884 = vmul.f32 %v3045, 0.5
    %v4885 = vmul.f32 %v3696, 0.5
    %v4886 = vmul.f32 %v3698, 0.5
    %v4887 = vmul.f32 %v4305, 0.5
    %v4888 = vmul.f32 %v2396, 0.5
    %v4889 = vmul.f32 %v2398, 0.5
    %v4890 = vmul.f32 %v3049, 0.5
    %v4891 = vmul.f32 %v3051, 0.5
    %v4892 = vmul.f32 %v3702, 0.5
    %v4893 = vmul.f32 %v3704, 0.5
    %v4894 = vmul.f32 %v4310, 0.5
    %v4895 = vmul.f32 %v2402, 0.5
    %v4896 = vmul.f32 %v2404, 0.5
    %v4897 = vmul.f32 %v3055, 0.5
    %v4898 = vmul.f32 %v3057, 0.5
    %v4899 = vmul.f32 %v3708, 0.5
    %v4900 = vmul.f32 %v3710, 0.5
    %v4901 = vmul.f32 %v4315, 0.5
    %v4902 = vmul.f32 %v2408, 0.5
    %v4903 = vmul.f32 %v2410, 0.5
    %v4904 = vmul.f32 %v3061, 0.5
    %v4905 = vmul.f32 %v3063, 0.5
    %v4906 = vmul.f32 %v3714, 0.5
    %v4907 = vmul.f32 %v3716, 0.5
    %v4908 = vmul.f32 %v4320, 0.5
    %v4909 = vmul.f32 %v2414, 0.5
    %v4910 = vmul.f32 %v2416, 0.5
    %v4911 = vmul.f32 %v3067, 0.5
    %v4912 = vmul.f32 %v3069, 0.5
    %v4913 = vmul.f32 %v3720, 0.5
    %v4914 = vmul.f32 %v3722, 0.5
    %v4915 = vmul.f32 %v4325, 0.5
    %v4916 = vmul.f32 %v2420, 0.5
    %v4917 = vmul.f32 %v2422, 0.5
    %v4918 = vmul.f32 %v3073, 0.5
    %v4919 = vmul.f32 %v3075, 0.5
    %v4920 = vmul.f32 %v3726, 0.5
    %v4921 = vmul.f32 %v3728, 0.5
    %v4922 = vmul.f32 %v4330, 0.5
    %v4923 = vmul.f32 %v2426, 0.5
    %v4924 = vmul.f32 %v2428, 0.5
    %v4925 = vmul.f32 %v3079, 0.5
    %v4926 = vmul.f32 %v3081, 0.5
    %v4927 = vmul.f32 %v3732, 0.5
    %v4928 = vmul.f32 %v3734, 0.5
    %v4929 = vmul.f32 %v4335, 0.5
    %v4930 = vmul.f32 %v2432, 0.5
    %v4931 = vmul.f32 %v2434, 0.5
    %v4932 = vmul.f32 %v3085, 0.5
    %v4933 = vmul.f32 %v3087, 0.5
    %v4934 = vmul.f32 %v3738, 0.5
    %v4935 = vmul.f32 %v3740, 0.5
    %v4936 = vmul.f32 %v4340, 0.5
    %v4937 = vmul.f32 %v2438, 0.5
    %v4938 = vmul.f32 %v2440, 0.5
    %v4939 = vmul.f32 %v3091, 0.5
    %v4940 = vmul.f32 %v3093, 0.5
    %v4941 = vmul.f32 %v3744, 0.5
    %v4942 = vmul.f32 %v3746, 0.5
    %v4943 = vmul.f32 %v4345, 0.5
    %v4944 = vmul.f32 %v2444, 0.5
    %v4945 = vmul.f32 %v2446, 0.5
    %v4946 = vmul.f32 %v3097, 0.5
    %v4947 = vmul.f32 %v3099, 0.5
    %v4948 = vmul.f32 %v3750, 0.5
    %v4949 = vmul.f32 %v3752, 0.5
    %v4950 = vmul.f32 %v4350, 0.5
    %v4951 = vmul.f32 %v2450, 0.5
    %v4952 = vmul.f32 %v2452, 0.5
    %v4953 = vmul.f32 %v3103, 0.5
    %v4954 = vmul.f32 %v3105, 0.5
    %v4955 = vmul.f32 %v3756, 0.5
    %v4956 = vmul.f32 %v3758, 0.5
    %v4957 = vmul.f32 %v4355, 0.5
    %v4958 = vmul.f32 %v2456, 0.5
    %v4959 = vmul.f32 %v2458, 0.5
    %v4960 = vmul.f32 %v3109, 0.5
    %v4961 = vmul.f32 %v3111, 0.5
    %v4962 = vmul.f32 %v3762, 0.5
    %v4963 = vmul.f32 %v3764, 0.5
    %v4964 = vmul.f32 %v4360, 0.5
    %v4965 = vmul.f32 %v2462, 0.5
    %v4966 = vmul.f32 %v2464, 0.5
    %v4967 = vmul.f32 %v3115, 0.5
    %v4968 = vmul.f32 %v3117, 0.5
    %v4969 = vmul.f32 %v3768, 0.5
    %v4970 = vmul.f32 %v3770, 0.5
    %v4971 = vmul.f32 %v4365, 0.5
    %v4972 = vmul.f32 %v2468, 0.5
    %v4973 = vmul.f32 %v2470, 0.5
    %v4974 = vmul.f32 %v3121, 0.5
    %v4975 = vmul.f32 %v3123, 0.5
    %v4976 = vmul.f32 %v3774, 0.5
    %v4977 = vmul.f32 %v3776, 0.5
    %v4978 = vmul.f32 %v4370, 0.5
    %v4979 = vmul.f32 %v2474, 0.5
    %v4980 = vmul.f32 %v2476, 0.5
    %v4981 = vmul.f32 %v3127, 0.5
    %v4982 = vmul.f32 %v3129, 0.5
    %v4983 = vmul.f32 %v3780, 0.5
    %v4984 = vmul.f32 %v3782, 0.5
    %v4985 = vmul.f32 %v4375, 0.5
    %v4986 = vmul.f32 %v2480, 0.5
    %v4987 = vmul.f32 %v2482, 0.5
    %v4988 = vmul.f32 %v3133, 0.5
    %v4989 = vmul.f32 %v3135, 0.5
    %v4990 = vmul.f32 %v3786, 0.5
    %v4991 = vmul.f32 %v3788, 0.5
    %v4992 = vmul.f32 %v4380, 0.5
    %v4993 = vmul.f32 %v2486, 0.5
    %v4994 = vmul.f32 %v2488, 0.5
    %v4995 = vmul.f32 %v3139, 0.5
    %v4996 = vmul.f32 %v3141, 0.5
    %v4997 = vmul.f32 %v3792, 0.5
    %v4998 = vmul.f32 %v3794, 0.5
    %v4999 = vmul.f32 %v4385, 0.5
    %v5000 = vmul.f32 %v2492, 0.5
    %v5001 = vmul.f32 %v2494, 0.5
    %v5002 = vmul.f32 %v3145, 0.5
    %v5003 = vmul.f32 %v3147, 0.5
    %v5004 = vmul.f32 %v3798, 0.5
    %v5005 = vmul.f32 %v3800, 0.5
    %v5006 = vmul.f32 %v4390, 0.5
    %v5007 = vmul.f32 %v2498, 0.5
    %v5008 = vmul.f32 %v2500, 0.5
    %v5009 = vmul.f32 %v3151, 0.5
    %v5010 = vmul.f32 %v3153, 0.5
    %v5011 = vmul.f32 %v3804, 0.5
    %v5012 = vmul.f32 %v3806, 0.5
    %v5013 = vmul.f32 %v4395, 0.5
    %v5014 = vmul.f32 %v2504, 0.5
    %v5015 = vmul.f32 %v2506, 0.5
    %v5016 = vmul.f32 %v3157, 0.5
    %v5017 = vmul.f32 %v3159, 0.5
    %v5018 = vmul.f32 %v3810, 0.5
    %v5019 = vmul.f32 %v3812, 0.5
    %v5020 = vmul.f32 %v4400, 0.5
    %v5021 = vmul.f32 %v2510, 0.5
    %v5022 = vmul.f32 %v2512, 0.5
    %v5023 = vmul.f32 %v3163, 0.5
    %v5024 = vmul.f32 %v3165, 0.5
    %v5025 = vmul.f32 %v3816, 0.5
    %v5026 = vmul.f32 %v3818, 0.5
    %v5027 = vmul.f32 %v4405, 0.5
    %v5028 = vmul.f32 %v2516, 0.5
    %v5029 = vmul.f32 %v2518, 0.5
    %v5030 = vmul.f32 %v3169, 0.5
    %v5031 = vmul.f32 %v3171, 0.5
    %v5032 = vmul.f32 %v3822, 0.5
    %v5033 = vmul.f32 %v3824, 0.5
    %v5034 = vmul.f32 %v4410, 0.5
    %v5035 = vmul.f32 %v2522, 0.5
    %v5036 = vmul.f32 %v2524, 0.5
    %v5037 = vmul.f32 %v3175, 0.5
    %v5038 = vmul.f32 %v3177, 0.5
    %v5039 = vmul.f32 %v3828, 0.5
    %v5040 = vmul.f32 %v3830, 0.5
    %v5041 = vmul.f32 %v4415, 0.5
    %v5042 = vmul.f32 %v2528, 0.5
    %v5043 = vmul.f32 %v2530, 0.5
    %v5044 = vmul.f32 %v3181, 0.5
    %v5045 = vmul.f32 %v3183, 0.5
    %v5046 = vmul.f32 %v3834, 0.5
    %v5047 = vmul.f32 %v3836, 0.5
    %v5048 = vmul.f32 %v4420, 0.5
    %v5049 = vmul.f32 %v2534, 0.5
    %v5050 = vmul.f32 %v2536, 0.5
    %v5051 = vmul.f32 %v3187, 0.5
    %v5052 = vmul.f32 %v3189, 0.5
    %v5053 = vmul.f32 %v3840, 0.5
    %v5054 = vmul.f32 %v3842, 0.5
    %v5055 = vmul.f32 %v4425, 0.5
    %v5056 = vmul.f32 %v2540, 0.5
    %v5057 = vmul.f32 %v2542, 0.5
    %v5058 = vmul.f32 %v3193, 0.5
    %v5059 = vmul.f32 %v3195, 0.5
    %v5060 = vmul.f32 %v3846, 0.5
    %v5061 = vmul.f32 %v3848, 0.5
    %v5062 = vmul.f32 %v4430, 0.5
    %v5063 = vmul.f32 %v2546, 0.5
    %v5064 = vmul.f32 %v2548, 0.5
    %v5065 = vmul.f32 %v3199, 0.5
    %v5066 = vmul.f32 %v3201, 0.5
    %v5067 = vmul.f32 %v3852, 0.5
    %v5068 = vmul.f32 %v3854, 0.5
    %v5069 = vmul.f32 %v4435, 0.5
    %v5070 = vmul.f32 %v2552, 0.5
    %v5071 = vmul.f32 %v2554, 0.5
    %v5072 = vmul.f32 %v3205, 0.5
    %v5073 = vmul.f32 %v3207, 0.5
    %v5074 = vmul.f32 %v3858, 0.5
    %v5075 = vmul.f32 %v3860, 0.5
    %v5076 = vmul.f32 %v4440, 0.5
    %v5077 = vmul.f32 %v2558, 0.5
    %v5078 = vmul.f32 %v2560, 0.5
    %v5079 = vmul.f32 %v3211, 0.5
    %v5080 = vmul.f32 %v3213, 0.5
    %v5081 = vmul.f32 %v3864, 0.5
    %v5082 = vmul.f32 %v3866, 0.5
    %v5083 = vmul.f32 %v4445, 0.5
    %v5084 = vmul.f32 %v2564, 0.5
    %v5085 = vmul.f32 %v2566, 0.5
    %v5086 = vmul.f32 %v3217, 0.5
    %v5087 = vmul.f32 %v3219, 0.5
    %v5088 = vmul.f32 %v3870, 0.5
    %v5089 = vmul.f32 %v3872, 0.5
    %v5090 = vmul.f32 %v4450, 0.5
    %v5091 = vmul.f32 %v2570, 0.5
    %v5092 = vmul.f32 %v2572, 0.5
    %v5093 = vmul.f32 %v3223, 0.5
    %v5094 = vmul.f32 %v3225, 0.5
    %v5095 = vmul.f32 %v3876, 0.5
    %v5096 = vmul.f32 %v3878, 0.5
    %v5097 = vmul.f32 %v4455, 0.5
    %v5098 = vmul.f32 %v2576, 0.5
    %v5099 = vmul.f32 %v2578, 0.5
    %v5100 = vmul.f32 %v3229, 0.5
    %v5101 = vmul.f32 %v3231, 0.5
    %v5102 = vmul.f32 %v3882, 0.5
    %v5103 = vmul.f32 %v3884, 0.5
    %v5104 = vmul.f32 %v4460, 0.5
    %v5105 = vmul.f32 %v2582, 0.5
    %v5106 = vmul.f32 %v2584, 0.5
    %v5107 = vmul.f32 %v3235, 0.5
    %v5108 = vmul.f32 %v3237, 0.5
    %v5109 = vmul.f32 %v3888, 0.5
    %v5110 = vmul.f32 %v3890, 0.5
    %v5111 = vmul.f32 %v4465, 0.5
    %v5112 = vmul.f32 %v2588, 0.5
    %v5113 = vmul.f32 %v2590, 0.5
    %v5114 = vmul.f32 %v3241, 0.5
    %v5115 = vmul.f32 %v3243, 0.5
    %v5116 = vmul.f32 %v3894, 0.5
    %v5117 = vmul.f32 %v3896, 0.5
    %v5118 = vmul.f32 %v4470, 0.5
    %v5119 = vmul.f32 %v2594, 0.5
    %v5120 = vmul.f32 %v2596, 0.5
    %v5121 = vmul.f32 %v3247, 0.5
    %v5122 = vmul.f32 %v3249, 0.5
    %v5123 = vmul.f32 %v3900, 0.5
    %v5124 = vmul.f32 %v3902, 0.5
    %v5125 = vmul.f32 %v4475, 0.5
    %v5126 = vmul.f32 %v2600, 0.5
    %v5127 = vmul.f32 %v2602, 0.5
    %v5128 = vmul.f32 %v3253, 0.5
    %v5129 = vmul.f32 %v3255, 0.5
    %v5130 = vmul.f32 %v3906, 0.5
    %v5131 = vmul.f32 %v3908, 0.5
    %v5132 = vmul.f32 %v4480, 0.5
    %v5133 = vmul.f32 %v2606, 0.5
    %v5134 = vmul.f32 %v2608, 0.5
    %v5135 = vmul.f32 %v3259, 0.5
    %v5136 = vmul.f32 %v3261, 0.5
    %v5137 = vmul.f32 %v3912, 0.5
    %v5138 = vmul.f32 %v3914, 0.5
    %v5139 = vmul.f32 %v4485, 0.5
    %v5140 = vmul.f32 %v2612, 0.5
    %v5141 = vmul.f32 %v2614, 0.5
    %v5142 = vmul.f32 %v3265, 0.5
    %v5143 = vmul.f32 %v3267, 0.5
    %v5144 = vmul.f32 %v3918, 0.5
    %v5145 = vmul.f32 %v3920, 0.5
    %v5146 = vmul.f32 %v4490, 0.5
    %v5147 = vmul.f32 %v2618, 0.5
    %v5148 = vmul.f32 %v2620, 0.5
    %v5149 = vmul.f32 %v3271, 0.5
    %v5150 = vmul.f32 %v3273, 0.5
    %v5151 = vmul.f32 %v3924, 0.5
    %v5152 = vmul.f32 %v3926, 0.5
    %v5153 = vmul.f32 %v4495, 0.5
    %v5154 = vmul.f32 %v2624, 0.5
    %v5155 = vmul.f32 %v2626, 0.5
    %v5156 = vmul.f32 %v3277, 0.5
    %v5157 = vmul.f32 %v3279, 0.5
    %v5158 = vmul.f32 %v3930, 0.5
    %v5159 = vmul.f32 %v3932, 0.5
    %v5160 = vmul.f32 %v4500, 0.5
    %v5161 = vmul.f32 %v2630, 0.5
    %v5162 = vmul.f32 %v2632, 0.5
    %v5163 = vmul.f32 %v3283, 0.5
    %v5164 = vmul.f32 %v3285, 0.5
    %v5165 = vmul.f32 %v3936, 0.5
    %v5166 = vmul.f32 %v3938, 0.5
    %v5167 = vmul.f32 %v4505, 0.5
    %v5168 = vmul.f32 %v2636, 0.5
    %v5169 = vmul.f32 %v2638, 0.5
    %v5170 = vmul.f32 %v3289, 0.5
    %v5171 = vmul.f32 %v3291, 0.5
    %v5172 = vmul.f32 %v3942, 0.5
    %v5173 = vmul.f32 %v3944, 0.5
    %v5174 = vmul.f32 %v4510, 0.5
    %v5175 = vmul.f32 %v2642, 0.5
    %v5176 = vmul.f32 %v2644, 0.5
    %v5177 = vmul.f32 %v3295, 0.5
    %v5178 = vmul.f32 %v3297, 0.5
    %v5179 = vmul.f32 %v3948, 0.5
    %v5180 = vmul.f32 %v3950, 0.5
    %v5181 = vmul.f32 %v4515, 0.5
    %v5182 = vmul.f32 %v2648, 0.5
    %v5183 = vmul.f32 %v2650, 0.5
    %v5184 = vmul.f32 %v3301, 0.5
    %v5185 = vmul.f32 %v3303, 0.5
    %v5186 = vmul.f32 %v3954, 0.5
    %v5187 = vmul.f32 %v3956, 0.5
    %v5188 = vmul.f32 %v4520, 0.5
    %v5189 = vmul.f32 %v2654, 0.5
    %v5190 = vmul.f32 %v2656, 0.5
    %v5191 = vmul.f32 %v3307, 0.5
    %v5192 = vmul.f32 %v3309, 0.5
    %v5193 = vmul.f32 %v3960, 0.5
    %v5194 = vmul.f32 %v3962, 0.5
    %v5195 = vmul.f32 %v4525, 0.5
    %v5196 = vmul.f32 %v2660, 0.5
    %v5197 = vmul.f32 %v2662, 0.5
    %v5198 = vmul.f32 %v3313, 0.5
    %v5199 = vmul.f32 %v3315, 0.5
    %v5200 = vmul.f32 %v3966, 0.5
    %v5201 = vmul.f32 %v3968, 0.5
    %v5202 = vmul.f32 %v4530, 0.5
    %v5203 = vmul.f32 %v2666, 0.5
    %v5204 = vmul.f32 %v2668, 0.5
    %v5205 = vmul.f32 %v3319, 0.5
    %v5206 = vmul.f32 %v3321, 0.5
    %v5207 = vmul.f32 %v3972, 0.5
    %v5208 = vmul.f32 %v3974, 0.5
    %v5209 = vmul.f32 %v4535, 0.5
    %v5210 = vmul.f32 %v2672, 0.5
    %v5211 = vmul.f32 %v2674, 0.5
    %v5212 = vmul.f32 %v3325, 0.5
    %v5213 = vmul.f32 %v3327, 0.5
    %v5214 = vmul.f32 %v3978, 0.5
    %v5215 = vmul.f32 %v3980, 0.5
    %v5216 = vmul.f32 %v4540, 0.5
    %v5217 = vmul.f32 %v2678, 0.5
    %v5218 = vmul.f32 %v2680, 0.5
    %v5219 = vmul.f32 %v3331, 0.5
    %v5220 = vmul.f32 %v3333, 0.5
    %v5221 = vmul.f32 %v3984, 0.5
    %v5222 = vmul.f32 %v3986, 0.5
    %v5223 = vmul.f32 %v4545, 0.5
    %v5224 = vmul.f32 %v2684, 0.5
    %v5225 = vmul.f32 %v2686, 0.5
    %v5226 = vmul.f32 %v3337, 0.5
    %v5227 = vmul.f32 %v3339, 0.5
    %v5228 = vmul.f32 %v3990, 0.5
    %v5229 = vmul.f32 %v3992, 0.5
    %v5230 = vmul.f32 %v4550, 0.5
    %v5231 = vmul.f32 %v2690, 0.5
    %v5232 = vmul.f32 %v2692, 0.5
    %v5233 = vmul.f32 %v3343, 0.5
    %v5234 = vmul.f32 %v3345, 0.5
    %v5235 = vmul.f32 %v3996, 0.5
    %v5236 = vmul.f32 %v3998, 0.5
    %v5237 = vmul.f32 %v4555, 0.5
    %v5238 = vmul.f32 %v2696, 0.5
    %v5239 = vmul.f32 %v2698, 0.5
    %v5240 = vmul.f32 %v3349, 0.5
    %v5241 = vmul.f32 %v3351, 0.5
    %v5242 = vmul.f32 %v4002, 0.5
    %v5243 = vmul.f32 %v4004, 0.5
    %v5244 = vmul.f32 %v4560, 0.5
    %v5245 = vmul.f32 %v2702, 0.5
    %v5246 = vmul.f32 %v2704, 0.5
    %v5247 = vmul.f32 %v3355, 0.5
    %v5248 = vmul.f32 %v3357, 0.5
    %v5249 = vmul.f32 %v4008, 0.5
    %v5250 = vmul.f32 %v4010, 0.5
    %v5251 = vmul.f32 %v4565, 0.5
    %v5252 = vmul.f32 %v2708, 0.5
    %v5253 = vmul.f32 %v2710, 0.5
    %v5254 = vmul.f32 %v3361, 0.5
    %v5255 = vmul.f32 %v3363, 0.5
    %v5256 = vmul.f32 %v4014, 0.5
    %v5257 = vmul.f32 %v4016, 0.5
    %v5258 = vmul.f32 %v4570, 0.5
    %v5259 = vtanh.pop %v4573
    %v5260 = vtanh.pop %v4574
    %v5261 = vtanh.pop %v4575
    %v5262 = vtanh.pop %v4576
    %v5263 = vtanh.pop %v4577
    %v5264 = vtanh.pop %v4578
    %v5265 = vtanh.pop %v4579
    %v5266 = vtanh.pop %v4580
    %v5267 = vtanh.pop %v4581
    %v5268 = vtanh.pop %v4582
    %v5269 = vtanh.pop %v4583
    %v5270 = vtanh.pop %v4584
    %v5271 = vtanh.pop %v4585
    %v5272 = vtanh.pop %v4586
    %v5273 = vtanh.pop %v4587
    %v5274 = vtanh.pop %v4588
    %v5275 = vtanh.pop %v4589
    %v5276 = vtanh.pop %v4590
    %v5277 = vtanh.pop %v4591
    %v5278 = vtanh.pop %v4592
    %v5279 = vtanh.pop %v4593
    %v5280 = vtanh.pop %v4594
    %v5281 = vtanh.pop %v4595
    %v5282 = vtanh.pop %v4596
    %v5283 = vtanh.pop %v4597
    %v5284 = vtanh.pop %v4598
    %v5285 = vtanh.pop %v4599
    %v5286 = vtanh.pop %v4600
    %v5287 = vtanh.pop %v4601
    %v5288 = vtanh.pop %v4602
    %v5289 = vtanh.pop %v4603
    %v5290 = vtanh.pop %v4604
    %v5291 = vtanh.pop %v4605
    %v5292 = vtanh.pop %v4606
    %v5293 = vtanh.pop %v4607
    %v5294 = vtanh.pop %v4608
    %v5295 = vtanh.pop %v4609
    %v5296 = vtanh.pop %v4610
    %v5297 = vtanh.pop %v4611
    %v5298 = vtanh.pop %v4612
    %v5299 = vtanh.pop %v4613
    %v5300 = vtanh.pop %v4614
    %v5301 = vtanh.pop %v4615
    %v5302 = vtanh.pop %v4616
    %v5303 = vtanh.pop %v4617
    %v5304 = vtanh.pop %v4618
    %v5305 = vtanh.pop %v4619
    %v5306 = vtanh.pop %v4620
    %v5307 = vtanh.pop %v4621
    %v5308 = vtanh.pop %v4622
    %v5309 = vtanh.pop %v4623
    %v5310 = vtanh.pop %v4624
    %v5311 = vtanh.pop %v4625
    %v5312 = vtanh.pop %v4626
    %v5313 = vtanh.pop %v4627
    %v5314 = vtanh.pop %v4628
    %v5315 = vtanh.pop %v4629
    %v5316 = vtanh.pop %v4630
    %v5317 = vtanh.pop %v4631
    %v5318 = vtanh.pop %v4632
    %v5319 = vtanh.pop %v4633
    %v5320 = vtanh.pop %v4634
    %v5321 = vtanh.pop %v4635
    %v5322 = vtanh.pop %v4636
    %v5323 = vtanh.pop %v4637
    %v5324 = vtanh.pop %v4638
    %v5325 = vtanh.pop %v4639
    %v5326 = vtanh.pop %v4640
    %v5327 = vtanh.pop %v4641
    %v5328 = vtanh.pop %v4642
    %v5329 = vtanh.pop %v4643
    %v5330 = vtanh.pop %v4644
    %v5331 = vtanh.pop %v4645
    %v5332 = vtanh.pop %v4646
    %v5333 = vtanh.pop %v4647
    %v5334 = vtanh.pop %v4648
    %v5335 = vtanh.pop %v4649
    %v5336 = vtanh.pop %v4650
    %v5337 = vtanh.pop %v4651
    %v5338 = vtanh.pop %v4652
    %v5339 = vtanh.pop %v4653
    %v5340 = vtanh.pop %v4654
    %v5341 = vtanh.pop %v4655
    %v5342 = vtanh.pop %v4656
    %v5343 = vtanh.pop %v4657
    %v5344 = vtanh.pop %v4658
    %v5345 = vtanh.pop %v4659
    %v5346 = vtanh.pop %v4660
    %v5347 = vtanh.pop %v4661
    %v5348 = vtanh.pop %v4662
    %v5349 = vtanh.pop %v4663
    %v5350 = vtanh.pop %v4664
    %v5351 = vtanh.pop %v4665
    %v5352 = vtanh.pop %v4666
    %v5353 = vtanh.pop %v4667
    %v5354 = vtanh.pop %v4668
    %v5355 = vtanh.pop %v4669
    %v5356 = vtanh.pop %v4670
    %v5357 = vtanh.pop %v4671
    %v5358 = vtanh.pop %v4672
    %v5359 = vtanh.pop %v4673
    %v5360 = vtanh.pop %v4674
    %v5361 = vtanh.pop %v4675
    %v5362 = vtanh.pop %v4676
    %v5363 = vtanh.pop %v4677
    %v5364 = vtanh.pop %v4678
    %v5365 = vtanh.pop %v4679
    %v5366 = vtanh.pop %v4680
    %v5367 = vtanh.pop %v4681
    %v5368 = vtanh.pop %v4682
    %v5369 = vtanh.pop %v4683
    %v5370 = vtanh.pop %v4684
    %v5371 = vtanh.pop %v4685
    %v5372 = vtanh.pop %v4686
    %v5373 = vtanh.pop %v4687
    %v5374 = vtanh.pop %v4688
    %v5375 = vtanh.pop %v4689
    %v5376 = vtanh.pop %v4690
    %v5377 = vtanh.pop %v4691
    %v5378 = vtanh.pop %v4692
    %v5379 = vtanh.pop %v4693
    %v5380 = vtanh.pop %v4694
    %v5381 = vtanh.pop %v4695
    %v5382 = vtanh.pop %v4696
    %v5383 = vtanh.pop %v4697
    %v5384 = vtanh.pop %v4698
    %v5385 = vtanh.pop %v4699
    %v5386 = vtanh.pop %v4700
    %v5387 = vtanh.pop %v4701
    %v5388 = vtanh.pop %v4702
    %v5389 = vtanh.pop %v4703
    %v5390 = vtanh.pop %v4704
    %v5391 = vtanh.pop %v4705
    %v5392 = vtanh.pop %v4706
    %v5393 = vtanh.pop %v4707
    %v5394 = vtanh.pop %v4708
    %v5395 = vtanh.pop %v4709
    %v5396 = vtanh.pop %v4710
    %v5397 = vtanh.pop %v4711
    %v5398 = vtanh.pop %v4712
    %v5399 = vtanh.pop %v4713
    %v5400 = vtanh.pop %v4714
    %v5401 = vtanh.pop %v4715
    %v5402 = vtanh.pop %v4716
    %v5403 = vtanh.pop %v4717
    %v5404 = vtanh.pop %v4718
    %v5405 = vtanh.pop %v4719
    %v5406 = vtanh.pop %v4720
    %v5407 = vtanh.pop %v4721
    %v5408 = vtanh.pop %v4722
    %v5409 = vtanh.pop %v4723
    %v5410 = vtanh.pop %v4724
    %v5411 = vtanh.pop %v4725
    %v5412 = vtanh.pop %v4726
    %v5413 = vtanh.pop %v4727
    %v5414 = vtanh.pop %v4728
    %v5415 = vtanh.pop %v4729
    %v5416 = vtanh.pop %v4730
    %v5417 = vtanh.pop %v4731
    %v5418 = vtanh.pop %v4732
    %v5419 = vtanh.pop %v4733
    %v5420 = vtanh.pop %v4734
    %v5421 = vtanh.pop %v4735
    %v5422 = vtanh.pop %v4736
    %v5423 = vtanh.pop %v4737
    %v5424 = vtanh.pop %v4738
    %v5425 = vtanh.pop %v4739
    %v5426 = vtanh.pop %v4740
    %v5427 = vtanh.pop %v4741
    %v5428 = vtanh.pop %v4742
    %v5429 = vtanh.pop %v4743
    %v5430 = vtanh.pop %v4744
    %v5431 = vtanh.pop %v4745
    %v5432 = vtanh.pop %v4746
    %v5433 = vtanh.pop %v4747
    %v5434 = vtanh.pop %v4748
    %v5435 = vtanh.pop %v4749
    %v5436 = vtanh.pop %v4750
    %v5437 = vtanh.pop %v4751
    %v5438 = vtanh.pop %v4752
    %v5439 = vtanh.pop %v4753
    %v5440 = vtanh.pop %v4754
    %v5441 = vtanh.pop %v4755
    %v5442 = vtanh.pop %v4756
    %v5443 = vtanh.pop %v4757
    %v5444 = vtanh.pop %v4758
    %v5445 = vtanh.pop %v4759
    %v5446 = vtanh.pop %v4760
    %v5447 = vtanh.pop %v4761
    %v5448 = vtanh.pop %v4762
    %v5449 = vtanh.pop %v4763
    %v5450 = vtanh.pop %v4764
    %v5451 = vtanh.pop %v4765
    %v5452 = vtanh.pop %v4766
    %v5453 = vtanh.pop %v4767
    %v5454 = vtanh.pop %v4768
    %v5455 = vtanh.pop %v4769
    %v5456 = vtanh.pop %v4770
    %v5457 = vtanh.pop %v4771
    %v5458 = vtanh.pop %v4772
    %v5459 = vtanh.pop %v4773
    %v5460 = vtanh.pop %v4774
    %v5461 = vtanh.pop %v4775
    %v5462 = vtanh.pop %v4776
    %v5463 = vtanh.pop %v4777
    %v5464 = vtanh.pop %v4778
    %v5465 = vtanh.pop %v4779
    %v5466 = vtanh.pop %v4780
    %v5467 = vtanh.pop %v4781
    %v5468 = vtanh.pop %v4782
    %v5469 = vtanh.pop %v4783
    %v5470 = vtanh.pop %v4784
    %v5471 = vtanh.pop %v4785
    %v5472 = vtanh.pop %v4786
    %v5473 = vtanh.pop %v4787
    %v5474 = vtanh.pop %v4788
    %v5475 = vtanh.pop %v4789
    %v5476 = vtanh.pop %v4790
    %v5477 = vtanh.pop %v4791
    %v5478 = vtanh.pop %v4792
    %v5479 = vtanh.pop %v4793
    %v5480 = vtanh.pop %v4794
    %v5481 = vtanh.pop %v4795
    %v5482 = vtanh.pop %v4796
    %v5483 = vtanh.pop %v4797
    %v5484 = vtanh.pop %v4798
    %v5485 = vtanh.pop %v4799
    %v5486 = vtanh.pop %v4800
    %v5487 = vtanh.pop %v4801
    %v5488 = vtanh.pop %v4802
    %v5489 = vtanh.pop %v4803
    %v5490 = vtanh.pop %v4804
    %v5491 = vtanh.pop %v4805
    %v5492 = vtanh.pop %v4806
    %v5493 = vtanh.pop %v4807
    %v5494 = vtanh.pop %v4808
    %v5495 = vtanh.pop %v4809
    %v5496 = vtanh.pop %v4810
    %v5497 = vtanh.pop %v4811
    %v5498 = vtanh.pop %v4812
    %v5499 = vtanh.pop %v4813
    %v5500 = vtanh.pop %v4814
    %v5501 = vtanh.pop %v4815
    %v5502 = vtanh.pop %v4816
    %v5503 = vtanh.pop %v4817
    %v5504 = vtanh.pop %v4818
    %v5505 = vtanh.pop %v4819
    %v5506 = vtanh.pop %v4820
    %v5507 = vtanh.pop %v4821
    %v5508 = vtanh.pop %v4822
    %v5509 = vtanh.pop %v4823
    %v5510 = vtanh.pop %v4824
    %v5511 = vtanh.pop %v4825
    %v5512 = vtanh.pop %v4826
    %v5513 = vtanh.pop %v4827
    %v5514 = vtanh.pop %v4828
    %v5515 = vtanh.pop %v4829
    %v5516 = vtanh.pop %v4830
    %v5517 = vtanh.pop %v4831
    %v5518 = vtanh.pop %v4832
    %v5519 = vtanh.pop %v4833
    %v5520 = vtanh.pop %v4834
    %v5521 = vtanh.pop %v4835
    %v5522 = vtanh.pop %v4836
    %v5523 = vtanh.pop %v4837
    %v5524 = vtanh.pop %v4838
    %v5525 = vtanh.pop %v4839
    %v5526 = vtanh.pop %v4840
    %v5527 = vtanh.pop %v4841
    %v5528 = vtanh.pop %v4842
    %v5529 = vtanh.pop %v4843
    %v5530 = vtanh.pop %v4844
    %v5531 = vtanh.pop %v4845
    %v5532 = vtanh.pop %v4846
    %v5533 = vtanh.pop %v4847
    %v5534 = vtanh.pop %v4848
    %v5535 = vtanh.pop %v4849
    %v5536 = vtanh.pop %v4850
    %v5537 = vtanh.pop %v4851
    %v5538 = vtanh.pop %v4852
    %v5539 = vtanh.pop %v4853
    %v5540 = vtanh.pop %v4854
    %v5541 = vtanh.pop %v4855
    %v5542 = vtanh.pop %v4856
    %v5543 = vtanh.pop %v4857
    %v5544 = vtanh.pop %v4858
    %v5545 = vtanh.pop %v4859
    %v5546 = vtanh.pop %v4860
    %v5547 = vtanh.pop %v4861
    %v5548 = vtanh.pop %v4862
    %v5549 = vtanh.pop %v4863
    %v5550 = vtanh.pop %v4864
    %v5551 = vtanh.pop %v4865
    %v5552 = vtanh.pop %v4866
    %v5553 = vtanh.pop %v4867
    %v5554 = vtanh.pop %v4868
    %v5555 = vtanh.pop %v4869
    %v5556 = vtanh.pop %v4870
    %v5557 = vtanh.pop %v4871
    %v5558 = vtanh.pop %v4872
    %v5559 = vtanh.pop %v4873
    %v5560 = vtanh.pop %v4874
    %v5561 = vtanh.pop %v4875
    %v5562 = vtanh.pop %v4876
    %v5563 = vtanh.pop %v4877
    %v5564 = vtanh.pop %v4878
    %v5565 = vtanh.pop %v4879
    %v5566 = vtanh.pop %v4880
    %v5567 = vtanh.pop %v4881
    %v5568 = vtanh.pop %v4882
    %v5569 = vtanh.pop %v4883
    %v5570 = vtanh.pop %v4884
    %v5571 = vtanh.pop %v4885
    %v5572 = vtanh.pop %v4886
    %v5573 = vtanh.pop %v4887
    %v5574 = vtanh.pop %v4888
    %v5575 = vtanh.pop %v4889
    %v5576 = vtanh.pop %v4890
    %v5577 = vtanh.pop %v4891
    %v5578 = vtanh.pop %v4892
    %v5579 = vtanh.pop %v4893
    %v5580 = vtanh.pop %v4894
    %v5581 = vtanh.pop %v4895
    %v5582 = vtanh.pop %v4896
    %v5583 = vtanh.pop %v4897
    %v5584 = vtanh.pop %v4898
    %v5585 = vtanh.pop %v4899
    %v5586 = vtanh.pop %v4900
    %v5587 = vtanh.pop %v4901
    %v5588 = vtanh.pop %v4902
    %v5589 = vtanh.pop %v4903
    %v5590 = vtanh.pop %v4904
    %v5591 = vtanh.pop %v4905
    %v5592 = vtanh.pop %v4906
    %v5593 = vtanh.pop %v4907
    %v5594 = vtanh.pop %v4908
    %v5595 = vtanh.pop %v4909
    %v5596 = vtanh.pop %v4910
    %v5597 = vtanh.pop %v4911
    %v5598 = vtanh.pop %v4912
    %v5599 = vtanh.pop %v4913
    %v5600 = vtanh.pop %v4914
    %v5601 = vtanh.pop %v4915
    %v5602 = vtanh.pop %v4916
    %v5603 = vtanh.pop %v4917
    %v5604 = vtanh.pop %v4918
    %v5605 = vtanh.pop %v4919
    %v5606 = vtanh.pop %v4920
    %v5607 = vtanh.pop %v4921
    %v5608 = vtanh.pop %v4922
    %v5609 = vtanh.pop %v4923
    %v5610 = vtanh.pop %v4924
    %v5611 = vtanh.pop %v4925
    %v5612 = vtanh.pop %v4926
    %v5613 = vtanh.pop %v4927
    %v5614 = vtanh.pop %v4928
    %v5615 = vtanh.pop %v4929
    %v5616 = vtanh.pop %v4930
    %v5617 = vtanh.pop %v4931
    %v5618 = vtanh.pop %v4932
    %v5619 = vtanh.pop %v4933
    %v5620 = vtanh.pop %v4934
    %v5621 = vtanh.pop %v4935
    %v5622 = vtanh.pop %v4936
    %v5623 = vtanh.pop %v4937
    %v5624 = vtanh.pop %v4938
    %v5625 = vtanh.pop %v4939
    %v5626 = vtanh.pop %v4940
    %v5627 = vtanh.pop %v4941
    %v5628 = vtanh.pop %v4942
    %v5629 = vtanh.pop %v4943
    %v5630 = vtanh.pop %v4944
    %v5631 = vtanh.pop %v4945
    %v5632 = vtanh.pop %v4946
    %v5633 = vtanh.pop %v4947
    %v5634 = vtanh.pop %v4948
    %v5635 = vtanh.pop %v4949
    %v5636 = vtanh.pop %v4950
    %v5637 = vtanh.pop %v4951
    %v5638 = vtanh.pop %v4952
    %v5639 = vtanh.pop %v4953
    %v5640 = vtanh.pop %v4954
    %v5641 = vtanh.pop %v4955
    %v5642 = vtanh.pop %v4956
    %v5643 = vtanh.pop %v4957
    %v5644 = vtanh.pop %v4958
    %v5645 = vtanh.pop %v4959
    %v5646 = vtanh.pop %v4960
    %v5647 = vtanh.pop %v4961
    %v5648 = vtanh.pop %v4962
    %v5649 = vtanh.pop %v4963
    %v5650 = vtanh.pop %v4964
    %v5651 = vtanh.pop %v4965
    %v5652 = vtanh.pop %v4966
    %v5653 = vtanh.pop %v4967
    %v5654 = vtanh.pop %v4968
    %v5655 = vtanh.pop %v4969
    %v5656 = vtanh.pop %v4970
    %v5657 = vtanh.pop %v4971
    %v5658 = vtanh.pop %v4972
    %v5659 = vtanh.pop %v4973
    %v5660 = vtanh.pop %v4974
    %v5661 = vtanh.pop %v4975
    %v5662 = vtanh.pop %v4976
    %v5663 = vtanh.pop %v4977
    %v5664 = vtanh.pop %v4978
    %v5665 = vtanh.pop %v4979
    %v5666 = vtanh.pop %v4980
    %v5667 = vtanh.pop %v4981
    %v5668 = vtanh.pop %v4982
    %v5669 = vtanh.pop %v4983
    %v5670 = vtanh.pop %v4984
    %v5671 = vtanh.pop %v4985
    %v5672 = vtanh.pop %v4986
    %v5673 = vtanh.pop %v4987
    %v5674 = vtanh.pop %v4988
    %v5675 = vtanh.pop %v4989
    %v5676 = vtanh.pop %v4990
    %v5677 = vtanh.pop %v4991
    %v5678 = vtanh.pop %v4992
    %v5679 = vtanh.pop %v4993
    %v5680 = vtanh.pop %v4994
    %v5681 = vtanh.pop %v4995
    %v5682 = vtanh.pop %v4996
    %v5683 = vtanh.pop %v4997
    %v5684 = vtanh.pop %v4998
    %v5685 = vtanh.pop %v4999
    %v5686 = vtanh.pop %v5000
    %v5687 = vtanh.pop %v5001
    %v5688 = vtanh.pop %v5002
    %v5689 = vtanh.pop %v5003
    %v5690 = vtanh.pop %v5004
    %v5691 = vtanh.pop %v5005
    %v5692 = vtanh.pop %v5006
    %v5693 = vtanh.pop %v5007
    %v5694 = vtanh.pop %v5008
    %v5695 = vtanh.pop %v5009
    %v5696 = vtanh.pop %v5010
    %v5697 = vtanh.pop %v5011
    %v5698 = vtanh.pop %v5012
    %v5699 = vtanh.pop %v5013
    %v5700 = vtanh.pop %v5014
    %v5701 = vtanh.pop %v5015
    %v5702 = vtanh.pop %v5016
    %v5703 = vtanh.pop %v5017
    %v5704 = vtanh.pop %v5018
    %v5705 = vtanh.pop %v5019
    %v5706 = vtanh.pop %v5020
    %v5707 = vtanh.pop %v5021
    %v5708 = vtanh.pop %v5022
    %v5709 = vtanh.pop %v5023
    %v5710 = vtanh.pop %v5024
    %v5711 = vtanh.pop %v5025
    %v5712 = vtanh.pop %v5026
    %v5713 = vtanh.pop %v5027
    %v5714 = vtanh.pop %v5028
    %v5715 = vtanh.pop %v5029
    %v5716 = vtanh.pop %v5030
    %v5717 = vtanh.pop %v5031
    %v5718 = vtanh.pop %v5032
    %v5719 = vtanh.pop %v5033
    %v5720 = vtanh.pop %v5034
    %v5721 = vtanh.pop %v5035
    %v5722 = vtanh.pop %v5036
    %v5723 = vtanh.pop %v5037
    %v5724 = vtanh.pop %v5038
    %v5725 = vtanh.pop %v5039
    %v5726 = vtanh.pop %v5040
    %v5727 = vtanh.pop %v5041
    %v5728 = vtanh.pop %v5042
    %v5729 = vtanh.pop %v5043
    %v5730 = vtanh.pop %v5044
    %v5731 = vtanh.pop %v5045
    %v5732 = vtanh.pop %v5046
    %v5733 = vtanh.pop %v5047
    %v5734 = vtanh.pop %v5048
    %v5735 = vtanh.pop %v5049
    %v5736 = vtanh.pop %v5050
    %v5737 = vtanh.pop %v5051
    %v5738 = vtanh.pop %v5052
    %v5739 = vtanh.pop %v5053
    %v5740 = vtanh.pop %v5054
    %v5741 = vtanh.pop %v5055
    %v5742 = vtanh.pop %v5056
    %v5743 = vtanh.pop %v5057
    %v5744 = vtanh.pop %v5058
    %v5745 = vtanh.pop %v5059
    %v5746 = vtanh.pop %v5060
    %v5747 = vtanh.pop %v5061
    %v5748 = vtanh.pop %v5062
    %v5749 = vtanh.pop %v5063
    %v5750 = vtanh.pop %v5064
    %v5751 = vtanh.pop %v5065
    %v5752 = vtanh.pop %v5066
    %v5753 = vtanh.pop %v5067
    %v5754 = vtanh.pop %v5068
    %v5755 = vtanh.pop %v5069
    %v5756 = vtanh.pop %v5070
    %v5757 = vtanh.pop %v5071
    %v5758 = vtanh.pop %v5072
    %v5759 = vtanh.pop %v5073
    %v5760 = vtanh.pop %v5074
    %v5761 = vtanh.pop %v5075
    %v5762 = vtanh.pop %v5076
    %v5763 = vtanh.pop %v5077
    %v5764 = vtanh.pop %v5078
    %v5765 = vtanh.pop %v5079
    %v5766 = vtanh.pop %v5080
    %v5767 = vtanh.pop %v5081
    %v5768 = vtanh.pop %v5082
    %v5769 = vtanh.pop %v5083
    %v5770 = vtanh.pop %v5084
    %v5771 = vtanh.pop %v5085
    %v5772 = vtanh.pop %v5086
    %v5773 = vtanh.pop %v5087
    %v5774 = vtanh.pop %v5088
    %v5775 = vtanh.pop %v5089
    %v5776 = vtanh.pop %v5090
    %v5777 = vtanh.pop %v5091
    %v5778 = vtanh.pop %v5092
    %v5779 = vtanh.pop %v5093
    %v5780 = vtanh.pop %v5094
    %v5781 = vtanh.pop %v5095
    %v5782 = vtanh.pop %v5096
    %v5783 = vtanh.pop %v5097
    %v5784 = vtanh.pop %v5098
    %v5785 = vtanh.pop %v5099
    %v5786 = vtanh.pop %v5100
    %v5787 = vtanh.pop %v5101
    %v5788 = vtanh.pop %v5102
    %v5789 = vtanh.pop %v5103
    %v5790 = vtanh.pop %v5104
    %v5791 = vtanh.pop %v5105
    %v5792 = vtanh.pop %v5106
    %v5793 = vtanh.pop %v5107
    %v5794 = vtanh.pop %v5108
    %v5795 = vtanh.pop %v5109
    %v5796 = vtanh.pop %v5110
    %v5797 = vtanh.pop %v5111
    %v5798 = vtanh.pop %v5112
    %v5799 = vtanh.pop %v5113
    %v5800 = vtanh.pop %v5114
    %v5801 = vtanh.pop %v5115
    %v5802 = vtanh.pop %v5116
    %v5803 = vtanh.pop %v5117
    %v5804 = vtanh.pop %v5118
    %v5805 = vtanh.pop %v5119
    %v5806 = vtanh.pop %v5120
    %v5807 = vtanh.pop %v5121
    %v5808 = vtanh.pop %v5122
    %v5809 = vtanh.pop %v5123
    %v5810 = vtanh.pop %v5124
    %v5811 = vtanh.pop %v5125
    %v5812 = vtanh.pop %v5126
    %v5813 = vtanh.pop %v5127
    %v5814 = vtanh.pop %v5128
    %v5815 = vtanh.pop %v5129
    %v5816 = vtanh.pop %v5130
    %v5817 = vtanh.pop %v5131
    %v5818 = vtanh.pop %v5132
    %v5819 = vtanh.pop %v5133
    %v5820 = vtanh.pop %v5134
    %v5821 = vtanh.pop %v5135
    %v5822 = vtanh.pop %v5136
    %v5823 = vtanh.pop %v5137
    %v5824 = vtanh.pop %v5138
    %v5825 = vtanh.pop %v5139
    %v5826 = vtanh.pop %v5140
    %v5827 = vtanh.pop %v5141
    %v5828 = vtanh.pop %v5142
    %v5829 = vtanh.pop %v5143
    %v5830 = vtanh.pop %v5144
    %v5831 = vtanh.pop %v5145
    %v5832 = vtanh.pop %v5146
    %v5833 = vtanh.pop %v5147
    %v5834 = vtanh.pop %v5148
    %v5835 = vtanh.pop %v5149
    %v5836 = vtanh.pop %v5150
    %v5837 = vtanh.pop %v5151
    %v5838 = vtanh.pop %v5152
    %v5839 = vtanh.pop %v5153
    %v5840 = vtanh.pop %v5154
    %v5841 = vtanh.pop %v5155
    %v5842 = vtanh.pop %v5156
    %v5843 = vtanh.pop %v5157
    %v5844 = vtanh.pop %v5158
    %v5845 = vtanh.pop %v5159
    %v5846 = vtanh.pop %v5160
    %v5847 = vtanh.pop %v5161
    %v5848 = vtanh.pop %v5162
    %v5849 = vtanh.pop %v5163
    %v5850 = vtanh.pop %v5164
    %v5851 = vtanh.pop %v5165
    %v5852 = vtanh.pop %v5166
    %v5853 = vtanh.pop %v5167
    %v5854 = vtanh.pop %v5168
    %v5855 = vtanh.pop %v5169
    %v5856 = vtanh.pop %v5170
    %v5857 = vtanh.pop %v5171
    %v5858 = vtanh.pop %v5172
    %v5859 = vtanh.pop %v5173
    %v5860 = vtanh.pop %v5174
    %v5861 = vtanh.pop %v5175
    %v5862 = vtanh.pop %v5176
    %v5863 = vtanh.pop %v5177
    %v5864 = vtanh.pop %v5178
    %v5865 = vtanh.pop %v5179
    %v5866 = vtanh.pop %v5180
    %v5867 = vtanh.pop %v5181
    %v5868 = vtanh.pop %v5182
    %v5869 = vtanh.pop %v5183
    %v5870 = vtanh.pop %v5184
    %v5871 = vtanh.pop %v5185
    %v5872 = vtanh.pop %v5186
    %v5873 = vtanh.pop %v5187
    %v5874 = vtanh.pop %v5188
    %v5875 = vtanh.pop %v5189
    %v5876 = vtanh.pop %v5190
    %v5877 = vtanh.pop %v5191
    %v5878 = vtanh.pop %v5192
    %v5879 = vtanh.pop %v5193
    %v5880 = vtanh.pop %v5194
    %v5881 = vtanh.pop %v5195
    %v5882 = vtanh.pop %v5196
    %v5883 = vtanh.pop %v5197
    %v5884 = vtanh.pop %v5198
    %v5885 = vtanh.pop %v5199
    %v5886 = vtanh.pop %v5200
    %v5887 = vtanh.pop %v5201
    %v5888 = vtanh.pop %v5202
    %v5889 = vtanh.pop %v5203
    %v5890 = vtanh.pop %v5204
    %v5891 = vtanh.pop %v5205
    %v5892 = vtanh.pop %v5206
    %v5893 = vtanh.pop %v5207
    %v5894 = vtanh.pop %v5208
    %v5895 = vtanh.pop %v5209
    %v5896 = vtanh.pop %v5210
    %v5897 = vtanh.pop %v5211
    %v5898 = vtanh.pop %v5212
    %v5899 = vtanh.pop %v5213
    %v5900 = vtanh.pop %v5214
    %v5901 = vtanh.pop %v5215
    %v5902 = vtanh.pop %v5216
    %v5903 = vtanh.pop %v5217
    %v5904 = vtanh.pop %v5218
    %v5905 = vtanh.pop %v5219
    %v5906 = vtanh.pop %v5220
    %v5907 = vtanh.pop %v5221
    %v5908 = vtanh.pop %v5222
    %v5909 = vtanh.pop %v5223
    %v5910 = vtanh.pop %v5224
    %v5911 = vtanh.pop %v5225
    %v5912 = vtanh.pop %v5226
    %v5913 = vtanh.pop %v5227
    %v5914 = vtanh.pop %v5228
    %v5915 = vtanh.pop %v5229
    %v5916 = vtanh.pop %v5230
    %v5917 = vtanh.pop %v5231
    %v5918 = vtanh.pop %v5232
    %v5919 = vtanh.pop %v5233
    %v5920 = vtanh.pop %v5234
    %v5921 = vtanh.pop %v5235
    %v5922 = vtanh.pop %v5236
    %v5923 = vtanh.pop %v5237
    %v5924 = vtanh.pop %v5238
    %v5925 = vtanh.pop %v5239
    %v5926 = vtanh.pop %v5240
    %v5927 = vtanh.pop %v5241
    %v5928 = vtanh.pop %v5242
    %v5929 = vtanh.pop %v5243
    %v5930 = vtanh.pop %v5244
    %v5931 = vtanh.pop %v5245
    %v5932 = vtanh.pop %v5246
    %v5933 = vtanh.pop %v5247
    %v5934 = vtanh.pop %v5248
    %v5935 = vtanh.pop %v5249
    %v5936 = vtanh.pop %v5250
    %v5937 = vtanh.pop %v5251
    %v5938 = vtanh.pop %v5252
    %v5939 = vtanh.pop %v5253
    %v5940 = vtanh.pop %v5254
    %v5941 = vtanh.pop %v5255
    %v5942 = vtanh.pop %v5256
    %v5943 = vtanh.pop %v5257
    %v5944 = vtanh.pop %v5258
    %v5945 = vmul.f32 %v5259, 0.5
    %v5946 = vmul.f32 %v5260, 0.5
    %v5947 = vmul.f32 %v5261, 0.5
    %v5948 = vmul.f32 %v5262, 0.5
    %v5949 = vmul.f32 %v5263, 0.5
    %v5950 = vmul.f32 %v5264, 0.5
    %v5951 = vmul.f32 %v5265, 0.5
    %v5952 = vmul.f32 %v5266, 0.5
    %v5953 = vmul.f32 %v5267, 0.5
    %v5954 = vmul.f32 %v5268, 0.5
    %v5955 = vmul.f32 %v5269, 0.5
    %v5956 = vmul.f32 %v5270, 0.5
    %v5957 = vmul.f32 %v5271, 0.5
    %v5958 = vmul.f32 %v5272, 0.5
    %v5959 = vmul.f32 %v5273, 0.5
    %v5960 = vmul.f32 %v5274, 0.5
    %v5961 = vmul.f32 %v5275, 0.5
    %v5962 = vmul.f32 %v5276, 0.5
    %v5963 = vmul.f32 %v5277, 0.5
    %v5964 = vmul.f32 %v5278, 0.5
    %v5965 = vmul.f32 %v5279, 0.5
    %v5966 = vmul.f32 %v5280, 0.5
    %v5967 = vmul.f32 %v5281, 0.5
    %v5968 = vmul.f32 %v5282, 0.5
    %v5969 = vmul.f32 %v5283, 0.5
    %v5970 = vmul.f32 %v5284, 0.5
    %v5971 = vmul.f32 %v5285, 0.5
    %v5972 = vmul.f32 %v5286, 0.5
    %v5973 = vmul.f32 %v5287, 0.5
    %v5974 = vmul.f32 %v5288, 0.5
    %v5975 = vmul.f32 %v5289, 0.5
    %v5976 = vmul.f32 %v5290, 0.5
    %v5977 = vmul.f32 %v5291, 0.5
    %v5978 = vmul.f32 %v5292, 0.5
    %v5979 = vmul.f32 %v5293, 0.5
    %v5980 = vmul.f32 %v5294, 0.5
    %v5981 = vmul.f32 %v5295, 0.5
    %v5982 = vmul.f32 %v5296, 0.5
    %v5983 = vmul.f32 %v5297, 0.5
    %v5984 = vmul.f32 %v5298, 0.5
    %v5985 = vmul.f32 %v5299, 0.5
    %v5986 = vmul.f32 %v5300, 0.5
    %v5987 = vmul.f32 %v5301, 0.5
    %v5988 = vmul.f32 %v5302, 0.5
    %v5989 = vmul.f32 %v5303, 0.5
    %v5990 = vmul.f32 %v5304, 0.5
    %v5991 = vmul.f32 %v5305, 0.5
    %v5992 = vmul.f32 %v5306, 0.5
    %v5993 = vmul.f32 %v5307, 0.5
    %v5994 = vmul.f32 %v5308, 0.5
    %v5995 = vmul.f32 %v5309, 0.5
    %v5996 = vmul.f32 %v5310, 0.5
    %v5997 = vmul.f32 %v5311, 0.5
    %v5998 = vmul.f32 %v5312, 0.5
    %v5999 = vmul.f32 %v5313, 0.5
    %v6000 = vmul.f32 %v5314, 0.5
    %v6001 = vmul.f32 %v5315, 0.5
    %v6002 = vmul.f32 %v5316, 0.5
    %v6003 = vmul.f32 %v5317, 0.5
    %v6004 = vmul.f32 %v5318, 0.5
    %v6005 = vmul.f32 %v5319, 0.5
    %v6006 = vmul.f32 %v5320, 0.5
    %v6007 = vmul.f32 %v5321, 0.5
    %v6008 = vmul.f32 %v5322, 0.5
    %v6009 = vmul.f32 %v5323, 0.5
    %v6010 = vmul.f32 %v5324, 0.5
    %v6011 = vmul.f32 %v5325, 0.5
    %v6012 = vmul.f32 %v5326, 0.5
    %v6013 = vmul.f32 %v5327, 0.5
    %v6014 = vmul.f32 %v5328, 0.5
    %v6015 = vmul.f32 %v5329, 0.5
    %v6016 = vmul.f32 %v5330, 0.5
    %v6017 = vmul.f32 %v5331, 0.5
    %v6018 = vmul.f32 %v5332, 0.5
    %v6019 = vmul.f32 %v5333, 0.5
    %v6020 = vmul.f32 %v5334, 0.5
    %v6021 = vmul.f32 %v5335, 0.5
    %v6022 = vmul.f32 %v5336, 0.5
    %v6023 = vmul.f32 %v5337, 0.5
    %v6024 = vmul.f32 %v5338, 0.5
    %v6025 = vmul.f32 %v5339, 0.5
    %v6026 = vmul.f32 %v5340, 0.5
    %v6027 = vmul.f32 %v5341, 0.5
    %v6028 = vmul.f32 %v5342, 0.5
    %v6029 = vmul.f32 %v5343, 0.5
    %v6030 = vmul.f32 %v5344, 0.5
    %v6031 = vmul.f32 %v5345, 0.5
    %v6032 = vmul.f32 %v5346, 0.5
    %v6033 = vmul.f32 %v5347, 0.5
    %v6034 = vmul.f32 %v5348, 0.5
    %v6035 = vmul.f32 %v5349, 0.5
    %v6036 = vmul.f32 %v5350, 0.5
    %v6037 = vmul.f32 %v5351, 0.5
    %v6038 = vmul.f32 %v5352, 0.5
    %v6039 = vmul.f32 %v5353, 0.5
    %v6040 = vmul.f32 %v5354, 0.5
    %v6041 = vmul.f32 %v5355, 0.5
    %v6042 = vmul.f32 %v5356, 0.5
    %v6043 = vmul.f32 %v5357, 0.5
    %v6044 = vmul.f32 %v5358, 0.5
    %v6045 = vmul.f32 %v5359, 0.5
    %v6046 = vmul.f32 %v5360, 0.5
    %v6047 = vmul.f32 %v5361, 0.5
    %v6048 = vmul.f32 %v5362, 0.5
    %v6049 = vmul.f32 %v5363, 0.5
    %v6050 = vmul.f32 %v5364, 0.5
    %v6051 = vmul.f32 %v5365, 0.5
    %v6052 = vmul.f32 %v5366, 0.5
    %v6053 = vmul.f32 %v5367, 0.5
    %v6054 = vmul.f32 %v5368, 0.5
    %v6055 = vmul.f32 %v5369, 0.5
    %v6056 = vmul.f32 %v5370, 0.5
    %v6057 = vmul.f32 %v5371, 0.5
    %v6058 = vmul.f32 %v5372, 0.5
    %v6059 = vmul.f32 %v5373, 0.5
    %v6060 = vmul.f32 %v5374, 0.5
    %v6061 = vmul.f32 %v5375, 0.5
    %v6062 = vmul.f32 %v5376, 0.5
    %v6063 = vmul.f32 %v5377, 0.5
    %v6064 = vmul.f32 %v5378, 0.5
    %v6065 = vmul.f32 %v5379, 0.5
    %v6066 = vmul.f32 %v5380, 0.5
    %v6067 = vmul.f32 %v5381, 0.5
    %v6068 = vmul.f32 %v5382, 0.5
    %v6069 = vmul.f32 %v5383, 0.5
    %v6070 = vmul.f32 %v5384, 0.5
    %v6071 = vmul.f32 %v5385, 0.5
    %v6072 = vmul.f32 %v5386, 0.5
    %v6073 = vmul.f32 %v5387, 0.5
    %v6074 = vmul.f32 %v5388, 0.5
    %v6075 = vmul.f32 %v5389, 0.5
    %v6076 = vmul.f32 %v5390, 0.5
    %v6077 = vmul.f32 %v5391, 0.5
    %v6078 = vmul.f32 %v5392, 0.5
    %v6079 = vmul.f32 %v5393, 0.5
    %v6080 = vmul.f32 %v5394, 0.5
    %v6081 = vmul.f32 %v5395, 0.5
    %v6082 = vmul.f32 %v5396, 0.5
    %v6083 = vmul.f32 %v5397, 0.5
    %v6084 = vmul.f32 %v5398, 0.5
    %v6085 = vmul.f32 %v5399, 0.5
    %v6086 = vmul.f32 %v5400, 0.5
    %v6087 = vmul.f32 %v5401, 0.5
    %v6088 = vmul.f32 %v5402, 0.5
    %v6089 = vmul.f32 %v5403, 0.5
    %v6090 = vmul.f32 %v5404, 0.5
    %v6091 = vmul.f32 %v5405, 0.5
    %v6092 = vmul.f32 %v5406, 0.5
    %v6093 = vmul.f32 %v5407, 0.5
    %v6094 = vmul.f32 %v5408, 0.5
    %v6095 = vmul.f32 %v5409, 0.5
    %v6096 = vmul.f32 %v5410, 0.5
    %v6097 = vmul.f32 %v5411, 0.5
    %v6098 = vmul.f32 %v5412, 0.5
    %v6099 = vmul.f32 %v5413, 0.5
    %v6100 = vmul.f32 %v5414, 0.5
    %v6101 = vmul.f32 %v5415, 0.5
    %v6102 = vmul.f32 %v5416, 0.5
    %v6103 = vmul.f32 %v5417, 0.5
    %v6104 = vmul.f32 %v5418, 0.5
    %v6105 = vmul.f32 %v5419, 0.5
    %v6106 = vmul.f32 %v5420, 0.5
    %v6107 = vmul.f32 %v5421, 0.5
    %v6108 = vmul.f32 %v5422, 0.5
    %v6109 = vmul.f32 %v5423, 0.5
    %v6110 = vmul.f32 %v5424, 0.5
    %v6111 = vmul.f32 %v5425, 0.5
    %v6112 = vmul.f32 %v5426, 0.5
    %v6113 = vmul.f32 %v5427, 0.5
    %v6114 = vmul.f32 %v5428, 0.5
    %v6115 = vmul.f32 %v5429, 0.5
    %v6116 = vmul.f32 %v5430, 0.5
    %v6117 = vmul.f32 %v5431, 0.5
    %v6118 = vmul.f32 %v5432, 0.5
    %v6119 = vmul.f32 %v5433, 0.5
    %v6120 = vmul.f32 %v5434, 0.5
    %v6121 = vmul.f32 %v5435, 0.5
    %v6122 = vmul.f32 %v5436, 0.5
    %v6123 = vmul.f32 %v5437, 0.5
    %v6124 = vmul.f32 %v5438, 0.5
    %v6125 = vmul.f32 %v5439, 0.5
    %v6126 = vmul.f32 %v5440, 0.5
    %v6127 = vmul.f32 %v5441, 0.5
    %v6128 = vmul.f32 %v5442, 0.5
    %v6129 = vmul.f32 %v5443, 0.5
    %v6130 = vmul.f32 %v5444, 0.5
    %v6131 = vmul.f32 %v5445, 0.5
    %v6132 = vmul.f32 %v5446, 0.5
    %v6133 = vmul.f32 %v5447, 0.5
    %v6134 = vmul.f32 %v5448, 0.5
    %v6135 = vmul.f32 %v5449, 0.5
    %v6136 = vmul.f32 %v5450, 0.5
    %v6137 = vmul.f32 %v5451, 0.5
    %v6138 = vmul.f32 %v5452, 0.5
    %v6139 = vmul.f32 %v5453, 0.5
    %v6140 = vmul.f32 %v5454, 0.5
    %v6141 = vmul.f32 %v5455, 0.5
    %v6142 = vmul.f32 %v5456, 0.5
    %v6143 = vmul.f32 %v5457, 0.5
    %v6144 = vmul.f32 %v5458, 0.5
    %v6145 = vmul.f32 %v5459, 0.5
    %v6146 = vmul.f32 %v5460, 0.5
    %v6147 = vmul.f32 %v5461, 0.5
    %v6148 = vmul.f32 %v5462, 0.5
    %v6149 = vmul.f32 %v5463, 0.5
    %v6150 = vmul.f32 %v5464, 0.5
    %v6151 = vmul.f32 %v5465, 0.5
    %v6152 = vmul.f32 %v5466, 0.5
    %v6153 = vmul.f32 %v5467, 0.5
    %v6154 = vmul.f32 %v5468, 0.5
    %v6155 = vmul.f32 %v5469, 0.5
    %v6156 = vmul.f32 %v5470, 0.5
    %v6157 = vmul.f32 %v5471, 0.5
    %v6158 = vmul.f32 %v5472, 0.5
    %v6159 = vmul.f32 %v5473, 0.5
    %v6160 = vmul.f32 %v5474, 0.5
    %v6161 = vmul.f32 %v5475, 0.5
    %v6162 = vmul.f32 %v5476, 0.5
    %v6163 = vmul.f32 %v5477, 0.5
    %v6164 = vmul.f32 %v5478, 0.5
    %v6165 = vmul.f32 %v5479, 0.5
    %v6166 = vmul.f32 %v5480, 0.5
    %v6167 = vmul.f32 %v5481, 0.5
    %v6168 = vmul.f32 %v5482, 0.5
    %v6169 = vmul.f32 %v5483, 0.5
    %v6170 = vmul.f32 %v5484, 0.5
    %v6171 = vmul.f32 %v5485, 0.5
    %v6172 = vmul.f32 %v5486, 0.5
    %v6173 = vmul.f32 %v5487, 0.5
    %v6174 = vmul.f32 %v5488, 0.5
    %v6175 = vmul.f32 %v5489, 0.5
    %v6176 = vmul.f32 %v5490, 0.5
    %v6177 = vmul.f32 %v5491, 0.5
    %v6178 = vmul.f32 %v5492, 0.5
    %v6179 = vmul.f32 %v5493, 0.5
    %v6180 = vmul.f32 %v5494, 0.5
    %v6181 = vmul.f32 %v5495, 0.5
    %v6182 = vmul.f32 %v5496, 0.5
    %v6183 = vmul.f32 %v5497, 0.5
    %v6184 = vmul.f32 %v5498, 0.5
    %v6185 = vmul.f32 %v5499, 0.5
    %v6186 = vmul.f32 %v5500, 0.5
    %v6187 = vmul.f32 %v5501, 0.5
    %v6188 = vmul.f32 %v5502, 0.5
    %v6189 = vmul.f32 %v5503, 0.5
    %v6190 = vmul.f32 %v5504, 0.5
    %v6191 = vmul.f32 %v5505, 0.5
    %v6192 = vmul.f32 %v5506, 0.5
    %v6193 = vmul.f32 %v5507, 0.5
    %v6194 = vmul.f32 %v5508, 0.5
    %v6195 = vmul.f32 %v5509, 0.5
    %v6196 = vmul.f32 %v5510, 0.5
    %v6197 = vmul.f32 %v5511, 0.5
    %v6198 = vmul.f32 %v5512, 0.5
    %v6199 = vmul.f32 %v5513, 0.5
    %v6200 = vmul.f32 %v5514, 0.5
    %v6201 = vmul.f32 %v5515, 0.5
    %v6202 = vmul.f32 %v5516, 0.5
    %v6203 = vmul.f32 %v5517, 0.5
    %v6204 = vmul.f32 %v5518, 0.5
    %v6205 = vmul.f32 %v5519, 0.5
    %v6206 = vmul.f32 %v5520, 0.5
    %v6207 = vmul.f32 %v5521, 0.5
    %v6208 = vmul.f32 %v5522, 0.5
    %v6209 = vmul.f32 %v5523, 0.5
    %v6210 = vmul.f32 %v5524, 0.5
    %v6211 = vmul.f32 %v5525, 0.5
    %v6212 = vmul.f32 %v5526, 0.5
    %v6213 = vmul.f32 %v5527, 0.5
    %v6214 = vmul.f32 %v5528, 0.5
    %v6215 = vmul.f32 %v5529, 0.5
    %v6216 = vmul.f32 %v5530, 0.5
    %v6217 = vmul.f32 %v5531, 0.5
    %v6218 = vmul.f32 %v5532, 0.5
    %v6219 = vmul.f32 %v5533, 0.5
    %v6220 = vmul.f32 %v5534, 0.5
    %v6221 = vmul.f32 %v5535, 0.5
    %v6222 = vmul.f32 %v5536, 0.5
    %v6223 = vmul.f32 %v5537, 0.5
    %v6224 = vmul.f32 %v5538, 0.5
    %v6225 = vmul.f32 %v5539, 0.5
    %v6226 = vmul.f32 %v5540, 0.5
    %v6227 = vmul.f32 %v5541, 0.5
    %v6228 = vmul.f32 %v5542, 0.5
    %v6229 = vmul.f32 %v5543, 0.5
    %v6230 = vmul.f32 %v5544, 0.5
    %v6231 = vmul.f32 %v5545, 0.5
    %v6232 = vmul.f32 %v5546, 0.5
    %v6233 = vmul.f32 %v5547, 0.5
    %v6234 = vmul.f32 %v5548, 0.5
    %v6235 = vmul.f32 %v5549, 0.5
    %v6236 = vmul.f32 %v5550, 0.5
    %v6237 = vmul.f32 %v5551, 0.5
    %v6238 = vmul.f32 %v5552, 0.5
    %v6239 = vmul.f32 %v5553, 0.5
    %v6240 = vmul.f32 %v5554, 0.5
    %v6241 = vmul.f32 %v5555, 0.5
    %v6242 = vmul.f32 %v5556, 0.5
    %v6243 = vmul.f32 %v5557, 0.5
    %v6244 = vmul.f32 %v5558, 0.5
    %v6245 = vmul.f32 %v5559, 0.5
    %v6246 = vmul.f32 %v5560, 0.5
    %v6247 = vmul.f32 %v5561, 0.5
    %v6248 = vmul.f32 %v5562, 0.5
    %v6249 = vmul.f32 %v5563, 0.5
    %v6250 = vmul.f32 %v5564, 0.5
    %v6251 = vmul.f32 %v5565, 0.5
    %v6252 = vmul.f32 %v5566, 0.5
    %v6253 = vmul.f32 %v5567, 0.5
    %v6254 = vmul.f32 %v5568, 0.5
    %v6255 = vmul.f32 %v5569, 0.5
    %v6256 = vmul.f32 %v5570, 0.5
    %v6257 = vmul.f32 %v5571, 0.5
    %v6258 = vmul.f32 %v5572, 0.5
    %v6259 = vmul.f32 %v5573, 0.5
    %v6260 = vmul.f32 %v5574, 0.5
    %v6261 = vmul.f32 %v5575, 0.5
    %v6262 = vmul.f32 %v5576, 0.5
    %v6263 = vmul.f32 %v5577, 0.5
    %v6264 = vmul.f32 %v5578, 0.5
    %v6265 = vmul.f32 %v5579, 0.5
    %v6266 = vmul.f32 %v5580, 0.5
    %v6267 = vmul.f32 %v5581, 0.5
    %v6268 = vmul.f32 %v5582, 0.5
    %v6269 = vmul.f32 %v5583, 0.5
    %v6270 = vmul.f32 %v5584, 0.5
    %v6271 = vmul.f32 %v5585, 0.5
    %v6272 = vmul.f32 %v5586, 0.5
    %v6273 = vmul.f32 %v5587, 0.5
    %v6274 = vmul.f32 %v5588, 0.5
    %v6275 = vmul.f32 %v5589, 0.5
    %v6276 = vmul.f32 %v5590, 0.5
    %v6277 = vmul.f32 %v5591, 0.5
    %v6278 = vmul.f32 %v5592, 0.5
    %v6279 = vmul.f32 %v5593, 0.5
    %v6280 = vmul.f32 %v5594, 0.5
    %v6281 = vmul.f32 %v5595, 0.5
    %v6282 = vmul.f32 %v5596, 0.5
    %v6283 = vmul.f32 %v5597, 0.5
    %v6284 = vmul.f32 %v5598, 0.5
    %v6285 = vmul.f32 %v5599, 0.5
    %v6286 = vmul.f32 %v5600, 0.5
    %v6287 = vmul.f32 %v5601, 0.5
    %v6288 = vmul.f32 %v5602, 0.5
    %v6289 = vmul.f32 %v5603, 0.5
    %v6290 = vmul.f32 %v5604, 0.5
    %v6291 = vmul.f32 %v5605, 0.5
    %v6292 = vmul.f32 %v5606, 0.5
    %v6293 = vmul.f32 %v5607, 0.5
    %v6294 = vmul.f32 %v5608, 0.5
    %v6295 = vmul.f32 %v5609, 0.5
    %v6296 = vmul.f32 %v5610, 0.5
    %v6297 = vmul.f32 %v5611, 0.5
    %v6298 = vmul.f32 %v5612, 0.5
    %v6299 = vmul.f32 %v5613, 0.5
    %v6300 = vmul.f32 %v5614, 0.5
    %v6301 = vmul.f32 %v5615, 0.5
    %v6302 = vmul.f32 %v5616, 0.5
    %v6303 = vmul.f32 %v5617, 0.5
    %v6304 = vmul.f32 %v5618, 0.5
    %v6305 = vmul.f32 %v5619, 0.5
    %v6306 = vmul.f32 %v5620, 0.5
    %v6307 = vmul.f32 %v5621, 0.5
    %v6308 = vmul.f32 %v5622, 0.5
    %v6309 = vmul.f32 %v5623, 0.5
    %v6310 = vmul.f32 %v5624, 0.5
    %v6311 = vmul.f32 %v5625, 0.5
    %v6312 = vmul.f32 %v5626, 0.5
    %v6313 = vmul.f32 %v5627, 0.5
    %v6314 = vmul.f32 %v5628, 0.5
    %v6315 = vmul.f32 %v5629, 0.5
    %v6316 = vmul.f32 %v5630, 0.5
    %v6317 = vmul.f32 %v5631, 0.5
    %v6318 = vmul.f32 %v5632, 0.5
    %v6319 = vmul.f32 %v5633, 0.5
    %v6320 = vmul.f32 %v5634, 0.5
    %v6321 = vmul.f32 %v5635, 0.5
    %v6322 = vmul.f32 %v5636, 0.5
    %v6323 = vmul.f32 %v5637, 0.5
    %v6324 = vmul.f32 %v5638, 0.5
    %v6325 = vmul.f32 %v5639, 0.5
    %v6326 = vmul.f32 %v5640, 0.5
    %v6327 = vmul.f32 %v5641, 0.5
    %v6328 = vmul.f32 %v5642, 0.5
    %v6329 = vmul.f32 %v5643, 0.5
    %v6330 = vmul.f32 %v5644, 0.5
    %v6331 = vmul.f32 %v5645, 0.5
    %v6332 = vmul.f32 %v5646, 0.5
    %v6333 = vmul.f32 %v5647, 0.5
    %v6334 = vmul.f32 %v5648, 0.5
    %v6335 = vmul.f32 %v5649, 0.5
    %v6336 = vmul.f32 %v5650, 0.5
    %v6337 = vmul.f32 %v5651, 0.5
    %v6338 = vmul.f32 %v5652, 0.5
    %v6339 = vmul.f32 %v5653, 0.5
    %v6340 = vmul.f32 %v5654, 0.5
    %v6341 = vmul.f32 %v5655, 0.5
    %v6342 = vmul.f32 %v5656, 0.5
    %v6343 = vmul.f32 %v5657, 0.5
    %v6344 = vmul.f32 %v5658, 0.5
    %v6345 = vmul.f32 %v5659, 0.5
    %v6346 = vmul.f32 %v5660, 0.5
    %v6347 = vmul.f32 %v5661, 0.5
    %v6348 = vmul.f32 %v5662, 0.5
    %v6349 = vmul.f32 %v5663, 0.5
    %v6350 = vmul.f32 %v5664, 0.5
    %v6351 = vmul.f32 %v5665, 0.5
    %v6352 = vmul.f32 %v5666, 0.5
    %v6353 = vmul.f32 %v5667, 0.5
    %v6354 = vmul.f32 %v5668, 0.5
    %v6355 = vmul.f32 %v5669, 0.5
    %v6356 = vmul.f32 %v5670, 0.5
    %v6357 = vmul.f32 %v5671, 0.5
    %v6358 = vmul.f32 %v5672, 0.5
    %v6359 = vmul.f32 %v5673, 0.5
    %v6360 = vmul.f32 %v5674, 0.5
    %v6361 = vmul.f32 %v5675, 0.5
    %v6362 = vmul.f32 %v5676, 0.5
    %v6363 = vmul.f32 %v5677, 0.5
    %v6364 = vmul.f32 %v5678, 0.5
    %v6365 = vmul.f32 %v5679, 0.5
    %v6366 = vmul.f32 %v5680, 0.5
    %v6367 = vmul.f32 %v5681, 0.5
    %v6368 = vmul.f32 %v5682, 0.5
    %v6369 = vmul.f32 %v5683, 0.5
    %v6370 = vmul.f32 %v5684, 0.5
    %v6371 = vmul.f32 %v5685, 0.5
    %v6372 = vmul.f32 %v5686, 0.5
    %v6373 = vmul.f32 %v5687, 0.5
    %v6374 = vmul.f32 %v5688, 0.5
    %v6375 = vmul.f32 %v5689, 0.5
    %v6376 = vmul.f32 %v5690, 0.5
    %v6377 = vmul.f32 %v5691, 0.5
    %v6378 = vmul.f32 %v5692, 0.5
    %v6379 = vmul.f32 %v5693, 0.5
    %v6380 = vmul.f32 %v5694, 0.5
    %v6381 = vmul.f32 %v5695, 0.5
    %v6382 = vmul.f32 %v5696, 0.5
    %v6383 = vmul.f32 %v5697, 0.5
    %v6384 = vmul.f32 %v5698, 0.5
    %v6385 = vmul.f32 %v5699, 0.5
    %v6386 = vmul.f32 %v5700, 0.5
    %v6387 = vmul.f32 %v5701, 0.5
    %v6388 = vmul.f32 %v5702, 0.5
    %v6389 = vmul.f32 %v5703, 0.5
    %v6390 = vmul.f32 %v5704, 0.5
    %v6391 = vmul.f32 %v5705, 0.5
    %v6392 = vmul.f32 %v5706, 0.5
    %v6393 = vmul.f32 %v5707, 0.5
    %v6394 = vmul.f32 %v5708, 0.5
    %v6395 = vmul.f32 %v5709, 0.5
    %v6396 = vmul.f32 %v5710, 0.5
    %v6397 = vmul.f32 %v5711, 0.5
    %v6398 = vmul.f32 %v5712, 0.5
    %v6399 = vmul.f32 %v5713, 0.5
    %v6400 = vmul.f32 %v5714, 0.5
    %v6401 = vmul.f32 %v5715, 0.5
    %v6402 = vmul.f32 %v5716, 0.5
    %v6403 = vmul.f32 %v5717, 0.5
    %v6404 = vmul.f32 %v5718, 0.5
    %v6405 = vmul.f32 %v5719, 0.5
    %v6406 = vmul.f32 %v5720, 0.5
    %v6407 = vmul.f32 %v5721, 0.5
    %v6408 = vmul.f32 %v5722, 0.5
    %v6409 = vmul.f32 %v5723, 0.5
    %v6410 = vmul.f32 %v5724, 0.5
    %v6411 = vmul.f32 %v5725, 0.5
    %v6412 = vmul.f32 %v5726, 0.5
    %v6413 = vmul.f32 %v5727, 0.5
    %v6414 = vmul.f32 %v5728, 0.5
    %v6415 = vmul.f32 %v5729, 0.5
    %v6416 = vmul.f32 %v5730, 0.5
    %v6417 = vmul.f32 %v5731, 0.5
    %v6418 = vmul.f32 %v5732, 0.5
    %v6419 = vmul.f32 %v5733, 0.5
    %v6420 = vmul.f32 %v5734, 0.5
    %v6421 = vmul.f32 %v5735, 0.5
    %v6422 = vmul.f32 %v5736, 0.5
    %v6423 = vmul.f32 %v5737, 0.5
    %v6424 = vmul.f32 %v5738, 0.5
    %v6425 = vmul.f32 %v5739, 0.5
    %v6426 = vmul.f32 %v5740, 0.5
    %v6427 = vmul.f32 %v5741, 0.5
    %v6428 = vmul.f32 %v5742, 0.5
    %v6429 = vmul.f32 %v5743, 0.5
    %v6430 = vmul.f32 %v5744, 0.5
    %v6431 = vmul.f32 %v5745, 0.5
    %v6432 = vmul.f32 %v5746, 0.5
    %v6433 = vmul.f32 %v5747, 0.5
    %v6434 = vmul.f32 %v5748, 0.5
    %v6435 = vmul.f32 %v5749, 0.5
    %v6436 = vmul.f32 %v5750, 0.5
    %v6437 = vmul.f32 %v5751, 0.5
    %v6438 = vmul.f32 %v5752, 0.5
    %v6439 = vmul.f32 %v5753, 0.5
    %v6440 = vmul.f32 %v5754, 0.5
    %v6441 = vmul.f32 %v5755, 0.5
    %v6442 = vmul.f32 %v5756, 0.5
    %v6443 = vmul.f32 %v5757, 0.5
    %v6444 = vmul.f32 %v5758, 0.5
    %v6445 = vmul.f32 %v5759, 0.5
    %v6446 = vmul.f32 %v5760, 0.5
    %v6447 = vmul.f32 %v5761, 0.5
    %v6448 = vmul.f32 %v5762, 0.5
    %v6449 = vmul.f32 %v5763, 0.5
    %v6450 = vmul.f32 %v5764, 0.5
    %v6451 = vmul.f32 %v5765, 0.5
    %v6452 = vmul.f32 %v5766, 0.5
    %v6453 = vmul.f32 %v5767, 0.5
    %v6454 = vmul.f32 %v5768, 0.5
    %v6455 = vmul.f32 %v5769, 0.5
    %v6456 = vmul.f32 %v5770, 0.5
    %v6457 = vmul.f32 %v5771, 0.5
    %v6458 = vmul.f32 %v5772, 0.5
    %v6459 = vmul.f32 %v5773, 0.5
    %v6460 = vmul.f32 %v5774, 0.5
    %v6461 = vmul.f32 %v5775, 0.5
    %v6462 = vmul.f32 %v5776, 0.5
    %v6463 = vmul.f32 %v5777, 0.5
    %v6464 = vmul.f32 %v5778, 0.5
    %v6465 = vmul.f32 %v5779, 0.5
    %v6466 = vmul.f32 %v5780, 0.5
    %v6467 = vmul.f32 %v5781, 0.5
    %v6468 = vmul.f32 %v5782, 0.5
    %v6469 = vmul.f32 %v5783, 0.5
    %v6470 = vmul.f32 %v5784, 0.5
    %v6471 = vmul.f32 %v5785, 0.5
    %v6472 = vmul.f32 %v5786, 0.5
    %v6473 = vmul.f32 %v5787, 0.5
    %v6474 = vmul.f32 %v5788, 0.5
    %v6475 = vmul.f32 %v5789, 0.5
    %v6476 = vmul.f32 %v5790, 0.5
    %v6477 = vmul.f32 %v5791, 0.5
    %v6478 = vmul.f32 %v5792, 0.5
    %v6479 = vmul.f32 %v5793, 0.5
    %v6480 = vmul.f32 %v5794, 0.5
    %v6481 = vmul.f32 %v5795, 0.5
    %v6482 = vmul.f32 %v5796, 0.5
    %v6483 = vmul.f32 %v5797, 0.5
    %v6484 = vmul.f32 %v5798, 0.5
    %v6485 = vmul.f32 %v5799, 0.5
    %v6486 = vmul.f32 %v5800, 0.5
    %v6487 = vmul.f32 %v5801, 0.5
    %v6488 = vmul.f32 %v5802, 0.5
    %v6489 = vmul.f32 %v5803, 0.5
    %v6490 = vmul.f32 %v5804, 0.5
    %v6491 = vmul.f32 %v5805, 0.5
    %v6492 = vmul.f32 %v5806, 0.5
    %v6493 = vmul.f32 %v5807, 0.5
    %v6494 = vmul.f32 %v5808, 0.5
    %v6495 = vmul.f32 %v5809, 0.5
    %v6496 = vmul.f32 %v5810, 0.5
    %v6497 = vmul.f32 %v5811, 0.5
    %v6498 = vmul.f32 %v5812, 0.5
    %v6499 = vmul.f32 %v5813, 0.5
    %v6500 = vmul.f32 %v5814, 0.5
    %v6501 = vmul.f32 %v5815, 0.5
    %v6502 = vmul.f32 %v5816, 0.5
    %v6503 = vmul.f32 %v5817, 0.5
    %v6504 = vmul.f32 %v5818, 0.5
    %v6505 = vmul.f32 %v5819, 0.5
    %v6506 = vmul.f32 %v5820, 0.5
    %v6507 = vmul.f32 %v5821, 0.5
    %v6508 = vmul.f32 %v5822, 0.5
    %v6509 = vmul.f32 %v5823, 0.5
    %v6510 = vmul.f32 %v5824, 0.5
    %v6511 = vmul.f32 %v5825, 0.5
    %v6512 = vmul.f32 %v5826, 0.5
    %v6513 = vmul.f32 %v5827, 0.5
    %v6514 = vmul.f32 %v5828, 0.5
    %v6515 = vmul.f32 %v5829, 0.5
    %v6516 = vmul.f32 %v5830, 0.5
    %v6517 = vmul.f32 %v5831, 0.5
    %v6518 = vmul.f32 %v5832, 0.5
    %v6519 = vmul.f32 %v5833, 0.5
    %v6520 = vmul.f32 %v5834, 0.5
    %v6521 = vmul.f32 %v5835, 0.5
    %v6522 = vmul.f32 %v5836, 0.5
    %v6523 = vmul.f32 %v5837, 0.5
    %v6524 = vmul.f32 %v5838, 0.5
    %v6525 = vmul.f32 %v5839, 0.5
    %v6526 = vmul.f32 %v5840, 0.5
    %v6527 = vmul.f32 %v5841, 0.5
    %v6528 = vmul.f32 %v5842, 0.5
    %v6529 = vmul.f32 %v5843, 0.5
    %v6530 = vmul.f32 %v5844, 0.5
    %v6531 = vmul.f32 %v5845, 0.5
    %v6532 = vmul.f32 %v5846, 0.5
    %v6533 = vmul.f32 %v5847, 0.5
    %v6534 = vmul.f32 %v5848, 0.5
    %v6535 = vmul.f32 %v5849, 0.5
    %v6536 = vmul.f32 %v5850, 0.5
    %v6537 = vmul.f32 %v5851, 0.5
    %v6538 = vmul.f32 %v5852, 0.5
    %v6539 = vmul.f32 %v5853, 0.5
    %v6540 = vmul.f32 %v5854, 0.5
    %v6541 = vmul.f32 %v5855, 0.5
    %v6542 = vmul.f32 %v5856, 0.5
    %v6543 = vmul.f32 %v5857, 0.5
    %v6544 = vmul.f32 %v5858, 0.5
    %v6545 = vmul.f32 %v5859, 0.5
    %v6546 = vmul.f32 %v5860, 0.5
    %v6547 = vmul.f32 %v5861, 0.5
    %v6548 = vmul.f32 %v5862, 0.5
    %v6549 = vmul.f32 %v5863, 0.5
    %v6550 = vmul.f32 %v5864, 0.5
    %v6551 = vmul.f32 %v5865, 0.5
    %v6552 = vmul.f32 %v5866, 0.5
    %v6553 = vmul.f32 %v5867, 0.5
    %v6554 = vmul.f32 %v5868, 0.5
    %v6555 = vmul.f32 %v5869, 0.5
    %v6556 = vmul.f32 %v5870, 0.5
    %v6557 = vmul.f32 %v5871, 0.5
    %v6558 = vmul.f32 %v5872, 0.5
    %v6559 = vmul.f32 %v5873, 0.5
    %v6560 = vmul.f32 %v5874, 0.5
    %v6561 = vmul.f32 %v5875, 0.5
    %v6562 = vmul.f32 %v5876, 0.5
    %v6563 = vmul.f32 %v5877, 0.5
    %v6564 = vmul.f32 %v5878, 0.5
    %v6565 = vmul.f32 %v5879, 0.5
    %v6566 = vmul.f32 %v5880, 0.5
    %v6567 = vmul.f32 %v5881, 0.5
    %v6568 = vmul.f32 %v5882, 0.5
    %v6569 = vmul.f32 %v5883, 0.5
    %v6570 = vmul.f32 %v5884, 0.5
    %v6571 = vmul.f32 %v5885, 0.5
    %v6572 = vmul.f32 %v5886, 0.5
    %v6573 = vmul.f32 %v5887, 0.5
    %v6574 = vmul.f32 %v5888, 0.5
    %v6575 = vmul.f32 %v5889, 0.5
    %v6576 = vmul.f32 %v5890, 0.5
    %v6577 = vmul.f32 %v5891, 0.5
    %v6578 = vmul.f32 %v5892, 0.5
    %v6579 = vmul.f32 %v5893, 0.5
    %v6580 = vmul.f32 %v5894, 0.5
    %v6581 = vmul.f32 %v5895, 0.5
    %v6582 = vmul.f32 %v5896, 0.5
    %v6583 = vmul.f32 %v5897, 0.5
    %v6584 = vmul.f32 %v5898, 0.5
    %v6585 = vmul.f32 %v5899, 0.5
    %v6586 = vmul.f32 %v5900, 0.5
    %v6587 = vmul.f32 %v5901, 0.5
    %v6588 = vmul.f32 %v5902, 0.5
    %v6589 = vmul.f32 %v5903, 0.5
    %v6590 = vmul.f32 %v5904, 0.5
    %v6591 = vmul.f32 %v5905, 0.5
    %v6592 = vmul.f32 %v5906, 0.5
    %v6593 = vmul.f32 %v5907, 0.5
    %v6594 = vmul.f32 %v5908, 0.5
    %v6595 = vmul.f32 %v5909, 0.5
    %v6596 = vmul.f32 %v5910, 0.5
    %v6597 = vmul.f32 %v5911, 0.5
    %v6598 = vmul.f32 %v5912, 0.5
    %v6599 = vmul.f32 %v5913, 0.5
    %v6600 = vmul.f32 %v5914, 0.5
    %v6601 = vmul.f32 %v5915, 0.5
    %v6602 = vmul.f32 %v5916, 0.5
    %v6603 = vmul.f32 %v5917, 0.5
    %v6604 = vmul.f32 %v5918, 0.5
    %v6605 = vmul.f32 %v5919, 0.5
    %v6606 = vmul.f32 %v5920, 0.5
    %v6607 = vmul.f32 %v5921, 0.5
    %v6608 = vmul.f32 %v5922, 0.5
    %v6609 = vmul.f32 %v5923, 0.5
    %v6610 = vmul.f32 %v5924, 0.5
    %v6611 = vmul.f32 %v5925, 0.5
    %v6612 = vmul.f32 %v5926, 0.5
    %v6613 = vmul.f32 %v5927, 0.5
    %v6614 = vmul.f32 %v5928, 0.5
    %v6615 = vmul.f32 %v5929, 0.5
    %v6616 = vmul.f32 %v5930, 0.5
    %v6617 = vmul.f32 %v5931, 0.5
    %v6618 = vmul.f32 %v5932, 0.5
    %v6619 = vmul.f32 %v5933, 0.5
    %v6620 = vmul.f32 %v5934, 0.5
    %v6621 = vmul.f32 %v5935, 0.5
    %v6622 = vmul.f32 %v5936, 0.5
    %v6623 = vmul.f32 %v5937, 0.5
    %v6624 = vmul.f32 %v5938, 0.5
    %v6625 = vmul.f32 %v5939, 0.5
    %v6626 = vmul.f32 %v5940, 0.5
    %v6627 = vmul.f32 %v5941, 0.5
    %v6628 = vmul.f32 %v5942, 0.5
    %v6629 = vmul.f32 %v5943, 0.5
    %v6630 = vmul.f32 %v5944, 0.5
    %v6631 = vadd.f32 %v5945, 0.5
    %v6632 = vadd.f32 %v5946, 0.5
    %v6633 = vadd.f32 %v5947, 0.5
    %v6634 = vadd.f32 %v5948, 0.5
    %v6635 = vadd.f32 %v5949, 0.5
    %v6636 = vadd.f32 %v5950, 0.5
    %v6637 = vadd.f32 %v5951, 0.5
    %v6638 = vadd.f32 %v5952, 0.5
    %v6639 = vadd.f32 %v5953, 0.5
    %v6640 = vadd.f32 %v5954, 0.5
    %v6641 = vadd.f32 %v5955, 0.5
    %v6642 = vadd.f32 %v5956, 0.5
    %v6643 = vadd.f32 %v5957, 0.5
    %v6644 = vadd.f32 %v5958, 0.5
    %v6645 = vadd.f32 %v5959, 0.5
    %v6646 = vadd.f32 %v5960, 0.5
    %v6647 = vadd.f32 %v5961, 0.5
    %v6648 = vadd.f32 %v5962, 0.5
    %v6649 = vadd.f32 %v5963, 0.5
    %v6650 = vadd.f32 %v5964, 0.5
    %v6651 = vadd.f32 %v5965, 0.5
    %v6652 = vadd.f32 %v5966, 0.5
    %v6653 = vadd.f32 %v5967, 0.5
    %v6654 = vadd.f32 %v5968, 0.5
    %v6655 = vadd.f32 %v5969, 0.5
    %v6656 = vadd.f32 %v5970, 0.5
    %v6657 = vadd.f32 %v5971, 0.5
    %v6658 = vadd.f32 %v5972, 0.5
    %v6659 = vadd.f32 %v5973, 0.5
    %v6660 = vadd.f32 %v5974, 0.5
    %v6661 = vadd.f32 %v5975, 0.5
    %v6662 = vadd.f32 %v5976, 0.5
    %v6663 = vadd.f32 %v5977, 0.5
    %v6664 = vadd.f32 %v5978, 0.5
    %v6665 = vadd.f32 %v5979, 0.5
    %v6666 = vadd.f32 %v5980, 0.5
    %v6667 = vadd.f32 %v5981, 0.5
    %v6668 = vadd.f32 %v5982, 0.5
    %v6669 = vadd.f32 %v5983, 0.5
    %v6670 = vadd.f32 %v5984, 0.5
    %v6671 = vadd.f32 %v5985, 0.5
    %v6672 = vadd.f32 %v5986, 0.5
    %v6673 = vadd.f32 %v5987, 0.5
    %v6674 = vadd.f32 %v5988, 0.5
    %v6675 = vadd.f32 %v5989, 0.5
    %v6676 = vadd.f32 %v5990, 0.5
    %v6677 = vadd.f32 %v5991, 0.5
    %v6678 = vadd.f32 %v5992, 0.5
    %v6679 = vadd.f32 %v5993, 0.5
    %v6680 = vadd.f32 %v5994, 0.5
    %v6681 = vadd.f32 %v5995, 0.5
    %v6682 = vadd.f32 %v5996, 0.5
    %v6683 = vadd.f32 %v5997, 0.5
    %v6684 = vadd.f32 %v5998, 0.5
    %v6685 = vadd.f32 %v5999, 0.5
    %v6686 = vadd.f32 %v6000, 0.5
    %v6687 = vadd.f32 %v6001, 0.5
    %v6688 = vadd.f32 %v6002, 0.5
    %v6689 = vadd.f32 %v6003, 0.5
    %v6690 = vadd.f32 %v6004, 0.5
    %v6691 = vadd.f32 %v6005, 0.5
    %v6692 = vadd.f32 %v6006, 0.5
    %v6693 = vadd.f32 %v6007, 0.5
    %v6694 = vadd.f32 %v6008, 0.5
    %v6695 = vadd.f32 %v6009, 0.5
    %v6696 = vadd.f32 %v6010, 0.5
    %v6697 = vadd.f32 %v6011, 0.5
    %v6698 = vadd.f32 %v6012, 0.5
    %v6699 = vadd.f32 %v6013, 0.5
    %v6700 = vadd.f32 %v6014, 0.5
    %v6701 = vadd.f32 %v6015, 0.5
    %v6702 = vadd.f32 %v6016, 0.5
    %v6703 = vadd.f32 %v6017, 0.5
    %v6704 = vadd.f32 %v6018, 0.5
    %v6705 = vadd.f32 %v6019, 0.5
    %v6706 = vadd.f32 %v6020, 0.5
    %v6707 = vadd.f32 %v6021, 0.5
    %v6708 = vadd.f32 %v6022, 0.5
    %v6709 = vadd.f32 %v6023, 0.5
    %v6710 = vadd.f32 %v6024, 0.5
    %v6711 = vadd.f32 %v6025, 0.5
    %v6712 = vadd.f32 %v6026, 0.5
    %v6713 = vadd.f32 %v6027, 0.5
    %v6714 = vadd.f32 %v6028, 0.5
    %v6715 = vadd.f32 %v6029, 0.5
    %v6716 = vadd.f32 %v6030, 0.5
    %v6717 = vadd.f32 %v6031, 0.5
    %v6718 = vadd.f32 %v6032, 0.5
    %v6719 = vadd.f32 %v6033, 0.5
    %v6720 = vadd.f32 %v6034, 0.5
    %v6721 = vadd.f32 %v6035, 0.5
    %v6722 = vadd.f32 %v6036, 0.5
    %v6723 = vadd.f32 %v6037, 0.5
    %v6724 = vadd.f32 %v6038, 0.5
    %v6725 = vadd.f32 %v6039, 0.5
    %v6726 = vadd.f32 %v6040, 0.5
    %v6727 = vadd.f32 %v6041, 0.5
    %v6728 = vadd.f32 %v6042, 0.5
    %v6729 = vadd.f32 %v6043, 0.5
    %v6730 = vadd.f32 %v6044, 0.5
    %v6731 = vadd.f32 %v6045, 0.5
    %v6732 = vadd.f32 %v6046, 0.5
    %v6733 = vadd.f32 %v6047, 0.5
    %v6734 = vadd.f32 %v6048, 0.5
    %v6735 = vadd.f32 %v6049, 0.5
    %v6736 = vadd.f32 %v6050, 0.5
    %v6737 = vadd.f32 %v6051, 0.5
    %v6738 = vadd.f32 %v6052, 0.5
    %v6739 = vadd.f32 %v6053, 0.5
    %v6740 = vadd.f32 %v6054, 0.5
    %v6741 = vadd.f32 %v6055, 0.5
    %v6742 = vadd.f32 %v6056, 0.5
    %v6743 = vadd.f32 %v6057, 0.5
    %v6744 = vadd.f32 %v6058, 0.5
    %v6745 = vadd.f32 %v6059, 0.5
    %v6746 = vadd.f32 %v6060, 0.5
    %v6747 = vadd.f32 %v6061, 0.5
    %v6748 = vadd.f32 %v6062, 0.5
    %v6749 = vadd.f32 %v6063, 0.5
    %v6750 = vadd.f32 %v6064, 0.5
    %v6751 = vadd.f32 %v6065, 0.5
    %v6752 = vadd.f32 %v6066, 0.5
    %v6753 = vadd.f32 %v6067, 0.5
    %v6754 = vadd.f32 %v6068, 0.5
    %v6755 = vadd.f32 %v6069, 0.5
    %v6756 = vadd.f32 %v6070, 0.5
    %v6757 = vadd.f32 %v6071, 0.5
    %v6758 = vadd.f32 %v6072, 0.5
    %v6759 = vadd.f32 %v6073, 0.5
    %v6760 = vadd.f32 %v6074, 0.5
    %v6761 = vadd.f32 %v6075, 0.5
    %v6762 = vadd.f32 %v6076, 0.5
    %v6763 = vadd.f32 %v6077, 0.5
    %v6764 = vadd.f32 %v6078, 0.5
    %v6765 = vadd.f32 %v6079, 0.5
    %v6766 = vadd.f32 %v6080, 0.5
    %v6767 = vadd.f32 %v6081, 0.5
    %v6768 = vadd.f32 %v6082, 0.5
    %v6769 = vadd.f32 %v6083, 0.5
    %v6770 = vadd.f32 %v6084, 0.5
    %v6771 = vadd.f32 %v6085, 0.5
    %v6772 = vadd.f32 %v6086, 0.5
    %v6773 = vadd.f32 %v6087, 0.5
    %v6774 = vadd.f32 %v6088, 0.5
    %v6775 = vadd.f32 %v6089, 0.5
    %v6776 = vadd.f32 %v6090, 0.5
    %v6777 = vadd.f32 %v6091, 0.5
    %v6778 = vadd.f32 %v6092, 0.5
    %v6779 = vadd.f32 %v6093, 0.5
    %v6780 = vadd.f32 %v6094, 0.5
    %v6781 = vadd.f32 %v6095, 0.5
    %v6782 = vadd.f32 %v6096, 0.5
    %v6783 = vadd.f32 %v6097, 0.5
    %v6784 = vadd.f32 %v6098, 0.5
    %v6785 = vadd.f32 %v6099, 0.5
    %v6786 = vadd.f32 %v6100, 0.5
    %v6787 = vadd.f32 %v6101, 0.5
    %v6788 = vadd.f32 %v6102, 0.5
    %v6789 = vadd.f32 %v6103, 0.5
    %v6790 = vadd.f32 %v6104, 0.5
    %v6791 = vadd.f32 %v6105, 0.5
    %v6792 = vadd.f32 %v6106, 0.5
    %v6793 = vadd.f32 %v6107, 0.5
    %v6794 = vadd.f32 %v6108, 0.5
    %v6795 = vadd.f32 %v6109, 0.5
    %v6796 = vadd.f32 %v6110, 0.5
    %v6797 = vadd.f32 %v6111, 0.5
    %v6798 = vadd.f32 %v6112, 0.5
    %v6799 = vadd.f32 %v6113, 0.5
    %v6800 = vadd.f32 %v6114, 0.5
    %v6801 = vadd.f32 %v6115, 0.5
    %v6802 = vadd.f32 %v6116, 0.5
    %v6803 = vadd.f32 %v6117, 0.5
    %v6804 = vadd.f32 %v6118, 0.5
    %v6805 = vadd.f32 %v6119, 0.5
    %v6806 = vadd.f32 %v6120, 0.5
    %v6807 = vadd.f32 %v6121, 0.5
    %v6808 = vadd.f32 %v6122, 0.5
    %v6809 = vadd.f32 %v6123, 0.5
    %v6810 = vadd.f32 %v6124, 0.5
    %v6811 = vadd.f32 %v6125, 0.5
    %v6812 = vadd.f32 %v6126, 0.5
    %v6813 = vadd.f32 %v6127, 0.5
    %v6814 = vadd.f32 %v6128, 0.5
    %v6815 = vadd.f32 %v6129, 0.5
    %v6816 = vadd.f32 %v6130, 0.5
    %v6817 = vadd.f32 %v6131, 0.5
    %v6818 = vadd.f32 %v6132, 0.5
    %v6819 = vadd.f32 %v6133, 0.5
    %v6820 = vadd.f32 %v6134, 0.5
    %v6821 = vadd.f32 %v6135, 0.5
    %v6822 = vadd.f32 %v6136, 0.5
    %v6823 = vadd.f32 %v6137, 0.5
    %v6824 = vadd.f32 %v6138, 0.5
    %v6825 = vadd.f32 %v6139, 0.5
    %v6826 = vadd.f32 %v6140, 0.5
    %v6827 = vadd.f32 %v6141, 0.5
    %v6828 = vadd.f32 %v6142, 0.5
    %v6829 = vadd.f32 %v6143, 0.5
    %v6830 = vadd.f32 %v6144, 0.5
    %v6831 = vadd.f32 %v6145, 0.5
    %v6832 = vadd.f32 %v6146, 0.5
    %v6833 = vadd.f32 %v6147, 0.5
    %v6834 = vadd.f32 %v6148, 0.5
    %v6835 = vadd.f32 %v6149, 0.5
    %v6836 = vadd.f32 %v6150, 0.5
    %v6837 = vadd.f32 %v6151, 0.5
    %v6838 = vadd.f32 %v6152, 0.5
    %v6839 = vadd.f32 %v6153, 0.5
    %v6840 = vadd.f32 %v6154, 0.5
    %v6841 = vadd.f32 %v6155, 0.5
    %v6842 = vadd.f32 %v6156, 0.5
    %v6843 = vadd.f32 %v6157, 0.5
    %v6844 = vadd.f32 %v6158, 0.5
    %v6845 = vadd.f32 %v6159, 0.5
    %v6846 = vadd.f32 %v6160, 0.5
    %v6847 = vadd.f32 %v6161, 0.5
    %v6848 = vadd.f32 %v6162, 0.5
    %v6849 = vadd.f32 %v6163, 0.5
    %v6850 = vadd.f32 %v6164, 0.5
    %v6851 = vadd.f32 %v6165, 0.5
    %v6852 = vadd.f32 %v6166, 0.5
    %v6853 = vadd.f32 %v6167, 0.5
    %v6854 = vadd.f32 %v6168, 0.5
    %v6855 = vadd.f32 %v6169, 0.5
    %v6856 = vadd.f32 %v6170, 0.5
    %v6857 = vadd.f32 %v6171, 0.5
    %v6858 = vadd.f32 %v6172, 0.5
    %v6859 = vadd.f32 %v6173, 0.5
    %v6860 = vadd.f32 %v6174, 0.5
    %v6861 = vadd.f32 %v6175, 0.5
    %v6862 = vadd.f32 %v6176, 0.5
    %v6863 = vadd.f32 %v6177, 0.5
    %v6864 = vadd.f32 %v6178, 0.5
    %v6865 = vadd.f32 %v6179, 0.5
    %v6866 = vadd.f32 %v6180, 0.5
    %v6867 = vadd.f32 %v6181, 0.5
    %v6868 = vadd.f32 %v6182, 0.5
    %v6869 = vadd.f32 %v6183, 0.5
    %v6870 = vadd.f32 %v6184, 0.5
    %v6871 = vadd.f32 %v6185, 0.5
    %v6872 = vadd.f32 %v6186, 0.5
    %v6873 = vadd.f32 %v6187, 0.5
    %v6874 = vadd.f32 %v6188, 0.5
    %v6875 = vadd.f32 %v6189, 0.5
    %v6876 = vadd.f32 %v6190, 0.5
    %v6877 = vadd.f32 %v6191, 0.5
    %v6878 = vadd.f32 %v6192, 0.5
    %v6879 = vadd.f32 %v6193, 0.5
    %v6880 = vadd.f32 %v6194, 0.5
    %v6881 = vadd.f32 %v6195, 0.5
    %v6882 = vadd.f32 %v6196, 0.5
    %v6883 = vadd.f32 %v6197, 0.5
    %v6884 = vadd.f32 %v6198, 0.5
    %v6885 = vadd.f32 %v6199, 0.5
    %v6886 = vadd.f32 %v6200, 0.5
    %v6887 = vadd.f32 %v6201, 0.5
    %v6888 = vadd.f32 %v6202, 0.5
    %v6889 = vadd.f32 %v6203, 0.5
    %v6890 = vadd.f32 %v6204, 0.5
    %v6891 = vadd.f32 %v6205, 0.5
    %v6892 = vadd.f32 %v6206, 0.5
    %v6893 = vadd.f32 %v6207, 0.5
    %v6894 = vadd.f32 %v6208, 0.5
    %v6895 = vadd.f32 %v6209, 0.5
    %v6896 = vadd.f32 %v6210, 0.5
    %v6897 = vadd.f32 %v6211, 0.5
    %v6898 = vadd.f32 %v6212, 0.5
    %v6899 = vadd.f32 %v6213, 0.5
    %v6900 = vadd.f32 %v6214, 0.5
    %v6901 = vadd.f32 %v6215, 0.5
    %v6902 = vadd.f32 %v6216, 0.5
    %v6903 = vadd.f32 %v6217, 0.5
    %v6904 = vadd.f32 %v6218, 0.5
    %v6905 = vadd.f32 %v6219, 0.5
    %v6906 = vadd.f32 %v6220, 0.5
    %v6907 = vadd.f32 %v6221, 0.5
    %v6908 = vadd.f32 %v6222, 0.5
    %v6909 = vadd.f32 %v6223, 0.5
    %v6910 = vadd.f32 %v6224, 0.5
    %v6911 = vadd.f32 %v6225, 0.5
    %v6912 = vadd.f32 %v6226, 0.5
    %v6913 = vadd.f32 %v6227, 0.5
    %v6914 = vadd.f32 %v6228, 0.5
    %v6915 = vadd.f32 %v6229, 0.5
    %v6916 = vadd.f32 %v6230, 0.5
    %v6917 = vadd.f32 %v6231, 0.5
    %v6918 = vadd.f32 %v6232, 0.5
    %v6919 = vadd.f32 %v6233, 0.5
    %v6920 = vadd.f32 %v6234, 0.5
    %v6921 = vadd.f32 %v6235, 0.5
    %v6922 = vadd.f32 %v6236, 0.5
    %v6923 = vadd.f32 %v6237, 0.5
    %v6924 = vadd.f32 %v6238, 0.5
    %v6925 = vadd.f32 %v6239, 0.5
    %v6926 = vadd.f32 %v6240, 0.5
    %v6927 = vadd.f32 %v6241, 0.5
    %v6928 = vadd.f32 %v6242, 0.5
    %v6929 = vadd.f32 %v6243, 0.5
    %v6930 = vadd.f32 %v6244, 0.5
    %v6931 = vadd.f32 %v6245, 0.5
    %v6932 = vadd.f32 %v6246, 0.5
    %v6933 = vadd.f32 %v6247, 0.5
    %v6934 = vadd.f32 %v6248, 0.5
    %v6935 = vadd.f32 %v6249, 0.5
    %v6936 = vadd.f32 %v6250, 0.5
    %v6937 = vadd.f32 %v6251, 0.5
    %v6938 = vadd.f32 %v6252, 0.5
    %v6939 = vadd.f32 %v6253, 0.5
    %v6940 = vadd.f32 %v6254, 0.5
    %v6941 = vadd.f32 %v6255, 0.5
    %v6942 = vadd.f32 %v6256, 0.5
    %v6943 = vadd.f32 %v6257, 0.5
    %v6944 = vadd.f32 %v6258, 0.5
    %v6945 = vadd.f32 %v6259, 0.5
    %v6946 = vadd.f32 %v6260, 0.5
    %v6947 = vadd.f32 %v6261, 0.5
    %v6948 = vadd.f32 %v6262, 0.5
    %v6949 = vadd.f32 %v6263, 0.5
    %v6950 = vadd.f32 %v6264, 0.5
    %v6951 = vadd.f32 %v6265, 0.5
    %v6952 = vadd.f32 %v6266, 0.5
    %v6953 = vadd.f32 %v6267, 0.5
    %v6954 = vadd.f32 %v6268, 0.5
    %v6955 = vadd.f32 %v6269, 0.5
    %v6956 = vadd.f32 %v6270, 0.5
    %v6957 = vadd.f32 %v6271, 0.5
    %v6958 = vadd.f32 %v6272, 0.5
    %v6959 = vadd.f32 %v6273, 0.5
    %v6960 = vadd.f32 %v6274, 0.5
    %v6961 = vadd.f32 %v6275, 0.5
    %v6962 = vadd.f32 %v6276, 0.5
    %v6963 = vadd.f32 %v6277, 0.5
    %v6964 = vadd.f32 %v6278, 0.5
    %v6965 = vadd.f32 %v6279, 0.5
    %v6966 = vadd.f32 %v6280, 0.5
    %v6967 = vadd.f32 %v6281, 0.5
    %v6968 = vadd.f32 %v6282, 0.5
    %v6969 = vadd.f32 %v6283, 0.5
    %v6970 = vadd.f32 %v6284, 0.5
    %v6971 = vadd.f32 %v6285, 0.5
    %v6972 = vadd.f32 %v6286, 0.5
    %v6973 = vadd.f32 %v6287, 0.5
    %v6974 = vadd.f32 %v6288, 0.5
    %v6975 = vadd.f32 %v6289, 0.5
    %v6976 = vadd.f32 %v6290, 0.5
    %v6977 = vadd.f32 %v6291, 0.5
    %v6978 = vadd.f32 %v6292, 0.5
    %v6979 = vadd.f32 %v6293, 0.5
    %v6980 = vadd.f32 %v6294, 0.5
    %v6981 = vadd.f32 %v6295, 0.5
    %v6982 = vadd.f32 %v6296, 0.5
    %v6983 = vadd.f32 %v6297, 0.5
    %v6984 = vadd.f32 %v6298, 0.5
    %v6985 = vadd.f32 %v6299, 0.5
    %v6986 = vadd.f32 %v6300, 0.5
    %v6987 = vadd.f32 %v6301, 0.5
    %v6988 = vadd.f32 %v6302, 0.5
    %v6989 = vadd.f32 %v6303, 0.5
    %v6990 = vadd.f32 %v6304, 0.5
    %v6991 = vadd.f32 %v6305, 0.5
    %v6992 = vadd.f32 %v6306, 0.5
    %v6993 = vadd.f32 %v6307, 0.5
    %v6994 = vadd.f32 %v6308, 0.5
    %v6995 = vadd.f32 %v6309, 0.5
    %v6996 = vadd.f32 %v6310, 0.5
    %v6997 = vadd.f32 %v6311, 0.5
    %v6998 = vadd.f32 %v6312, 0.5
    %v6999 = vadd.f32 %v6313, 0.5
    %v7000 = vadd.f32 %v6314, 0.5
    %v7001 = vadd.f32 %v6315, 0.5
    %v7002 = vadd.f32 %v6316, 0.5
    %v7003 = vadd.f32 %v6317, 0.5
    %v7004 = vadd.f32 %v6318, 0.5
    %v7005 = vadd.f32 %v6319, 0.5
    %v7006 = vadd.f32 %v6320, 0.5
    %v7007 = vadd.f32 %v6321, 0.5
    %v7008 = vadd.f32 %v6322, 0.5
    %v7009 = vadd.f32 %v6323, 0.5
    %v7010 = vadd.f32 %v6324, 0.5
    %v7011 = vadd.f32 %v6325, 0.5
    %v7012 = vadd.f32 %v6326, 0.5
    %v7013 = vadd.f32 %v6327, 0.5
    %v7014 = vadd.f32 %v6328, 0.5
    %v7015 = vadd.f32 %v6329, 0.5
    %v7016 = vadd.f32 %v6330, 0.5
    %v7017 = vadd.f32 %v6331, 0.5
    %v7018 = vadd.f32 %v6332, 0.5
    %v7019 = vadd.f32 %v6333, 0.5
    %v7020 = vadd.f32 %v6334, 0.5
    %v7021 = vadd.f32 %v6335, 0.5
    %v7022 = vadd.f32 %v6336, 0.5
    %v7023 = vadd.f32 %v6337, 0.5
    %v7024 = vadd.f32 %v6338, 0.5
    %v7025 = vadd.f32 %v6339, 0.5
    %v7026 = vadd.f32 %v6340, 0.5
    %v7027 = vadd.f32 %v6341, 0.5
    %v7028 = vadd.f32 %v6342, 0.5
    %v7029 = vadd.f32 %v6343, 0.5
    %v7030 = vadd.f32 %v6344, 0.5
    %v7031 = vadd.f32 %v6345, 0.5
    %v7032 = vadd.f32 %v6346, 0.5
    %v7033 = vadd.f32 %v6347, 0.5
    %v7034 = vadd.f32 %v6348, 0.5
    %v7035 = vadd.f32 %v6349, 0.5
    %v7036 = vadd.f32 %v6350, 0.5
    %v7037 = vadd.f32 %v6351, 0.5
    %v7038 = vadd.f32 %v6352, 0.5
    %v7039 = vadd.f32 %v6353, 0.5
    %v7040 = vadd.f32 %v6354, 0.5
    %v7041 = vadd.f32 %v6355, 0.5
    %v7042 = vadd.f32 %v6356, 0.5
    %v7043 = vadd.f32 %v6357, 0.5
    %v7044 = vadd.f32 %v6358, 0.5
    %v7045 = vadd.f32 %v6359, 0.5
    %v7046 = vadd.f32 %v6360, 0.5
    %v7047 = vadd.f32 %v6361, 0.5
    %v7048 = vadd.f32 %v6362, 0.5
    %v7049 = vadd.f32 %v6363, 0.5
    %v7050 = vadd.f32 %v6364, 0.5
    %v7051 = vadd.f32 %v6365, 0.5
    %v7052 = vadd.f32 %v6366, 0.5
    %v7053 = vadd.f32 %v6367, 0.5
    %v7054 = vadd.f32 %v6368, 0.5
    %v7055 = vadd.f32 %v6369, 0.5
    %v7056 = vadd.f32 %v6370, 0.5
    %v7057 = vadd.f32 %v6371, 0.5
    %v7058 = vadd.f32 %v6372, 0.5
    %v7059 = vadd.f32 %v6373, 0.5
    %v7060 = vadd.f32 %v6374, 0.5
    %v7061 = vadd.f32 %v6375, 0.5
    %v7062 = vadd.f32 %v6376, 0.5
    %v7063 = vadd.f32 %v6377, 0.5
    %v7064 = vadd.f32 %v6378, 0.5
    %v7065 = vadd.f32 %v6379, 0.5
    %v7066 = vadd.f32 %v6380, 0.5
    %v7067 = vadd.f32 %v6381, 0.5
    %v7068 = vadd.f32 %v6382, 0.5
    %v7069 = vadd.f32 %v6383, 0.5
    %v7070 = vadd.f32 %v6384, 0.5
    %v7071 = vadd.f32 %v6385, 0.5
    %v7072 = vadd.f32 %v6386, 0.5
    %v7073 = vadd.f32 %v6387, 0.5
    %v7074 = vadd.f32 %v6388, 0.5
    %v7075 = vadd.f32 %v6389, 0.5
    %v7076 = vadd.f32 %v6390, 0.5
    %v7077 = vadd.f32 %v6391, 0.5
    %v7078 = vadd.f32 %v6392, 0.5
    %v7079 = vadd.f32 %v6393, 0.5
    %v7080 = vadd.f32 %v6394, 0.5
    %v7081 = vadd.f32 %v6395, 0.5
    %v7082 = vadd.f32 %v6396, 0.5
    %v7083 = vadd.f32 %v6397, 0.5
    %v7084 = vadd.f32 %v6398, 0.5
    %v7085 = vadd.f32 %v6399, 0.5
    %v7086 = vadd.f32 %v6400, 0.5
    %v7087 = vadd.f32 %v6401, 0.5
    %v7088 = vadd.f32 %v6402, 0.5
    %v7089 = vadd.f32 %v6403, 0.5
    %v7090 = vadd.f32 %v6404, 0.5
    %v7091 = vadd.f32 %v6405, 0.5
    %v7092 = vadd.f32 %v6406, 0.5
    %v7093 = vadd.f32 %v6407, 0.5
    %v7094 = vadd.f32 %v6408, 0.5
    %v7095 = vadd.f32 %v6409, 0.5
    %v7096 = vadd.f32 %v6410, 0.5
    %v7097 = vadd.f32 %v6411, 0.5
    %v7098 = vadd.f32 %v6412, 0.5
    %v7099 = vadd.f32 %v6413, 0.5
    %v7100 = vadd.f32 %v6414, 0.5
    %v7101 = vadd.f32 %v6415, 0.5
    %v7102 = vadd.f32 %v6416, 0.5
    %v7103 = vadd.f32 %v6417, 0.5
    %v7104 = vadd.f32 %v6418, 0.5
    %v7105 = vadd.f32 %v6419, 0.5
    %v7106 = vadd.f32 %v6420, 0.5
    %v7107 = vadd.f32 %v6421, 0.5
    %v7108 = vadd.f32 %v6422, 0.5
    %v7109 = vadd.f32 %v6423, 0.5
    %v7110 = vadd.f32 %v6424, 0.5
    %v7111 = vadd.f32 %v6425, 0.5
    %v7112 = vadd.f32 %v6426, 0.5
    %v7113 = vadd.f32 %v6427, 0.5
    %v7114 = vadd.f32 %v6428, 0.5
    %v7115 = vadd.f32 %v6429, 0.5
    %v7116 = vadd.f32 %v6430, 0.5
    %v7117 = vadd.f32 %v6431, 0.5
    %v7118 = vadd.f32 %v6432, 0.5
    %v7119 = vadd.f32 %v6433, 0.5
    %v7120 = vadd.f32 %v6434, 0.5
    %v7121 = vadd.f32 %v6435, 0.5
    %v7122 = vadd.f32 %v6436, 0.5
    %v7123 = vadd.f32 %v6437, 0.5
    %v7124 = vadd.f32 %v6438, 0.5
    %v7125 = vadd.f32 %v6439, 0.5
    %v7126 = vadd.f32 %v6440, 0.5
    %v7127 = vadd.f32 %v6441, 0.5
    %v7128 = vadd.f32 %v6442, 0.5
    %v7129 = vadd.f32 %v6443, 0.5
    %v7130 = vadd.f32 %v6444, 0.5
    %v7131 = vadd.f32 %v6445, 0.5
    %v7132 = vadd.f32 %v6446, 0.5
    %v7133 = vadd.f32 %v6447, 0.5
    %v7134 = vadd.f32 %v6448, 0.5
    %v7135 = vadd.f32 %v6449, 0.5
    %v7136 = vadd.f32 %v6450, 0.5
    %v7137 = vadd.f32 %v6451, 0.5
    %v7138 = vadd.f32 %v6452, 0.5
    %v7139 = vadd.f32 %v6453, 0.5
    %v7140 = vadd.f32 %v6454, 0.5
    %v7141 = vadd.f32 %v6455, 0.5
    %v7142 = vadd.f32 %v6456, 0.5
    %v7143 = vadd.f32 %v6457, 0.5
    %v7144 = vadd.f32 %v6458, 0.5
    %v7145 = vadd.f32 %v6459, 0.5
    %v7146 = vadd.f32 %v6460, 0.5
    %v7147 = vadd.f32 %v6461, 0.5
    %v7148 = vadd.f32 %v6462, 0.5
    %v7149 = vadd.f32 %v6463, 0.5
    %v7150 = vadd.f32 %v6464, 0.5
    %v7151 = vadd.f32 %v6465, 0.5
    %v7152 = vadd.f32 %v6466, 0.5
    %v7153 = vadd.f32 %v6467, 0.5
    %v7154 = vadd.f32 %v6468, 0.5
    %v7155 = vadd.f32 %v6469, 0.5
    %v7156 = vadd.f32 %v6470, 0.5
    %v7157 = vadd.f32 %v6471, 0.5
    %v7158 = vadd.f32 %v6472, 0.5
    %v7159 = vadd.f32 %v6473, 0.5
    %v7160 = vadd.f32 %v6474, 0.5
    %v7161 = vadd.f32 %v6475, 0.5
    %v7162 = vadd.f32 %v6476, 0.5
    %v7163 = vadd.f32 %v6477, 0.5
    %v7164 = vadd.f32 %v6478, 0.5
    %v7165 = vadd.f32 %v6479, 0.5
    %v7166 = vadd.f32 %v6480, 0.5
    %v7167 = vadd.f32 %v6481, 0.5
    %v7168 = vadd.f32 %v6482, 0.5
    %v7169 = vadd.f32 %v6483, 0.5
    %v7170 = vadd.f32 %v6484, 0.5
    %v7171 = vadd.f32 %v6485, 0.5
    %v7172 = vadd.f32 %v6486, 0.5
    %v7173 = vadd.f32 %v6487, 0.5
    %v7174 = vadd.f32 %v6488, 0.5
    %v7175 = vadd.f32 %v6489, 0.5
    %v7176 = vadd.f32 %v6490, 0.5
    %v7177 = vadd.f32 %v6491, 0.5
    %v7178 = vadd.f32 %v6492, 0.5
    %v7179 = vadd.f32 %v6493, 0.5
    %v7180 = vadd.f32 %v6494, 0.5
    %v7181 = vadd.f32 %v6495, 0.5
    %v7182 = vadd.f32 %v6496, 0.5
    %v7183 = vadd.f32 %v6497, 0.5
    %v7184 = vadd.f32 %v6498, 0.5
    %v7185 = vadd.f32 %v6499, 0.5
    %v7186 = vadd.f32 %v6500, 0.5
    %v7187 = vadd.f32 %v6501, 0.5
    %v7188 = vadd.f32 %v6502, 0.5
    %v7189 = vadd.f32 %v6503, 0.5
    %v7190 = vadd.f32 %v6504, 0.5
    %v7191 = vadd.f32 %v6505, 0.5
    %v7192 = vadd.f32 %v6506, 0.5
    %v7193 = vadd.f32 %v6507, 0.5
    %v7194 = vadd.f32 %v6508, 0.5
    %v7195 = vadd.f32 %v6509, 0.5
    %v7196 = vadd.f32 %v6510, 0.5
    %v7197 = vadd.f32 %v6511, 0.5
    %v7198 = vadd.f32 %v6512, 0.5
    %v7199 = vadd.f32 %v6513, 0.5
    %v7200 = vadd.f32 %v6514, 0.5
    %v7201 = vadd.f32 %v6515, 0.5
    %v7202 = vadd.f32 %v6516, 0.5
    %v7203 = vadd.f32 %v6517, 0.5
    %v7204 = vadd.f32 %v6518, 0.5
    %v7205 = vadd.f32 %v6519, 0.5
    %v7206 = vadd.f32 %v6520, 0.5
    %v7207 = vadd.f32 %v6521, 0.5
    %v7208 = vadd.f32 %v6522, 0.5
    %v7209 = vadd.f32 %v6523, 0.5
    %v7210 = vadd.f32 %v6524, 0.5
    %v7211 = vadd.f32 %v6525, 0.5
    %v7212 = vadd.f32 %v6526, 0.5
    %v7213 = vadd.f32 %v6527, 0.5
    %v7214 = vadd.f32 %v6528, 0.5
    %v7215 = vadd.f32 %v6529, 0.5
    %v7216 = vadd.f32 %v6530, 0.5
    %v7217 = vadd.f32 %v6531, 0.5
    %v7218 = vadd.f32 %v6532, 0.5
    %v7219 = vadd.f32 %v6533, 0.5
    %v7220 = vadd.f32 %v6534, 0.5
    %v7221 = vadd.f32 %v6535, 0.5
    %v7222 = vadd.f32 %v6536, 0.5
    %v7223 = vadd.f32 %v6537, 0.5
    %v7224 = vadd.f32 %v6538, 0.5
    %v7225 = vadd.f32 %v6539, 0.5
    %v7226 = vadd.f32 %v6540, 0.5
    %v7227 = vadd.f32 %v6541, 0.5
    %v7228 = vadd.f32 %v6542, 0.5
    %v7229 = vadd.f32 %v6543, 0.5
    %v7230 = vadd.f32 %v6544, 0.5
    %v7231 = vadd.f32 %v6545, 0.5
    %v7232 = vadd.f32 %v6546, 0.5
    %v7233 = vadd.f32 %v6547, 0.5
    %v7234 = vadd.f32 %v6548, 0.5
    %v7235 = vadd.f32 %v6549, 0.5
    %v7236 = vadd.f32 %v6550, 0.5
    %v7237 = vadd.f32 %v6551, 0.5
    %v7238 = vadd.f32 %v6552, 0.5
    %v7239 = vadd.f32 %v6553, 0.5
    %v7240 = vadd.f32 %v6554, 0.5
    %v7241 = vadd.f32 %v6555, 0.5
    %v7242 = vadd.f32 %v6556, 0.5
    %v7243 = vadd.f32 %v6557, 0.5
    %v7244 = vadd.f32 %v6558, 0.5
    %v7245 = vadd.f32 %v6559, 0.5
    %v7246 = vadd.f32 %v6560, 0.5
    %v7247 = vadd.f32 %v6561, 0.5
    %v7248 = vadd.f32 %v6562, 0.5
    %v7249 = vadd.f32 %v6563, 0.5
    %v7250 = vadd.f32 %v6564, 0.5
    %v7251 = vadd.f32 %v6565, 0.5
    %v7252 = vadd.f32 %v6566, 0.5
    %v7253 = vadd.f32 %v6567, 0.5
    %v7254 = vadd.f32 %v6568, 0.5
    %v7255 = vadd.f32 %v6569, 0.5
    %v7256 = vadd.f32 %v6570, 0.5
    %v7257 = vadd.f32 %v6571, 0.5
    %v7258 = vadd.f32 %v6572, 0.5
    %v7259 = vadd.f32 %v6573, 0.5
    %v7260 = vadd.f32 %v6574, 0.5
    %v7261 = vadd.f32 %v6575, 0.5
    %v7262 = vadd.f32 %v6576, 0.5
    %v7263 = vadd.f32 %v6577, 0.5
    %v7264 = vadd.f32 %v6578, 0.5
    %v7265 = vadd.f32 %v6579, 0.5
    %v7266 = vadd.f32 %v6580, 0.5
    %v7267 = vadd.f32 %v6581, 0.5
    %v7268 = vadd.f32 %v6582, 0.5
    %v7269 = vadd.f32 %v6583, 0.5
    %v7270 = vadd.f32 %v6584, 0.5
    %v7271 = vadd.f32 %v6585, 0.5
    %v7272 = vadd.f32 %v6586, 0.5
    %v7273 = vadd.f32 %v6587, 0.5
    %v7274 = vadd.f32 %v6588, 0.5
    %v7275 = vadd.f32 %v6589, 0.5
    %v7276 = vadd.f32 %v6590, 0.5
    %v7277 = vadd.f32 %v6591, 0.5
    %v7278 = vadd.f32 %v6592, 0.5
    %v7279 = vadd.f32 %v6593, 0.5
    %v7280 = vadd.f32 %v6594, 0.5
    %v7281 = vadd.f32 %v6595, 0.5
    %v7282 = vadd.f32 %v6596, 0.5
    %v7283 = vadd.f32 %v6597, 0.5
    %v7284 = vadd.f32 %v6598, 0.5
    %v7285 = vadd.f32 %v6599, 0.5
    %v7286 = vadd.f32 %v6600, 0.5
    %v7287 = vadd.f32 %v6601, 0.5
    %v7288 = vadd.f32 %v6602, 0.5
    %v7289 = vadd.f32 %v6603, 0.5
    %v7290 = vadd.f32 %v6604, 0.5
    %v7291 = vadd.f32 %v6605, 0.5
    %v7292 = vadd.f32 %v6606, 0.5
    %v7293 = vadd.f32 %v6607, 0.5
    %v7294 = vadd.f32 %v6608, 0.5
    %v7295 = vadd.f32 %v6609, 0.5
    %v7296 = vadd.f32 %v6610, 0.5
    %v7297 = vadd.f32 %v6611, 0.5
    %v7298 = vadd.f32 %v6612, 0.5
    %v7299 = vadd.f32 %v6613, 0.5
    %v7300 = vadd.f32 %v6614, 0.5
    %v7301 = vadd.f32 %v6615, 0.5
    %v7302 = vadd.f32 %v6616, 0.5
    %v7303 = vadd.f32 %v6617, 0.5
    %v7304 = vadd.f32 %v6618, 0.5
    %v7305 = vadd.f32 %v6619, 0.5
    %v7306 = vadd.f32 %v6620, 0.5
    %v7307 = vadd.f32 %v6621, 0.5
    %v7308 = vadd.f32 %v6622, 0.5
    %v7309 = vadd.f32 %v6623, 0.5
    %v7310 = vadd.f32 %v6624, 0.5
    %v7311 = vadd.f32 %v6625, 0.5
    %v7312 = vadd.f32 %v6626, 0.5
    %v7313 = vadd.f32 %v6627, 0.5
    %v7314 = vadd.f32 %v6628, 0.5
    %v7315 = vadd.f32 %v6629, 0.5
    %v7316 = vadd.f32 %v6630, 0.5
    %7317 = vst [vmem:[#allocation5] sm:$0xff] %v6631
    %7318 = vst [vmem:[#allocation5 + $0x8] sm:$0xff] %v6632
    %7319 = vst [vmem:[#allocation5 + $0x10] sm:$0xff] %v6633
    %7320 = vst [vmem:[#allocation5 + $0x18] sm:$0xff] %v6634
    %7321 = vst [vmem:[#allocation5 + $0x20] sm:$0xff] %v6635
    %7322 = vst [vmem:[#allocation5 + $0x28] sm:$0xff] %v6636
    %vm7323 = vcmask 130048
    %7324 = vst.msk [vmem:[#allocation5 + $0x30] sm:$0xff] %vm7323, %v6637
    %7325 = vst [vmem:[#allocation5 + $0x38] sm:$0xff] %v6638
    %7326 = vst [vmem:[#allocation5 + $0x40] sm:$0xff] %v6639
    %7327 = vst [vmem:[#allocation5 + $0x48] sm:$0xff] %v6640
    %7328 = vst [vmem:[#allocation5 + $0x50] sm:$0xff] %v6641
    %7329 = vst [vmem:[#allocation5 + $0x58] sm:$0xff] %v6642
    %7330 = vst [vmem:[#allocation5 + $0x60] sm:$0xff] %v6643
    %7331 = vst.msk [vmem:[#allocation5 + $0x68] sm:$0xff] %vm7323, %v6644
    %7332 = vst [vmem:[#allocation5 + $0x70] sm:$0xff] %v6645
    %7333 = vst [vmem:[#allocation5 + $0x78] sm:$0xff] %v6646
    %7334 = vst [vmem:[#allocation5 + $0x80] sm:$0xff] %v6647
    %7335 = vst [vmem:[#allocation5 + $0x88] sm:$0xff] %v6648
    %7336 = vst [vmem:[#allocation5 + $0x90] sm:$0xff] %v6649
    %7337 = vst [vmem:[#allocation5 + $0x98] sm:$0xff] %v6650
    %7338 = vst.msk [vmem:[#allocation5 + $0xa0] sm:$0xff] %vm7323, %v6651
    %7339 = vst [vmem:[#allocation5 + $0xa8] sm:$0xff] %v6652
    %7340 = vst [vmem:[#allocation5 + $0xb0] sm:$0xff] %v6653
    %7341 = vst [vmem:[#allocation5 + $0xb8] sm:$0xff] %v6654
    %7342 = vst [vmem:[#allocation5 + $0xc0] sm:$0xff] %v6655
    %7343 = vst [vmem:[#allocation5 + $0xc8] sm:$0xff] %v6656
    %7344 = vst [vmem:[#allocation5 + $0xd0] sm:$0xff] %v6657
    %7345 = vst.msk [vmem:[#allocation5 + $0xd8] sm:$0xff] %vm7323, %v6658
    %7346 = vst [vmem:[#allocation5 + $0xe0] sm:$0xff] %v6659
    %7347 = vst [vmem:[#allocation5 + $0xe8] sm:$0xff] %v6660
    %7348 = vst [vmem:[#allocation5 + $0xf0] sm:$0xff] %v6661
    %7349 = vst [vmem:[#allocation5 + $0xf8] sm:$0xff] %v6662
    %7350 = vst [vmem:[#allocation5 + $0x100] sm:$0xff] %v6663
    %7351 = vst [vmem:[#allocation5 + $0x108] sm:$0xff] %v6664
    %7352 = vst.msk [vmem:[#allocation5 + $0x110] sm:$0xff] %vm7323, %v6665
    %7353 = vst [vmem:[#allocation5 + $0x118] sm:$0xff] %v6666
    %7354 = vst [vmem:[#allocation5 + $0x120] sm:$0xff] %v6667
    %7355 = vst [vmem:[#allocation5 + $0x128] sm:$0xff] %v6668
    %7356 = vst [vmem:[#allocation5 + $0x130] sm:$0xff] %v6669
    %7357 = vst [vmem:[#allocation5 + $0x138] sm:$0xff] %v6670
    %7358 = vst [vmem:[#allocation5 + $0x140] sm:$0xff] %v6671
    %7359 = vst.msk [vmem:[#allocation5 + $0x148] sm:$0xff] %vm7323, %v6672
    %7360 = vst [vmem:[#allocation5 + $0x150] sm:$0xff] %v6673
    %7361 = vst [vmem:[#allocation5 + $0x158] sm:$0xff] %v6674
    %7362 = vst [vmem:[#allocation5 + $0x160] sm:$0xff] %v6675
    %7363 = vst [vmem:[#allocation5 + $0x168] sm:$0xff] %v6676
    %7364 = vst [vmem:[#allocation5 + $0x170] sm:$0xff] %v6677
    %7365 = vst [vmem:[#allocation5 + $0x178] sm:$0xff] %v6678
    %7366 = vst.msk [vmem:[#allocation5 + $0x180] sm:$0xff] %vm7323, %v6679
    %7367 = vst [vmem:[#allocation5 + $0x188] sm:$0xff] %v6680
    %7368 = vst [vmem:[#allocation5 + $0x190] sm:$0xff] %v6681
    %7369 = vst [vmem:[#allocation5 + $0x198] sm:$0xff] %v6682
    %7370 = vst [vmem:[#allocation5 + $0x1a0] sm:$0xff] %v6683
    %7371 = vst [vmem:[#allocation5 + $0x1a8] sm:$0xff] %v6684
    %7372 = vst [vmem:[#allocation5 + $0x1b0] sm:$0xff] %v6685
    %7373 = vst.msk [vmem:[#allocation5 + $0x1b8] sm:$0xff] %vm7323, %v6686
    %7374 = vst [vmem:[#allocation5 + $0x1c0] sm:$0xff] %v6687
    %7375 = vst [vmem:[#allocation5 + $0x1c8] sm:$0xff] %v6688
    %7376 = vst [vmem:[#allocation5 + $0x1d0] sm:$0xff] %v6689
    %7377 = vst [vmem:[#allocation5 + $0x1d8] sm:$0xff] %v6690
    %7378 = vst [vmem:[#allocation5 + $0x1e0] sm:$0xff] %v6691
    %7379 = vst [vmem:[#allocation5 + $0x1e8] sm:$0xff] %v6692
    %7380 = vst.msk [vmem:[#allocation5 + $0x1f0] sm:$0xff] %vm7323, %v6693
    %7381 = vst [vmem:[#allocation5 + $0x1f8] sm:$0xff] %v6694
    %7382 = vst [vmem:[#allocation5 + $0x200] sm:$0xff] %v6695
    %7383 = vst [vmem:[#allocation5 + $0x208] sm:$0xff] %v6696
    %7384 = vst [vmem:[#allocation5 + $0x210] sm:$0xff] %v6697
    %7385 = vst [vmem:[#allocation5 + $0x218] sm:$0xff] %v6698
    %7386 = vst [vmem:[#allocation5 + $0x220] sm:$0xff] %v6699
    %7387 = vst.msk [vmem:[#allocation5 + $0x228] sm:$0xff] %vm7323, %v6700
    %7388 = vst [vmem:[#allocation5 + $0x230] sm:$0xff] %v6701
    %7389 = vst [vmem:[#allocation5 + $0x238] sm:$0xff] %v6702
    %7390 = vst [vmem:[#allocation5 + $0x240] sm:$0xff] %v6703
    %7391 = vst [vmem:[#allocation5 + $0x248] sm:$0xff] %v6704
    %7392 = vst [vmem:[#allocation5 + $0x250] sm:$0xff] %v6705
    %7393 = vst [vmem:[#allocation5 + $0x258] sm:$0xff] %v6706
    %7394 = vst.msk [vmem:[#allocation5 + $0x260] sm:$0xff] %vm7323, %v6707
    %7395 = vst [vmem:[#allocation5 + $0x268] sm:$0xff] %v6708
    %7396 = vst [vmem:[#allocation5 + $0x270] sm:$0xff] %v6709
    %7397 = vst [vmem:[#allocation5 + $0x278] sm:$0xff] %v6710
    %7398 = vst [vmem:[#allocation5 + $0x280] sm:$0xff] %v6711
    %7399 = vst [vmem:[#allocation5 + $0x288] sm:$0xff] %v6712
    %7400 = vst [vmem:[#allocation5 + $0x290] sm:$0xff] %v6713
    %7401 = vst.msk [vmem:[#allocation5 + $0x298] sm:$0xff] %vm7323, %v6714
    %7402 = vst [vmem:[#allocation5 + $0x2a0] sm:$0xff] %v6715
    %7403 = vst [vmem:[#allocation5 + $0x2a8] sm:$0xff] %v6716
    %7404 = vst [vmem:[#allocation5 + $0x2b0] sm:$0xff] %v6717
    %7405 = vst [vmem:[#allocation5 + $0x2b8] sm:$0xff] %v6718
    %7406 = vst [vmem:[#allocation5 + $0x2c0] sm:$0xff] %v6719
    %7407 = vst [vmem:[#allocation5 + $0x2c8] sm:$0xff] %v6720
    %7408 = vst.msk [vmem:[#allocation5 + $0x2d0] sm:$0xff] %vm7323, %v6721
    %7409 = vst [vmem:[#allocation5 + $0x2d8] sm:$0xff] %v6722
    %7410 = vst [vmem:[#allocation5 + $0x2e0] sm:$0xff] %v6723
    %7411 = vst [vmem:[#allocation5 + $0x2e8] sm:$0xff] %v6724
    %7412 = vst [vmem:[#allocation5 + $0x2f0] sm:$0xff] %v6725
    %7413 = vst [vmem:[#allocation5 + $0x2f8] sm:$0xff] %v6726
    %7414 = vst [vmem:[#allocation5 + $0x300] sm:$0xff] %v6727
    %7415 = vst.msk [vmem:[#allocation5 + $0x308] sm:$0xff] %vm7323, %v6728
    %7416 = vst [vmem:[#allocation5 + $0x310] sm:$0xff] %v6729
    %7417 = vst [vmem:[#allocation5 + $0x318] sm:$0xff] %v6730
    %7418 = vst [vmem:[#allocation5 + $0x320] sm:$0xff] %v6731
    %7419 = vst [vmem:[#allocation5 + $0x328] sm:$0xff] %v6732
    %7420 = vst [vmem:[#allocation5 + $0x330] sm:$0xff] %v6733
    %7421 = vst [vmem:[#allocation5 + $0x338] sm:$0xff] %v6734
    %7422 = vst.msk [vmem:[#allocation5 + $0x340] sm:$0xff] %vm7323, %v6735
    %7423 = vst [vmem:[#allocation5 + $0x348] sm:$0xff] %v6736
    %7424 = vst [vmem:[#allocation5 + $0x350] sm:$0xff] %v6737
    %7425 = vst [vmem:[#allocation5 + $0x358] sm:$0xff] %v6738
    %7426 = vst [vmem:[#allocation5 + $0x360] sm:$0xff] %v6739
    %7427 = vst [vmem:[#allocation5 + $0x368] sm:$0xff] %v6740
    %7428 = vst [vmem:[#allocation5 + $0x370] sm:$0xff] %v6741
    %7429 = vst.msk [vmem:[#allocation5 + $0x378] sm:$0xff] %vm7323, %v6742
    %7430 = vst [vmem:[#allocation5 + $0x380] sm:$0xff] %v6743
    %7431 = vst [vmem:[#allocation5 + $0x388] sm:$0xff] %v6744
    %7432 = vst [vmem:[#allocation5 + $0x390] sm:$0xff] %v6745
    %7433 = vst [vmem:[#allocation5 + $0x398] sm:$0xff] %v6746
    %7434 = vst [vmem:[#allocation5 + $0x3a0] sm:$0xff] %v6747
    %7435 = vst [vmem:[#allocation5 + $0x3a8] sm:$0xff] %v6748
    %7436 = vst.msk [vmem:[#allocation5 + $0x3b0] sm:$0xff] %vm7323, %v6749
    %7437 = vst [vmem:[#allocation5 + $0x3b8] sm:$0xff] %v6750
    %7438 = vst [vmem:[#allocation5 + $0x3c0] sm:$0xff] %v6751
    %7439 = vst [vmem:[#allocation5 + $0x3c8] sm:$0xff] %v6752
    %7440 = vst [vmem:[#allocation5 + $0x3d0] sm:$0xff] %v6753
    %7441 = vst [vmem:[#allocation5 + $0x3d8] sm:$0xff] %v6754
    %7442 = vst [vmem:[#allocation5 + $0x3e0] sm:$0xff] %v6755
    %7443 = vst.msk [vmem:[#allocation5 + $0x3e8] sm:$0xff] %vm7323, %v6756
    %7444 = vst [vmem:[#allocation5 + $0x3f0] sm:$0xff] %v6757
    %7445 = vst [vmem:[#allocation5 + $0x3f8] sm:$0xff] %v6758
    %7446 = vst [vmem:[#allocation5 + $0x400] sm:$0xff] %v6759
    %7447 = vst [vmem:[#allocation5 + $0x408] sm:$0xff] %v6760
    %7448 = vst [vmem:[#allocation5 + $0x410] sm:$0xff] %v6761
    %7449 = vst [vmem:[#allocation5 + $0x418] sm:$0xff] %v6762
    %7450 = vst.msk [vmem:[#allocation5 + $0x420] sm:$0xff] %vm7323, %v6763
    %7451 = vst [vmem:[#allocation5 + $0x428] sm:$0xff] %v6764
    %7452 = vst [vmem:[#allocation5 + $0x430] sm:$0xff] %v6765
    %7453 = vst [vmem:[#allocation5 + $0x438] sm:$0xff] %v6766
    %7454 = vst [vmem:[#allocation5 + $0x440] sm:$0xff] %v6767
    %7455 = vst [vmem:[#allocation5 + $0x448] sm:$0xff] %v6768
    %7456 = vst [vmem:[#allocation5 + $0x450] sm:$0xff] %v6769
    %7457 = vst.msk [vmem:[#allocation5 + $0x458] sm:$0xff] %vm7323, %v6770
    %7458 = vst [vmem:[#allocation5 + $0x460] sm:$0xff] %v6771
    %7459 = vst [vmem:[#allocation5 + $0x468] sm:$0xff] %v6772
    %7460 = vst [vmem:[#allocation5 + $0x470] sm:$0xff] %v6773
    %7461 = vst [vmem:[#allocation5 + $0x478] sm:$0xff] %v6774
    %7462 = vst [vmem:[#allocation5 + $0x480] sm:$0xff] %v6775
    %7463 = vst [vmem:[#allocation5 + $0x488] sm:$0xff] %v6776
    %7464 = vst.msk [vmem:[#allocation5 + $0x490] sm:$0xff] %vm7323, %v6777
    %7465 = vst [vmem:[#allocation5 + $0x498] sm:$0xff] %v6778
    %7466 = vst [vmem:[#allocation5 + $0x4a0] sm:$0xff] %v6779
    %7467 = vst [vmem:[#allocation5 + $0x4a8] sm:$0xff] %v6780
    %7468 = vst [vmem:[#allocation5 + $0x4b0] sm:$0xff] %v6781
    %7469 = vst [vmem:[#allocation5 + $0x4b8] sm:$0xff] %v6782
    %7470 = vst [vmem:[#allocation5 + $0x4c0] sm:$0xff] %v6783
    %7471 = vst.msk [vmem:[#allocation5 + $0x4c8] sm:$0xff] %vm7323, %v6784
    %7472 = vst [vmem:[#allocation5 + $0x4d0] sm:$0xff] %v6785
    %7473 = vst [vmem:[#allocation5 + $0x4d8] sm:$0xff] %v6786
    %7474 = vst [vmem:[#allocation5 + $0x4e0] sm:$0xff] %v6787
    %7475 = vst [vmem:[#allocation5 + $0x4e8] sm:$0xff] %v6788
    %7476 = vst [vmem:[#allocation5 + $0x4f0] sm:$0xff] %v6789
    %7477 = vst [vmem:[#allocation5 + $0x4f8] sm:$0xff] %v6790
    %7478 = vst.msk [vmem:[#allocation5 + $0x500] sm:$0xff] %vm7323, %v6791
    %7479 = vst [vmem:[#allocation5 + $0x508] sm:$0xff] %v6792
    %7480 = vst [vmem:[#allocation5 + $0x510] sm:$0xff] %v6793
    %7481 = vst [vmem:[#allocation5 + $0x518] sm:$0xff] %v6794
    %7482 = vst [vmem:[#allocation5 + $0x520] sm:$0xff] %v6795
    %7483 = vst [vmem:[#allocation5 + $0x528] sm:$0xff] %v6796
    %7484 = vst [vmem:[#allocation5 + $0x530] sm:$0xff] %v6797
    %7485 = vst.msk [vmem:[#allocation5 + $0x538] sm:$0xff] %vm7323, %v6798
    %7486 = vst [vmem:[#allocation5 + $0x540] sm:$0xff] %v6799
    %7487 = vst [vmem:[#allocation5 + $0x548] sm:$0xff] %v6800
    %7488 = vst [vmem:[#allocation5 + $0x550] sm:$0xff] %v6801
    %7489 = vst [vmem:[#allocation5 + $0x558] sm:$0xff] %v6802
    %7490 = vst [vmem:[#allocation5 + $0x560] sm:$0xff] %v6803
    %7491 = vst [vmem:[#allocation5 + $0x568] sm:$0xff] %v6804
    %7492 = vst.msk [vmem:[#allocation5 + $0x570] sm:$0xff] %vm7323, %v6805
    %7493 = vst [vmem:[#allocation5 + $0x578] sm:$0xff] %v6806
    %7494 = vst [vmem:[#allocation5 + $0x580] sm:$0xff] %v6807
    %7495 = vst [vmem:[#allocation5 + $0x588] sm:$0xff] %v6808
    %7496 = vst [vmem:[#allocation5 + $0x590] sm:$0xff] %v6809
    %7497 = vst [vmem:[#allocation5 + $0x598] sm:$0xff] %v6810
    %7498 = vst [vmem:[#allocation5 + $0x5a0] sm:$0xff] %v6811
    %7499 = vst.msk [vmem:[#allocation5 + $0x5a8] sm:$0xff] %vm7323, %v6812
    %7500 = vst [vmem:[#allocation5 + $0x5b0] sm:$0xff] %v6813
    %7501 = vst [vmem:[#allocation5 + $0x5b8] sm:$0xff] %v6814
    %7502 = vst [vmem:[#allocation5 + $0x5c0] sm:$0xff] %v6815
    %7503 = vst [vmem:[#allocation5 + $0x5c8] sm:$0xff] %v6816
    %7504 = vst [vmem:[#allocation5 + $0x5d0] sm:$0xff] %v6817
    %7505 = vst [vmem:[#allocation5 + $0x5d8] sm:$0xff] %v6818
    %7506 = vst.msk [vmem:[#allocation5 + $0x5e0] sm:$0xff] %vm7323, %v6819
    %7507 = vst [vmem:[#allocation5 + $0x5e8] sm:$0xff] %v6820
    %7508 = vst [vmem:[#allocation5 + $0x5f0] sm:$0xff] %v6821
    %7509 = vst [vmem:[#allocation5 + $0x5f8] sm:$0xff] %v6822
    %7510 = vst [vmem:[#allocation5 + $0x600] sm:$0xff] %v6823
    %7511 = vst [vmem:[#allocation5 + $0x608] sm:$0xff] %v6824
    %7512 = vst [vmem:[#allocation5 + $0x610] sm:$0xff] %v6825
    %7513 = vst.msk [vmem:[#allocation5 + $0x618] sm:$0xff] %vm7323, %v6826
    %7514 = vst [vmem:[#allocation5 + $0x620] sm:$0xff] %v6827
    %7515 = vst [vmem:[#allocation5 + $0x628] sm:$0xff] %v6828
    %7516 = vst [vmem:[#allocation5 + $0x630] sm:$0xff] %v6829
    %7517 = vst [vmem:[#allocation5 + $0x638] sm:$0xff] %v6830
    %7518 = vst [vmem:[#allocation5 + $0x640] sm:$0xff] %v6831
    %7519 = vst [vmem:[#allocation5 + $0x648] sm:$0xff] %v6832
    %7520 = vst.msk [vmem:[#allocation5 + $0x650] sm:$0xff] %vm7323, %v6833
    %7521 = vst [vmem:[#allocation5 + $0x658] sm:$0xff] %v6834
    %7522 = vst [vmem:[#allocation5 + $0x660] sm:$0xff] %v6835
    %7523 = vst [vmem:[#allocation5 + $0x668] sm:$0xff] %v6836
    %7524 = vst [vmem:[#allocation5 + $0x670] sm:$0xff] %v6837
    %7525 = vst [vmem:[#allocation5 + $0x678] sm:$0xff] %v6838
    %7526 = vst [vmem:[#allocation5 + $0x680] sm:$0xff] %v6839
    %7527 = vst.msk [vmem:[#allocation5 + $0x688] sm:$0xff] %vm7323, %v6840
    %7528 = vst [vmem:[#allocation5 + $0x690] sm:$0xff] %v6841
    %7529 = vst [vmem:[#allocation5 + $0x698] sm:$0xff] %v6842
    %7530 = vst [vmem:[#allocation5 + $0x6a0] sm:$0xff] %v6843
    %7531 = vst [vmem:[#allocation5 + $0x6a8] sm:$0xff] %v6844
    %7532 = vst [vmem:[#allocation5 + $0x6b0] sm:$0xff] %v6845
    %7533 = vst [vmem:[#allocation5 + $0x6b8] sm:$0xff] %v6846
    %7534 = vst.msk [vmem:[#allocation5 + $0x6c0] sm:$0xff] %vm7323, %v6847
    %7535 = vst [vmem:[#allocation5 + $0x6c8] sm:$0xff] %v6848
    %7536 = vst [vmem:[#allocation5 + $0x6d0] sm:$0xff] %v6849
    %7537 = vst [vmem:[#allocation5 + $0x6d8] sm:$0xff] %v6850
    %7538 = vst [vmem:[#allocation5 + $0x6e0] sm:$0xff] %v6851
    %7539 = vst [vmem:[#allocation5 + $0x6e8] sm:$0xff] %v6852
    %7540 = vst [vmem:[#allocation5 + $0x6f0] sm:$0xff] %v6853
    %7541 = vst.msk [vmem:[#allocation5 + $0x6f8] sm:$0xff] %vm7323, %v6854
    %7542 = vst [vmem:[#allocation5 + $0x700] sm:$0xff] %v6855
    %7543 = vst [vmem:[#allocation5 + $0x708] sm:$0xff] %v6856
    %7544 = vst [vmem:[#allocation5 + $0x710] sm:$0xff] %v6857
    %7545 = vst [vmem:[#allocation5 + $0x718] sm:$0xff] %v6858
    %7546 = vst [vmem:[#allocation5 + $0x720] sm:$0xff] %v6859
    %7547 = vst [vmem:[#allocation5 + $0x728] sm:$0xff] %v6860
    %7548 = vst.msk [vmem:[#allocation5 + $0x730] sm:$0xff] %vm7323, %v6861
    %7549 = vst [vmem:[#allocation5 + $0x738] sm:$0xff] %v6862
    %7550 = vst [vmem:[#allocation5 + $0x740] sm:$0xff] %v6863
    %7551 = vst [vmem:[#allocation5 + $0x748] sm:$0xff] %v6864
    %7552 = vst [vmem:[#allocation5 + $0x750] sm:$0xff] %v6865
    %7553 = vst [vmem:[#allocation5 + $0x758] sm:$0xff] %v6866
    %7554 = vst [vmem:[#allocation5 + $0x760] sm:$0xff] %v6867
    %7555 = vst.msk [vmem:[#allocation5 + $0x768] sm:$0xff] %vm7323, %v6868
    %7556 = vst [vmem:[#allocation5 + $0x770] sm:$0xff] %v6869
    %7557 = vst [vmem:[#allocation5 + $0x778] sm:$0xff] %v6870
    %7558 = vst [vmem:[#allocation5 + $0x780] sm:$0xff] %v6871
    %7559 = vst [vmem:[#allocation5 + $0x788] sm:$0xff] %v6872
    %7560 = vst [vmem:[#allocation5 + $0x790] sm:$0xff] %v6873
    %7561 = vst [vmem:[#allocation5 + $0x798] sm:$0xff] %v6874
    %7562 = vst.msk [vmem:[#allocation5 + $0x7a0] sm:$0xff] %vm7323, %v6875
    %7563 = vst [vmem:[#allocation5 + $0x7a8] sm:$0xff] %v6876
    %7564 = vst [vmem:[#allocation5 + $0x7b0] sm:$0xff] %v6877
    %7565 = vst [vmem:[#allocation5 + $0x7b8] sm:$0xff] %v6878
    %7566 = vst [vmem:[#allocation5 + $0x7c0] sm:$0xff] %v6879
    %7567 = vst [vmem:[#allocation5 + $0x7c8] sm:$0xff] %v6880
    %7568 = vst [vmem:[#allocation5 + $0x7d0] sm:$0xff] %v6881
    %7569 = vst.msk [vmem:[#allocation5 + $0x7d8] sm:$0xff] %vm7323, %v6882
    %7570 = vst [vmem:[#allocation5 + $0x7e0] sm:$0xff] %v6883
    %7571 = vst [vmem:[#allocation5 + $0x7e8] sm:$0xff] %v6884
    %7572 = vst [vmem:[#allocation5 + $0x7f0] sm:$0xff] %v6885
    %7573 = vst [vmem:[#allocation5 + $0x7f8] sm:$0xff] %v6886
    %7574 = vst [vmem:[#allocation5 + $0x800] sm:$0xff] %v6887
    %7575 = vst [vmem:[#allocation5 + $0x808] sm:$0xff] %v6888
    %7576 = vst.msk [vmem:[#allocation5 + $0x810] sm:$0xff] %vm7323, %v6889
    %7577 = vst [vmem:[#allocation5 + $0x818] sm:$0xff] %v6890
    %7578 = vst [vmem:[#allocation5 + $0x820] sm:$0xff] %v6891
    %7579 = vst [vmem:[#allocation5 + $0x828] sm:$0xff] %v6892
    %7580 = vst [vmem:[#allocation5 + $0x830] sm:$0xff] %v6893
    %7581 = vst [vmem:[#allocation5 + $0x838] sm:$0xff] %v6894
    %7582 = vst [vmem:[#allocation5 + $0x840] sm:$0xff] %v6895
    %7583 = vst.msk [vmem:[#allocation5 + $0x848] sm:$0xff] %vm7323, %v6896
    %7584 = vst [vmem:[#allocation5 + $0x850] sm:$0xff] %v6897
    %7585 = vst [vmem:[#allocation5 + $0x858] sm:$0xff] %v6898
    %7586 = vst [vmem:[#allocation5 + $0x860] sm:$0xff] %v6899
    %7587 = vst [vmem:[#allocation5 + $0x868] sm:$0xff] %v6900
    %7588 = vst [vmem:[#allocation5 + $0x870] sm:$0xff] %v6901
    %7589 = vst [vmem:[#allocation5 + $0x878] sm:$0xff] %v6902
    %7590 = vst.msk [vmem:[#allocation5 + $0x880] sm:$0xff] %vm7323, %v6903
    %7591 = vst [vmem:[#allocation5 + $0x888] sm:$0xff] %v6904
    %7592 = vst [vmem:[#allocation5 + $0x890] sm:$0xff] %v6905
    %7593 = vst [vmem:[#allocation5 + $0x898] sm:$0xff] %v6906
    %7594 = vst [vmem:[#allocation5 + $0x8a0] sm:$0xff] %v6907
    %7595 = vst [vmem:[#allocation5 + $0x8a8] sm:$0xff] %v6908
    %7596 = vst [vmem:[#allocation5 + $0x8b0] sm:$0xff] %v6909
    %7597 = vst.msk [vmem:[#allocation5 + $0x8b8] sm:$0xff] %vm7323, %v6910
    %7598 = vst [vmem:[#allocation5 + $0x8c0] sm:$0xff] %v6911
    %7599 = vst [vmem:[#allocation5 + $0x8c8] sm:$0xff] %v6912
    %7600 = vst [vmem:[#allocation5 + $0x8d0] sm:$0xff] %v6913
    %7601 = vst [vmem:[#allocation5 + $0x8d8] sm:$0xff] %v6914
    %7602 = vst [vmem:[#allocation5 + $0x8e0] sm:$0xff] %v6915
    %7603 = vst [vmem:[#allocation5 + $0x8e8] sm:$0xff] %v6916
    %7604 = vst.msk [vmem:[#allocation5 + $0x8f0] sm:$0xff] %vm7323, %v6917
    %7605 = vst [vmem:[#allocation5 + $0x8f8] sm:$0xff] %v6918
    %7606 = vst [vmem:[#allocation5 + $0x900] sm:$0xff] %v6919
    %7607 = vst [vmem:[#allocation5 + $0x908] sm:$0xff] %v6920
    %7608 = vst [vmem:[#allocation5 + $0x910] sm:$0xff] %v6921
    %7609 = vst [vmem:[#allocation5 + $0x918] sm:$0xff] %v6922
    %7610 = vst [vmem:[#allocation5 + $0x920] sm:$0xff] %v6923
    %7611 = vst.msk [vmem:[#allocation5 + $0x928] sm:$0xff] %vm7323, %v6924
    %7612 = vst [vmem:[#allocation5 + $0x930] sm:$0xff] %v6925
    %7613 = vst [vmem:[#allocation5 + $0x938] sm:$0xff] %v6926
    %7614 = vst [vmem:[#allocation5 + $0x940] sm:$0xff] %v6927
    %7615 = vst [vmem:[#allocation5 + $0x948] sm:$0xff] %v6928
    %7616 = vst [vmem:[#allocation5 + $0x950] sm:$0xff] %v6929
    %7617 = vst [vmem:[#allocation5 + $0x958] sm:$0xff] %v6930
    %7618 = vst.msk [vmem:[#allocation5 + $0x960] sm:$0xff] %vm7323, %v6931
    %7619 = vst [vmem:[#allocation5 + $0x968] sm:$0xff] %v6932
    %7620 = vst [vmem:[#allocation5 + $0x970] sm:$0xff] %v6933
    %7621 = vst [vmem:[#allocation5 + $0x978] sm:$0xff] %v6934
    %7622 = vst [vmem:[#allocation5 + $0x980] sm:$0xff] %v6935
    %7623 = vst [vmem:[#allocation5 + $0x988] sm:$0xff] %v6936
    %7624 = vst [vmem:[#allocation5 + $0x990] sm:$0xff] %v6937
    %7625 = vst.msk [vmem:[#allocation5 + $0x998] sm:$0xff] %vm7323, %v6938
    %7626 = vst [vmem:[#allocation5 + $0x9a0] sm:$0xff] %v6939
    %7627 = vst [vmem:[#allocation5 + $0x9a8] sm:$0xff] %v6940
    %7628 = vst [vmem:[#allocation5 + $0x9b0] sm:$0xff] %v6941
    %7629 = vst [vmem:[#allocation5 + $0x9b8] sm:$0xff] %v6942
    %7630 = vst [vmem:[#allocation5 + $0x9c0] sm:$0xff] %v6943
    %7631 = vst [vmem:[#allocation5 + $0x9c8] sm:$0xff] %v6944
    %7632 = vst.msk [vmem:[#allocation5 + $0x9d0] sm:$0xff] %vm7323, %v6945
    %7633 = vst [vmem:[#allocation5 + $0x9d8] sm:$0xff] %v6946
    %7634 = vst [vmem:[#allocation5 + $0x9e0] sm:$0xff] %v6947
    %7635 = vst [vmem:[#allocation5 + $0x9e8] sm:$0xff] %v6948
    %7636 = vst [vmem:[#allocation5 + $0x9f0] sm:$0xff] %v6949
    %7637 = vst [vmem:[#allocation5 + $0x9f8] sm:$0xff] %v6950
    %7638 = vst [vmem:[#allocation5 + $0xa00] sm:$0xff] %v6951
    %7639 = vst.msk [vmem:[#allocation5 + $0xa08] sm:$0xff] %vm7323, %v6952
    %7640 = vst [vmem:[#allocation5 + $0xa10] sm:$0xff] %v6953
    %7641 = vst [vmem:[#allocation5 + $0xa18] sm:$0xff] %v6954
    %7642 = vst [vmem:[#allocation5 + $0xa20] sm:$0xff] %v6955
    %7643 = vst [vmem:[#allocation5 + $0xa28] sm:$0xff] %v6956
    %7644 = vst [vmem:[#allocation5 + $0xa30] sm:$0xff] %v6957
    %7645 = vst [vmem:[#allocation5 + $0xa38] sm:$0xff] %v6958
    %7646 = vst.msk [vmem:[#allocation5 + $0xa40] sm:$0xff] %vm7323, %v6959
    %7647 = vst [vmem:[#allocation5 + $0xa48] sm:$0xff] %v6960
    %7648 = vst [vmem:[#allocation5 + $0xa50] sm:$0xff] %v6961
    %7649 = vst [vmem:[#allocation5 + $0xa58] sm:$0xff] %v6962
    %7650 = vst [vmem:[#allocation5 + $0xa60] sm:$0xff] %v6963
    %7651 = vst [vmem:[#allocation5 + $0xa68] sm:$0xff] %v6964
    %7652 = vst [vmem:[#allocation5 + $0xa70] sm:$0xff] %v6965
    %7653 = vst.msk [vmem:[#allocation5 + $0xa78] sm:$0xff] %vm7323, %v6966
    %7654 = vst [vmem:[#allocation5 + $0xa80] sm:$0xff] %v6967
    %7655 = vst [vmem:[#allocation5 + $0xa88] sm:$0xff] %v6968
    %7656 = vst [vmem:[#allocation5 + $0xa90] sm:$0xff] %v6969
    %7657 = vst [vmem:[#allocation5 + $0xa98] sm:$0xff] %v6970
    %7658 = vst [vmem:[#allocation5 + $0xaa0] sm:$0xff] %v6971
    %7659 = vst [vmem:[#allocation5 + $0xaa8] sm:$0xff] %v6972
    %7660 = vst.msk [vmem:[#allocation5 + $0xab0] sm:$0xff] %vm7323, %v6973
    %7661 = vst [vmem:[#allocation5 + $0xab8] sm:$0xff] %v6974
    %7662 = vst [vmem:[#allocation5 + $0xac0] sm:$0xff] %v6975
    %7663 = vst [vmem:[#allocation5 + $0xac8] sm:$0xff] %v6976
    %7664 = vst [vmem:[#allocation5 + $0xad0] sm:$0xff] %v6977
    %7665 = vst [vmem:[#allocation5 + $0xad8] sm:$0xff] %v6978
    %7666 = vst [vmem:[#allocation5 + $0xae0] sm:$0xff] %v6979
    %7667 = vst.msk [vmem:[#allocation5 + $0xae8] sm:$0xff] %vm7323, %v6980
    %7668 = vst [vmem:[#allocation5 + $0xaf0] sm:$0xff] %v6981
    %7669 = vst [vmem:[#allocation5 + $0xaf8] sm:$0xff] %v6982
    %7670 = vst [vmem:[#allocation5 + $0xb00] sm:$0xff] %v6983
    %7671 = vst [vmem:[#allocation5 + $0xb08] sm:$0xff] %v6984
    %7672 = vst [vmem:[#allocation5 + $0xb10] sm:$0xff] %v6985
    %7673 = vst [vmem:[#allocation5 + $0xb18] sm:$0xff] %v6986
    %7674 = vst.msk [vmem:[#allocation5 + $0xb20] sm:$0xff] %vm7323, %v6987
    %7675 = vst [vmem:[#allocation5 + $0xb28] sm:$0xff] %v6988
    %7676 = vst [vmem:[#allocation5 + $0xb30] sm:$0xff] %v6989
    %7677 = vst [vmem:[#allocation5 + $0xb38] sm:$0xff] %v6990
    %7678 = vst [vmem:[#allocation5 + $0xb40] sm:$0xff] %v6991
    %7679 = vst [vmem:[#allocation5 + $0xb48] sm:$0xff] %v6992
    %7680 = vst [vmem:[#allocation5 + $0xb50] sm:$0xff] %v6993
    %7681 = vst.msk [vmem:[#allocation5 + $0xb58] sm:$0xff] %vm7323, %v6994
    %7682 = vst [vmem:[#allocation5 + $0xb60] sm:$0xff] %v6995
    %7683 = vst [vmem:[#allocation5 + $0xb68] sm:$0xff] %v6996
    %7684 = vst [vmem:[#allocation5 + $0xb70] sm:$0xff] %v6997
    %7685 = vst [vmem:[#allocation5 + $0xb78] sm:$0xff] %v6998
    %7686 = vst [vmem:[#allocation5 + $0xb80] sm:$0xff] %v6999
    %7687 = vst [vmem:[#allocation5 + $0xb88] sm:$0xff] %v7000
    %7688 = vst.msk [vmem:[#allocation5 + $0xb90] sm:$0xff] %vm7323, %v7001
    %7689 = vst [vmem:[#allocation5 + $0xb98] sm:$0xff] %v7002
    %7690 = vst [vmem:[#allocation5 + $0xba0] sm:$0xff] %v7003
    %7691 = vst [vmem:[#allocation5 + $0xba8] sm:$0xff] %v7004
    %7692 = vst [vmem:[#allocation5 + $0xbb0] sm:$0xff] %v7005
    %7693 = vst [vmem:[#allocation5 + $0xbb8] sm:$0xff] %v7006
    %7694 = vst [vmem:[#allocation5 + $0xbc0] sm:$0xff] %v7007
    %7695 = vst.msk [vmem:[#allocation5 + $0xbc8] sm:$0xff] %vm7323, %v7008
    %7696 = vst [vmem:[#allocation5 + $0xbd0] sm:$0xff] %v7009
    %7697 = vst [vmem:[#allocation5 + $0xbd8] sm:$0xff] %v7010
    %7698 = vst [vmem:[#allocation5 + $0xbe0] sm:$0xff] %v7011
    %7699 = vst [vmem:[#allocation5 + $0xbe8] sm:$0xff] %v7012
    %7700 = vst [vmem:[#allocation5 + $0xbf0] sm:$0xff] %v7013
    %7701 = vst [vmem:[#allocation5 + $0xbf8] sm:$0xff] %v7014
    %7702 = vst.msk [vmem:[#allocation5 + $0xc00] sm:$0xff] %vm7323, %v7015
    %7703 = vst [vmem:[#allocation5 + $0xc08] sm:$0xff] %v7016
    %7704 = vst [vmem:[#allocation5 + $0xc10] sm:$0xff] %v7017
    %7705 = vst [vmem:[#allocation5 + $0xc18] sm:$0xff] %v7018
    %7706 = vst [vmem:[#allocation5 + $0xc20] sm:$0xff] %v7019
    %7707 = vst [vmem:[#allocation5 + $0xc28] sm:$0xff] %v7020
    %7708 = vst [vmem:[#allocation5 + $0xc30] sm:$0xff] %v7021
    %7709 = vst.msk [vmem:[#allocation5 + $0xc38] sm:$0xff] %vm7323, %v7022
    %7710 = vst [vmem:[#allocation5 + $0xc40] sm:$0xff] %v7023
    %7711 = vst [vmem:[#allocation5 + $0xc48] sm:$0xff] %v7024
    %7712 = vst [vmem:[#allocation5 + $0xc50] sm:$0xff] %v7025
    %7713 = vst [vmem:[#allocation5 + $0xc58] sm:$0xff] %v7026
    %7714 = vst [vmem:[#allocation5 + $0xc60] sm:$0xff] %v7027
    %7715 = vst [vmem:[#allocation5 + $0xc68] sm:$0xff] %v7028
    %7716 = vst.msk [vmem:[#allocation5 + $0xc70] sm:$0xff] %vm7323, %v7029
    %7717 = vst [vmem:[#allocation5 + $0xc78] sm:$0xff] %v7030
    %7718 = vst [vmem:[#allocation5 + $0xc80] sm:$0xff] %v7031
    %7719 = vst [vmem:[#allocation5 + $0xc88] sm:$0xff] %v7032
    %7720 = vst [vmem:[#allocation5 + $0xc90] sm:$0xff] %v7033
    %7721 = vst [vmem:[#allocation5 + $0xc98] sm:$0xff] %v7034
    %7722 = vst [vmem:[#allocation5 + $0xca0] sm:$0xff] %v7035
    %7723 = vst.msk [vmem:[#allocation5 + $0xca8] sm:$0xff] %vm7323, %v7036
    %7724 = vst [vmem:[#allocation5 + $0xcb0] sm:$0xff] %v7037
    %7725 = vst [vmem:[#allocation5 + $0xcb8] sm:$0xff] %v7038
    %7726 = vst [vmem:[#allocation5 + $0xcc0] sm:$0xff] %v7039
    %7727 = vst [vmem:[#allocation5 + $0xcc8] sm:$0xff] %v7040
    %7728 = vst [vmem:[#allocation5 + $0xcd0] sm:$0xff] %v7041
    %7729 = vst [vmem:[#allocation5 + $0xcd8] sm:$0xff] %v7042
    %7730 = vst.msk [vmem:[#allocation5 + $0xce0] sm:$0xff] %vm7323, %v7043
    %7731 = vst [vmem:[#allocation5 + $0xce8] sm:$0xff] %v7044
    %7732 = vst [vmem:[#allocation5 + $0xcf0] sm:$0xff] %v7045
    %7733 = vst [vmem:[#allocation5 + $0xcf8] sm:$0xff] %v7046
    %7734 = vst [vmem:[#allocation5 + $0xd00] sm:$0xff] %v7047
    %7735 = vst [vmem:[#allocation5 + $0xd08] sm:$0xff] %v7048
    %7736 = vst [vmem:[#allocation5 + $0xd10] sm:$0xff] %v7049
    %7737 = vst.msk [vmem:[#allocation5 + $0xd18] sm:$0xff] %vm7323, %v7050
    %7738 = vst [vmem:[#allocation5 + $0xd20] sm:$0xff] %v7051
    %7739 = vst [vmem:[#allocation5 + $0xd28] sm:$0xff] %v7052
    %7740 = vst [vmem:[#allocation5 + $0xd30] sm:$0xff] %v7053
    %7741 = vst [vmem:[#allocation5 + $0xd38] sm:$0xff] %v7054
    %7742 = vst [vmem:[#allocation5 + $0xd40] sm:$0xff] %v7055
    %7743 = vst [vmem:[#allocation5 + $0xd48] sm:$0xff] %v7056
    %7744 = vst.msk [vmem:[#allocation5 + $0xd50] sm:$0xff] %vm7323, %v7057
    %7745 = vst [vmem:[#allocation5 + $0xd58] sm:$0xff] %v7058
    %7746 = vst [vmem:[#allocation5 + $0xd60] sm:$0xff] %v7059
    %7747 = vst [vmem:[#allocation5 + $0xd68] sm:$0xff] %v7060
    %7748 = vst [vmem:[#allocation5 + $0xd70] sm:$0xff] %v7061
    %7749 = vst [vmem:[#allocation5 + $0xd78] sm:$0xff] %v7062
    %7750 = vst [vmem:[#allocation5 + $0xd80] sm:$0xff] %v7063
    %7751 = vst.msk [vmem:[#allocation5 + $0xd88] sm:$0xff] %vm7323, %v7064
    %7752 = vst [vmem:[#allocation5 + $0xd90] sm:$0xff] %v7065
    %7753 = vst [vmem:[#allocation5 + $0xd98] sm:$0xff] %v7066
    %7754 = vst [vmem:[#allocation5 + $0xda0] sm:$0xff] %v7067
    %7755 = vst [vmem:[#allocation5 + $0xda8] sm:$0xff] %v7068
    %7756 = vst [vmem:[#allocation5 + $0xdb0] sm:$0xff] %v7069
    %7757 = vst [vmem:[#allocation5 + $0xdb8] sm:$0xff] %v7070
    %7758 = vst.msk [vmem:[#allocation5 + $0xdc0] sm:$0xff] %vm7323, %v7071
    %7759 = vst [vmem:[#allocation5 + $0xdc8] sm:$0xff] %v7072
    %7760 = vst [vmem:[#allocation5 + $0xdd0] sm:$0xff] %v7073
    %7761 = vst [vmem:[#allocation5 + $0xdd8] sm:$0xff] %v7074
    %7762 = vst [vmem:[#allocation5 + $0xde0] sm:$0xff] %v7075
    %7763 = vst [vmem:[#allocation5 + $0xde8] sm:$0xff] %v7076
    %7764 = vst [vmem:[#allocation5 + $0xdf0] sm:$0xff] %v7077
    %7765 = vst.msk [vmem:[#allocation5 + $0xdf8] sm:$0xff] %vm7323, %v7078
    %7766 = vst [vmem:[#allocation5 + $0xe00] sm:$0xff] %v7079
    %7767 = vst [vmem:[#allocation5 + $0xe08] sm:$0xff] %v7080
    %7768 = vst [vmem:[#allocation5 + $0xe10] sm:$0xff] %v7081
    %7769 = vst [vmem:[#allocation5 + $0xe18] sm:$0xff] %v7082
    %7770 = vst [vmem:[#allocation5 + $0xe20] sm:$0xff] %v7083
    %7771 = vst [vmem:[#allocation5 + $0xe28] sm:$0xff] %v7084
    %7772 = vst.msk [vmem:[#allocation5 + $0xe30] sm:$0xff] %vm7323, %v7085
    %7773 = vst [vmem:[#allocation5 + $0xe38] sm:$0xff] %v7086
    %7774 = vst [vmem:[#allocation5 + $0xe40] sm:$0xff] %v7087
    %7775 = vst [vmem:[#allocation5 + $0xe48] sm:$0xff] %v7088
    %7776 = vst [vmem:[#allocation5 + $0xe50] sm:$0xff] %v7089
    %7777 = vst [vmem:[#allocation5 + $0xe58] sm:$0xff] %v7090
    %7778 = vst [vmem:[#allocation5 + $0xe60] sm:$0xff] %v7091
    %7779 = vst.msk [vmem:[#allocation5 + $0xe68] sm:$0xff] %vm7323, %v7092
    %7780 = vst [vmem:[#allocation5 + $0xe70] sm:$0xff] %v7093
    %7781 = vst [vmem:[#allocation5 + $0xe78] sm:$0xff] %v7094
    %7782 = vst [vmem:[#allocation5 + $0xe80] sm:$0xff] %v7095
    %7783 = vst [vmem:[#allocation5 + $0xe88] sm:$0xff] %v7096
    %7784 = vst [vmem:[#allocation5 + $0xe90] sm:$0xff] %v7097
    %7785 = vst [vmem:[#allocation5 + $0xe98] sm:$0xff] %v7098
    %7786 = vst.msk [vmem:[#allocation5 + $0xea0] sm:$0xff] %vm7323, %v7099
    %7787 = vst [vmem:[#allocation5 + $0xea8] sm:$0xff] %v7100
    %7788 = vst [vmem:[#allocation5 + $0xeb0] sm:$0xff] %v7101
    %7789 = vst [vmem:[#allocation5 + $0xeb8] sm:$0xff] %v7102
    %7790 = vst [vmem:[#allocation5 + $0xec0] sm:$0xff] %v7103
    %7791 = vst [vmem:[#allocation5 + $0xec8] sm:$0xff] %v7104
    %7792 = vst [vmem:[#allocation5 + $0xed0] sm:$0xff] %v7105
    %7793 = vst.msk [vmem:[#allocation5 + $0xed8] sm:$0xff] %vm7323, %v7106
    %7794 = vst [vmem:[#allocation5 + $0xee0] sm:$0xff] %v7107
    %7795 = vst [vmem:[#allocation5 + $0xee8] sm:$0xff] %v7108
    %7796 = vst [vmem:[#allocation5 + $0xef0] sm:$0xff] %v7109
    %7797 = vst [vmem:[#allocation5 + $0xef8] sm:$0xff] %v7110
    %7798 = vst [vmem:[#allocation5 + $0xf00] sm:$0xff] %v7111
    %7799 = vst [vmem:[#allocation5 + $0xf08] sm:$0xff] %v7112
    %7800 = vst.msk [vmem:[#allocation5 + $0xf10] sm:$0xff] %vm7323, %v7113
    %7801 = vst [vmem:[#allocation5 + $0xf18] sm:$0xff] %v7114
    %7802 = vst [vmem:[#allocation5 + $0xf20] sm:$0xff] %v7115
    %7803 = vst [vmem:[#allocation5 + $0xf28] sm:$0xff] %v7116
    %7804 = vst [vmem:[#allocation5 + $0xf30] sm:$0xff] %v7117
    %7805 = vst [vmem:[#allocation5 + $0xf38] sm:$0xff] %v7118
    %7806 = vst [vmem:[#allocation5 + $0xf40] sm:$0xff] %v7119
    %7807 = vst.msk [vmem:[#allocation5 + $0xf48] sm:$0xff] %vm7323, %v7120
    %7808 = vst [vmem:[#allocation5 + $0xf50] sm:$0xff] %v7121
    %7809 = vst [vmem:[#allocation5 + $0xf58] sm:$0xff] %v7122
    %7810 = vst [vmem:[#allocation5 + $0xf60] sm:$0xff] %v7123
    %7811 = vst [vmem:[#allocation5 + $0xf68] sm:$0xff] %v7124
    %7812 = vst [vmem:[#allocation5 + $0xf70] sm:$0xff] %v7125
    %7813 = vst [vmem:[#allocation5 + $0xf78] sm:$0xff] %v7126
    %7814 = vst.msk [vmem:[#allocation5 + $0xf80] sm:$0xff] %vm7323, %v7127
    %7815 = vst [vmem:[#allocation5 + $0xf88] sm:$0xff] %v7128
    %7816 = vst [vmem:[#allocation5 + $0xf90] sm:$0xff] %v7129
    %7817 = vst [vmem:[#allocation5 + $0xf98] sm:$0xff] %v7130
    %7818 = vst [vmem:[#allocation5 + $0xfa0] sm:$0xff] %v7131
    %7819 = vst [vmem:[#allocation5 + $0xfa8] sm:$0xff] %v7132
    %7820 = vst [vmem:[#allocation5 + $0xfb0] sm:$0xff] %v7133
    %7821 = vst.msk [vmem:[#allocation5 + $0xfb8] sm:$0xff] %vm7323, %v7134
    %7822 = vst [vmem:[#allocation5 + $0xfc0] sm:$0xff] %v7135
    %7823 = vst [vmem:[#allocation5 + $0xfc8] sm:$0xff] %v7136
    %7824 = vst [vmem:[#allocation5 + $0xfd0] sm:$0xff] %v7137
    %7825 = vst [vmem:[#allocation5 + $0xfd8] sm:$0xff] %v7138
    %7826 = vst [vmem:[#allocation5 + $0xfe0] sm:$0xff] %v7139
    %7827 = vst [vmem:[#allocation5 + $0xfe8] sm:$0xff] %v7140
    %7828 = vst.msk [vmem:[#allocation5 + $0xff0] sm:$0xff] %vm7323, %v7141
    %7829 = vst [vmem:[#allocation5 + $0xff8] sm:$0xff] %v7142
    %7830 = vst [vmem:[#allocation5 + $0x1000] sm:$0xff] %v7143
    %7831 = vst [vmem:[#allocation5 + $0x1008] sm:$0xff] %v7144
    %7832 = vst [vmem:[#allocation5 + $0x1010] sm:$0xff] %v7145
    %7833 = vst [vmem:[#allocation5 + $0x1018] sm:$0xff] %v7146
    %7834 = vst [vmem:[#allocation5 + $0x1020] sm:$0xff] %v7147
    %7835 = vst.msk [vmem:[#allocation5 + $0x1028] sm:$0xff] %vm7323, %v7148
    %7836 = vst [vmem:[#allocation5 + $0x1030] sm:$0xff] %v7149
    %7837 = vst [vmem:[#allocation5 + $0x1038] sm:$0xff] %v7150
    %7838 = vst [vmem:[#allocation5 + $0x1040] sm:$0xff] %v7151
    %7839 = vst [vmem:[#allocation5 + $0x1048] sm:$0xff] %v7152
    %7840 = vst [vmem:[#allocation5 + $0x1050] sm:$0xff] %v7153
    %7841 = vst [vmem:[#allocation5 + $0x1058] sm:$0xff] %v7154
    %7842 = vst.msk [vmem:[#allocation5 + $0x1060] sm:$0xff] %vm7323, %v7155
    %7843 = vst [vmem:[#allocation5 + $0x1068] sm:$0xff] %v7156
    %7844 = vst [vmem:[#allocation5 + $0x1070] sm:$0xff] %v7157
    %7845 = vst [vmem:[#allocation5 + $0x1078] sm:$0xff] %v7158
    %7846 = vst [vmem:[#allocation5 + $0x1080] sm:$0xff] %v7159
    %7847 = vst [vmem:[#allocation5 + $0x1088] sm:$0xff] %v7160
    %7848 = vst [vmem:[#allocation5 + $0x1090] sm:$0xff] %v7161
    %7849 = vst.msk [vmem:[#allocation5 + $0x1098] sm:$0xff] %vm7323, %v7162
    %7850 = vst [vmem:[#allocation5 + $0x10a0] sm:$0xff] %v7163
    %7851 = vst [vmem:[#allocation5 + $0x10a8] sm:$0xff] %v7164
    %7852 = vst [vmem:[#allocation5 + $0x10b0] sm:$0xff] %v7165
    %7853 = vst [vmem:[#allocation5 + $0x10b8] sm:$0xff] %v7166
    %7854 = vst [vmem:[#allocation5 + $0x10c0] sm:$0xff] %v7167
    %7855 = vst [vmem:[#allocation5 + $0x10c8] sm:$0xff] %v7168
    %7856 = vst.msk [vmem:[#allocation5 + $0x10d0] sm:$0xff] %vm7323, %v7169
    %7857 = vst [vmem:[#allocation5 + $0x10d8] sm:$0xff] %v7170
    %7858 = vst [vmem:[#allocation5 + $0x10e0] sm:$0xff] %v7171
    %7859 = vst [vmem:[#allocation5 + $0x10e8] sm:$0xff] %v7172
    %7860 = vst [vmem:[#allocation5 + $0x10f0] sm:$0xff] %v7173
    %7861 = vst [vmem:[#allocation5 + $0x10f8] sm:$0xff] %v7174
    %7862 = vst [vmem:[#allocation5 + $0x1100] sm:$0xff] %v7175
    %7863 = vst.msk [vmem:[#allocation5 + $0x1108] sm:$0xff] %vm7323, %v7176
    %7864 = vst [vmem:[#allocation5 + $0x1110] sm:$0xff] %v7177
    %7865 = vst [vmem:[#allocation5 + $0x1118] sm:$0xff] %v7178
    %7866 = vst [vmem:[#allocation5 + $0x1120] sm:$0xff] %v7179
    %7867 = vst [vmem:[#allocation5 + $0x1128] sm:$0xff] %v7180
    %7868 = vst [vmem:[#allocation5 + $0x1130] sm:$0xff] %v7181
    %7869 = vst [vmem:[#allocation5 + $0x1138] sm:$0xff] %v7182
    %7870 = vst.msk [vmem:[#allocation5 + $0x1140] sm:$0xff] %vm7323, %v7183
    %7871 = vst [vmem:[#allocation5 + $0x1148] sm:$0xff] %v7184
    %7872 = vst [vmem:[#allocation5 + $0x1150] sm:$0xff] %v7185
    %7873 = vst [vmem:[#allocation5 + $0x1158] sm:$0xff] %v7186
    %7874 = vst [vmem:[#allocation5 + $0x1160] sm:$0xff] %v7187
    %7875 = vst [vmem:[#allocation5 + $0x1168] sm:$0xff] %v7188
    %7876 = vst [vmem:[#allocation5 + $0x1170] sm:$0xff] %v7189
    %7877 = vst.msk [vmem:[#allocation5 + $0x1178] sm:$0xff] %vm7323, %v7190
    %7878 = vst [vmem:[#allocation5 + $0x1180] sm:$0xff] %v7191
    %7879 = vst [vmem:[#allocation5 + $0x1188] sm:$0xff] %v7192
    %7880 = vst [vmem:[#allocation5 + $0x1190] sm:$0xff] %v7193
    %7881 = vst [vmem:[#allocation5 + $0x1198] sm:$0xff] %v7194
    %7882 = vst [vmem:[#allocation5 + $0x11a0] sm:$0xff] %v7195
    %7883 = vst [vmem:[#allocation5 + $0x11a8] sm:$0xff] %v7196
    %7884 = vst.msk [vmem:[#allocation5 + $0x11b0] sm:$0xff] %vm7323, %v7197
    %7885 = vst [vmem:[#allocation5 + $0x11b8] sm:$0xff] %v7198
    %7886 = vst [vmem:[#allocation5 + $0x11c0] sm:$0xff] %v7199
    %7887 = vst [vmem:[#allocation5 + $0x11c8] sm:$0xff] %v7200
    %7888 = vst [vmem:[#allocation5 + $0x11d0] sm:$0xff] %v7201
    %7889 = vst [vmem:[#allocation5 + $0x11d8] sm:$0xff] %v7202
    %7890 = vst [vmem:[#allocation5 + $0x11e0] sm:$0xff] %v7203
    %7891 = vst.msk [vmem:[#allocation5 + $0x11e8] sm:$0xff] %vm7323, %v7204
    %7892 = vst [vmem:[#allocation5 + $0x11f0] sm:$0xff] %v7205
    %7893 = vst [vmem:[#allocation5 + $0x11f8] sm:$0xff] %v7206
    %7894 = vst [vmem:[#allocation5 + $0x1200] sm:$0xff] %v7207
    %7895 = vst [vmem:[#allocation5 + $0x1208] sm:$0xff] %v7208
    %7896 = vst [vmem:[#allocation5 + $0x1210] sm:$0xff] %v7209
    %7897 = vst [vmem:[#allocation5 + $0x1218] sm:$0xff] %v7210
    %7898 = vst.msk [vmem:[#allocation5 + $0x1220] sm:$0xff] %vm7323, %v7211
    %7899 = vst [vmem:[#allocation5 + $0x1228] sm:$0xff] %v7212
    %7900 = vst [vmem:[#allocation5 + $0x1230] sm:$0xff] %v7213
    %7901 = vst [vmem:[#allocation5 + $0x1238] sm:$0xff] %v7214
    %7902 = vst [vmem:[#allocation5 + $0x1240] sm:$0xff] %v7215
    %7903 = vst [vmem:[#allocation5 + $0x1248] sm:$0xff] %v7216
    %7904 = vst [vmem:[#allocation5 + $0x1250] sm:$0xff] %v7217
    %7905 = vst.msk [vmem:[#allocation5 + $0x1258] sm:$0xff] %vm7323, %v7218
    %7906 = vst [vmem:[#allocation5 + $0x1260] sm:$0xff] %v7219
    %7907 = vst [vmem:[#allocation5 + $0x1268] sm:$0xff] %v7220
    %7908 = vst [vmem:[#allocation5 + $0x1270] sm:$0xff] %v7221
    %7909 = vst [vmem:[#allocation5 + $0x1278] sm:$0xff] %v7222
    %7910 = vst [vmem:[#allocation5 + $0x1280] sm:$0xff] %v7223
    %7911 = vst [vmem:[#allocation5 + $0x1288] sm:$0xff] %v7224
    %7912 = vst.msk [vmem:[#allocation5 + $0x1290] sm:$0xff] %vm7323, %v7225
    %7913 = vst [vmem:[#allocation5 + $0x1298] sm:$0xff] %v7226
    %7914 = vst [vmem:[#allocation5 + $0x12a0] sm:$0xff] %v7227
    %7915 = vst [vmem:[#allocation5 + $0x12a8] sm:$0xff] %v7228
    %7916 = vst [vmem:[#allocation5 + $0x12b0] sm:$0xff] %v7229
    %7917 = vst [vmem:[#allocation5 + $0x12b8] sm:$0xff] %v7230
    %7918 = vst [vmem:[#allocation5 + $0x12c0] sm:$0xff] %v7231
    %7919 = vst.msk [vmem:[#allocation5 + $0x12c8] sm:$0xff] %vm7323, %v7232
    %7920 = vst [vmem:[#allocation5 + $0x12d0] sm:$0xff] %v7233
    %7921 = vst [vmem:[#allocation5 + $0x12d8] sm:$0xff] %v7234
    %7922 = vst [vmem:[#allocation5 + $0x12e0] sm:$0xff] %v7235
    %7923 = vst [vmem:[#allocation5 + $0x12e8] sm:$0xff] %v7236
    %7924 = vst [vmem:[#allocation5 + $0x12f0] sm:$0xff] %v7237
    %7925 = vst [vmem:[#allocation5 + $0x12f8] sm:$0xff] %v7238
    %7926 = vst.msk [vmem:[#allocation5 + $0x1300] sm:$0xff] %vm7323, %v7239
    %7927 = vst [vmem:[#allocation5 + $0x1308] sm:$0xff] %v7240
    %7928 = vst [vmem:[#allocation5 + $0x1310] sm:$0xff] %v7241
    %7929 = vst [vmem:[#allocation5 + $0x1318] sm:$0xff] %v7242
    %7930 = vst [vmem:[#allocation5 + $0x1320] sm:$0xff] %v7243
    %7931 = vst [vmem:[#allocation5 + $0x1328] sm:$0xff] %v7244
    %7932 = vst [vmem:[#allocation5 + $0x1330] sm:$0xff] %v7245
    %7933 = vst.msk [vmem:[#allocation5 + $0x1338] sm:$0xff] %vm7323, %v7246
    %7934 = vst [vmem:[#allocation5 + $0x1340] sm:$0xff] %v7247
    %7935 = vst [vmem:[#allocation5 + $0x1348] sm:$0xff] %v7248
    %7936 = vst [vmem:[#allocation5 + $0x1350] sm:$0xff] %v7249
    %7937 = vst [vmem:[#allocation5 + $0x1358] sm:$0xff] %v7250
    %7938 = vst [vmem:[#allocation5 + $0x1360] sm:$0xff] %v7251
    %7939 = vst [vmem:[#allocation5 + $0x1368] sm:$0xff] %v7252
    %7940 = vst.msk [vmem:[#allocation5 + $0x1370] sm:$0xff] %vm7323, %v7253
    %7941 = vst [vmem:[#allocation5 + $0x1378] sm:$0xff] %v7254
    %7942 = vst [vmem:[#allocation5 + $0x1380] sm:$0xff] %v7255
    %7943 = vst [vmem:[#allocation5 + $0x1388] sm:$0xff] %v7256
    %7944 = vst [vmem:[#allocation5 + $0x1390] sm:$0xff] %v7257
    %7945 = vst [vmem:[#allocation5 + $0x1398] sm:$0xff] %v7258
    %7946 = vst [vmem:[#allocation5 + $0x13a0] sm:$0xff] %v7259
    %7947 = vst.msk [vmem:[#allocation5 + $0x13a8] sm:$0xff] %vm7323, %v7260
    %7948 = vst [vmem:[#allocation5 + $0x13b0] sm:$0xff] %v7261
    %7949 = vst [vmem:[#allocation5 + $0x13b8] sm:$0xff] %v7262
    %7950 = vst [vmem:[#allocation5 + $0x13c0] sm:$0xff] %v7263
    %7951 = vst [vmem:[#allocation5 + $0x13c8] sm:$0xff] %v7264
    %7952 = vst [vmem:[#allocation5 + $0x13d0] sm:$0xff] %v7265
    %7953 = vst [vmem:[#allocation5 + $0x13d8] sm:$0xff] %v7266
    %7954 = vst.msk [vmem:[#allocation5 + $0x13e0] sm:$0xff] %vm7323, %v7267
    %7955 = vst [vmem:[#allocation5 + $0x13e8] sm:$0xff] %v7268
    %7956 = vst [vmem:[#allocation5 + $0x13f0] sm:$0xff] %v7269
    %7957 = vst [vmem:[#allocation5 + $0x13f8] sm:$0xff] %v7270
    %7958 = vst [vmem:[#allocation5 + $0x1400] sm:$0xff] %v7271
    %7959 = vst [vmem:[#allocation5 + $0x1408] sm:$0xff] %v7272
    %7960 = vst [vmem:[#allocation5 + $0x1410] sm:$0xff] %v7273
    %7961 = vst.msk [vmem:[#allocation5 + $0x1418] sm:$0xff] %vm7323, %v7274
    %7962 = vst [vmem:[#allocation5 + $0x1420] sm:$0xff] %v7275
    %7963 = vst [vmem:[#allocation5 + $0x1428] sm:$0xff] %v7276
    %7964 = vst [vmem:[#allocation5 + $0x1430] sm:$0xff] %v7277
    %7965 = vst [vmem:[#allocation5 + $0x1438] sm:$0xff] %v7278
    %7966 = vst [vmem:[#allocation5 + $0x1440] sm:$0xff] %v7279
    %7967 = vst [vmem:[#allocation5 + $0x1448] sm:$0xff] %v7280
    %7968 = vst.msk [vmem:[#allocation5 + $0x1450] sm:$0xff] %vm7323, %v7281
    %7969 = vst [vmem:[#allocation5 + $0x1458] sm:$0xff] %v7282
    %7970 = vst [vmem:[#allocation5 + $0x1460] sm:$0xff] %v7283
    %7971 = vst [vmem:[#allocation5 + $0x1468] sm:$0xff] %v7284
    %7972 = vst [vmem:[#allocation5 + $0x1470] sm:$0xff] %v7285
    %7973 = vst [vmem:[#allocation5 + $0x1478] sm:$0xff] %v7286
    %7974 = vst [vmem:[#allocation5 + $0x1480] sm:$0xff] %v7287
    %7975 = vst.msk [vmem:[#allocation5 + $0x1488] sm:$0xff] %vm7323, %v7288
    %7976 = vst [vmem:[#allocation5 + $0x1490] sm:$0xff] %v7289
    %7977 = vst [vmem:[#allocation5 + $0x1498] sm:$0xff] %v7290
    %7978 = vst [vmem:[#allocation5 + $0x14a0] sm:$0xff] %v7291
    %7979 = vst [vmem:[#allocation5 + $0x14a8] sm:$0xff] %v7292
    %7980 = vst [vmem:[#allocation5 + $0x14b0] sm:$0xff] %v7293
    %7981 = vst [vmem:[#allocation5 + $0x14b8] sm:$0xff] %v7294
    %7982 = vst.msk [vmem:[#allocation5 + $0x14c0] sm:$0xff] %vm7323, %v7295
    %7983 = vst [vmem:[#allocation5 + $0x14c8] sm:$0xff] %v7296
    %7984 = vst [vmem:[#allocation5 + $0x14d0] sm:$0xff] %v7297
    %7985 = vst [vmem:[#allocation5 + $0x14d8] sm:$0xff] %v7298
    %7986 = vst [vmem:[#allocation5 + $0x14e0] sm:$0xff] %v7299
    %7987 = vst [vmem:[#allocation5 + $0x14e8] sm:$0xff] %v7300
    %7988 = vst [vmem:[#allocation5 + $0x14f0] sm:$0xff] %v7301
    %7989 = vst.msk [vmem:[#allocation5 + $0x14f8] sm:$0xff] %vm7323, %v7302
    %7990 = vst [vmem:[#allocation5 + $0x1500] sm:$0xff] %v7303
    %7991 = vst [vmem:[#allocation5 + $0x1508] sm:$0xff] %v7304
    %7992 = vst [vmem:[#allocation5 + $0x1510] sm:$0xff] %v7305
    %7993 = vst [vmem:[#allocation5 + $0x1518] sm:$0xff] %v7306
    %7994 = vst [vmem:[#allocation5 + $0x1520] sm:$0xff] %v7307
    %7995 = vst [vmem:[#allocation5 + $0x1528] sm:$0xff] %v7308
    %7996 = vst.msk [vmem:[#allocation5 + $0x1530] sm:$0xff] %vm7323, %v7309
    %7997 = vst [vmem:[#allocation5 + $0x1538] sm:$0xff] %v7310
    %7998 = vst [vmem:[#allocation5 + $0x1540] sm:$0xff] %v7311
    %7999 = vst [vmem:[#allocation5 + $0x1548] sm:$0xff] %v7312
    %8000 = vst [vmem:[#allocation5 + $0x1550] sm:$0xff] %v7313
    %8001 = vst [vmem:[#allocation5 + $0x1558] sm:$0xff] %v7314
    %8002 = vst [vmem:[#allocation5 + $0x1560] sm:$0xff] %v7315
    %8003 = vst.msk [vmem:[#allocation5 + $0x1568] sm:$0xff] %vm7323, %v7316
    // Predicated region
    $region18: #{tpu_custom_call.1} parent=1 // pred_check
      _
    $region19: #{tpu_custom_call.1} parent=1 // pred_check_branch
      %8005 = sbr.rel (0) target = $region21
    $region20: #{tpu_custom_call.1} parent=1 // pred_region
      %s8007 = ssub.s32 87808, 87808
      %8008 = vsyncadd [#allocation4], %s8007
      %s8009 = sshll.u32 [#allocation5], 4
      %s8010 = int_to_ptr.vmem [resolvable:$true] %s8009
      %8015 = dma.vmem_to_hbm [thread:$0]  %s8010, 87808, %s3, [#allocation4], 896, 896, 56
    $region21: #{tpu_custom_call.1} parent=1 // pred_fallthru
      _
    // Predicated region
    $region22: #{tpu_custom_call.1} parent=1 // pred_check
      _
    $region23: #{tpu_custom_call.1} parent=1 // pred_check_branch
      %8017 = sbr.rel (0) target = $region25
    $region24: #{tpu_custom_call.1} parent=1 // pred_region
      %8018 = dma.done [#allocation4], 87808
    $region25: #{tpu_custom_call.1} parent=1 // pred_fallthru
      _
    %8019 = vsyncpa [#allocation3], 1
    %8020 = vsyncpa [#allocation4], 1

</llo_original>
